<compile_context>
chip_gen: v6e
topology: v6e:2x2x1
jax: 0.10.0
libtpu: 0.0.40
codegen_flags: <defaults>
</compile_context>

<pallas_src>
import math
from functools import partial

import jax
import jax.numpy as jnp
from jax.experimental import pallas as pl
from jax.experimental.pallas import tpu as pltpu


# ------------------------------ Pallas kernel -------------------------------

def _block_kernel(*refs, num_heads, num_layers, has_conv):
    # One batch element per grid step; activation (C, S) is VMEM-resident for
    # the entire stem + all layers.
    if has_conv:
        (x_ref, wc_ref, cb_ref, wl_ref, bl_ref,
         wqkv_ref, bqkv_ref, wo_ref, bo_ref, w12_ref,
         o_ref, oc_ref) = refs
    else:
        (x_ref, wl_ref, bl_ref,
         wqkv_ref, bqkv_ref, wo_ref, bo_ref, w12_ref,
         o_ref, oc_ref) = refs

    # ---- stem: 1x1 conv (eval-BN folded into weight/bias) + SiLU ----------
    if has_conv:
        y = jnp.dot(wc_ref[...], x_ref[0],
                    preferred_element_type=jnp.float32) + cb_ref[...]
        y = y * jax.nn.sigmoid(y)                    # SiLU (f32, VPU/EUP)
    else:
        y = x_ref[0]                                 # (C2, S)

    # ---- p + linear(p)  (torch-layout W used directly in (C,S) layout) ----
    x = y + (jnp.dot(wl_ref[...], y, preferred_element_type=jnp.float32)
             + bl_ref[...])

    c = x.shape[0]
    d = c // num_heads                               # head_dim (8 here)

    # ---- transformer layers ------------------------------------------------
    for l in range(num_layers):
        # Fused (q/k/v Linear + MHA in_proj) projection: one K=C matmul.
        qkv = (jnp.dot(wqkv_ref[l], x, preferred_element_type=jnp.float32)
               + bqkv_ref[l])                        # (3C, S)

        for h in range(num_heads):
            # Sublane slices (rows are multiples of d=8): cheap and aligned.
            q_h = qkv[h * d:(h + 1) * d, :]                   # (d, S)
            k_h = qkv[c + h * d:c + (h + 1) * d, :]           # (d, S)
            v_h = qkv[2 * c + h * d:2 * c + (h + 1) * d, :]   # (d, S)

            # scores[s, t] = sum_d q_h[d, s] * k_h[d, t]   -> (S, S) lane-dense
            s = jax.lax.dot_general(q_h, k_h, (((0,), (0,)), ((), ())),
                                    preferred_element_type=jnp.float32)
            s = s - jnp.max(s, axis=-1, keepdims=True)
            p = jnp.exp(s)
            p = p * pl.reciprocal(jnp.sum(p, axis=-1, keepdims=True),
                                  approx=False)

            # o_h[d, s] = sum_t v_h[d, t] * p[s, t]  (contraction depth = S)
            o_h = jax.lax.dot_general(v_h, p, (((1,), (1,)), ((), ())),
                                      preferred_element_type=jnp.float32)
            oc_ref[h * d:(h + 1) * d, :] = o_h       # head-concat in scratch

        # Single out_proj matmul (K = C) + bias + residual.
        x = (jnp.dot(wo_ref[l], oc_ref[...],
                     preferred_element_type=jnp.float32)
             + bo_ref[l] + x)

        # Folded FFN: fc2(fc1(x)) + x == (W2@W1) @ x_t + x_t.
        x = jnp.dot(w12_ref[l], x, preferred_element_type=jnp.float32) + x

    # Lane-dense store: last dim is S (multiple of 128).
    o_ref[0] = x


# --------------------------- pallas_call wrapper ----------------------------

def transformer_block_forward(x_nchw, params, num_heads):
    b, c_in, hh, ww = x_nchw.shape
    s = hh * ww
    c2 = params["lin_w"].shape[0]
    num_layers = params["wqkv"].shape[0]
    has_conv = "conv_w" in params
    assert c2 % num_heads == 0

    # NCHW -> (B, C, S): a free reshape (no transpose / extra HBM pass).
    x3 = x_nchw.reshape(b, c_in, s)

    if has_conv:
        w_args = (params["conv_w"], params["conv_b"],
                  params["lin_w"], params["lin_b"],
                  params["wqkv"], params["bqkv"],
                  params["wo"], params["bo"], params["w12"])
    else:
        w_args = (params["lin_w"], params["lin_b"],
                  params["wqkv"], params["bqkv"],
                  params["wo"], params["bo"], params["w12"])

    def _resident(a):
        # Full array, same block every grid step -> stays resident in VMEM.
        return pl.BlockSpec(a.shape, lambda i, _n=a.ndim: (0,) * _n)

    out = pl.pallas_call(
        partial(_block_kernel, num_heads=num_heads,
                num_layers=num_layers, has_conv=has_conv),
        out_shape=jax.ShapeDtypeStruct((b, c2, s), jnp.float32),
        grid=(b,),                                   # batch axis only
        in_specs=[pl.BlockSpec((1, c_in, s), lambda i: (i, 0, 0))]
                 + [_resident(a) for a in w_args],
        out_specs=pl.BlockSpec((1, c2, s), lambda i: (i, 0, 0)),
        scratch_shapes=[pltpu.VMEM((c2, s), jnp.float32)],   # head-concat buf
        compiler_params=pltpu.CompilerParams(
            dimension_semantics=("parallel",),       # 2 TCs on v7x
            vmem_limit_bytes=32 * 1024 * 1024),
    )(x3, *w_args)

    # Matches torch .permute(1,2,0).reshape(b, c2, H, W): output already
    # channel-major, so this reshape is free.
    return out.reshape(b, c2, hh, ww)


# -------------------------------- parameters --------------------------------

def init_raw_params(key, c1, c2, num_layers):
    keys = iter(jax.random.split(key, 16 + 16 * num_layers))

    def nrm(shape, scale):
        return jax.random.normal(next(keys), shape, jnp.float32) * scale

    params = {}
    if c1 != c2:
        params["conv"] = {
            "w": nrm((c2, c1), 1.0 / math.sqrt(c1)),   # Conv2d (c2,c1,1,1)
            "gamma": 1.0 + nrm((c2,), 0.1),
            "beta": nrm((c2,), 0.1),
            "mean": nrm((c2,), 0.1),
            "var": 1.0 + jax.random.uniform(next(keys), (c2,), jnp.float32),
        }
    sc = 1.0 / math.sqrt(c2)
    params["lin_w"] = nrm((c2, c2), sc)                # torch (out, in)
    params["lin_b"] = nrm((c2,), 0.1)

    layers = []
    for _ in range(num_layers):
        layers.append({
            "wq": nrm((c2, c2), sc), "wk": nrm((c2, c2), sc),
            "wv": nrm((c2, c2), sc),
            "in_proj_w": nrm((3 * c2, c2), sc),
            "in_proj_b": nrm((3 * c2,), 0.1),
            "out_proj_w": nrm((c2, c2), sc),
            "out_proj_b": nrm((c2,), 0.1),
            "fc1": nrm((c2, c2), sc), "fc2": nrm((c2, c2), sc),
        })
    params["layers"] = layers
    return params


def fuse_params(raw, num_heads, c2):
    """Fold parameter algebra for the transposed (C, S) kernel layout."""
    d = c2 // num_heads
    qs = 1.0 / math.sqrt(d)                            # MHA q scaling
    eps = 1e-5
    fused = {}

    if "conv" in raw:
        cv = raw["conv"]
        scale = cv["gamma"] / jnp.sqrt(cv["var"] + eps)   # eval-mode BN fold
        shift = cv["beta"] - cv["mean"] * scale
        fused["conv_w"] = cv["w"] * scale[:, None]        # (C2, C1)
        fused["conv_b"] = shift[:, None]                  # (C2, 1)

    fused["lin_w"] = raw["lin_w"]                         # (C2, C2) as-is
    fused["lin_b"] = raw["lin_b"][:, None]                # (C2, 1)

    wqkv, bqkv, wo, bo, w12 = [], [], [], [], []
    for lp in raw["layers"]:
        wq_in, wk_in, wv_in = (lp["in_proj_w"][:c2],
                               lp["in_proj_w"][c2:2 * c2],
                               lp["in_proj_w"][2 * c2:])
        bq_in, bk_in, bv_in = (lp["in_proj_b"][:c2],
                               lp["in_proj_b"][c2:2 * c2],
                               lp["in_proj_b"][2 * c2:])
        # in_proj(q(x)) == x @ (Wq_in @ Wq)^T + bq ; Q path pre-scaled.
        wq_f = (wq_in @ lp["wq"]) * qs
        wk_f = wk_in @ lp["wk"]
        wv_f = wv_in @ lp["wv"]
        wqkv.append(jnp.concatenate([wq_f, wk_f, wv_f], axis=0))   # (3C, C)
        bqkv.append(jnp.concatenate([bq_in * qs, bk_in, bv_in])[:, None])
        wo.append(lp["out_proj_w"])
        bo.append(lp["out_proj_b"][:, None])
        # Reference FFN has no nonlinearity between fc1 and fc2 -> fold.
        w12.append(lp["fc2"] @ lp["fc1"])

    fused["wqkv"] = jnp.stack(wqkv)    # (L, 3C, C)
    fused["bqkv"] = jnp.stack(bqkv)    # (L, 3C, 1)
    fused["wo"] = jnp.stack(wo)        # (L, C, C)
    fused["bo"] = jnp.stack(bo)        # (L, C, 1)
    fused["w12"] = jnp.stack(w12)      # (L, C, C)
    return fused


# ----------------------------------- main -----------------------------------

if __name__ == "__main__":
    B, C1, H, W = 2, 4, 16, 16
    C2, NUM_HEADS, NUM_LAYERS = 32, 4, 2

    key = jax.random.PRNGKey(0)
    kx, kp = jax.random.split(key)
    x = jax.random.normal(kx, (B, C1, H, W), jnp.float32)
    raw = init_raw_params(kp, C1, C2, NUM_LAYERS)
    params = fuse_params(raw, NUM_HEADS, C2)

    fwd = jax.jit(partial(transformer_block_forward, num_heads=NUM_HEADS))
    out = jax.block_until_ready(fwd(x, params))

    assert out.shape == (B, C2, H, W), out.shape
    assert bool(jnp.all(jnp.isfinite(out))), "non-finite output"
    print("KERNEL_OK")
</pallas_src>

<mosaic_0001>
module attributes {stable_mosaic.version = 11 : i64} {
  func.func @_block_kernel(%arg0: i32, %arg1: memref<1x4x256xf32, #tpu.memory_space<vmem>>, %arg2: memref<32x4xf32, #tpu.memory_space<vmem>>, %arg3: memref<32x1xf32, #tpu.memory_space<vmem>>, %arg4: memref<32x32xf32, #tpu.memory_space<vmem>>, %arg5: memref<32x1xf32, #tpu.memory_space<vmem>>, %arg6: memref<2x96x32xf32, #tpu.memory_space<vmem>>, %arg7: memref<2x96x1xf32, #tpu.memory_space<vmem>>, %arg8: memref<2x32x32xf32, #tpu.memory_space<vmem>>, %arg9: memref<2x32x1xf32, #tpu.memory_space<vmem>>, %arg10: memref<2x32x32xf32, #tpu.memory_space<vmem>>, %arg11: memref<1x32x256xf32, #tpu.memory_space<vmem>>, %arg12: memref<32x256xf32, #tpu.memory_space<vmem>>) attributes {dimension_semantics = [#tpu.dimension_semantics<parallel>], iteration_bounds = array<i64: 2>, scalar_prefetch = 0 : i64, scratch_operands = 1 : i64, tpu.core_type = #tpu.core_type<tc>, window_params = [{transform_indices = @transform_0, window_bounds = array<i64: 1, 4, 256>}, {pipeline_mode = #tpu.pipeline_mode<synchronous>, transform_indices = @transform_1, window_bounds = array<i64: 32, 4>}, {pipeline_mode = #tpu.pipeline_mode<synchronous>, transform_indices = @transform_2, window_bounds = array<i64: 32, 1>}, {pipeline_mode = #tpu.pipeline_mode<synchronous>, transform_indices = @transform_3, window_bounds = array<i64: 32, 32>}, {pipeline_mode = #tpu.pipeline_mode<synchronous>, transform_indices = @transform_4, window_bounds = array<i64: 32, 1>}, {pipeline_mode = #tpu.pipeline_mode<synchronous>, transform_indices = @transform_5, window_bounds = array<i64: 2, 96, 32>}, {pipeline_mode = #tpu.pipeline_mode<synchronous>, transform_indices = @transform_6, window_bounds = array<i64: 2, 96, 1>}, {pipeline_mode = #tpu.pipeline_mode<synchronous>, transform_indices = @transform_7, window_bounds = array<i64: 2, 32, 32>}, {pipeline_mode = #tpu.pipeline_mode<synchronous>, transform_indices = @transform_8, window_bounds = array<i64: 2, 32, 1>}, {pipeline_mode = #tpu.pipeline_mode<synchronous>, transform_indices = @transform_9, window_bounds = array<i64: 2, 32, 32>}, {transform_indices = @transform_10, window_bounds = array<i64: 1, 32, 256>}]} {
    %c0 = arith.constant 0 : index
    %c0_0 = arith.constant 0 : index
    %0 = vector.load %arg2[%c0, %c0_0] : memref<32x4xf32, #tpu.memory_space<vmem>>, vector<32x4xf32>
    %c0_1 = arith.constant 0 : index
    %c0_2 = arith.constant 0 : index
    %c0_3 = arith.constant 0 : index
    %1 = vector.load %arg1[%c0_1, %c0_2, %c0_3] : memref<1x4x256xf32, #tpu.memory_space<vmem>>, vector<1x4x256xf32>
    %2 = vector.shape_cast %1 : vector<1x4x256xf32> to vector<4x256xf32>
    %cst = arith.constant dense<0.000000e+00> : vector<32x256xf32>
    %3 = tpu.matmul %0, %2, %cst {dimension_numbers = #tpu.dot_dimension_numbers<[1], [0], [0], [1], [0, 0, 1, 1], [], []>} : vector<32x4xf32>, vector<4x256xf32>, vector<32x256xf32> -> vector<32x256xf32>
    %c0_4 = arith.constant 0 : index
    %c0_5 = arith.constant 0 : index
    %4 = vector.load %arg3[%c0_4, %c0_5] : memref<32x1xf32, #tpu.memory_space<vmem>>, vector<32x1xf32>
    %5 = vector.broadcast %4 : vector<32x1xf32> to vector<32x256xf32>
    %6 = arith.addf %3, %5 : vector<32x256xf32>
    %7 = arith.negf %6 : vector<32x256xf32>
    %8 = math.exp %7 : vector<32x256xf32>
    %cst_6 = arith.constant 1.000000e+00 : f32
    %9 = vector.broadcast %cst_6 : f32 to vector<32x256xf32>
    %10 = arith.addf %9, %8 : vector<32x256xf32>
    %11 = arith.divf %9, %10 : vector<32x256xf32>
    %12 = arith.mulf %6, %11 : vector<32x256xf32>
    %c0_7 = arith.constant 0 : index
    %c0_8 = arith.constant 0 : index
    %13 = vector.load %arg4[%c0_7, %c0_8] : memref<32x32xf32, #tpu.memory_space<vmem>>, vector<32x32xf32>
    %cst_9 = arith.constant dense<0.000000e+00> : vector<32x256xf32>
    %14 = tpu.matmul %13, %12, %cst_9 {dimension_numbers = #tpu.dot_dimension_numbers<[1], [0], [0], [1], [0, 0, 1, 1], [], []>} : vector<32x32xf32>, vector<32x256xf32>, vector<32x256xf32> -> vector<32x256xf32>
    %c0_10 = arith.constant 0 : index
    %c0_11 = arith.constant 0 : index
    %15 = vector.load %arg5[%c0_10, %c0_11] : memref<32x1xf32, #tpu.memory_space<vmem>>, vector<32x1xf32>
    %16 = vector.broadcast %15 : vector<32x1xf32> to vector<32x256xf32>
    %17 = arith.addf %14, %16 : vector<32x256xf32>
    %18 = arith.addf %12, %17 : vector<32x256xf32>
    %c0_12 = arith.constant 0 : index
    %c0_13 = arith.constant 0 : index
    %c0_14 = arith.constant 0 : index
    %19 = vector.load %arg6[%c0_12, %c0_13, %c0_14] : memref<2x96x32xf32, #tpu.memory_space<vmem>>, vector<1x96x32xf32>
    %20 = vector.shape_cast %19 : vector<1x96x32xf32> to vector<96x32xf32>
    %cst_15 = arith.constant dense<0.000000e+00> : vector<96x256xf32>
    %21 = tpu.matmul %20, %18, %cst_15 {dimension_numbers = #tpu.dot_dimension_numbers<[1], [0], [0], [1], [0, 0, 1, 1], [], []>} : vector<96x32xf32>, vector<32x256xf32>, vector<96x256xf32> -> vector<96x256xf32>
    %c0_16 = arith.constant 0 : index
    %c0_17 = arith.constant 0 : index
    %c0_18 = arith.constant 0 : index
    %22 = vector.load %arg7[%c0_16, %c0_17, %c0_18] : memref<2x96x1xf32, #tpu.memory_space<vmem>>, vector<1x96x1xf32>
    %23 = vector.shape_cast %22 : vector<1x96x1xf32> to vector<96x1xf32>
    %24 = vector.broadcast %23 : vector<96x1xf32> to vector<96x256xf32>
    %25 = arith.addf %21, %24 : vector<96x256xf32>
    %26 = vector.extract_strided_slice %25 {offsets = [0, 0], sizes = [8, 256], strides = [1, 1]} : vector<96x256xf32> to vector<8x256xf32>
    %27 = vector.extract_strided_slice %25 {offsets = [32, 0], sizes = [8, 256], strides = [1, 1]} : vector<96x256xf32> to vector<8x256xf32>
    %28 = vector.extract_strided_slice %25 {offsets = [64, 0], sizes = [8, 256], strides = [1, 1]} : vector<96x256xf32> to vector<8x256xf32>
    %cst_19 = arith.constant dense<0.000000e+00> : vector<256x256xf32>
    %29 = tpu.matmul %26, %27, %cst_19 {dimension_numbers = #tpu.dot_dimension_numbers<[0], [0], [1], [1], [0, 1, 1, 1], [], []>} : vector<8x256xf32>, vector<8x256xf32>, vector<256x256xf32> -> vector<256x256xf32>
    %cst_20 = arith.constant dense<0xFF800000> : vector<256xf32>
    %30 = vector.multi_reduction <maximumf>, %29, %cst_20 [1] : vector<256x256xf32> to vector<256xf32>
    %31 = vector.shape_cast %30 : vector<256xf32> to vector<256x1xf32>
    %32 = vector.broadcast %31 : vector<256x1xf32> to vector<256x256xf32>
    %33 = arith.subf %29, %32 : vector<256x256xf32>
    %34 = math.exp %33 : vector<256x256xf32>
    %cst_21 = arith.constant dense<0.000000e+00> : vector<256xf32>
    %35 = vector.multi_reduction <add>, %34, %cst_21 [1] : vector<256x256xf32> to vector<256xf32>
    %36 = vector.shape_cast %35 : vector<256xf32> to vector<256x1xf32>
    %37 = tpu.reciprocal %36 : vector<256x1xf32> -> vector<256x1xf32>
    %38 = vector.broadcast %37 : vector<256x1xf32> to vector<256x256xf32>
    %39 = arith.mulf %34, %38 : vector<256x256xf32>
    %cst_22 = arith.constant dense<0.000000e+00> : vector<8x256xf32>
    %40 = tpu.matmul %28, %39, %cst_22 {dimension_numbers = #tpu.dot_dimension_numbers<[1], [1], [0], [0], [0, 0, 1, 0], [], []>} : vector<8x256xf32>, vector<256x256xf32>, vector<8x256xf32> -> vector<8x256xf32>
    %c0_23 = arith.constant 0 : index
    %c0_24 = arith.constant 0 : index
    %41 = vector.load %arg12[%c0_23, %c0_24] : memref<32x256xf32, #tpu.memory_space<vmem>>, vector<8x256xf32>
    tpu.vector_store %arg12[%c0_23, %c0_24], %40 {strides = array<i32>} : memref<32x256xf32, #tpu.memory_space<vmem>>, vector<8x256xf32>,
    %42 = vector.extract_strided_slice %25 {offsets = [8, 0], sizes = [8, 256], strides = [1, 1]} : vector<96x256xf32> to vector<8x256xf32>
    %43 = vector.extract_strided_slice %25 {offsets = [40, 0], sizes = [8, 256], strides = [1, 1]} : vector<96x256xf32> to vector<8x256xf32>
    %44 = vector.extract_strided_slice %25 {offsets = [72, 0], sizes = [8, 256], strides = [1, 1]} : vector<96x256xf32> to vector<8x256xf32>
    %cst_25 = arith.constant dense<0.000000e+00> : vector<256x256xf32>
    %45 = tpu.matmul %42, %43, %cst_25 {dimension_numbers = #tpu.dot_dimension_numbers<[0], [0], [1], [1], [0, 1, 1, 1], [], []>} : vector<8x256xf32>, vector<8x256xf32>, vector<256x256xf32> -> vector<256x256xf32>
    %cst_26 = arith.constant dense<0xFF800000> : vector<256xf32>
    %46 = vector.multi_reduction <maximumf>, %45, %cst_26 [1] : vector<256x256xf32> to vector<256xf32>
    %47 = vector.shape_cast %46 : vector<256xf32> to vector<256x1xf32>
    %48 = vector.broadcast %47 : vector<256x1xf32> to vector<256x256xf32>
    %49 = arith.subf %45, %48 : vector<256x256xf32>
    %50 = math.exp %49 : vector<256x256xf32>
    %cst_27 = arith.constant dense<0.000000e+00> : vector<256xf32>
    %51 = vector.multi_reduction <add>, %50, %cst_27 [1] : vector<256x256xf32> to vector<256xf32>
    %52 = vector.shape_cast %51 : vector<256xf32> to vector<256x1xf32>
    %53 = tpu.reciprocal %52 : vector<256x1xf32> -> vector<256x1xf32>
    %54 = vector.broadcast %53 : vector<256x1xf32> to vector<256x256xf32>
    %55 = arith.mulf %50, %54 : vector<256x256xf32>
    %cst_28 = arith.constant dense<0.000000e+00> : vector<8x256xf32>
    %56 = tpu.matmul %44, %55, %cst_28 {dimension_numbers = #tpu.dot_dimension_numbers<[1], [1], [0], [0], [0, 0, 1, 0], [], []>} : vector<8x256xf32>, vector<256x256xf32>, vector<8x256xf32> -> vector<8x256xf32>
    %c8 = arith.constant 8 : index
    %c0_29 = arith.constant 0 : index
    %57 = vector.load %arg12[%c8, %c0_29] : memref<32x256xf32, #tpu.memory_space<vmem>>, vector<8x256xf32>
    tpu.vector_store %arg12[%c8, %c0_29], %56 {strides = array<i32>} : memref<32x256xf32, #tpu.memory_space<vmem>>, vector<8x256xf32>,
    %58 = vector.extract_strided_slice %25 {offsets = [16, 0], sizes = [8, 256], strides = [1, 1]} : vector<96x256xf32> to vector<8x256xf32>
    %59 = vector.extract_strided_slice %25 {offsets = [48, 0], sizes = [8, 256], strides = [1, 1]} : vector<96x256xf32> to vector<8x256xf32>
    %60 = vector.extract_strided_slice %25 {offsets = [80, 0], sizes = [8, 256], strides = [1, 1]} : vector<96x256xf32> to vector<8x256xf32>
    %cst_30 = arith.constant dense<0.000000e+00> : vector<256x256xf32>
    %61 = tpu.matmul %58, %59, %cst_30 {dimension_numbers = #tpu.dot_dimension_numbers<[0], [0], [1], [1], [0, 1, 1, 1], [], []>} : vector<8x256xf32>, vector<8x256xf32>, vector<256x256xf32> -> vector<256x256xf32>
    %cst_31 = arith.constant dense<0xFF800000> : vector<256xf32>
    %62 = vector.multi_reduction <maximumf>, %61, %cst_31 [1] : vector<256x256xf32> to vector<256xf32>
    %63 = vector.shape_cast %62 : vector<256xf32> to vector<256x1xf32>
    %64 = vector.broadcast %63 : vector<256x1xf32> to vector<256x256xf32>
    %65 = arith.subf %61, %64 : vector<256x256xf32>
    %66 = math.exp %65 : vector<256x256xf32>
    %cst_32 = arith.constant dense<0.000000e+00> : vector<256xf32>
    %67 = vector.multi_reduction <add>, %66, %cst_32 [1] : vector<256x256xf32> to vector<256xf32>
    %68 = vector.shape_cast %67 : vector<256xf32> to vector<256x1xf32>
    %69 = tpu.reciprocal %68 : vector<256x1xf32> -> vector<256x1xf32>
    %70 = vector.broadcast %69 : vector<256x1xf32> to vector<256x256xf32>
    %71 = arith.mulf %66, %70 : vector<256x256xf32>
    %cst_33 = arith.constant dense<0.000000e+00> : vector<8x256xf32>
    %72 = tpu.matmul %60, %71, %cst_33 {dimension_numbers = #tpu.dot_dimension_numbers<[1], [1], [0], [0], [0, 0, 1, 0], [], []>} : vector<8x256xf32>, vector<256x256xf32>, vector<8x256xf32> -> vector<8x256xf32>
    %c16 = arith.constant 16 : index
    %c0_34 = arith.constant 0 : index
    %73 = vector.load %arg12[%c16, %c0_34] : memref<32x256xf32, #tpu.memory_space<vmem>>, vector<8x256xf32>
    tpu.vector_store %arg12[%c16, %c0_34], %72 {strides = array<i32>} : memref<32x256xf32, #tpu.memory_space<vmem>>, vector<8x256xf32>,
    %74 = vector.extract_strided_slice %25 {offsets = [24, 0], sizes = [8, 256], strides = [1, 1]} : vector<96x256xf32> to vector<8x256xf32>
    %75 = vector.extract_strided_slice %25 {offsets = [56, 0], sizes = [8, 256], strides = [1, 1]} : vector<96x256xf32> to vector<8x256xf32>
    %76 = vector.extract_strided_slice %25 {offsets = [88, 0], sizes = [8, 256], strides = [1, 1]} : vector<96x256xf32> to vector<8x256xf32>
    %cst_35 = arith.constant dense<0.000000e+00> : vector<256x256xf32>
    %77 = tpu.matmul %74, %75, %cst_35 {dimension_numbers = #tpu.dot_dimension_numbers<[0], [0], [1], [1], [0, 1, 1, 1], [], []>} : vector<8x256xf32>, vector<8x256xf32>, vector<256x256xf32> -> vector<256x256xf32>
    %cst_36 = arith.constant dense<0xFF800000> : vector<256xf32>
    %78 = vector.multi_reduction <maximumf>, %77, %cst_36 [1] : vector<256x256xf32> to vector<256xf32>
    %79 = vector.shape_cast %78 : vector<256xf32> to vector<256x1xf32>
    %80 = vector.broadcast %79 : vector<256x1xf32> to vector<256x256xf32>
    %81 = arith.subf %77, %80 : vector<256x256xf32>
    %82 = math.exp %81 : vector<256x256xf32>
    %cst_37 = arith.constant dense<0.000000e+00> : vector<256xf32>
    %83 = vector.multi_reduction <add>, %82, %cst_37 [1] : vector<256x256xf32> to vector<256xf32>
    %84 = vector.shape_cast %83 : vector<256xf32> to vector<256x1xf32>
    %85 = tpu.reciprocal %84 : vector<256x1xf32> -> vector<256x1xf32>
    %86 = vector.broadcast %85 : vector<256x1xf32> to vector<256x256xf32>
    %87 = arith.mulf %82, %86 : vector<256x256xf32>
    %cst_38 = arith.constant dense<0.000000e+00> : vector<8x256xf32>
    %88 = tpu.matmul %76, %87, %cst_38 {dimension_numbers = #tpu.dot_dimension_numbers<[1], [1], [0], [0], [0, 0, 1, 0], [], []>} : vector<8x256xf32>, vector<256x256xf32>, vector<8x256xf32> -> vector<8x256xf32>
    %c24 = arith.constant 24 : index
    %c0_39 = arith.constant 0 : index
    %89 = vector.load %arg12[%c24, %c0_39] : memref<32x256xf32, #tpu.memory_space<vmem>>, vector<8x256xf32>
    tpu.vector_store %arg12[%c24, %c0_39], %88 {strides = array<i32>} : memref<32x256xf32, #tpu.memory_space<vmem>>, vector<8x256xf32>,
    %c0_40 = arith.constant 0 : index
    %c0_41 = arith.constant 0 : index
    %c0_42 = arith.constant 0 : index
    %90 = vector.load %arg8[%c0_40, %c0_41, %c0_42] : memref<2x32x32xf32, #tpu.memory_space<vmem>>, vector<1x32x32xf32>
    %91 = vector.shape_cast %90 : vector<1x32x32xf32> to vector<32x32xf32>
    %c0_43 = arith.constant 0 : index
    %c0_44 = arith.constant 0 : index
    %92 = vector.load %arg12[%c0_43, %c0_44] : memref<32x256xf32, #tpu.memory_space<vmem>>, vector<32x256xf32>
    %cst_45 = arith.constant dense<0.000000e+00> : vector<32x256xf32>
    %93 = tpu.matmul %91, %92, %cst_45 {dimension_numbers = #tpu.dot_dimension_numbers<[1], [0], [0], [1], [0, 0, 1, 1], [], []>} : vector<32x32xf32>, vector<32x256xf32>, vector<32x256xf32> -> vector<32x256xf32>
    %c0_46 = arith.constant 0 : index
    %c0_47 = arith.constant 0 : index
    %c0_48 = arith.constant 0 : index
    %94 = vector.load %arg9[%c0_46, %c0_47, %c0_48] : memref<2x32x1xf32, #tpu.memory_space<vmem>>, vector<1x32x1xf32>
    %95 = vector.shape_cast %94 : vector<1x32x1xf32> to vector<32x1xf32>
    %96 = vector.broadcast %95 : vector<32x1xf32> to vector<32x256xf32>
    %97 = arith.addf %93, %96 : vector<32x256xf32>
    %98 = arith.addf %97, %18 : vector<32x256xf32>
    %c0_49 = arith.constant 0 : index
    %c0_50 = arith.constant 0 : index
    %c0_51 = arith.constant 0 : index
    %99 = vector.load %arg10[%c0_49, %c0_50, %c0_51] : memref<2x32x32xf32, #tpu.memory_space<vmem>>, vector<1x32x32xf32>
    %100 = vector.shape_cast %99 : vector<1x32x32xf32> to vector<32x32xf32>
    %cst_52 = arith.constant dense<0.000000e+00> : vector<32x256xf32>
    %101 = tpu.matmul %100, %98, %cst_52 {dimension_numbers = #tpu.dot_dimension_numbers<[1], [0], [0], [1], [0, 0, 1, 1], [], []>} : vector<32x32xf32>, vector<32x256xf32>, vector<32x256xf32> -> vector<32x256xf32>
    %102 = arith.addf %101, %98 : vector<32x256xf32>
    %c1 = arith.constant 1 : index
    %c0_53 = arith.constant 0 : index
    %c0_54 = arith.constant 0 : index
    %103 = vector.load %arg6[%c1, %c0_53, %c0_54] : memref<2x96x32xf32, #tpu.memory_space<vmem>>, vector<1x96x32xf32>
    %104 = vector.shape_cast %103 : vector<1x96x32xf32> to vector<96x32xf32>
    %cst_55 = arith.constant dense<0.000000e+00> : vector<96x256xf32>
    %105 = tpu.matmul %104, %102, %cst_55 {dimension_numbers = #tpu.dot_dimension_numbers<[1], [0], [0], [1], [0, 0, 1, 1], [], []>} : vector<96x32xf32>, vector<32x256xf32>, vector<96x256xf32> -> vector<96x256xf32>
    %c1_56 = arith.constant 1 : index
    %c0_57 = arith.constant 0 : index
    %c0_58 = arith.constant 0 : index
    %106 = vector.load %arg7[%c1_56, %c0_57, %c0_58] : memref<2x96x1xf32, #tpu.memory_space<vmem>>, vector<1x96x1xf32>
    %107 = vector.shape_cast %106 : vector<1x96x1xf32> to vector<96x1xf32>
    %108 = vector.broadcast %107 : vector<96x1xf32> to vector<96x256xf32>
    %109 = arith.addf %105, %108 : vector<96x256xf32>
    %110 = vector.extract_strided_slice %109 {offsets = [0, 0], sizes = [8, 256], strides = [1, 1]} : vector<96x256xf32> to vector<8x256xf32>
    %111 = vector.extract_strided_slice %109 {offsets = [32, 0], sizes = [8, 256], strides = [1, 1]} : vector<96x256xf32> to vector<8x256xf32>
    %112 = vector.extract_strided_slice %109 {offsets = [64, 0], sizes = [8, 256], strides = [1, 1]} : vector<96x256xf32> to vector<8x256xf32>
    %cst_59 = arith.constant dense<0.000000e+00> : vector<256x256xf32>
    %113 = tpu.matmul %110, %111, %cst_59 {dimension_numbers = #tpu.dot_dimension_numbers<[0], [0], [1], [1], [0, 1, 1, 1], [], []>} : vector<8x256xf32>, vector<8x256xf32>, vector<256x256xf32> -> vector<256x256xf32>
    %cst_60 = arith.constant dense<0xFF800000> : vector<256xf32>
    %114 = vector.multi_reduction <maximumf>, %113, %cst_60 [1] : vector<256x256xf32> to vector<256xf32>
    %115 = vector.shape_cast %114 : vector<256xf32> to vector<256x1xf32>
    %116 = vector.broadcast %115 : vector<256x1xf32> to vector<256x256xf32>
    %117 = arith.subf %113, %116 : vector<256x256xf32>
    %118 = math.exp %117 : vector<256x256xf32>
    %cst_61 = arith.constant dense<0.000000e+00> : vector<256xf32>
    %119 = vector.multi_reduction <add>, %118, %cst_61 [1] : vector<256x256xf32> to vector<256xf32>
    %120 = vector.shape_cast %119 : vector<256xf32> to vector<256x1xf32>
    %121 = tpu.reciprocal %120 : vector<256x1xf32> -> vector<256x1xf32>
    %122 = vector.broadcast %121 : vector<256x1xf32> to vector<256x256xf32>
    %123 = arith.mulf %118, %122 : vector<256x256xf32>
    %cst_62 = arith.constant dense<0.000000e+00> : vector<8x256xf32>
    %124 = tpu.matmul %112, %123, %cst_62 {dimension_numbers = #tpu.dot_dimension_numbers<[1], [1], [0], [0], [0, 0, 1, 0], [], []>} : vector<8x256xf32>, vector<256x256xf32>, vector<8x256xf32> -> vector<8x256xf32>
    %c0_63 = arith.constant 0 : index
    %c0_64 = arith.constant 0 : index
    %125 = vector.load %arg12[%c0_63, %c0_64] : memref<32x256xf32, #tpu.memory_space<vmem>>, vector<8x256xf32>
    tpu.vector_store %arg12[%c0_63, %c0_64], %124 {strides = array<i32>} : memref<32x256xf32, #tpu.memory_space<vmem>>, vector<8x256xf32>,
    %126 = vector.extract_strided_slice %109 {offsets = [8, 0], sizes = [8, 256], strides = [1, 1]} : vector<96x256xf32> to vector<8x256xf32>
    %127 = vector.extract_strided_slice %109 {offsets = [40, 0], sizes = [8, 256], strides = [1, 1]} : vector<96x256xf32> to vector<8x256xf32>
    %128 = vector.extract_strided_slice %109 {offsets = [72, 0], sizes = [8, 256], strides = [1, 1]} : vector<96x256xf32> to vector<8x256xf32>
    %cst_65 = arith.constant dense<0.000000e+00> : vector<256x256xf32>
    %129 = tpu.matmul %126, %127, %cst_65 {dimension_numbers = #tpu.dot_dimension_numbers<[0], [0], [1], [1], [0, 1, 1, 1], [], []>} : vector<8x256xf32>, vector<8x256xf32>, vector<256x256xf32> -> vector<256x256xf32>
    %cst_66 = arith.constant dense<0xFF800000> : vector<256xf32>
    %130 = vector.multi_reduction <maximumf>, %129, %cst_66 [1] : vector<256x256xf32> to vector<256xf32>
    %131 = vector.shape_cast %130 : vector<256xf32> to vector<256x1xf32>
    %132 = vector.broadcast %131 : vector<256x1xf32> to vector<256x256xf32>
    %133 = arith.subf %129, %132 : vector<256x256xf32>
    %134 = math.exp %133 : vector<256x256xf32>
    %cst_67 = arith.constant dense<0.000000e+00> : vector<256xf32>
    %135 = vector.multi_reduction <add>, %134, %cst_67 [1] : vector<256x256xf32> to vector<256xf32>
    %136 = vector.shape_cast %135 : vector<256xf32> to vector<256x1xf32>
    %137 = tpu.reciprocal %136 : vector<256x1xf32> -> vector<256x1xf32>
    %138 = vector.broadcast %137 : vector<256x1xf32> to vector<256x256xf32>
    %139 = arith.mulf %134, %138 : vector<256x256xf32>
    %cst_68 = arith.constant dense<0.000000e+00> : vector<8x256xf32>
    %140 = tpu.matmul %128, %139, %cst_68 {dimension_numbers = #tpu.dot_dimension_numbers<[1], [1], [0], [0], [0, 0, 1, 0], [], []>} : vector<8x256xf32>, vector<256x256xf32>, vector<8x256xf32> -> vector<8x256xf32>
    %c8_69 = arith.constant 8 : index
    %c0_70 = arith.constant 0 : index
    %141 = vector.load %arg12[%c8_69, %c0_70] : memref<32x256xf32, #tpu.memory_space<vmem>>, vector<8x256xf32>
    tpu.vector_store %arg12[%c8_69, %c0_70], %140 {strides = array<i32>} : memref<32x256xf32, #tpu.memory_space<vmem>>, vector<8x256xf32>,
    %142 = vector.extract_strided_slice %109 {offsets = [16, 0], sizes = [8, 256], strides = [1, 1]} : vector<96x256xf32> to vector<8x256xf32>
    %143 = vector.extract_strided_slice %109 {offsets = [48, 0], sizes = [8, 256], strides = [1, 1]} : vector<96x256xf32> to vector<8x256xf32>
    %144 = vector.extract_strided_slice %109 {offsets = [80, 0], sizes = [8, 256], strides = [1, 1]} : vector<96x256xf32> to vector<8x256xf32>
    %cst_71 = arith.constant dense<0.000000e+00> : vector<256x256xf32>
    %145 = tpu.matmul %142, %143, %cst_71 {dimension_numbers = #tpu.dot_dimension_numbers<[0], [0], [1], [1], [0, 1, 1, 1], [], []>} : vector<8x256xf32>, vector<8x256xf32>, vector<256x256xf32> -> vector<256x256xf32>
    %cst_72 = arith.constant dense<0xFF800000> : vector<256xf32>
    %146 = vector.multi_reduction <maximumf>, %145, %cst_72 [1] : vector<256x256xf32> to vector<256xf32>
    %147 = vector.shape_cast %146 : vector<256xf32> to vector<256x1xf32>
    %148 = vector.broadcast %147 : vector<256x1xf32> to vector<256x256xf32>
    %149 = arith.subf %145, %148 : vector<256x256xf32>
    %150 = math.exp %149 : vector<256x256xf32>
    %cst_73 = arith.constant dense<0.000000e+00> : vector<256xf32>
    %151 = vector.multi_reduction <add>, %150, %cst_73 [1] : vector<256x256xf32> to vector<256xf32>
    %152 = vector.shape_cast %151 : vector<256xf32> to vector<256x1xf32>
    %153 = tpu.reciprocal %152 : vector<256x1xf32> -> vector<256x1xf32>
    %154 = vector.broadcast %153 : vector<256x1xf32> to vector<256x256xf32>
    %155 = arith.mulf %150, %154 : vector<256x256xf32>
    %cst_74 = arith.constant dense<0.000000e+00> : vector<8x256xf32>
    %156 = tpu.matmul %144, %155, %cst_74 {dimension_numbers = #tpu.dot_dimension_numbers<[1], [1], [0], [0], [0, 0, 1, 0], [], []>} : vector<8x256xf32>, vector<256x256xf32>, vector<8x256xf32> -> vector<8x256xf32>
    %c16_75 = arith.constant 16 : index
    %c0_76 = arith.constant 0 : index
    %157 = vector.load %arg12[%c16_75, %c0_76] : memref<32x256xf32, #tpu.memory_space<vmem>>, vector<8x256xf32>
    tpu.vector_store %arg12[%c16_75, %c0_76], %156 {strides = array<i32>} : memref<32x256xf32, #tpu.memory_space<vmem>>, vector<8x256xf32>,
    %158 = vector.extract_strided_slice %109 {offsets = [24, 0], sizes = [8, 256], strides = [1, 1]} : vector<96x256xf32> to vector<8x256xf32>
    %159 = vector.extract_strided_slice %109 {offsets = [56, 0], sizes = [8, 256], strides = [1, 1]} : vector<96x256xf32> to vector<8x256xf32>
    %160 = vector.extract_strided_slice %109 {offsets = [88, 0], sizes = [8, 256], strides = [1, 1]} : vector<96x256xf32> to vector<8x256xf32>
    %cst_77 = arith.constant dense<0.000000e+00> : vector<256x256xf32>
    %161 = tpu.matmul %158, %159, %cst_77 {dimension_numbers = #tpu.dot_dimension_numbers<[0], [0], [1], [1], [0, 1, 1, 1], [], []>} : vector<8x256xf32>, vector<8x256xf32>, vector<256x256xf32> -> vector<256x256xf32>
    %cst_78 = arith.constant dense<0xFF800000> : vector<256xf32>
    %162 = vector.multi_reduction <maximumf>, %161, %cst_78 [1] : vector<256x256xf32> to vector<256xf32>
    %163 = vector.shape_cast %162 : vector<256xf32> to vector<256x1xf32>
    %164 = vector.broadcast %163 : vector<256x1xf32> to vector<256x256xf32>
    %165 = arith.subf %161, %164 : vector<256x256xf32>
    %166 = math.exp %165 : vector<256x256xf32>
    %cst_79 = arith.constant dense<0.000000e+00> : vector<256xf32>
    %167 = vector.multi_reduction <add>, %166, %cst_79 [1] : vector<256x256xf32> to vector<256xf32>
    %168 = vector.shape_cast %167 : vector<256xf32> to vector<256x1xf32>
    %169 = tpu.reciprocal %168 : vector<256x1xf32> -> vector<256x1xf32>
    %170 = vector.broadcast %169 : vector<256x1xf32> to vector<256x256xf32>
    %171 = arith.mulf %166, %170 : vector<256x256xf32>
    %cst_80 = arith.constant dense<0.000000e+00> : vector<8x256xf32>
    %172 = tpu.matmul %160, %171, %cst_80 {dimension_numbers = #tpu.dot_dimension_numbers<[1], [1], [0], [0], [0, 0, 1, 0], [], []>} : vector<8x256xf32>, vector<256x256xf32>, vector<8x256xf32> -> vector<8x256xf32>
    %c24_81 = arith.constant 24 : index
    %c0_82 = arith.constant 0 : index
    %173 = vector.load %arg12[%c24_81, %c0_82] : memref<32x256xf32, #tpu.memory_space<vmem>>, vector<8x256xf32>
    tpu.vector_store %arg12[%c24_81, %c0_82], %172 {strides = array<i32>} : memref<32x256xf32, #tpu.memory_space<vmem>>, vector<8x256xf32>,
    %c1_83 = arith.constant 1 : index
    %c0_84 = arith.constant 0 : index
    %c0_85 = arith.constant 0 : index
    %174 = vector.load %arg8[%c1_83, %c0_84, %c0_85] : memref<2x32x32xf32, #tpu.memory_space<vmem>>, vector<1x32x32xf32>
    %175 = vector.shape_cast %174 : vector<1x32x32xf32> to vector<32x32xf32>
    %c0_86 = arith.constant 0 : index
    %c0_87 = arith.constant 0 : index
    %176 = vector.load %arg12[%c0_86, %c0_87] : memref<32x256xf32, #tpu.memory_space<vmem>>, vector<32x256xf32>
    %cst_88 = arith.constant dense<0.000000e+00> : vector<32x256xf32>
    %177 = tpu.matmul %175, %176, %cst_88 {dimension_numbers = #tpu.dot_dimension_numbers<[1], [0], [0], [1], [0, 0, 1, 1], [], []>} : vector<32x32xf32>, vector<32x256xf32>, vector<32x256xf32> -> vector<32x256xf32>
    %c1_89 = arith.constant 1 : index
    %c0_90 = arith.constant 0 : index
    %c0_91 = arith.constant 0 : index
    %178 = vector.load %arg9[%c1_89, %c0_90, %c0_91] : memref<2x32x1xf32, #tpu.memory_space<vmem>>, vector<1x32x1xf32>
    %179 = vector.shape_cast %178 : vector<1x32x1xf32> to vector<32x1xf32>
    %180 = vector.broadcast %179 : vector<32x1xf32> to vector<32x256xf32>
    %181 = arith.addf %177, %180 : vector<32x256xf32>
    %182 = arith.addf %181, %102 : vector<32x256xf32>
    %c1_92 = arith.constant 1 : index
    %c0_93 = arith.constant 0 : index
    %c0_94 = arith.constant 0 : index
    %183 = vector.load %arg10[%c1_92, %c0_93, %c0_94] : memref<2x32x32xf32, #tpu.memory_space<vmem>>, vector<1x32x32xf32>
    %184 = vector.shape_cast %183 : vector<1x32x32xf32> to vector<32x32xf32>
    %cst_95 = arith.constant dense<0.000000e+00> : vector<32x256xf32>
    %185 = tpu.matmul %184, %182, %cst_95 {dimension_numbers = #tpu.dot_dimension_numbers<[1], [0], [0], [1], [0, 0, 1, 1], [], []>} : vector<32x32xf32>, vector<32x256xf32>, vector<32x256xf32> -> vector<32x256xf32>
    %186 = arith.addf %185, %182 : vector<32x256xf32>
    %c0_96 = arith.constant 0 : index
    %c0_97 = arith.constant 0 : index
    %c0_98 = arith.constant 0 : index
    %187 = vector.load %arg11[%c0_96, %c0_97, %c0_98] : memref<1x32x256xf32, #tpu.memory_space<vmem>>, vector<1x32x256xf32>
    %188 = vector.shape_cast %187 : vector<1x32x256xf32> to vector<32x256xf32>
    %189 = vector.shape_cast %186 : vector<32x256xf32> to vector<1x32x256xf32>
    tpu.vector_store %arg11[%c0_96, %c0_97, %c0_98], %189 {strides = array<i32>} : memref<1x32x256xf32, #tpu.memory_space<vmem>>, vector<1x32x256xf32>,
    return
  }
  func.func @transform_0(%arg0: i32) -> (i32, i32, i32) {
    %c0_i32 = arith.constant 0 : i32
    %c0_i32_0 = arith.constant 0 : i32
    %c0_i32_1 = arith.constant 0 : i32
    return %arg0, %c0_i32, %c0_i32_0 : i32, i32, i32
  }
  func.func @transform_1(%arg0: i32) -> (i32, i32) {
    %c0_i32 = arith.constant 0 : i32
    %c0_i32_0 = arith.constant 0 : i32
    %c0_i32_1 = arith.constant 0 : i32
    return %c0_i32, %c0_i32_0 : i32, i32
  }
  func.func @transform_2(%arg0: i32) -> (i32, i32) {
    %c0_i32 = arith.constant 0 : i32
    %c0_i32_0 = arith.constant 0 : i32
    %c0_i32_1 = arith.constant 0 : i32
    return %c0_i32, %c0_i32_0 : i32, i32
  }
  func.func @transform_3(%arg0: i32) -> (i32, i32) {
    %c0_i32 = arith.constant 0 : i32
    %c0_i32_0 = arith.constant 0 : i32
    %c0_i32_1 = arith.constant 0 : i32
    return %c0_i32, %c0_i32_0 : i32, i32
  }
  func.func @transform_4(%arg0: i32) -> (i32, i32) {
    %c0_i32 = arith.constant 0 : i32
    %c0_i32_0 = arith.constant 0 : i32
    %c0_i32_1 = arith.constant 0 : i32
    return %c0_i32, %c0_i32_0 : i32, i32
  }
  func.func @transform_5(%arg0: i32) -> (i32, i32, i32) {
    %c0_i32 = arith.constant 0 : i32
    %c0_i32_0 = arith.constant 0 : i32
    %c0_i32_1 = arith.constant 0 : i32
    %c0_i32_2 = arith.constant 0 : i32
    return %c0_i32, %c0_i32_0, %c0_i32_1 : i32, i32, i32
  }
  func.func @transform_6(%arg0: i32) -> (i32, i32, i32) {
    %c0_i32 = arith.constant 0 : i32
    %c0_i32_0 = arith.constant 0 : i32
    %c0_i32_1 = arith.constant 0 : i32
    %c0_i32_2 = arith.constant 0 : i32
    return %c0_i32, %c0_i32_0, %c0_i32_1 : i32, i32, i32
  }
  func.func @transform_7(%arg0: i32) -> (i32, i32, i32) {
    %c0_i32 = arith.constant 0 : i32
    %c0_i32_0 = arith.constant 0 : i32
    %c0_i32_1 = arith.constant 0 : i32
    %c0_i32_2 = arith.constant 0 : i32
    return %c0_i32, %c0_i32_0, %c0_i32_1 : i32, i32, i32
  }
  func.func @transform_8(%arg0: i32) -> (i32, i32, i32) {
    %c0_i32 = arith.constant 0 : i32
    %c0_i32_0 = arith.constant 0 : i32
    %c0_i32_1 = arith.constant 0 : i32
    %c0_i32_2 = arith.constant 0 : i32
    return %c0_i32, %c0_i32_0, %c0_i32_1 : i32, i32, i32
  }
  func.func @transform_9(%arg0: i32) -> (i32, i32, i32) {
    %c0_i32 = arith.constant 0 : i32
    %c0_i32_0 = arith.constant 0 : i32
    %c0_i32_1 = arith.constant 0 : i32
    %c0_i32_2 = arith.constant 0 : i32
    return %c0_i32, %c0_i32_0, %c0_i32_1 : i32, i32, i32
  }
  func.func @transform_10(%arg0: i32) -> (i32, i32, i32) {
    %c0_i32 = arith.constant 0 : i32
    %c0_i32_0 = arith.constant 0 : i32
    %c0_i32_1 = arith.constant 0 : i32
    return %arg0, %c0_i32, %c0_i32_0 : i32, i32, i32
  }
}

</mosaic_0001>

<llo_original>
// kernel: transformer_block_forward.1
$region0: #{transformer_block_forward.1}
  #allocation0 [shape = 'u32[]', space=smem, size = 0x4, offset = 0x4, fixed_abs, tag = 'smem constant byte address 0x4 - core index']
  #allocation1 [shape = 'u32[144,128]{1,0:T(1,128)}', space=vmem, size = 0x12000, scoped, tag = 'internal scratch']
  #allocation2 [shape = 'f32[32,256]{1,0:T(8,128)}', space=vmem, size = 0x8000, scoped, tag = 'scratch operand']
  %s0 = inlined_call_operand.vmem [shape: f32[2,4,256], index: 0, kind: input, shape index: {}]
  %s1 = inlined_call_operand.vmem [shape: f32[32,4], index: 1, kind: input, shape index: {}]
  %s2 = inlined_call_operand.vmem [shape: f32[32,1], index: 2, kind: input, shape index: {}]
  %s3 = inlined_call_operand.vmem [shape: f32[32,32], index: 3, kind: input, shape index: {}]
  %s4 = inlined_call_operand.vmem [shape: f32[32,1], index: 4, kind: input, shape index: {}]
  %s5 = inlined_call_operand.vmem [shape: f32[2,96,32], index: 5, kind: input, shape index: {}]
  %s6 = inlined_call_operand.vmem [shape: f32[2,96,1], index: 6, kind: input, shape index: {}]
  %s7 = inlined_call_operand.vmem [shape: f32[2,32,32], index: 7, kind: input, shape index: {}]
  %s8 = inlined_call_operand.vmem [shape: f32[2,32,1], index: 8, kind: input, shape index: {}]
  %s9 = inlined_call_operand.vmem [shape: f32[2,32,32], index: 9, kind: input, shape index: {}]
  %s10 = inlined_call_operand.vmem [shape: f32[2,32,256], index: 10, kind: output, shape index: {}]
  %s11 = sld [smem:[#allocation0]]
  $region73: #{transformer_block_forward.1} parent=0
    _
  %s13 = ssub.s32 1, %s11
  %s14 = scalar_select 0, %s13, %s11
  loop: start=0, step=1, limit=4
  $region2: #{transformer_block_forward.1} parent=0 // loop_pre_header
    _
  $region3: #{transformer_block_forward.1} parent=0 // loop_header
    %s16 = sphi 0, %s20
    %p17 = scmp.ge.s32.totalorder %s16, 4
    %s26 = sphi 0, %s28
    %s29 = sphi 0, %s26
    %s30 = sphi 0, %s29
    %s46 = sphi 0, %s30
    %s50 = sphi 0, %s50
    %s52 = sphi 0, %s50
    %s53 = sphi 0, %s52
    %s67 = sphi 0, %s53
    %s71 = sphi 0, %s71
    %s73 = sphi 0, %s71
    %s74 = sphi 0, %s73
    %s88 = sphi 0, %s74
    %s92 = sphi 0, %s92
    %s94 = sphi 0, %s92
    %s95 = sphi 0, %s94
    %s109 = sphi 0, %s95
    %s113 = sphi 0, %s113
    %s115 = sphi 0, %s113
    %s116 = sphi 0, %s115
    %s130 = sphi 0, %s116
    %s134 = sphi 0, %s134
    %s136 = sphi 0, %s134
    %s137 = sphi 0, %s136
    %s151 = sphi 0, %s137
    %s155 = sphi 0, %s155
    %s157 = sphi 0, %s155
    %s158 = sphi 0, %s157
    %s172 = sphi 0, %s158
    %s176 = sphi 0, %s176
    %s178 = sphi 0, %s176
    %s179 = sphi 0, %s178
    %s193 = sphi 0, %s179
    %s197 = sphi 0, %s197
    %s199 = sphi 0, %s197
    %s200 = sphi 0, %s199
    %s214 = sphi 0, %s200
    %s218 = sphi 0, %s218
    %s220 = sphi 0, %s218
    %s221 = sphi 0, %s220
    %s235 = sphi 0, %s221
    %s241 = sphi 0, %s243
    %s244 = sphi 0, %s241
    %s245 = sphi 0, %s244
    %s261 = sphi 0, %s245
  $region4: #{transformer_block_forward.1} parent=0 // loop_header_branch
    %19 = sbr.rel (%p17) target = $region8
  $region5: #{transformer_block_forward.1} parent=0 // loop_body
    %s21 = ssub.s32 %s16, 1
    %s22 = ssub.s32 %s16, 2
    %s23 = sadd.s32 %s16, 1
    %s24 = ssub.s32 %s16, %s23
    %p25 = scmp.eq.s32.totalorder %s24, 0
    %s27 = sadd.s32 %s26, 1
    %s28 = scalar_select %p25, %s26, %s27
    %p31 = pneg %p25
    %p32 = scmp.eq.s32.totalorder %s16, 1
    %p33 = por %p31, %p32
    %p34 = scmp.ne.s32.totalorder %s26, %s29
    %p35 = scmp.eq.s32.totalorder %s16, 0
    %p36 = por %p34, %p35
    %p37 = scmp.ne.s32.totalorder %s26, %s29
    %p38 = scmp.eq.s32.totalorder %s21, 1
    %p39 = por %p37, %p38
    %p40 = scmp.ne.s32.totalorder %s29, %s30
    %p41 = scmp.eq.s32.totalorder %s21, 0
    %p42 = por %p40, %p41
    %p43 = scmp.ne.s32.totalorder %s29, %s30
    %p44 = scmp.eq.s32.totalorder %s22, 1
    %p45 = por %p43, %p44
    %p47 = scmp.ne.s32.totalorder %s30, %s46
    %p48 = scmp.eq.s32.totalorder %s22, 0
    %p49 = por %p47, %p48
    %s51 = sadd.s32 %s50, 1
    %p54 = scmp.eq.s32.totalorder %s16, 1
    %p55 = scmp.ne.s32.totalorder %s50, %s52
    %p56 = scmp.eq.s32.totalorder %s16, 0
    %p57 = por %p55, %p56
    %p58 = scmp.ne.s32.totalorder %s50, %s52
    %p59 = scmp.eq.s32.totalorder %s21, 1
    %p60 = por %p58, %p59
    %p61 = scmp.ne.s32.totalorder %s52, %s53
    %p62 = scmp.eq.s32.totalorder %s21, 0
    %p63 = por %p61, %p62
    %p64 = scmp.ne.s32.totalorder %s52, %s53
    %p65 = scmp.eq.s32.totalorder %s22, 1
    %p66 = por %p64, %p65
    %p68 = scmp.ne.s32.totalorder %s53, %s67
    %p69 = scmp.eq.s32.totalorder %s22, 0
    %p70 = por %p68, %p69
    %s72 = sadd.s32 %s71, 1
    %p75 = scmp.eq.s32.totalorder %s16, 1
    %p76 = scmp.ne.s32.totalorder %s71, %s73
    %p77 = scmp.eq.s32.totalorder %s16, 0
    %p78 = por %p76, %p77
    %p79 = scmp.ne.s32.totalorder %s71, %s73
    %p80 = scmp.eq.s32.totalorder %s21, 1
    %p81 = por %p79, %p80
    %p82 = scmp.ne.s32.totalorder %s73, %s74
    %p83 = scmp.eq.s32.totalorder %s21, 0
    %p84 = por %p82, %p83
    %p85 = scmp.ne.s32.totalorder %s73, %s74
    %p86 = scmp.eq.s32.totalorder %s22, 1
    %p87 = por %p85, %p86
    %p89 = scmp.ne.s32.totalorder %s74, %s88
    %p90 = scmp.eq.s32.totalorder %s22, 0
    %p91 = por %p89, %p90
    %s93 = sadd.s32 %s92, 1
    %p96 = scmp.eq.s32.totalorder %s16, 1
    %p97 = scmp.ne.s32.totalorder %s92, %s94
    %p98 = scmp.eq.s32.totalorder %s16, 0
    %p99 = por %p97, %p98
    %p100 = scmp.ne.s32.totalorder %s92, %s94
    %p101 = scmp.eq.s32.totalorder %s21, 1
    %p102 = por %p100, %p101
    %p103 = scmp.ne.s32.totalorder %s94, %s95
    %p104 = scmp.eq.s32.totalorder %s21, 0
    %p105 = por %p103, %p104
    %p106 = scmp.ne.s32.totalorder %s94, %s95
    %p107 = scmp.eq.s32.totalorder %s22, 1
    %p108 = por %p106, %p107
    %p110 = scmp.ne.s32.totalorder %s95, %s109
    %p111 = scmp.eq.s32.totalorder %s22, 0
    %p112 = por %p110, %p111
    %s114 = sadd.s32 %s113, 1
    %p117 = scmp.eq.s32.totalorder %s16, 1
    %p118 = scmp.ne.s32.totalorder %s113, %s115
    %p119 = scmp.eq.s32.totalorder %s16, 0
    %p120 = por %p118, %p119
    %p121 = scmp.ne.s32.totalorder %s113, %s115
    %p122 = scmp.eq.s32.totalorder %s21, 1
    %p123 = por %p121, %p122
    %p124 = scmp.ne.s32.totalorder %s115, %s116
    %p125 = scmp.eq.s32.totalorder %s21, 0
    %p126 = por %p124, %p125
    %p127 = scmp.ne.s32.totalorder %s115, %s116
    %p128 = scmp.eq.s32.totalorder %s22, 1
    %p129 = por %p127, %p128
    %p131 = scmp.ne.s32.totalorder %s116, %s130
    %p132 = scmp.eq.s32.totalorder %s22, 0
    %p133 = por %p131, %p132
    %s135 = sadd.s32 %s134, 1
    %p138 = scmp.eq.s32.totalorder %s16, 1
    %p139 = scmp.ne.s32.totalorder %s134, %s136
    %p140 = scmp.eq.s32.totalorder %s16, 0
    %p141 = por %p139, %p140
    %p142 = scmp.ne.s32.totalorder %s134, %s136
    %p143 = scmp.eq.s32.totalorder %s21, 1
    %p144 = por %p142, %p143
    %p145 = scmp.ne.s32.totalorder %s136, %s137
    %p146 = scmp.eq.s32.totalorder %s21, 0
    %p147 = por %p145, %p146
    %p148 = scmp.ne.s32.totalorder %s136, %s137
    %p149 = scmp.eq.s32.totalorder %s22, 1
    %p150 = por %p148, %p149
    %p152 = scmp.ne.s32.totalorder %s137, %s151
    %p153 = scmp.eq.s32.totalorder %s22, 0
    %p154 = por %p152, %p153
    %s156 = sadd.s32 %s155, 1
    %p159 = scmp.eq.s32.totalorder %s16, 1
    %p160 = scmp.ne.s32.totalorder %s155, %s157
    %p161 = scmp.eq.s32.totalorder %s16, 0
    %p162 = por %p160, %p161
    %p163 = scmp.ne.s32.totalorder %s155, %s157
    %p164 = scmp.eq.s32.totalorder %s21, 1
    %p165 = por %p163, %p164
    %p166 = scmp.ne.s32.totalorder %s157, %s158
    %p167 = scmp.eq.s32.totalorder %s21, 0
    %p168 = por %p166, %p167
    %p169 = scmp.ne.s32.totalorder %s157, %s158
    %p170 = scmp.eq.s32.totalorder %s22, 1
    %p171 = por %p169, %p170
    %p173 = scmp.ne.s32.totalorder %s158, %s172
    %p174 = scmp.eq.s32.totalorder %s22, 0
    %p175 = por %p173, %p174
    %s177 = sadd.s32 %s176, 1
    %p180 = scmp.eq.s32.totalorder %s16, 1
    %p181 = scmp.ne.s32.totalorder %s176, %s178
    %p182 = scmp.eq.s32.totalorder %s16, 0
    %p183 = por %p181, %p182
    %p184 = scmp.ne.s32.totalorder %s176, %s178
    %p185 = scmp.eq.s32.totalorder %s21, 1
    %p186 = por %p184, %p185
    %p187 = scmp.ne.s32.totalorder %s178, %s179
    %p188 = scmp.eq.s32.totalorder %s21, 0
    %p189 = por %p187, %p188
    %p190 = scmp.ne.s32.totalorder %s178, %s179
    %p191 = scmp.eq.s32.totalorder %s22, 1
    %p192 = por %p190, %p191
    %p194 = scmp.ne.s32.totalorder %s179, %s193
    %p195 = scmp.eq.s32.totalorder %s22, 0
    %p196 = por %p194, %p195
    %s198 = sadd.s32 %s197, 1
    %p201 = scmp.eq.s32.totalorder %s16, 1
    %p202 = scmp.ne.s32.totalorder %s197, %s199
    %p203 = scmp.eq.s32.totalorder %s16, 0
    %p204 = por %p202, %p203
    %p205 = scmp.ne.s32.totalorder %s197, %s199
    %p206 = scmp.eq.s32.totalorder %s21, 1
    %p207 = por %p205, %p206
    %p208 = scmp.ne.s32.totalorder %s199, %s200
    %p209 = scmp.eq.s32.totalorder %s21, 0
    %p210 = por %p208, %p209
    %p211 = scmp.ne.s32.totalorder %s199, %s200
    %p212 = scmp.eq.s32.totalorder %s22, 1
    %p213 = por %p211, %p212
    %p215 = scmp.ne.s32.totalorder %s200, %s214
    %p216 = scmp.eq.s32.totalorder %s22, 0
    %p217 = por %p215, %p216
    %s219 = sadd.s32 %s218, 1
    %p222 = scmp.eq.s32.totalorder %s16, 1
    %p223 = scmp.ne.s32.totalorder %s218, %s220
    %p224 = scmp.eq.s32.totalorder %s16, 0
    %p225 = por %p223, %p224
    %p226 = scmp.ne.s32.totalorder %s218, %s220
    %p227 = scmp.eq.s32.totalorder %s21, 1
    %p228 = por %p226, %p227
    %p229 = scmp.ne.s32.totalorder %s220, %s221
    %p230 = scmp.eq.s32.totalorder %s21, 0
    %p231 = por %p229, %p230
    %p232 = scmp.ne.s32.totalorder %s220, %s221
    %p233 = scmp.eq.s32.totalorder %s22, 1
    %p234 = por %p232, %p233
    %p236 = scmp.ne.s32.totalorder %s221, %s235
    %p237 = scmp.eq.s32.totalorder %s22, 0
    %p238 = por %p236, %p237
    %s239 = ssub.s32 %s16, %s23
    %p240 = scmp.eq.s32.totalorder %s239, 0
    %s242 = sadd.s32 %s241, 1
    %s243 = scalar_select %p240, %s241, %s242
    %p246 = pneg %p240
    %p247 = scmp.eq.s32.totalorder %s16, 1
    %p248 = por %p246, %p247
    %p249 = scmp.ne.s32.totalorder %s241, %s244
    %p250 = scmp.eq.s32.totalorder %s16, 0
    %p251 = por %p249, %p250
    %p252 = scmp.ne.s32.totalorder %s241, %s244
    %p253 = scmp.eq.s32.totalorder %s21, 1
    %p254 = por %p252, %p253
    %p255 = scmp.ne.s32.totalorder %s244, %s245
    %p256 = scmp.eq.s32.totalorder %s21, 0
    %p257 = por %p255, %p256
    %p258 = scmp.ne.s32.totalorder %s244, %s245
    %p259 = scmp.eq.s32.totalorder %s22, 1
    %p260 = por %p258, %p259
    %p262 = scmp.ne.s32.totalorder %s245, %s261
    %p263 = scmp.eq.s32.totalorder %s22, 0
    %p264 = por %p262, %p263
    %p265 = scmp.le.s32.totalorder 1, %s16
    %p266 = scmp.lt.s32.totalorder %s16, 3
    %p267 = pnand %p265, %p266
    %p268 = pneg %p267
    // Predicated region
    $region9: #{transformer_block_forward.1} parent=5 // pred_check
      _
    $region10: #{transformer_block_forward.1} parent=5 // pred_check_branch
      %270 = sbr.rel (%p267) target = $region12
    $region11: #{transformer_block_forward.1} parent=5 // pred_region
      %s271 = ssub.s32 %s16, 1
      // Predicated region
      $region13: #{transformer_block_forward.1} parent=11 // pred_check
        %p272 = pneg %p63
      $region14: #{transformer_block_forward.1} parent=11 // pred_check_branch
        %274 = sbr.rel (%p272) target = $region16
      $region15: #{transformer_block_forward.1} parent=11 // pred_region
        _
      $region16: #{transformer_block_forward.1} parent=11 // pred_fallthru
        _
      // Predicated region
      $region17: #{transformer_block_forward.1} parent=11 // pred_check
        %p275 = pneg %p84
      $region18: #{transformer_block_forward.1} parent=11 // pred_check_branch
        %277 = sbr.rel (%p275) target = $region20
      $region19: #{transformer_block_forward.1} parent=11 // pred_region
        _
      $region20: #{transformer_block_forward.1} parent=11 // pred_fallthru
        _
      // Predicated region
      $region21: #{transformer_block_forward.1} parent=11 // pred_check
        %p278 = pneg %p105
      $region22: #{transformer_block_forward.1} parent=11 // pred_check_branch
        %280 = sbr.rel (%p278) target = $region24
      $region23: #{transformer_block_forward.1} parent=11 // pred_region
        _
      $region24: #{transformer_block_forward.1} parent=11 // pred_fallthru
        _
      // Predicated region
      $region25: #{transformer_block_forward.1} parent=11 // pred_check
        %p281 = pneg %p126
      $region26: #{transformer_block_forward.1} parent=11 // pred_check_branch
        %283 = sbr.rel (%p281) target = $region28
      $region27: #{transformer_block_forward.1} parent=11 // pred_region
        _
      $region28: #{transformer_block_forward.1} parent=11 // pred_fallthru
        _
      // Predicated region
      $region29: #{transformer_block_forward.1} parent=11 // pred_check
        %p284 = pneg %p147
      $region30: #{transformer_block_forward.1} parent=11 // pred_check_branch
        %286 = sbr.rel (%p284) target = $region32
      $region31: #{transformer_block_forward.1} parent=11 // pred_region
        _
      $region32: #{transformer_block_forward.1} parent=11 // pred_fallthru
        _
      // Predicated region
      $region33: #{transformer_block_forward.1} parent=11 // pred_check
        %p287 = pneg %p168
      $region34: #{transformer_block_forward.1} parent=11 // pred_check_branch
        %289 = sbr.rel (%p287) target = $region36
      $region35: #{transformer_block_forward.1} parent=11 // pred_region
        _
      $region36: #{transformer_block_forward.1} parent=11 // pred_fallthru
        _
      // Predicated region
      $region37: #{transformer_block_forward.1} parent=11 // pred_check
        %p290 = pneg %p189
      $region38: #{transformer_block_forward.1} parent=11 // pred_check_branch
        %292 = sbr.rel (%p290) target = $region40
      $region39: #{transformer_block_forward.1} parent=11 // pred_region
        _
      $region40: #{transformer_block_forward.1} parent=11 // pred_fallthru
        _
      // Predicated region
      $region41: #{transformer_block_forward.1} parent=11 // pred_check
        %p293 = pneg %p210
      $region42: #{transformer_block_forward.1} parent=11 // pred_check_branch
        %295 = sbr.rel (%p293) target = $region44
      $region43: #{transformer_block_forward.1} parent=11 // pred_region
        _
      $region44: #{transformer_block_forward.1} parent=11 // pred_fallthru
        _
      // Predicated region
      $region45: #{transformer_block_forward.1} parent=11 // pred_check
        %p296 = pneg %p231
      $region46: #{transformer_block_forward.1} parent=11 // pred_check_branch
        %298 = sbr.rel (%p296) target = $region48
      $region47: #{transformer_block_forward.1} parent=11 // pred_region
        _
      $region48: #{transformer_block_forward.1} parent=11 // pred_fallthru
        _
    $region12: #{transformer_block_forward.1} parent=5 // pred_fallthru
      _
    %p299 = scmp.lt.s32.totalorder %s16, 2
    // Predicated region
    $region49: #{transformer_block_forward.1} parent=5 // pred_check
      %p300 = pneg %p299
    $region50: #{transformer_block_forward.1} parent=5 // pred_check_branch
      %302 = sbr.rel (%p300) target = $region52
    $region51: #{transformer_block_forward.1} parent=5 // pred_region
      // Predicated region
      $region53: #{transformer_block_forward.1} parent=51 // pred_check
        %p303 = pneg %p36
      $region54: #{transformer_block_forward.1} parent=51 // pred_check_branch
        %305 = sbr.rel (%p303) target = $region56
      $region55: #{transformer_block_forward.1} parent=51 // pred_region
        %p306 = scmp.lt.s32.totalorder %s16, 1
        %s307 = scalar_select %p306, %s16, 1
        %s308 = smul.addr %s307, 2
        %s309 = smul.addr %s308, 4
        %s310 = scalar_lea.vmem %s0, %s309
      $region56: #{transformer_block_forward.1} parent=51 // pred_fallthru
        _
    $region52: #{transformer_block_forward.1} parent=5 // pred_fallthru
      _
    %p311 = scmp.le.s32.totalorder 1, %s16
    %p312 = scmp.lt.s32.totalorder %s16, 3
    %p313 = pnand %p311, %p312
    %p314 = pneg %p313
    // Predicated region
    $region57: #{transformer_block_forward.1} parent=5 // pred_check
      _
    $region58: #{transformer_block_forward.1} parent=5 // pred_check_branch
      %316 = sbr.rel (%p313) target = $region60
    $region59: #{transformer_block_forward.1} parent=5 // pred_region
      %s317 = ssub.s32 %s16, 1
      %p318 = scmp.lt.s32.totalorder %s21, 1
      %s319 = scalar_select %p318, %s21, 1
      %s320 = smul.addr %s319, 2
      %s321 = smul.addr %s320, 4
      %s322 = scalar_lea.vmem %s0, %s321
      %p323 = pneg %p42
      %p324 = pneg %p39
      %p325 = pneg %p63
      %p326 = pneg %p60
      %p327 = pneg %p84
      %p328 = pneg %p81
      %p329 = pneg %p105
      %p330 = pneg %p102
      %p331 = pneg %p126
      %p332 = pneg %p123
      %p333 = pneg %p147
      %p334 = pneg %p144
      %p335 = pneg %p168
      %p336 = pneg %p165
      %p337 = pneg %p189
      %p338 = pneg %p186
      %p339 = pneg %p210
      %p340 = pneg %p207
      %p341 = pneg %p231
      %p342 = pneg %p228
      %p343 = pneg %p257
      %p344 = pneg %p254
      %p345 = scmp.lt.s32.totalorder %s21, 1
      %s346 = scalar_select %p345, %s21, 1
      %s347 = smul.addr %s346, 8
      %s348 = smul.addr %s347, 8
      %s349 = scalar_lea.vmem %s10, %s348
      %p350 = scmp.lt.s32.totalorder %s21, 1
      %s351 = scalar_select %p350, %s21, 1
      %s352 = smul.addr %s351, 2
      %s353 = smul.addr %s352, 4
      %s354 = scalar_lea.vmem %s0, %s353
      %p355 = scmp.lt.s32.totalorder %s21, 1
      %s356 = scalar_select %p355, %s21, 1
      %s357 = smul.addr %s356, 8
      %s358 = smul.addr %s357, 8
      %s359 = scalar_lea.vmem %s10, %s358
      %v360 = vld [vmem:[%s1] sm:$0xff]
      %v361 = vld [vmem:[%s1 + $0x8] sm:$0xff]
      %v362 = vld [vmem:[%s1 + $0x10] sm:$0xff]
      %v363 = vld [vmem:[%s1 + $0x18] sm:$0xff]
      %v364 = vld [vmem:[%s354] sm:$0xff]
      %v365 = vld [vmem:[%s2] sm:$0xff]
      %v366 = vld [vmem:[%s2 + $0x8] sm:$0xff]
      %v367 = vld [vmem:[%s2 + $0x10] sm:$0xff]
      %v368 = vld [vmem:[%s2 + $0x18] sm:$0xff]
      %370 = vset.pattern.permute.xlu0 0
      %371 = vperm.xlu0 %370, %v365
      %v372 = vpop.permute.xlu0 %371
      %375 = vset.pattern.permute.xlu0 0
      %376 = vperm.xlu0 %375, %v366
      %v377 = vpop.permute.xlu0 %376
      %380 = vset.pattern.permute.xlu0 0
      %381 = vperm.xlu0 %380, %v367
      %v382 = vpop.permute.xlu0 %381
      %385 = vset.pattern.permute.xlu0 0
      %386 = vperm.xlu0 %385, %v368
      %v387 = vpop.permute.xlu0 %386
      %v390 = vcombine.high %v364, %v364
      %vm391 = vcmask 31744
      %v393 = vsel %vm391, %v360, 0
      %v396 = vsel %vm391, %v361, 0
      %v399 = vsel %vm391, %v362, 0
      %v402 = vsel %vm391, %v363, 0
      %vm404 = vcmask 1043456
      %v405 = vsel %vm404, %v364, 0
      %v407 = vsel %vm404, %v390, 0
      %409 = vmatprep.subr.mxu0 0.0
      %410 = vmatpush1.msra.mxu0 0.0
      %411 = vmatprep.subr.mxu0 0.0
      %412 = vmatpush1.msra.mxu0 0.0
      %413 = vmatprep.subr.mxu0 0.0
      %414 = vmatpush1.msra.mxu0 0.0
      %415 = vmatprep.subr.mxu0 0.0
      %416 = vmatpush1.msra.mxu0 0.0
      %417 = vmatprep.subr.mxu0 0.0
      %418 = vmatpush1.msra.mxu0 0.0
      %419 = vmatprep.subr.mxu0 0.0
      %420 = vmatpush1.msra.mxu0 0.0
      %421 = vmatprep.subr.mxu0 0.0
      %422 = vmatpush1.msra.mxu0 0.0
      %423 = vmatprep.subr.mxu0 0.0
      %424 = vmatpush1.msra.mxu0 0.0
      %425 = vmatprep.subr.mxu0 0.0
      %426 = vmatpush1.msra.mxu0 0.0
      %427 = vmatprep.subr.mxu0 0.0
      %428 = vmatpush1.msra.mxu0 0.0
      %429 = vmatprep.subr.mxu0 0.0
      %430 = vmatpush1.msra.mxu0 0.0
      %431 = vmatprep.subr.mxu0 0.0
      %432 = vmatpush1.msra.mxu0 0.0
      %433 = vmatprep.subr.mxu0 0.0
      %434 = vmatpush1.msra.mxu0 0.0
      %435 = vmatprep.subr.mxu0 0.0
      %436 = vmatpush1.msra.mxu0 0.0
      %437 = vmatprep.subr.mxu0 0.0
      %438 = vmatpush1.msra.mxu0 0.0
      %439 = vmatprep.subr.mxu0 %v407
      %440 = vmatpush1.msra.mxu0 %v405
      %441 = vmatprep.subr.mxu0 0.0
      %442 = vmatpush2.msra.mxu0 0.0
      %443 = vmatprep.subr.mxu0 0.0
      %444 = vmatpush2.msra.mxu0 0.0
      %445 = vmatprep.subr.mxu0 0.0
      %446 = vmatpush2.msra.mxu0 0.0
      %447 = vmatprep.subr.mxu0 0.0
      %448 = vmatpush2.msra.mxu0 0.0
      %449 = vmatprep.subr.mxu0 0.0
      %450 = vmatpush2.msra.mxu0 0.0
      %451 = vmatprep.subr.mxu0 0.0
      %452 = vmatpush2.msra.mxu0 0.0
      %453 = vmatprep.subr.mxu0 0.0
      %454 = vmatpush2.msra.mxu0 0.0
      %455 = vmatprep.subr.mxu0 0.0
      %456 = vmatpush2.msra.mxu0 0.0
      %457 = vmatprep.subr.mxu0 0.0
      %458 = vmatpush2.msra.mxu0 0.0
      %459 = vmatprep.subr.mxu0 0.0
      %460 = vmatpush2.msra.mxu0 0.0
      %461 = vmatprep.subr.mxu0 0.0
      %462 = vmatpush2.msra.mxu0 0.0
      %463 = vmatprep.subr.mxu0 0.0
      %464 = vmatpush2.msra.mxu0 0.0
      %465 = vmatprep.subr.mxu0 0.0
      %466 = vmatpush2.msra.mxu0 0.0
      %467 = vmatprep.subr.mxu0 0.0
      %468 = vmatpush2.msra.mxu0 0.0
      %469 = vmatprep.subr.mxu0 0.0
      %470 = vmatpush2.msra.mxu0 0.0
      %471 = vmatprep.subr.mxu0 0.0
      %472 = vmatpush2.msra.mxu0 0.0
      %473 = vmatprep.mubr.f32.mxu0 0.0
      %474 = vmatmul.mubr.f32.gmra.mxu0 %v393
      %v475 = vpop.f32.mrf.mxu0
      %v476 = vadd.f32 %v372, %v475
      %v477 = vpop.f32.mrf.mxu0
      %v478 = vadd.f32 %v372, %v477
      %479 = vmatprep.mubr.f32.mxu0 0.0
      %480 = vmatmul.mubr.f32.gmra.mxu0 %v396
      %v481 = vpop.f32.mrf.mxu0
      %v482 = vadd.f32 %v377, %v481
      %v483 = vpop.f32.mrf.mxu0
      %v484 = vadd.f32 %v377, %v483
      %485 = vmatprep.mubr.f32.mxu0 0.0
      %486 = vmatmul.mubr.f32.gmra.mxu0 %v399
      %v487 = vpop.f32.mrf.mxu0
      %v488 = vadd.f32 %v382, %v487
      %v489 = vpop.f32.mrf.mxu0
      %v490 = vadd.f32 %v382, %v489
      %491 = vmatprep.mubr.f32.mxu0 0.0
      %492 = vmatmul.mubr.f32.gmra.mxu0 %v402
      %v493 = vpop.f32.mrf.mxu0
      %v494 = vadd.f32 %v387, %v493
      %v495 = vpop.f32.mrf.mxu0
      %v496 = vadd.f32 %v387, %v495
      %497 = vdwg.mxu0
      %v498 = vxor.u32 %v476, 2147483648
      %v499 = vxor.u32 %v478, 2147483648
      %v500 = vxor.u32 %v482, 2147483648
      %v501 = vxor.u32 %v484, 2147483648
      %v502 = vxor.u32 %v488, 2147483648
      %v503 = vxor.u32 %v490, 2147483648
      %v504 = vxor.u32 %v494, 2147483648
      %v505 = vxor.u32 %v496, 2147483648
      %v506 = vmul.f32 %v498, 1.442695
      %v507 = vpow.pop %v506
      %v508 = vmul.f32 %v499, 1.442695
      %v509 = vpow.pop %v508
      %v510 = vmul.f32 %v500, 1.442695
      %v511 = vpow.pop %v510
      %v512 = vmul.f32 %v501, 1.442695
      %v513 = vpow.pop %v512
      %v514 = vmul.f32 %v502, 1.442695
      %v515 = vpow.pop %v514
      %v516 = vmul.f32 %v503, 1.442695
      %v517 = vpow.pop %v516
      %v518 = vmul.f32 %v504, 1.442695
      %v519 = vpow.pop %v518
      %v520 = vmul.f32 %v505, 1.442695
      %v521 = vpow.pop %v520
      %v522 = vadd.f32 %v507, 1.0
      %v523 = vadd.f32 %v509, 1.0
      %v524 = vadd.f32 %v511, 1.0
      %v525 = vadd.f32 %v513, 1.0
      %v526 = vadd.f32 %v515, 1.0
      %v527 = vadd.f32 %v517, 1.0
      %v528 = vadd.f32 %v519, 1.0
      %v529 = vadd.f32 %v521, 1.0
      %v530 = vrcp.pop %v522
      %v531 = vmul.f32 1.0, %v530
      %v532 = vrcp.pop %v523
      %v533 = vmul.f32 1.0, %v532
      %v534 = vrcp.pop %v524
      %v535 = vmul.f32 1.0, %v534
      %v536 = vrcp.pop %v525
      %v537 = vmul.f32 1.0, %v536
      %v538 = vrcp.pop %v526
      %v539 = vmul.f32 1.0, %v538
      %v540 = vrcp.pop %v527
      %v541 = vmul.f32 1.0, %v540
      %v542 = vrcp.pop %v528
      %v543 = vmul.f32 1.0, %v542
      %v544 = vrcp.pop %v529
      %v545 = vmul.f32 1.0, %v544
      %v546 = vmul.f32 %v476, %v531
      %v547 = vmul.f32 %v478, %v533
      %v548 = vmul.f32 %v482, %v535
      %v549 = vmul.f32 %v484, %v537
      %v550 = vmul.f32 %v488, %v539
      %v551 = vmul.f32 %v490, %v541
      %v552 = vmul.f32 %v494, %v543
      %v553 = vmul.f32 %v496, %v545
      %v554 = vld [vmem:[%s3] sm:$0xff]
      %v555 = vld [vmem:[%s3 + $0x8] sm:$0xff]
      %v556 = vld [vmem:[%s3 + $0x10] sm:$0xff]
      %v557 = vld [vmem:[%s3 + $0x18] sm:$0xff]
      %v558 = vld [vmem:[%s4] sm:$0xff]
      %v559 = vld [vmem:[%s4 + $0x8] sm:$0xff]
      %v560 = vld [vmem:[%s4 + $0x10] sm:$0xff]
      %v561 = vld [vmem:[%s4 + $0x18] sm:$0xff]
      %563 = vset.pattern.permute.xlu0 0
      %564 = vperm.xlu0 %563, %v558
      %v565 = vpop.permute.xlu0 %564
      %568 = vset.pattern.permute.xlu0 0
      %569 = vperm.xlu0 %568, %v559
      %v570 = vpop.permute.xlu0 %569
      %573 = vset.pattern.permute.xlu0 0
      %574 = vperm.xlu0 %573, %v560
      %v575 = vpop.permute.xlu0 %574
      %578 = vset.pattern.permute.xlu0 0
      %579 = vperm.xlu0 %578, %v561
      %v580 = vpop.permute.xlu0 %579
      %vm582 = vcmask 261120
      %v584 = vsel %vm582, %v554, 0
      %v587 = vsel %vm582, %v555, 0
      %v590 = vsel %vm582, %v556, 0
      %v593 = vsel %vm582, %v557, 0
      %595 = vmatprep.subr.mxu0 0.0
      %596 = vmatpush1.msra.mxu0 0.0
      %597 = vmatprep.subr.mxu0 0.0
      %598 = vmatpush1.msra.mxu0 0.0
      %599 = vmatprep.subr.mxu0 0.0
      %600 = vmatpush1.msra.mxu0 0.0
      %601 = vmatprep.subr.mxu0 0.0
      %602 = vmatpush1.msra.mxu0 0.0
      %603 = vmatprep.subr.mxu0 0.0
      %604 = vmatpush1.msra.mxu0 0.0
      %605 = vmatprep.subr.mxu0 0.0
      %606 = vmatpush1.msra.mxu0 0.0
      %607 = vmatprep.subr.mxu0 0.0
      %608 = vmatpush1.msra.mxu0 0.0
      %609 = vmatprep.subr.mxu0 0.0
      %610 = vmatpush1.msra.mxu0 0.0
      %611 = vmatprep.subr.mxu0 0.0
      %612 = vmatpush1.msra.mxu0 0.0
      %613 = vmatprep.subr.mxu0 0.0
      %614 = vmatpush1.msra.mxu0 0.0
      %615 = vmatprep.subr.mxu0 0.0
      %616 = vmatpush1.msra.mxu0 0.0
      %617 = vmatprep.subr.mxu0 0.0
      %618 = vmatpush1.msra.mxu0 0.0
      %619 = vmatprep.subr.mxu0 %v553
      %620 = vmatpush1.msra.mxu0 %v552
      %621 = vmatprep.subr.mxu0 %v551
      %622 = vmatpush1.msra.mxu0 %v550
      %623 = vmatprep.subr.mxu0 %v549
      %624 = vmatpush1.msra.mxu0 %v548
      %625 = vmatprep.subr.mxu0 %v547
      %626 = vmatpush1.msra.mxu0 %v546
      %627 = vmatprep.subr.mxu0 0.0
      %628 = vmatpush2.msra.mxu0 0.0
      %629 = vmatprep.subr.mxu0 0.0
      %630 = vmatpush2.msra.mxu0 0.0
      %631 = vmatprep.subr.mxu0 0.0
      %632 = vmatpush2.msra.mxu0 0.0
      %633 = vmatprep.subr.mxu0 0.0
      %634 = vmatpush2.msra.mxu0 0.0
      %635 = vmatprep.subr.mxu0 0.0
      %636 = vmatpush2.msra.mxu0 0.0
      %637 = vmatprep.subr.mxu0 0.0
      %638 = vmatpush2.msra.mxu0 0.0
      %639 = vmatprep.subr.mxu0 0.0
      %640 = vmatpush2.msra.mxu0 0.0
      %641 = vmatprep.subr.mxu0 0.0
      %642 = vmatpush2.msra.mxu0 0.0
      %643 = vmatprep.subr.mxu0 0.0
      %644 = vmatpush2.msra.mxu0 0.0
      %645 = vmatprep.subr.mxu0 0.0
      %646 = vmatpush2.msra.mxu0 0.0
      %647 = vmatprep.subr.mxu0 0.0
      %648 = vmatpush2.msra.mxu0 0.0
      %649 = vmatprep.subr.mxu0 0.0
      %650 = vmatpush2.msra.mxu0 0.0
      %651 = vmatprep.subr.mxu0 0.0
      %652 = vmatpush2.msra.mxu0 0.0
      %653 = vmatprep.subr.mxu0 0.0
      %654 = vmatpush2.msra.mxu0 0.0
      %655 = vmatprep.subr.mxu0 0.0
      %656 = vmatpush2.msra.mxu0 0.0
      %657 = vmatprep.subr.mxu0 0.0
      %658 = vmatpush2.msra.mxu0 0.0
      %659 = vmatprep.mubr.f32.mxu0 0.0
      %660 = vmatmul.mubr.f32.gmra.mxu0 %v584
      %v661 = vpop.f32.mrf.mxu0
      %v662 = vadd.f32 %v565, %v661
      %v663 = vpop.f32.mrf.mxu0
      %v664 = vadd.f32 %v565, %v663
      %665 = vmatprep.mubr.f32.mxu0 0.0
      %666 = vmatmul.mubr.f32.gmra.mxu0 %v587
      %v667 = vpop.f32.mrf.mxu0
      %v668 = vadd.f32 %v570, %v667
      %v669 = vpop.f32.mrf.mxu0
      %v670 = vadd.f32 %v570, %v669
      %671 = vmatprep.mubr.f32.mxu0 0.0
      %672 = vmatmul.mubr.f32.gmra.mxu0 %v590
      %v673 = vpop.f32.mrf.mxu0
      %v674 = vadd.f32 %v575, %v673
      %v675 = vpop.f32.mrf.mxu0
      %v676 = vadd.f32 %v575, %v675
      %677 = vmatprep.mubr.f32.mxu0 0.0
      %678 = vmatmul.mubr.f32.gmra.mxu0 %v593
      %v679 = vpop.f32.mrf.mxu0
      %v680 = vadd.f32 %v580, %v679
      %v681 = vpop.f32.mrf.mxu0
      %v682 = vadd.f32 %v580, %v681
      %683 = vdwg.mxu0
      %v684 = vadd.f32 %v546, %v662
      %v685 = vadd.f32 %v547, %v664
      %v686 = vadd.f32 %v548, %v668
      %v687 = vadd.f32 %v549, %v670
      %v688 = vadd.f32 %v550, %v674
      %v689 = vadd.f32 %v551, %v676
      %v690 = vadd.f32 %v552, %v680
      %v691 = vadd.f32 %v553, %v682
      %v692 = vld [vmem:[%s5] sm:$0xff]
      %v693 = vld [vmem:[%s5 + $0x8] sm:$0xff]
      %v694 = vld [vmem:[%s5 + $0x10] sm:$0xff]
      %v695 = vld [vmem:[%s5 + $0x18] sm:$0xff]
      %v696 = vld [vmem:[%s5 + $0x20] sm:$0xff]
      %v697 = vld [vmem:[%s5 + $0x28] sm:$0xff]
      %v698 = vld [vmem:[%s5 + $0x30] sm:$0xff]
      %v699 = vld [vmem:[%s5 + $0x38] sm:$0xff]
      %v700 = vld [vmem:[%s5 + $0x40] sm:$0xff]
      %v701 = vld [vmem:[%s5 + $0x48] sm:$0xff]
      %v702 = vld [vmem:[%s5 + $0x50] sm:$0xff]
      %v703 = vld [vmem:[%s5 + $0x58] sm:$0xff]
      %v704 = vld [vmem:[%s6] sm:$0xff]
      %v705 = vld [vmem:[%s6 + $0x8] sm:$0xff]
      %v706 = vld [vmem:[%s6 + $0x10] sm:$0xff]
      %v707 = vld [vmem:[%s6 + $0x18] sm:$0xff]
      %v708 = vld [vmem:[%s6 + $0x20] sm:$0xff]
      %v709 = vld [vmem:[%s6 + $0x28] sm:$0xff]
      %v710 = vld [vmem:[%s6 + $0x30] sm:$0xff]
      %v711 = vld [vmem:[%s6 + $0x38] sm:$0xff]
      %v712 = vld [vmem:[%s6 + $0x40] sm:$0xff]
      %v713 = vld [vmem:[%s6 + $0x48] sm:$0xff]
      %v714 = vld [vmem:[%s6 + $0x50] sm:$0xff]
      %v715 = vld [vmem:[%s6 + $0x58] sm:$0xff]
      %717 = vset.pattern.permute.xlu0 0
      %718 = vperm.xlu0 %717, %v704
      %v719 = vpop.permute.xlu0 %718
      %722 = vset.pattern.permute.xlu0 0
      %723 = vperm.xlu0 %722, %v705
      %v724 = vpop.permute.xlu0 %723
      %727 = vset.pattern.permute.xlu0 0
      %728 = vperm.xlu0 %727, %v706
      %v729 = vpop.permute.xlu0 %728
      %732 = vset.pattern.permute.xlu0 0
      %733 = vperm.xlu0 %732, %v707
      %v734 = vpop.permute.xlu0 %733
      %737 = vset.pattern.permute.xlu0 0
      %738 = vperm.xlu0 %737, %v708
      %v739 = vpop.permute.xlu0 %738
      %742 = vset.pattern.permute.xlu0 0
      %743 = vperm.xlu0 %742, %v709
      %v744 = vpop.permute.xlu0 %743
      %747 = vset.pattern.permute.xlu0 0
      %748 = vperm.xlu0 %747, %v710
      %v749 = vpop.permute.xlu0 %748
      %752 = vset.pattern.permute.xlu0 0
      %753 = vperm.xlu0 %752, %v711
      %v754 = vpop.permute.xlu0 %753
      %757 = vset.pattern.permute.xlu0 0
      %758 = vperm.xlu0 %757, %v712
      %v759 = vpop.permute.xlu0 %758
      %762 = vset.pattern.permute.xlu0 0
      %763 = vperm.xlu0 %762, %v713
      %v764 = vpop.permute.xlu0 %763
      %767 = vset.pattern.permute.xlu0 0
      %768 = vperm.xlu0 %767, %v714
      %v769 = vpop.permute.xlu0 %768
      %772 = vset.pattern.permute.xlu0 0
      %773 = vperm.xlu0 %772, %v715
      %v774 = vpop.permute.xlu0 %773
      %v777 = vsel %vm582, %v692, 0
      %v780 = vsel %vm582, %v693, 0
      %v783 = vsel %vm582, %v694, 0
      %v786 = vsel %vm582, %v695, 0
      %v789 = vsel %vm582, %v696, 0
      %v792 = vsel %vm582, %v697, 0
      %v795 = vsel %vm582, %v698, 0
      %v798 = vsel %vm582, %v699, 0
      %v801 = vsel %vm582, %v700, 0
      %v804 = vsel %vm582, %v701, 0
      %v807 = vsel %vm582, %v702, 0
      %v810 = vsel %vm582, %v703, 0
      %812 = vmatprep.subr.mxu0 0.0
      %813 = vmatpush1.msra.mxu0 0.0
      %814 = vmatprep.subr.mxu0 0.0
      %815 = vmatpush1.msra.mxu0 0.0
      %816 = vmatprep.subr.mxu0 0.0
      %817 = vmatpush1.msra.mxu0 0.0
      %818 = vmatprep.subr.mxu0 0.0
      %819 = vmatpush1.msra.mxu0 0.0
      %820 = vmatprep.subr.mxu0 0.0
      %821 = vmatpush1.msra.mxu0 0.0
      %822 = vmatprep.subr.mxu0 0.0
      %823 = vmatpush1.msra.mxu0 0.0
      %824 = vmatprep.subr.mxu0 0.0
      %825 = vmatpush1.msra.mxu0 0.0
      %826 = vmatprep.subr.mxu0 0.0
      %827 = vmatpush1.msra.mxu0 0.0
      %828 = vmatprep.subr.mxu0 0.0
      %829 = vmatpush1.msra.mxu0 0.0
      %830 = vmatprep.subr.mxu0 0.0
      %831 = vmatpush1.msra.mxu0 0.0
      %832 = vmatprep.subr.mxu0 0.0
      %833 = vmatpush1.msra.mxu0 0.0
      %834 = vmatprep.subr.mxu0 0.0
      %835 = vmatpush1.msra.mxu0 0.0
      %836 = vmatprep.subr.mxu0 %v691
      %837 = vmatpush1.msra.mxu0 %v690
      %838 = vmatprep.subr.mxu0 %v689
      %839 = vmatpush1.msra.mxu0 %v688
      %840 = vmatprep.subr.mxu0 %v687
      %841 = vmatpush1.msra.mxu0 %v686
      %842 = vmatprep.subr.mxu0 %v685
      %843 = vmatpush1.msra.mxu0 %v684
      %844 = vmatprep.subr.mxu0 0.0
      %845 = vmatpush2.msra.mxu0 0.0
      %846 = vmatprep.subr.mxu0 0.0
      %847 = vmatpush2.msra.mxu0 0.0
      %848 = vmatprep.subr.mxu0 0.0
      %849 = vmatpush2.msra.mxu0 0.0
      %850 = vmatprep.subr.mxu0 0.0
      %851 = vmatpush2.msra.mxu0 0.0
      %852 = vmatprep.subr.mxu0 0.0
      %853 = vmatpush2.msra.mxu0 0.0
      %854 = vmatprep.subr.mxu0 0.0
      %855 = vmatpush2.msra.mxu0 0.0
      %856 = vmatprep.subr.mxu0 0.0
      %857 = vmatpush2.msra.mxu0 0.0
      %858 = vmatprep.subr.mxu0 0.0
      %859 = vmatpush2.msra.mxu0 0.0
      %860 = vmatprep.subr.mxu0 0.0
      %861 = vmatpush2.msra.mxu0 0.0
      %862 = vmatprep.subr.mxu0 0.0
      %863 = vmatpush2.msra.mxu0 0.0
      %864 = vmatprep.subr.mxu0 0.0
      %865 = vmatpush2.msra.mxu0 0.0
      %866 = vmatprep.subr.mxu0 0.0
      %867 = vmatpush2.msra.mxu0 0.0
      %868 = vmatprep.subr.mxu0 0.0
      %869 = vmatpush2.msra.mxu0 0.0
      %870 = vmatprep.subr.mxu0 0.0
      %871 = vmatpush2.msra.mxu0 0.0
      %872 = vmatprep.subr.mxu0 0.0
      %873 = vmatpush2.msra.mxu0 0.0
      %874 = vmatprep.subr.mxu0 0.0
      %875 = vmatpush2.msra.mxu0 0.0
      %876 = vmatprep.mubr.f32.mxu0 0.0
      %877 = vmatmul.mubr.f32.gmra.mxu0 %v777
      %v878 = vpop.f32.mrf.mxu0
      %v879 = vadd.f32 %v719, %v878
      %v880 = vpop.f32.mrf.mxu0
      %v881 = vadd.f32 %v719, %v880
      %882 = vmatprep.mubr.f32.mxu0 0.0
      %883 = vmatmul.mubr.f32.gmra.mxu0 %v780
      %v884 = vpop.f32.mrf.mxu0
      %v885 = vadd.f32 %v724, %v884
      %v886 = vpop.f32.mrf.mxu0
      %v887 = vadd.f32 %v724, %v886
      %888 = vmatprep.mubr.f32.mxu0 0.0
      %889 = vmatmul.mubr.f32.gmra.mxu0 %v783
      %v890 = vpop.f32.mrf.mxu0
      %v891 = vadd.f32 %v729, %v890
      %v892 = vpop.f32.mrf.mxu0
      %v893 = vadd.f32 %v729, %v892
      %894 = vmatprep.mubr.f32.mxu0 0.0
      %895 = vmatmul.mubr.f32.gmra.mxu0 %v786
      %v896 = vpop.f32.mrf.mxu0
      %v897 = vadd.f32 %v734, %v896
      %v898 = vpop.f32.mrf.mxu0
      %v899 = vadd.f32 %v734, %v898
      %900 = vmatprep.mubr.f32.mxu0 0.0
      %901 = vmatmul.mubr.f32.gmra.mxu0 %v789
      %v902 = vpop.f32.mrf.mxu0
      %v903 = vadd.f32 %v739, %v902
      %v904 = vpop.f32.mrf.mxu0
      %v905 = vadd.f32 %v739, %v904
      %906 = vmatprep.mubr.f32.mxu0 0.0
      %907 = vmatmul.mubr.f32.gmra.mxu0 %v792
      %v908 = vpop.f32.mrf.mxu0
      %v909 = vadd.f32 %v744, %v908
      %v910 = vpop.f32.mrf.mxu0
      %v911 = vadd.f32 %v744, %v910
      %912 = vmatprep.mubr.f32.mxu0 0.0
      %913 = vmatmul.mubr.f32.gmra.mxu0 %v795
      %v914 = vpop.f32.mrf.mxu0
      %v915 = vadd.f32 %v749, %v914
      %v916 = vpop.f32.mrf.mxu0
      %v917 = vadd.f32 %v749, %v916
      %918 = vmatprep.mubr.f32.mxu0 0.0
      %919 = vmatmul.mubr.f32.gmra.mxu0 %v798
      %v920 = vpop.f32.mrf.mxu0
      %v921 = vadd.f32 %v754, %v920
      %v922 = vpop.f32.mrf.mxu0
      %v923 = vadd.f32 %v754, %v922
      %924 = vmatprep.mubr.f32.mxu0 0.0
      %925 = vmatmul.mubr.f32.gmra.mxu0 %v801
      %v926 = vpop.f32.mrf.mxu0
      %v927 = vadd.f32 %v759, %v926
      %v928 = vpop.f32.mrf.mxu0
      %v929 = vadd.f32 %v759, %v928
      %930 = vmatprep.mubr.f32.mxu0 0.0
      %931 = vmatmul.mubr.f32.gmra.mxu0 %v804
      %v932 = vpop.f32.mrf.mxu0
      %v933 = vadd.f32 %v764, %v932
      %v934 = vpop.f32.mrf.mxu0
      %v935 = vadd.f32 %v764, %v934
      %936 = vmatprep.mubr.f32.mxu0 0.0
      %937 = vmatmul.mubr.f32.gmra.mxu0 %v807
      %v938 = vpop.f32.mrf.mxu0
      %v939 = vadd.f32 %v769, %v938
      %v940 = vpop.f32.mrf.mxu0
      %v941 = vadd.f32 %v769, %v940
      %942 = vmatprep.mubr.f32.mxu0 0.0
      %943 = vmatmul.mubr.f32.gmra.mxu0 %v810
      %v944 = vpop.f32.mrf.mxu0
      %v945 = vadd.f32 %v774, %v944
      %v946 = vpop.f32.mrf.mxu0
      %v947 = vadd.f32 %v774, %v946
      %948 = vdwg.mxu0
      %949 = vxpose.xlu0.b32.start [1/16] %v879, 128
      %950 = vxpose.xlu0.b32.cont [2/16] 0.0, 128
      %951 = vxpose.xlu0.b32.cont [3/16] 0.0, 128
      %952 = vxpose.xlu0.b32.cont [4/16] 0.0, 128
      %953 = vxpose.xlu0.b32.cont [5/16] 0.0, 128
      %954 = vxpose.xlu0.b32.cont [6/16] 0.0, 128
      %955 = vxpose.xlu0.b32.cont [7/16] 0.0, 128
      %956 = vxpose.xlu0.b32.cont [8/16] 0.0, 128
      %957 = vxpose.xlu0.b32.cont [9/16] 0.0, 128
      %958 = vxpose.xlu0.b32.cont [10/16] 0.0, 128
      %959 = vxpose.xlu0.b32.cont [11/16] 0.0, 128
      %960 = vxpose.xlu0.b32.cont [12/16] 0.0, 128
      %961 = vxpose.xlu0.b32.cont [13/16] 0.0, 128
      %962 = vxpose.xlu0.b32.cont [14/16] 0.0, 128
      %963 = vxpose.xlu0.b32.cont [15/16] 0.0, 128
      %964 = vxpose.xlu0.b32.end [16/16] 0.0, 128
      %v965 = vpop.trf.xlu0
      %v966 = vpop.trf.xlu0
      %v967 = vpop.trf.xlu0
      %v968 = vpop.trf.xlu0
      %v969 = vpop.trf.xlu0
      %v970 = vpop.trf.xlu0
      %v971 = vpop.trf.xlu0
      %v972 = vpop.trf.xlu0
      %v973 = vpop.trf.xlu0
      %v974 = vpop.trf.xlu0
      %v975 = vpop.trf.xlu0
      %v976 = vpop.trf.xlu0
      %v977 = vpop.trf.xlu0
      %v978 = vpop.trf.xlu0
      %v979 = vpop.trf.xlu0
      %v980 = vpop.trf.xlu0
      %981 = vxpose.xlu0.b32.start [1/16] %v881, 128
      %982 = vxpose.xlu0.b32.cont [2/16] 0.0, 128
      %983 = vxpose.xlu0.b32.cont [3/16] 0.0, 128
      %984 = vxpose.xlu0.b32.cont [4/16] 0.0, 128
      %985 = vxpose.xlu0.b32.cont [5/16] 0.0, 128
      %986 = vxpose.xlu0.b32.cont [6/16] 0.0, 128
      %987 = vxpose.xlu0.b32.cont [7/16] 0.0, 128
      %988 = vxpose.xlu0.b32.cont [8/16] 0.0, 128
      %989 = vxpose.xlu0.b32.cont [9/16] 0.0, 128
      %990 = vxpose.xlu0.b32.cont [10/16] 0.0, 128
      %991 = vxpose.xlu0.b32.cont [11/16] 0.0, 128
      %992 = vxpose.xlu0.b32.cont [12/16] 0.0, 128
      %993 = vxpose.xlu0.b32.cont [13/16] 0.0, 128
      %994 = vxpose.xlu0.b32.cont [14/16] 0.0, 128
      %995 = vxpose.xlu0.b32.cont [15/16] 0.0, 128
      %996 = vxpose.xlu0.b32.end [16/16] 0.0, 128
      %v997 = vpop.trf.xlu0
      %v998 = vpop.trf.xlu0
      %v999 = vpop.trf.xlu0
      %v1000 = vpop.trf.xlu0
      %v1001 = vpop.trf.xlu0
      %v1002 = vpop.trf.xlu0
      %v1003 = vpop.trf.xlu0
      %v1004 = vpop.trf.xlu0
      %v1005 = vpop.trf.xlu0
      %v1006 = vpop.trf.xlu0
      %v1007 = vpop.trf.xlu0
      %v1008 = vpop.trf.xlu0
      %v1009 = vpop.trf.xlu0
      %v1010 = vpop.trf.xlu0
      %v1011 = vpop.trf.xlu0
      %v1012 = vpop.trf.xlu0
      %vm1013 = vcmask 64512
      %v1015 = vsel %vm1013, %v965, 0
      %v1018 = vsel %vm1013, %v966, 0
      %v1021 = vsel %vm1013, %v967, 0
      %v1024 = vsel %vm1013, %v968, 0
      %v1027 = vsel %vm1013, %v969, 0
      %v1030 = vsel %vm1013, %v970, 0
      %v1033 = vsel %vm1013, %v971, 0
      %v1036 = vsel %vm1013, %v972, 0
      %v1039 = vsel %vm1013, %v973, 0
      %v1042 = vsel %vm1013, %v974, 0
      %v1045 = vsel %vm1013, %v975, 0
      %v1048 = vsel %vm1013, %v976, 0
      %v1051 = vsel %vm1013, %v977, 0
      %v1054 = vsel %vm1013, %v978, 0
      %v1057 = vsel %vm1013, %v979, 0
      %v1060 = vsel %vm1013, %v980, 0
      %v1063 = vsel %vm1013, %v997, 0
      %v1066 = vsel %vm1013, %v998, 0
      %v1069 = vsel %vm1013, %v999, 0
      %v1072 = vsel %vm1013, %v1000, 0
      %v1075 = vsel %vm1013, %v1001, 0
      %v1078 = vsel %vm1013, %v1002, 0
      %v1081 = vsel %vm1013, %v1003, 0
      %v1084 = vsel %vm1013, %v1004, 0
      %v1087 = vsel %vm1013, %v1005, 0
      %v1090 = vsel %vm1013, %v1006, 0
      %v1093 = vsel %vm1013, %v1007, 0
      %v1096 = vsel %vm1013, %v1008, 0
      %v1099 = vsel %vm1013, %v1009, 0
      %v1102 = vsel %vm1013, %v1010, 0
      %v1105 = vsel %vm1013, %v1011, 0
      %v1108 = vsel %vm1013, %v1012, 0
      %1110 = vmatprep.subr.mxu0 0.0
      %1111 = vmatpush1.msra.mxu0 0.0
      %1112 = vmatprep.subr.mxu0 0.0
      %1113 = vmatpush1.msra.mxu0 0.0
      %1114 = vmatprep.subr.mxu0 0.0
      %1115 = vmatpush1.msra.mxu0 0.0
      %1116 = vmatprep.subr.mxu0 0.0
      %1117 = vmatpush1.msra.mxu0 0.0
      %1118 = vmatprep.subr.mxu0 0.0
      %1119 = vmatpush1.msra.mxu0 0.0
      %1120 = vmatprep.subr.mxu0 0.0
      %1121 = vmatpush1.msra.mxu0 0.0
      %1122 = vmatprep.subr.mxu0 0.0
      %1123 = vmatpush1.msra.mxu0 0.0
      %1124 = vmatprep.subr.mxu0 0.0
      %1125 = vmatpush1.msra.mxu0 0.0
      %1126 = vmatprep.subr.mxu0 0.0
      %1127 = vmatpush1.msra.mxu0 0.0
      %1128 = vmatprep.subr.mxu0 0.0
      %1129 = vmatpush1.msra.mxu0 0.0
      %1130 = vmatprep.subr.mxu0 0.0
      %1131 = vmatpush1.msra.mxu0 0.0
      %1132 = vmatprep.subr.mxu0 0.0
      %1133 = vmatpush1.msra.mxu0 0.0
      %1134 = vmatprep.subr.mxu0 0.0
      %1135 = vmatpush1.msra.mxu0 0.0
      %1136 = vmatprep.subr.mxu0 0.0
      %1137 = vmatpush1.msra.mxu0 0.0
      %1138 = vmatprep.subr.mxu0 0.0
      %1139 = vmatpush1.msra.mxu0 0.0
      %1140 = vmatprep.subr.mxu0 %v905
      %1141 = vmatpush1.msra.mxu0 %v903
      %1142 = vmatprep.subr.mxu0 0.0
      %1143 = vmatpush2.msra.mxu0 0.0
      %1144 = vmatprep.subr.mxu0 0.0
      %1145 = vmatpush2.msra.mxu0 0.0
      %1146 = vmatprep.subr.mxu0 0.0
      %1147 = vmatpush2.msra.mxu0 0.0
      %1148 = vmatprep.subr.mxu0 0.0
      %1149 = vmatpush2.msra.mxu0 0.0
      %1150 = vmatprep.subr.mxu0 0.0
      %1151 = vmatpush2.msra.mxu0 0.0
      %1152 = vmatprep.subr.mxu0 0.0
      %1153 = vmatpush2.msra.mxu0 0.0
      %1154 = vmatprep.subr.mxu0 0.0
      %1155 = vmatpush2.msra.mxu0 0.0
      %1156 = vmatprep.subr.mxu0 0.0
      %1157 = vmatpush2.msra.mxu0 0.0
      %1158 = vmatprep.subr.mxu0 0.0
      %1159 = vmatpush2.msra.mxu0 0.0
      %1160 = vmatprep.subr.mxu0 0.0
      %1161 = vmatpush2.msra.mxu0 0.0
      %1162 = vmatprep.subr.mxu0 0.0
      %1163 = vmatpush2.msra.mxu0 0.0
      %1164 = vmatprep.subr.mxu0 0.0
      %1165 = vmatpush2.msra.mxu0 0.0
      %1166 = vmatprep.subr.mxu0 0.0
      %1167 = vmatpush2.msra.mxu0 0.0
      %1168 = vmatprep.subr.mxu0 0.0
      %1169 = vmatpush2.msra.mxu0 0.0
      %1170 = vmatprep.subr.mxu0 0.0
      %1171 = vmatpush2.msra.mxu0 0.0
      %1172 = vmatprep.subr.mxu0 0.0
      %1173 = vmatpush2.msra.mxu0 0.0
      %1174 = vmatprep.mubr.f32.mxu0 0.0
      %1175 = vmatmul.mubr.f32.gmra.mxu0 %v1015
      %v1176 = vpop.f32.mrf.mxu0
      %v1177 = vadd.f32 0.0, %v1176
      %v1178 = vpop.f32.mrf.mxu0
      %v1179 = vadd.f32 0.0, %v1178
      %1180 = vmatprep.mubr.f32.mxu0 0.0
      %1181 = vmatmul.mubr.f32.gmra.mxu0 %v1018
      %v1182 = vpop.f32.mrf.mxu0
      %v1183 = vadd.f32 0.0, %v1182
      %v1184 = vpop.f32.mrf.mxu0
      %v1185 = vadd.f32 0.0, %v1184
      %1186 = vmatprep.mubr.f32.mxu0 0.0
      %1187 = vmatmul.mubr.f32.gmra.mxu0 %v1021
      %v1188 = vpop.f32.mrf.mxu0
      %v1189 = vadd.f32 0.0, %v1188
      %v1190 = vpop.f32.mrf.mxu0
      %v1191 = vadd.f32 0.0, %v1190
      %1192 = vmatprep.mubr.f32.mxu0 0.0
      %1193 = vmatmul.mubr.f32.gmra.mxu0 %v1024
      %v1194 = vpop.f32.mrf.mxu0
      %v1195 = vadd.f32 0.0, %v1194
      %v1196 = vpop.f32.mrf.mxu0
      %v1197 = vadd.f32 0.0, %v1196
      %1198 = vmatprep.mubr.f32.mxu0 0.0
      %1199 = vmatmul.mubr.f32.gmra.mxu0 %v1027
      %v1200 = vpop.f32.mrf.mxu0
      %v1201 = vadd.f32 0.0, %v1200
      %v1202 = vpop.f32.mrf.mxu0
      %v1203 = vadd.f32 0.0, %v1202
      %1204 = vmatprep.mubr.f32.mxu0 0.0
      %1205 = vmatmul.mubr.f32.gmra.mxu0 %v1030
      %v1206 = vpop.f32.mrf.mxu0
      %v1207 = vadd.f32 0.0, %v1206
      %v1208 = vpop.f32.mrf.mxu0
      %v1209 = vadd.f32 0.0, %v1208
      %1210 = vmatprep.mubr.f32.mxu0 0.0
      %1211 = vmatmul.mubr.f32.gmra.mxu0 %v1033
      %v1212 = vpop.f32.mrf.mxu0
      %v1213 = vadd.f32 0.0, %v1212
      %v1214 = vpop.f32.mrf.mxu0
      %v1215 = vadd.f32 0.0, %v1214
      %1216 = vmatprep.mubr.f32.mxu0 0.0
      %1217 = vmatmul.mubr.f32.gmra.mxu0 %v1036
      %v1218 = vpop.f32.mrf.mxu0
      %v1219 = vadd.f32 0.0, %v1218
      %v1220 = vpop.f32.mrf.mxu0
      %v1221 = vadd.f32 0.0, %v1220
      %1222 = vmatprep.mubr.f32.mxu0 0.0
      %1223 = vmatmul.mubr.f32.gmra.mxu0 %v1039
      %v1224 = vpop.f32.mrf.mxu0
      %v1225 = vadd.f32 0.0, %v1224
      %v1226 = vpop.f32.mrf.mxu0
      %v1227 = vadd.f32 0.0, %v1226
      %1228 = vmatprep.mubr.f32.mxu0 0.0
      %1229 = vmatmul.mubr.f32.gmra.mxu0 %v1042
      %v1230 = vpop.f32.mrf.mxu0
      %v1231 = vadd.f32 0.0, %v1230
      %v1232 = vpop.f32.mrf.mxu0
      %v1233 = vadd.f32 0.0, %v1232
      %1234 = vmatprep.mubr.f32.mxu0 0.0
      %1235 = vmatmul.mubr.f32.gmra.mxu0 %v1045
      %v1236 = vpop.f32.mrf.mxu0
      %v1237 = vadd.f32 0.0, %v1236
      %v1238 = vpop.f32.mrf.mxu0
      %v1239 = vadd.f32 0.0, %v1238
      %1240 = vmatprep.mubr.f32.mxu0 0.0
      %1241 = vmatmul.mubr.f32.gmra.mxu0 %v1048
      %v1242 = vpop.f32.mrf.mxu0
      %v1243 = vadd.f32 0.0, %v1242
      %v1244 = vpop.f32.mrf.mxu0
      %v1245 = vadd.f32 0.0, %v1244
      %1246 = vmatprep.mubr.f32.mxu0 0.0
      %1247 = vmatmul.mubr.f32.gmra.mxu0 %v1051
      %v1248 = vpop.f32.mrf.mxu0
      %v1249 = vadd.f32 0.0, %v1248
      %v1250 = vpop.f32.mrf.mxu0
      %v1251 = vadd.f32 0.0, %v1250
      %1252 = vmatprep.mubr.f32.mxu0 0.0
      %1253 = vmatmul.mubr.f32.gmra.mxu0 %v1054
      %v1254 = vpop.f32.mrf.mxu0
      %v1255 = vadd.f32 0.0, %v1254
      %v1256 = vpop.f32.mrf.mxu0
      %v1257 = vadd.f32 0.0, %v1256
      %1258 = vmatprep.mubr.f32.mxu0 0.0
      %1259 = vmatmul.mubr.f32.gmra.mxu0 %v1057
      %v1260 = vpop.f32.mrf.mxu0
      %v1261 = vadd.f32 0.0, %v1260
      %v1262 = vpop.f32.mrf.mxu0
      %v1263 = vadd.f32 0.0, %v1262
      %1264 = vmatprep.mubr.f32.mxu0 0.0
      %1265 = vmatmul.mubr.f32.gmra.mxu0 %v1060
      %v1266 = vpop.f32.mrf.mxu0
      %v1267 = vadd.f32 0.0, %v1266
      %v1268 = vpop.f32.mrf.mxu0
      %v1269 = vadd.f32 0.0, %v1268
      %1270 = vmatprep.mubr.f32.mxu0 0.0
      %1271 = vmatmul.mubr.f32.gmra.mxu0 %v1063
      %v1272 = vpop.f32.mrf.mxu0
      %v1273 = vadd.f32 0.0, %v1272
      %v1274 = vpop.f32.mrf.mxu0
      %v1275 = vadd.f32 0.0, %v1274
      %1276 = vmatprep.mubr.f32.mxu0 0.0
      %1277 = vmatmul.mubr.f32.gmra.mxu0 %v1066
      %v1278 = vpop.f32.mrf.mxu0
      %v1279 = vadd.f32 0.0, %v1278
      %v1280 = vpop.f32.mrf.mxu0
      %v1281 = vadd.f32 0.0, %v1280
      %1282 = vmatprep.mubr.f32.mxu0 0.0
      %1283 = vmatmul.mubr.f32.gmra.mxu0 %v1069
      %v1284 = vpop.f32.mrf.mxu0
      %v1285 = vadd.f32 0.0, %v1284
      %v1286 = vpop.f32.mrf.mxu0
      %v1287 = vadd.f32 0.0, %v1286
      %1288 = vmatprep.mubr.f32.mxu0 0.0
      %1289 = vmatmul.mubr.f32.gmra.mxu0 %v1072
      %v1290 = vpop.f32.mrf.mxu0
      %v1291 = vadd.f32 0.0, %v1290
      %v1292 = vpop.f32.mrf.mxu0
      %v1293 = vadd.f32 0.0, %v1292
      %1294 = vmatprep.mubr.f32.mxu0 0.0
      %1295 = vmatmul.mubr.f32.gmra.mxu0 %v1075
      %v1296 = vpop.f32.mrf.mxu0
      %v1297 = vadd.f32 0.0, %v1296
      %v1298 = vpop.f32.mrf.mxu0
      %v1299 = vadd.f32 0.0, %v1298
      %1300 = vmatprep.mubr.f32.mxu0 0.0
      %1301 = vmatmul.mubr.f32.gmra.mxu0 %v1078
      %v1302 = vpop.f32.mrf.mxu0
      %v1303 = vadd.f32 0.0, %v1302
      %v1304 = vpop.f32.mrf.mxu0
      %v1305 = vadd.f32 0.0, %v1304
      %1306 = vmatprep.mubr.f32.mxu0 0.0
      %1307 = vmatmul.mubr.f32.gmra.mxu0 %v1081
      %v1308 = vpop.f32.mrf.mxu0
      %v1309 = vadd.f32 0.0, %v1308
      %v1310 = vpop.f32.mrf.mxu0
      %v1311 = vadd.f32 0.0, %v1310
      %1312 = vmatprep.mubr.f32.mxu0 0.0
      %1313 = vmatmul.mubr.f32.gmra.mxu0 %v1084
      %v1314 = vpop.f32.mrf.mxu0
      %v1315 = vadd.f32 0.0, %v1314
      %v1316 = vpop.f32.mrf.mxu0
      %v1317 = vadd.f32 0.0, %v1316
      %1318 = vmatprep.mubr.f32.mxu0 0.0
      %1319 = vmatmul.mubr.f32.gmra.mxu0 %v1087
      %v1320 = vpop.f32.mrf.mxu0
      %v1321 = vadd.f32 0.0, %v1320
      %v1322 = vpop.f32.mrf.mxu0
      %v1323 = vadd.f32 0.0, %v1322
      %1324 = vmatprep.mubr.f32.mxu0 0.0
      %1325 = vmatmul.mubr.f32.gmra.mxu0 %v1090
      %v1326 = vpop.f32.mrf.mxu0
      %v1327 = vadd.f32 0.0, %v1326
      %v1328 = vpop.f32.mrf.mxu0
      %v1329 = vadd.f32 0.0, %v1328
      %1330 = vmatprep.mubr.f32.mxu0 0.0
      %1331 = vmatmul.mubr.f32.gmra.mxu0 %v1093
      %v1332 = vpop.f32.mrf.mxu0
      %v1333 = vadd.f32 0.0, %v1332
      %v1334 = vpop.f32.mrf.mxu0
      %v1335 = vadd.f32 0.0, %v1334
      %1336 = vmatprep.mubr.f32.mxu0 0.0
      %1337 = vmatmul.mubr.f32.gmra.mxu0 %v1096
      %v1338 = vpop.f32.mrf.mxu0
      %v1339 = vadd.f32 0.0, %v1338
      %v1340 = vpop.f32.mrf.mxu0
      %v1341 = vadd.f32 0.0, %v1340
      %1342 = vmatprep.mubr.f32.mxu0 0.0
      %1343 = vmatmul.mubr.f32.gmra.mxu0 %v1099
      %v1344 = vpop.f32.mrf.mxu0
      %v1345 = vadd.f32 0.0, %v1344
      %v1346 = vpop.f32.mrf.mxu0
      %v1347 = vadd.f32 0.0, %v1346
      %1348 = vmatprep.mubr.f32.mxu0 0.0
      %1349 = vmatmul.mubr.f32.gmra.mxu0 %v1102
      %v1350 = vpop.f32.mrf.mxu0
      %v1351 = vadd.f32 0.0, %v1350
      %v1352 = vpop.f32.mrf.mxu0
      %v1353 = vadd.f32 0.0, %v1352
      %1354 = vmatprep.mubr.f32.mxu0 0.0
      %1355 = vmatmul.mubr.f32.gmra.mxu0 %v1105
      %v1356 = vpop.f32.mrf.mxu0
      %v1357 = vadd.f32 0.0, %v1356
      %v1358 = vpop.f32.mrf.mxu0
      %v1359 = vadd.f32 0.0, %v1358
      %1360 = vmatprep.mubr.f32.mxu0 0.0
      %1361 = vmatmul.mubr.f32.gmra.mxu0 %v1108
      %v1362 = vpop.f32.mrf.mxu0
      %v1363 = vadd.f32 0.0, %v1362
      %v1364 = vpop.f32.mrf.mxu0
      %v1365 = vadd.f32 0.0, %v1364
      %1366 = vdwg.mxu0
      %v1367 = vmax.f32 %v1177, %v1179
      %1368 = vmax.xlane.f32.xlu0 %v1367
      %v1369 = vpop.xlane.xlu0 %1368
      %v1370 = vmax.f32 %v1183, %v1185
      %1371 = vmax.xlane.f32.xlu0 %v1370
      %v1372 = vpop.xlane.xlu0 %1371
      %v1373 = vmax.f32 %v1189, %v1191
      %1374 = vmax.xlane.f32.xlu0 %v1373
      %v1375 = vpop.xlane.xlu0 %1374
      %v1376 = vmax.f32 %v1195, %v1197
      %1377 = vmax.xlane.f32.xlu0 %v1376
      %v1378 = vpop.xlane.xlu0 %1377
      %v1379 = vmax.f32 %v1201, %v1203
      %1380 = vmax.xlane.f32.xlu0 %v1379
      %v1381 = vpop.xlane.xlu0 %1380
      %v1382 = vmax.f32 %v1207, %v1209
      %1383 = vmax.xlane.f32.xlu0 %v1382
      %v1384 = vpop.xlane.xlu0 %1383
      %v1385 = vmax.f32 %v1213, %v1215
      %1386 = vmax.xlane.f32.xlu0 %v1385
      %v1387 = vpop.xlane.xlu0 %1386
      %v1388 = vmax.f32 %v1219, %v1221
      %1389 = vmax.xlane.f32.xlu0 %v1388
      %v1390 = vpop.xlane.xlu0 %1389
      %v1391 = vmax.f32 %v1225, %v1227
      %1392 = vmax.xlane.f32.xlu0 %v1391
      %v1393 = vpop.xlane.xlu0 %1392
      %v1394 = vmax.f32 %v1231, %v1233
      %1395 = vmax.xlane.f32.xlu0 %v1394
      %v1396 = vpop.xlane.xlu0 %1395
      %v1397 = vmax.f32 %v1237, %v1239
      %1398 = vmax.xlane.f32.xlu0 %v1397
      %v1399 = vpop.xlane.xlu0 %1398
      %v1400 = vmax.f32 %v1243, %v1245
      %1401 = vmax.xlane.f32.xlu0 %v1400
      %v1402 = vpop.xlane.xlu0 %1401
      %v1403 = vmax.f32 %v1249, %v1251
      %1404 = vmax.xlane.f32.xlu0 %v1403
      %v1405 = vpop.xlane.xlu0 %1404
      %v1406 = vmax.f32 %v1255, %v1257
      %1407 = vmax.xlane.f32.xlu0 %v1406
      %v1408 = vpop.xlane.xlu0 %1407
      %v1409 = vmax.f32 %v1261, %v1263
      %1410 = vmax.xlane.f32.xlu0 %v1409
      %v1411 = vpop.xlane.xlu0 %1410
      %v1412 = vmax.f32 %v1267, %v1269
      %1413 = vmax.xlane.f32.xlu0 %v1412
      %v1414 = vpop.xlane.xlu0 %1413
      %v1415 = vmax.f32 %v1273, %v1275
      %1416 = vmax.xlane.f32.xlu0 %v1415
      %v1417 = vpop.xlane.xlu0 %1416
      %v1418 = vmax.f32 %v1279, %v1281
      %1419 = vmax.xlane.f32.xlu0 %v1418
      %v1420 = vpop.xlane.xlu0 %1419
      %v1421 = vmax.f32 %v1285, %v1287
      %1422 = vmax.xlane.f32.xlu0 %v1421
      %v1423 = vpop.xlane.xlu0 %1422
      %v1424 = vmax.f32 %v1291, %v1293
      %1425 = vmax.xlane.f32.xlu0 %v1424
      %v1426 = vpop.xlane.xlu0 %1425
      %v1427 = vmax.f32 %v1297, %v1299
      %1428 = vmax.xlane.f32.xlu0 %v1427
      %v1429 = vpop.xlane.xlu0 %1428
      %v1430 = vmax.f32 %v1303, %v1305
      %1431 = vmax.xlane.f32.xlu0 %v1430
      %v1432 = vpop.xlane.xlu0 %1431
      %v1433 = vmax.f32 %v1309, %v1311
      %1434 = vmax.xlane.f32.xlu0 %v1433
      %v1435 = vpop.xlane.xlu0 %1434
      %v1436 = vmax.f32 %v1315, %v1317
      %1437 = vmax.xlane.f32.xlu0 %v1436
      %v1438 = vpop.xlane.xlu0 %1437
      %v1439 = vmax.f32 %v1321, %v1323
      %1440 = vmax.xlane.f32.xlu0 %v1439
      %v1441 = vpop.xlane.xlu0 %1440
      %v1442 = vmax.f32 %v1327, %v1329
      %1443 = vmax.xlane.f32.xlu0 %v1442
      %v1444 = vpop.xlane.xlu0 %1443
      %v1445 = vmax.f32 %v1333, %v1335
      %1446 = vmax.xlane.f32.xlu0 %v1445
      %v1447 = vpop.xlane.xlu0 %1446
      %v1448 = vmax.f32 %v1339, %v1341
      %1449 = vmax.xlane.f32.xlu0 %v1448
      %v1450 = vpop.xlane.xlu0 %1449
      %v1451 = vmax.f32 %v1345, %v1347
      %1452 = vmax.xlane.f32.xlu0 %v1451
      %v1453 = vpop.xlane.xlu0 %1452
      %v1454 = vmax.f32 %v1351, %v1353
      %1455 = vmax.xlane.f32.xlu0 %v1454
      %v1456 = vpop.xlane.xlu0 %1455
      %v1457 = vmax.f32 %v1357, %v1359
      %1458 = vmax.xlane.f32.xlu0 %v1457
      %v1459 = vpop.xlane.xlu0 %1458
      %v1460 = vmax.f32 %v1363, %v1365
      %1461 = vmax.xlane.f32.xlu0 %v1460
      %v1462 = vpop.xlane.xlu0 %1461
      %v1463 = vsub.f32 %v1177, %v1369
      %v1464 = vsub.f32 %v1179, %v1369
      %v1465 = vsub.f32 %v1183, %v1372
      %v1466 = vsub.f32 %v1185, %v1372
      %v1467 = vsub.f32 %v1189, %v1375
      %v1468 = vsub.f32 %v1191, %v1375
      %v1469 = vsub.f32 %v1195, %v1378
      %v1470 = vsub.f32 %v1197, %v1378
      %v1471 = vsub.f32 %v1201, %v1381
      %v1472 = vsub.f32 %v1203, %v1381
      %v1473 = vsub.f32 %v1207, %v1384
      %v1474 = vsub.f32 %v1209, %v1384
      %v1475 = vsub.f32 %v1213, %v1387
      %v1476 = vsub.f32 %v1215, %v1387
      %v1477 = vsub.f32 %v1219, %v1390
      %v1478 = vsub.f32 %v1221, %v1390
      %v1479 = vsub.f32 %v1225, %v1393
      %v1480 = vsub.f32 %v1227, %v1393
      %v1481 = vsub.f32 %v1231, %v1396
      %v1482 = vsub.f32 %v1233, %v1396
      %v1483 = vsub.f32 %v1237, %v1399
      %v1484 = vsub.f32 %v1239, %v1399
      %v1485 = vsub.f32 %v1243, %v1402
      %v1486 = vsub.f32 %v1245, %v1402
      %v1487 = vsub.f32 %v1249, %v1405
      %v1488 = vsub.f32 %v1251, %v1405
      %v1489 = vsub.f32 %v1255, %v1408
      %v1490 = vsub.f32 %v1257, %v1408
      %v1491 = vsub.f32 %v1261, %v1411
      %v1492 = vsub.f32 %v1263, %v1411
      %v1493 = vsub.f32 %v1267, %v1414
      %v1494 = vsub.f32 %v1269, %v1414
      %v1495 = vsub.f32 %v1273, %v1417
      %v1496 = vsub.f32 %v1275, %v1417
      %v1497 = vsub.f32 %v1279, %v1420
      %v1498 = vsub.f32 %v1281, %v1420
      %v1499 = vsub.f32 %v1285, %v1423
      %v1500 = vsub.f32 %v1287, %v1423
      %v1501 = vsub.f32 %v1291, %v1426
      %v1502 = vsub.f32 %v1293, %v1426
      %v1503 = vsub.f32 %v1297, %v1429
      %v1504 = vsub.f32 %v1299, %v1429
      %v1505 = vsub.f32 %v1303, %v1432
      %v1506 = vsub.f32 %v1305, %v1432
      %v1507 = vsub.f32 %v1309, %v1435
      %v1508 = vsub.f32 %v1311, %v1435
      %v1509 = vsub.f32 %v1315, %v1438
      %v1510 = vsub.f32 %v1317, %v1438
      %v1511 = vsub.f32 %v1321, %v1441
      %v1512 = vsub.f32 %v1323, %v1441
      %v1513 = vsub.f32 %v1327, %v1444
      %v1514 = vsub.f32 %v1329, %v1444
      %v1515 = vsub.f32 %v1333, %v1447
      %v1516 = vsub.f32 %v1335, %v1447
      %v1517 = vsub.f32 %v1339, %v1450
      %v1518 = vsub.f32 %v1341, %v1450
      %v1519 = vsub.f32 %v1345, %v1453
      %v1520 = vsub.f32 %v1347, %v1453
      %v1521 = vsub.f32 %v1351, %v1456
      %v1522 = vsub.f32 %v1353, %v1456
      %v1523 = vsub.f32 %v1357, %v1459
      %v1524 = vsub.f32 %v1359, %v1459
      %v1525 = vsub.f32 %v1363, %v1462
      %v1526 = vsub.f32 %v1365, %v1462
      %v1527 = vmul.f32 %v1463, 1.442695
      %v1528 = vpow.pop %v1527
      %v1529 = vmul.f32 %v1464, 1.442695
      %v1530 = vpow.pop %v1529
      %v1531 = vmul.f32 %v1465, 1.442695
      %v1532 = vpow.pop %v1531
      %v1533 = vmul.f32 %v1466, 1.442695
      %v1534 = vpow.pop %v1533
      %v1535 = vmul.f32 %v1467, 1.442695
      %v1536 = vpow.pop %v1535
      %v1537 = vmul.f32 %v1468, 1.442695
      %v1538 = vpow.pop %v1537
      %v1539 = vmul.f32 %v1469, 1.442695
      %v1540 = vpow.pop %v1539
      %v1541 = vmul.f32 %v1470, 1.442695
      %v1542 = vpow.pop %v1541
      %v1543 = vmul.f32 %v1471, 1.442695
      %v1544 = vpow.pop %v1543
      %v1545 = vmul.f32 %v1472, 1.442695
      %v1546 = vpow.pop %v1545
      %v1547 = vmul.f32 %v1473, 1.442695
      %v1548 = vpow.pop %v1547
      %v1549 = vmul.f32 %v1474, 1.442695
      %v1550 = vpow.pop %v1549
      %v1551 = vmul.f32 %v1475, 1.442695
      %v1552 = vpow.pop %v1551
      %v1553 = vmul.f32 %v1476, 1.442695
      %v1554 = vpow.pop %v1553
      %v1555 = vmul.f32 %v1477, 1.442695
      %v1556 = vpow.pop %v1555
      %v1557 = vmul.f32 %v1478, 1.442695
      %v1558 = vpow.pop %v1557
      %v1559 = vmul.f32 %v1479, 1.442695
      %v1560 = vpow.pop %v1559
      %v1561 = vmul.f32 %v1480, 1.442695
      %v1562 = vpow.pop %v1561
      %v1563 = vmul.f32 %v1481, 1.442695
      %v1564 = vpow.pop %v1563
      %v1565 = vmul.f32 %v1482, 1.442695
      %v1566 = vpow.pop %v1565
      %v1567 = vmul.f32 %v1483, 1.442695
      %v1568 = vpow.pop %v1567
      %v1569 = vmul.f32 %v1484, 1.442695
      %v1570 = vpow.pop %v1569
      %v1571 = vmul.f32 %v1485, 1.442695
      %v1572 = vpow.pop %v1571
      %v1573 = vmul.f32 %v1486, 1.442695
      %v1574 = vpow.pop %v1573
      %v1575 = vmul.f32 %v1487, 1.442695
      %v1576 = vpow.pop %v1575
      %v1577 = vmul.f32 %v1488, 1.442695
      %v1578 = vpow.pop %v1577
      %v1579 = vmul.f32 %v1489, 1.442695
      %v1580 = vpow.pop %v1579
      %v1581 = vmul.f32 %v1490, 1.442695
      %v1582 = vpow.pop %v1581
      %v1583 = vmul.f32 %v1491, 1.442695
      %v1584 = vpow.pop %v1583
      %v1585 = vmul.f32 %v1492, 1.442695
      %v1586 = vpow.pop %v1585
      %v1587 = vmul.f32 %v1493, 1.442695
      %v1588 = vpow.pop %v1587
      %v1589 = vmul.f32 %v1494, 1.442695
      %v1590 = vpow.pop %v1589
      %v1591 = vmul.f32 %v1495, 1.442695
      %v1592 = vpow.pop %v1591
      %v1593 = vmul.f32 %v1496, 1.442695
      %v1594 = vpow.pop %v1593
      %v1595 = vmul.f32 %v1497, 1.442695
      %v1596 = vpow.pop %v1595
      %v1597 = vmul.f32 %v1498, 1.442695
      %v1598 = vpow.pop %v1597
      %v1599 = vmul.f32 %v1499, 1.442695
      %v1600 = vpow.pop %v1599
      %v1601 = vmul.f32 %v1500, 1.442695
      %v1602 = vpow.pop %v1601
      %v1603 = vmul.f32 %v1501, 1.442695
      %v1604 = vpow.pop %v1603
      %v1605 = vmul.f32 %v1502, 1.442695
      %v1606 = vpow.pop %v1605
      %v1607 = vmul.f32 %v1503, 1.442695
      %v1608 = vpow.pop %v1607
      %v1609 = vmul.f32 %v1504, 1.442695
      %v1610 = vpow.pop %v1609
      %v1611 = vmul.f32 %v1505, 1.442695
      %v1612 = vpow.pop %v1611
      %v1613 = vmul.f32 %v1506, 1.442695
      %v1614 = vpow.pop %v1613
      %v1615 = vmul.f32 %v1507, 1.442695
      %v1616 = vpow.pop %v1615
      %v1617 = vmul.f32 %v1508, 1.442695
      %v1618 = vpow.pop %v1617
      %v1619 = vmul.f32 %v1509, 1.442695
      %v1620 = vpow.pop %v1619
      %v1621 = vmul.f32 %v1510, 1.442695
      %v1622 = vpow.pop %v1621
      %v1623 = vmul.f32 %v1511, 1.442695
      %v1624 = vpow.pop %v1623
      %v1625 = vmul.f32 %v1512, 1.442695
      %v1626 = vpow.pop %v1625
      %v1627 = vmul.f32 %v1513, 1.442695
      %v1628 = vpow.pop %v1627
      %v1629 = vmul.f32 %v1514, 1.442695
      %v1630 = vpow.pop %v1629
      %v1631 = vmul.f32 %v1515, 1.442695
      %v1632 = vpow.pop %v1631
      %v1633 = vmul.f32 %v1516, 1.442695
      %v1634 = vpow.pop %v1633
      %v1635 = vmul.f32 %v1517, 1.442695
      %v1636 = vpow.pop %v1635
      %v1637 = vmul.f32 %v1518, 1.442695
      %v1638 = vpow.pop %v1637
      %v1639 = vmul.f32 %v1519, 1.442695
      %v1640 = vpow.pop %v1639
      %v1641 = vmul.f32 %v1520, 1.442695
      %v1642 = vpow.pop %v1641
      %v1643 = vmul.f32 %v1521, 1.442695
      %v1644 = vpow.pop %v1643
      %v1645 = vmul.f32 %v1522, 1.442695
      %v1646 = vpow.pop %v1645
      %v1647 = vmul.f32 %v1523, 1.442695
      %v1648 = vpow.pop %v1647
      %v1649 = vmul.f32 %v1524, 1.442695
      %v1650 = vpow.pop %v1649
      %v1651 = vmul.f32 %v1525, 1.442695
      %v1652 = vpow.pop %v1651
      %v1653 = vmul.f32 %v1526, 1.442695
      %v1654 = vpow.pop %v1653
      %v1655 = vadd.f32 %v1528, %v1530
      %1656 = vadd.xlane.f32.xlu0 %v1655
      %v1657 = vpop.xlane.xlu0 %1656
      %v1658 = vadd.f32 %v1532, %v1534
      %1659 = vadd.xlane.f32.xlu0 %v1658
      %v1660 = vpop.xlane.xlu0 %1659
      %v1661 = vadd.f32 %v1536, %v1538
      %1662 = vadd.xlane.f32.xlu0 %v1661
      %v1663 = vpop.xlane.xlu0 %1662
      %v1664 = vadd.f32 %v1540, %v1542
      %1665 = vadd.xlane.f32.xlu0 %v1664
      %v1666 = vpop.xlane.xlu0 %1665
      %v1667 = vadd.f32 %v1544, %v1546
      %1668 = vadd.xlane.f32.xlu0 %v1667
      %v1669 = vpop.xlane.xlu0 %1668
      %v1670 = vadd.f32 %v1548, %v1550
      %1671 = vadd.xlane.f32.xlu0 %v1670
      %v1672 = vpop.xlane.xlu0 %1671
      %v1673 = vadd.f32 %v1552, %v1554
      %1674 = vadd.xlane.f32.xlu0 %v1673
      %v1675 = vpop.xlane.xlu0 %1674
      %v1676 = vadd.f32 %v1556, %v1558
      %1677 = vadd.xlane.f32.xlu0 %v1676
      %v1678 = vpop.xlane.xlu0 %1677
      %v1679 = vadd.f32 %v1560, %v1562
      %1680 = vadd.xlane.f32.xlu0 %v1679
      %v1681 = vpop.xlane.xlu0 %1680
      %v1682 = vadd.f32 %v1564, %v1566
      %1683 = vadd.xlane.f32.xlu0 %v1682
      %v1684 = vpop.xlane.xlu0 %1683
      %v1685 = vadd.f32 %v1568, %v1570
      %1686 = vadd.xlane.f32.xlu0 %v1685
      %v1687 = vpop.xlane.xlu0 %1686
      %v1688 = vadd.f32 %v1572, %v1574
      %1689 = vadd.xlane.f32.xlu0 %v1688
      %v1690 = vpop.xlane.xlu0 %1689
      %v1691 = vadd.f32 %v1576, %v1578
      %1692 = vadd.xlane.f32.xlu0 %v1691
      %v1693 = vpop.xlane.xlu0 %1692
      %v1694 = vadd.f32 %v1580, %v1582
      %1695 = vadd.xlane.f32.xlu0 %v1694
      %v1696 = vpop.xlane.xlu0 %1695
      %v1697 = vadd.f32 %v1584, %v1586
      %1698 = vadd.xlane.f32.xlu0 %v1697
      %v1699 = vpop.xlane.xlu0 %1698
      %v1700 = vadd.f32 %v1588, %v1590
      %1701 = vadd.xlane.f32.xlu0 %v1700
      %v1702 = vpop.xlane.xlu0 %1701
      %v1703 = vadd.f32 %v1592, %v1594
      %1704 = vadd.xlane.f32.xlu0 %v1703
      %v1705 = vpop.xlane.xlu0 %1704
      %v1706 = vadd.f32 %v1596, %v1598
      %1707 = vadd.xlane.f32.xlu0 %v1706
      %v1708 = vpop.xlane.xlu0 %1707
      %v1709 = vadd.f32 %v1600, %v1602
      %1710 = vadd.xlane.f32.xlu0 %v1709
      %v1711 = vpop.xlane.xlu0 %1710
      %v1712 = vadd.f32 %v1604, %v1606
      %1713 = vadd.xlane.f32.xlu0 %v1712
      %v1714 = vpop.xlane.xlu0 %1713
      %v1715 = vadd.f32 %v1608, %v1610
      %1716 = vadd.xlane.f32.xlu0 %v1715
      %v1717 = vpop.xlane.xlu0 %1716
      %v1718 = vadd.f32 %v1612, %v1614
      %1719 = vadd.xlane.f32.xlu0 %v1718
      %v1720 = vpop.xlane.xlu0 %1719
      %v1721 = vadd.f32 %v1616, %v1618
      %1722 = vadd.xlane.f32.xlu0 %v1721
      %v1723 = vpop.xlane.xlu0 %1722
      %v1724 = vadd.f32 %v1620, %v1622
      %1725 = vadd.xlane.f32.xlu0 %v1724
      %v1726 = vpop.xlane.xlu0 %1725
      %v1727 = vadd.f32 %v1624, %v1626
      %1728 = vadd.xlane.f32.xlu0 %v1727
      %v1729 = vpop.xlane.xlu0 %1728
      %v1730 = vadd.f32 %v1628, %v1630
      %1731 = vadd.xlane.f32.xlu0 %v1730
      %v1732 = vpop.xlane.xlu0 %1731
      %v1733 = vadd.f32 %v1632, %v1634
      %1734 = vadd.xlane.f32.xlu0 %v1733
      %v1735 = vpop.xlane.xlu0 %1734
      %v1736 = vadd.f32 %v1636, %v1638
      %1737 = vadd.xlane.f32.xlu0 %v1736
      %v1738 = vpop.xlane.xlu0 %1737
      %v1739 = vadd.f32 %v1640, %v1642
      %1740 = vadd.xlane.f32.xlu0 %v1739
      %v1741 = vpop.xlane.xlu0 %1740
      %v1742 = vadd.f32 %v1644, %v1646
      %1743 = vadd.xlane.f32.xlu0 %v1742
      %v1744 = vpop.xlane.xlu0 %1743
      %v1745 = vadd.f32 %v1648, %v1650
      %1746 = vadd.xlane.f32.xlu0 %v1745
      %v1747 = vpop.xlane.xlu0 %1746
      %v1748 = vadd.f32 %v1652, %v1654
      %1749 = vadd.xlane.f32.xlu0 %v1748
      %v1750 = vpop.xlane.xlu0 %1749
      %v1751 = vrcp.pop %v1657
      %v1752 = vrcp.pop %v1660
      %v1753 = vrcp.pop %v1663
      %v1754 = vrcp.pop %v1666
      %v1755 = vrcp.pop %v1669
      %v1756 = vrcp.pop %v1672
      %v1757 = vrcp.pop %v1675
      %v1758 = vrcp.pop %v1678
      %v1759 = vrcp.pop %v1681
      %v1760 = vrcp.pop %v1684
      %v1761 = vrcp.pop %v1687
      %v1762 = vrcp.pop %v1690
      %v1763 = vrcp.pop %v1693
      %v1764 = vrcp.pop %v1696
      %v1765 = vrcp.pop %v1699
      %v1766 = vrcp.pop %v1702
      %v1767 = vrcp.pop %v1705
      %v1768 = vrcp.pop %v1708
      %v1769 = vrcp.pop %v1711
      %v1770 = vrcp.pop %v1714
      %v1771 = vrcp.pop %v1717
      %v1772 = vrcp.pop %v1720
      %v1773 = vrcp.pop %v1723
      %v1774 = vrcp.pop %v1726
      %v1775 = vrcp.pop %v1729
      %v1776 = vrcp.pop %v1732
      %v1777 = vrcp.pop %v1735
      %v1778 = vrcp.pop %v1738
      %v1779 = vrcp.pop %v1741
      %v1780 = vrcp.pop %v1744
      %v1781 = vrcp.pop %v1747
      %v1782 = vrcp.pop %v1750
      %v1783 = vmul.f32 %v1528, %v1751
      %v1784 = vmul.f32 %v1530, %v1751
      %v1785 = vmul.f32 %v1532, %v1752
      %v1786 = vmul.f32 %v1534, %v1752
      %v1787 = vmul.f32 %v1536, %v1753
      %v1788 = vmul.f32 %v1538, %v1753
      %v1789 = vmul.f32 %v1540, %v1754
      %v1790 = vmul.f32 %v1542, %v1754
      %v1791 = vmul.f32 %v1544, %v1755
      %v1792 = vmul.f32 %v1546, %v1755
      %v1793 = vmul.f32 %v1548, %v1756
      %v1794 = vmul.f32 %v1550, %v1756
      %v1795 = vmul.f32 %v1552, %v1757
      %v1796 = vmul.f32 %v1554, %v1757
      %v1797 = vmul.f32 %v1556, %v1758
      %v1798 = vmul.f32 %v1558, %v1758
      %v1799 = vmul.f32 %v1560, %v1759
      %v1800 = vmul.f32 %v1562, %v1759
      %v1801 = vmul.f32 %v1564, %v1760
      %v1802 = vmul.f32 %v1566, %v1760
      %v1803 = vmul.f32 %v1568, %v1761
      %v1804 = vmul.f32 %v1570, %v1761
      %v1805 = vmul.f32 %v1572, %v1762
      %v1806 = vmul.f32 %v1574, %v1762
      %v1807 = vmul.f32 %v1576, %v1763
      %v1808 = vmul.f32 %v1578, %v1763
      %v1809 = vmul.f32 %v1580, %v1764
      %v1810 = vmul.f32 %v1582, %v1764
      %v1811 = vmul.f32 %v1584, %v1765
      %v1812 = vmul.f32 %v1586, %v1765
      %v1813 = vmul.f32 %v1588, %v1766
      %v1814 = vmul.f32 %v1590, %v1766
      %v1815 = vmul.f32 %v1592, %v1767
      %v1816 = vmul.f32 %v1594, %v1767
      %v1817 = vmul.f32 %v1596, %v1768
      %v1818 = vmul.f32 %v1598, %v1768
      %v1819 = vmul.f32 %v1600, %v1769
      %v1820 = vmul.f32 %v1602, %v1769
      %v1821 = vmul.f32 %v1604, %v1770
      %v1822 = vmul.f32 %v1606, %v1770
      %v1823 = vmul.f32 %v1608, %v1771
      %v1824 = vmul.f32 %v1610, %v1771
      %v1825 = vmul.f32 %v1612, %v1772
      %v1826 = vmul.f32 %v1614, %v1772
      %v1827 = vmul.f32 %v1616, %v1773
      %v1828 = vmul.f32 %v1618, %v1773
      %v1829 = vmul.f32 %v1620, %v1774
      %v1830 = vmul.f32 %v1622, %v1774
      %v1831 = vmul.f32 %v1624, %v1775
      %v1832 = vmul.f32 %v1626, %v1775
      %v1833 = vmul.f32 %v1628, %v1776
      %v1834 = vmul.f32 %v1630, %v1776
      %v1835 = vmul.f32 %v1632, %v1777
      %v1836 = vmul.f32 %v1634, %v1777
      %v1837 = vmul.f32 %v1636, %v1778
      %v1838 = vmul.f32 %v1638, %v1778
      %v1839 = vmul.f32 %v1640, %v1779
      %v1840 = vmul.f32 %v1642, %v1779
      %v1841 = vmul.f32 %v1644, %v1780
      %v1842 = vmul.f32 %v1646, %v1780
      %v1843 = vmul.f32 %v1648, %v1781
      %v1844 = vmul.f32 %v1650, %v1781
      %v1845 = vmul.f32 %v1652, %v1782
      %v1846 = vmul.f32 %v1654, %v1782
      %1847 = vmatprep.subr.mxu0 %v1814
      %1848 = vmatpush1.xpose.msra.mxu0 %v1813
      %1849 = vmatprep.subr.mxu0 %v1812
      %1850 = vmatpush1.xpose.msra.mxu0 %v1811
      %1851 = vmatprep.subr.mxu0 %v1810
      %1852 = vmatpush1.xpose.msra.mxu0 %v1809
      %1853 = vmatprep.subr.mxu0 %v1808
      %1854 = vmatpush1.xpose.msra.mxu0 %v1807
      %1855 = vmatprep.subr.mxu0 %v1806
      %1856 = vmatpush1.xpose.msra.mxu0 %v1805
      %1857 = vmatprep.subr.mxu0 %v1804
      %1858 = vmatpush1.xpose.msra.mxu0 %v1803
      %1859 = vmatprep.subr.mxu0 %v1802
      %1860 = vmatpush1.xpose.msra.mxu0 %v1801
      %1861 = vmatprep.subr.mxu0 %v1800
      %1862 = vmatpush1.xpose.msra.mxu0 %v1799
      %1863 = vmatprep.subr.mxu0 %v1798
      %1864 = vmatpush1.xpose.msra.mxu0 %v1797
      %1865 = vmatprep.subr.mxu0 %v1796
      %1866 = vmatpush1.xpose.msra.mxu0 %v1795
      %1867 = vmatprep.subr.mxu0 %v1794
      %1868 = vmatpush1.xpose.msra.mxu0 %v1793
      %1869 = vmatprep.subr.mxu0 %v1792
      %1870 = vmatpush1.xpose.msra.mxu0 %v1791
      %1871 = vmatprep.subr.mxu0 %v1790
      %1872 = vmatpush1.xpose.msra.mxu0 %v1789
      %1873 = vmatprep.subr.mxu0 %v1788
      %1874 = vmatpush1.xpose.msra.mxu0 %v1787
      %1875 = vmatprep.subr.mxu0 %v1786
      %1876 = vmatpush1.xpose.msra.mxu0 %v1785
      %1877 = vmatprep.subr.mxu0 %v1784
      %1878 = vmatpush1.xpose.msra.mxu0 %v1783
      %1879 = vmatprep.subr.mxu0 %v1846
      %1880 = vmatpush2.xpose.msra.mxu0 %v1845
      %1881 = vmatprep.subr.mxu0 %v1844
      %1882 = vmatpush2.xpose.msra.mxu0 %v1843
      %1883 = vmatprep.subr.mxu0 %v1842
      %1884 = vmatpush2.xpose.msra.mxu0 %v1841
      %1885 = vmatprep.subr.mxu0 %v1840
      %1886 = vmatpush2.xpose.msra.mxu0 %v1839
      %1887 = vmatprep.subr.mxu0 %v1838
      %1888 = vmatpush2.xpose.msra.mxu0 %v1837
      %1889 = vmatprep.subr.mxu0 %v1836
      %1890 = vmatpush2.xpose.msra.mxu0 %v1835
      %1891 = vmatprep.subr.mxu0 %v1834
      %1892 = vmatpush2.xpose.msra.mxu0 %v1833
      %1893 = vmatprep.subr.mxu0 %v1832
      %1894 = vmatpush2.xpose.msra.mxu0 %v1831
      %1895 = vmatprep.subr.mxu0 %v1830
      %1896 = vmatpush2.xpose.msra.mxu0 %v1829
      %1897 = vmatprep.subr.mxu0 %v1828
      %1898 = vmatpush2.xpose.msra.mxu0 %v1827
      %1899 = vmatprep.subr.mxu0 %v1826
      %1900 = vmatpush2.xpose.msra.mxu0 %v1825
      %1901 = vmatprep.subr.mxu0 %v1824
      %1902 = vmatpush2.xpose.msra.mxu0 %v1823
      %1903 = vmatprep.subr.mxu0 %v1822
      %1904 = vmatpush2.xpose.msra.mxu0 %v1821
      %1905 = vmatprep.subr.mxu0 %v1820
      %1906 = vmatpush2.xpose.msra.mxu0 %v1819
      %1907 = vmatprep.subr.mxu0 %v1818
      %1908 = vmatpush2.xpose.msra.mxu0 %v1817
      %1909 = vmatprep.subr.mxu0 %v1816
      %1910 = vmatpush2.xpose.msra.mxu0 %v1815
      %1911 = vmatprep.mubr.f32.mxu0 %v929
      %1912 = vmatmul.mubr.f32.gmra.mxu0 %v927
      %v1913 = vpop.f32.mrf.mxu0
      %v1914 = vadd.f32 0.0, %v1913
      %v1915 = vpop.f32.mrf.mxu0
      %v1916 = vadd.f32 0.0, %v1915
      %1917 = vdwg.mxu0
      %1918 = vst [vmem:[#allocation2] sm:$0xff] %v1914
      %1919 = vst [vmem:[#allocation2 + $0x8] sm:$0xff] %v1916
      %1920 = vxpose.xlu0.b32.start [1/16] %v885, 128
      %1921 = vxpose.xlu0.b32.cont [2/16] 0.0, 128
      %1922 = vxpose.xlu0.b32.cont [3/16] 0.0, 128
      %1923 = vxpose.xlu0.b32.cont [4/16] 0.0, 128
      %1924 = vxpose.xlu0.b32.cont [5/16] 0.0, 128
      %1925 = vxpose.xlu0.b32.cont [6/16] 0.0, 128
      %1926 = vxpose.xlu0.b32.cont [7/16] 0.0, 128
      %1927 = vxpose.xlu0.b32.cont [8/16] 0.0, 128
      %1928 = vxpose.xlu0.b32.cont [9/16] 0.0, 128
      %1929 = vxpose.xlu0.b32.cont [10/16] 0.0, 128
      %1930 = vxpose.xlu0.b32.cont [11/16] 0.0, 128
      %1931 = vxpose.xlu0.b32.cont [12/16] 0.0, 128
      %1932 = vxpose.xlu0.b32.cont [13/16] 0.0, 128
      %1933 = vxpose.xlu0.b32.cont [14/16] 0.0, 128
      %1934 = vxpose.xlu0.b32.cont [15/16] 0.0, 128
      %1935 = vxpose.xlu0.b32.end [16/16] 0.0, 128
      %v1936 = vpop.trf.xlu0
      %v1937 = vpop.trf.xlu0
      %v1938 = vpop.trf.xlu0
      %v1939 = vpop.trf.xlu0
      %v1940 = vpop.trf.xlu0
      %v1941 = vpop.trf.xlu0
      %v1942 = vpop.trf.xlu0
      %v1943 = vpop.trf.xlu0
      %v1944 = vpop.trf.xlu0
      %v1945 = vpop.trf.xlu0
      %v1946 = vpop.trf.xlu0
      %v1947 = vpop.trf.xlu0
      %v1948 = vpop.trf.xlu0
      %v1949 = vpop.trf.xlu0
      %v1950 = vpop.trf.xlu0
      %v1951 = vpop.trf.xlu0
      %1952 = vxpose.xlu0.b32.start [1/16] %v887, 128
      %1953 = vxpose.xlu0.b32.cont [2/16] 0.0, 128
      %1954 = vxpose.xlu0.b32.cont [3/16] 0.0, 128
      %1955 = vxpose.xlu0.b32.cont [4/16] 0.0, 128
      %1956 = vxpose.xlu0.b32.cont [5/16] 0.0, 128
      %1957 = vxpose.xlu0.b32.cont [6/16] 0.0, 128
      %1958 = vxpose.xlu0.b32.cont [7/16] 0.0, 128
      %1959 = vxpose.xlu0.b32.cont [8/16] 0.0, 128
      %1960 = vxpose.xlu0.b32.cont [9/16] 0.0, 128
      %1961 = vxpose.xlu0.b32.cont [10/16] 0.0, 128
      %1962 = vxpose.xlu0.b32.cont [11/16] 0.0, 128
      %1963 = vxpose.xlu0.b32.cont [12/16] 0.0, 128
      %1964 = vxpose.xlu0.b32.cont [13/16] 0.0, 128
      %1965 = vxpose.xlu0.b32.cont [14/16] 0.0, 128
      %1966 = vxpose.xlu0.b32.cont [15/16] 0.0, 128
      %1967 = vxpose.xlu0.b32.end [16/16] 0.0, 128
      %v1968 = vpop.trf.xlu0
      %v1969 = vpop.trf.xlu0
      %v1970 = vpop.trf.xlu0
      %v1971 = vpop.trf.xlu0
      %v1972 = vpop.trf.xlu0
      %v1973 = vpop.trf.xlu0
      %v1974 = vpop.trf.xlu0
      %v1975 = vpop.trf.xlu0
      %v1976 = vpop.trf.xlu0
      %v1977 = vpop.trf.xlu0
      %v1978 = vpop.trf.xlu0
      %v1979 = vpop.trf.xlu0
      %v1980 = vpop.trf.xlu0
      %v1981 = vpop.trf.xlu0
      %v1982 = vpop.trf.xlu0
      %v1983 = vpop.trf.xlu0
      %v1985 = vsel %vm1013, %v1936, 0
      %v1988 = vsel %vm1013, %v1937, 0
      %v1991 = vsel %vm1013, %v1938, 0
      %v1994 = vsel %vm1013, %v1939, 0
      %v1997 = vsel %vm1013, %v1940, 0
      %v2000 = vsel %vm1013, %v1941, 0
      %v2003 = vsel %vm1013, %v1942, 0
      %v2006 = vsel %vm1013, %v1943, 0
      %v2009 = vsel %vm1013, %v1944, 0
      %v2012 = vsel %vm1013, %v1945, 0
      %v2015 = vsel %vm1013, %v1946, 0
      %v2018 = vsel %vm1013, %v1947, 0
      %v2021 = vsel %vm1013, %v1948, 0
      %v2024 = vsel %vm1013, %v1949, 0
      %v2027 = vsel %vm1013, %v1950, 0
      %v2030 = vsel %vm1013, %v1951, 0
      %v2033 = vsel %vm1013, %v1968, 0
      %v2036 = vsel %vm1013, %v1969, 0
      %v2039 = vsel %vm1013, %v1970, 0
      %v2042 = vsel %vm1013, %v1971, 0
      %v2045 = vsel %vm1013, %v1972, 0
      %v2048 = vsel %vm1013, %v1973, 0
      %v2051 = vsel %vm1013, %v1974, 0
      %v2054 = vsel %vm1013, %v1975, 0
      %v2057 = vsel %vm1013, %v1976, 0
      %v2060 = vsel %vm1013, %v1977, 0
      %v2063 = vsel %vm1013, %v1978, 0
      %v2066 = vsel %vm1013, %v1979, 0
      %v2069 = vsel %vm1013, %v1980, 0
      %v2072 = vsel %vm1013, %v1981, 0
      %v2075 = vsel %vm1013, %v1982, 0
      %v2078 = vsel %vm1013, %v1983, 0
      %2080 = vmatprep.subr.mxu0 0.0
      %2081 = vmatpush1.msra.mxu0 0.0
      %2082 = vmatprep.subr.mxu0 0.0
      %2083 = vmatpush1.msra.mxu0 0.0
      %2084 = vmatprep.subr.mxu0 0.0
      %2085 = vmatpush1.msra.mxu0 0.0
      %2086 = vmatprep.subr.mxu0 0.0
      %2087 = vmatpush1.msra.mxu0 0.0
      %2088 = vmatprep.subr.mxu0 0.0
      %2089 = vmatpush1.msra.mxu0 0.0
      %2090 = vmatprep.subr.mxu0 0.0
      %2091 = vmatpush1.msra.mxu0 0.0
      %2092 = vmatprep.subr.mxu0 0.0
      %2093 = vmatpush1.msra.mxu0 0.0
      %2094 = vmatprep.subr.mxu0 0.0
      %2095 = vmatpush1.msra.mxu0 0.0
      %2096 = vmatprep.subr.mxu0 0.0
      %2097 = vmatpush1.msra.mxu0 0.0
      %2098 = vmatprep.subr.mxu0 0.0
      %2099 = vmatpush1.msra.mxu0 0.0
      %2100 = vmatprep.subr.mxu0 0.0
      %2101 = vmatpush1.msra.mxu0 0.0
      %2102 = vmatprep.subr.mxu0 0.0
      %2103 = vmatpush1.msra.mxu0 0.0
      %2104 = vmatprep.subr.mxu0 0.0
      %2105 = vmatpush1.msra.mxu0 0.0
      %2106 = vmatprep.subr.mxu0 0.0
      %2107 = vmatpush1.msra.mxu0 0.0
      %2108 = vmatprep.subr.mxu0 0.0
      %2109 = vmatpush1.msra.mxu0 0.0
      %2110 = vmatprep.subr.mxu0 %v911
      %2111 = vmatpush1.msra.mxu0 %v909
      %2112 = vmatprep.subr.mxu0 0.0
      %2113 = vmatpush2.msra.mxu0 0.0
      %2114 = vmatprep.subr.mxu0 0.0
      %2115 = vmatpush2.msra.mxu0 0.0
      %2116 = vmatprep.subr.mxu0 0.0
      %2117 = vmatpush2.msra.mxu0 0.0
      %2118 = vmatprep.subr.mxu0 0.0
      %2119 = vmatpush2.msra.mxu0 0.0
      %2120 = vmatprep.subr.mxu0 0.0
      %2121 = vmatpush2.msra.mxu0 0.0
      %2122 = vmatprep.subr.mxu0 0.0
      %2123 = vmatpush2.msra.mxu0 0.0
      %2124 = vmatprep.subr.mxu0 0.0
      %2125 = vmatpush2.msra.mxu0 0.0
      %2126 = vmatprep.subr.mxu0 0.0
      %2127 = vmatpush2.msra.mxu0 0.0
      %2128 = vmatprep.subr.mxu0 0.0
      %2129 = vmatpush2.msra.mxu0 0.0
      %2130 = vmatprep.subr.mxu0 0.0
      %2131 = vmatpush2.msra.mxu0 0.0
      %2132 = vmatprep.subr.mxu0 0.0
      %2133 = vmatpush2.msra.mxu0 0.0
      %2134 = vmatprep.subr.mxu0 0.0
      %2135 = vmatpush2.msra.mxu0 0.0
      %2136 = vmatprep.subr.mxu0 0.0
      %2137 = vmatpush2.msra.mxu0 0.0
      %2138 = vmatprep.subr.mxu0 0.0
      %2139 = vmatpush2.msra.mxu0 0.0
      %2140 = vmatprep.subr.mxu0 0.0
      %2141 = vmatpush2.msra.mxu0 0.0
      %2142 = vmatprep.subr.mxu0 0.0
      %2143 = vmatpush2.msra.mxu0 0.0
      %2144 = vmatprep.mubr.f32.mxu0 0.0
      %2145 = vmatmul.mubr.f32.gmra.mxu0 %v1985
      %v2146 = vpop.f32.mrf.mxu0
      %v2147 = vadd.f32 0.0, %v2146
      %v2148 = vpop.f32.mrf.mxu0
      %v2149 = vadd.f32 0.0, %v2148
      %2150 = vmatprep.mubr.f32.mxu0 0.0
      %2151 = vmatmul.mubr.f32.gmra.mxu0 %v1988
      %v2152 = vpop.f32.mrf.mxu0
      %v2153 = vadd.f32 0.0, %v2152
      %v2154 = vpop.f32.mrf.mxu0
      %v2155 = vadd.f32 0.0, %v2154
      %2156 = vmatprep.mubr.f32.mxu0 0.0
      %2157 = vmatmul.mubr.f32.gmra.mxu0 %v1991
      %v2158 = vpop.f32.mrf.mxu0
      %v2159 = vadd.f32 0.0, %v2158
      %v2160 = vpop.f32.mrf.mxu0
      %v2161 = vadd.f32 0.0, %v2160
      %2162 = vmatprep.mubr.f32.mxu0 0.0
      %2163 = vmatmul.mubr.f32.gmra.mxu0 %v1994
      %v2164 = vpop.f32.mrf.mxu0
      %v2165 = vadd.f32 0.0, %v2164
      %v2166 = vpop.f32.mrf.mxu0
      %v2167 = vadd.f32 0.0, %v2166
      %2168 = vmatprep.mubr.f32.mxu0 0.0
      %2169 = vmatmul.mubr.f32.gmra.mxu0 %v1997
      %v2170 = vpop.f32.mrf.mxu0
      %v2171 = vadd.f32 0.0, %v2170
      %v2172 = vpop.f32.mrf.mxu0
      %v2173 = vadd.f32 0.0, %v2172
      %2174 = vmatprep.mubr.f32.mxu0 0.0
      %2175 = vmatmul.mubr.f32.gmra.mxu0 %v2000
      %v2176 = vpop.f32.mrf.mxu0
      %v2177 = vadd.f32 0.0, %v2176
      %v2178 = vpop.f32.mrf.mxu0
      %v2179 = vadd.f32 0.0, %v2178
      %2180 = vmatprep.mubr.f32.mxu0 0.0
      %2181 = vmatmul.mubr.f32.gmra.mxu0 %v2003
      %v2182 = vpop.f32.mrf.mxu0
      %v2183 = vadd.f32 0.0, %v2182
      %v2184 = vpop.f32.mrf.mxu0
      %v2185 = vadd.f32 0.0, %v2184
      %2186 = vmatprep.mubr.f32.mxu0 0.0
      %2187 = vmatmul.mubr.f32.gmra.mxu0 %v2006
      %v2188 = vpop.f32.mrf.mxu0
      %v2189 = vadd.f32 0.0, %v2188
      %v2190 = vpop.f32.mrf.mxu0
      %v2191 = vadd.f32 0.0, %v2190
      %2192 = vmatprep.mubr.f32.mxu0 0.0
      %2193 = vmatmul.mubr.f32.gmra.mxu0 %v2009
      %v2194 = vpop.f32.mrf.mxu0
      %v2195 = vadd.f32 0.0, %v2194
      %v2196 = vpop.f32.mrf.mxu0
      %v2197 = vadd.f32 0.0, %v2196
      %2198 = vmatprep.mubr.f32.mxu0 0.0
      %2199 = vmatmul.mubr.f32.gmra.mxu0 %v2012
      %v2200 = vpop.f32.mrf.mxu0
      %v2201 = vadd.f32 0.0, %v2200
      %v2202 = vpop.f32.mrf.mxu0
      %v2203 = vadd.f32 0.0, %v2202
      %2204 = vmatprep.mubr.f32.mxu0 0.0
      %2205 = vmatmul.mubr.f32.gmra.mxu0 %v2015
      %v2206 = vpop.f32.mrf.mxu0
      %v2207 = vadd.f32 0.0, %v2206
      %v2208 = vpop.f32.mrf.mxu0
      %v2209 = vadd.f32 0.0, %v2208
      %2210 = vmatprep.mubr.f32.mxu0 0.0
      %2211 = vmatmul.mubr.f32.gmra.mxu0 %v2018
      %v2212 = vpop.f32.mrf.mxu0
      %v2213 = vadd.f32 0.0, %v2212
      %v2214 = vpop.f32.mrf.mxu0
      %v2215 = vadd.f32 0.0, %v2214
      %2216 = vmatprep.mubr.f32.mxu0 0.0
      %2217 = vmatmul.mubr.f32.gmra.mxu0 %v2021
      %v2218 = vpop.f32.mrf.mxu0
      %v2219 = vadd.f32 0.0, %v2218
      %v2220 = vpop.f32.mrf.mxu0
      %v2221 = vadd.f32 0.0, %v2220
      %2222 = vmatprep.mubr.f32.mxu0 0.0
      %2223 = vmatmul.mubr.f32.gmra.mxu0 %v2024
      %v2224 = vpop.f32.mrf.mxu0
      %v2225 = vadd.f32 0.0, %v2224
      %v2226 = vpop.f32.mrf.mxu0
      %v2227 = vadd.f32 0.0, %v2226
      %2228 = vmatprep.mubr.f32.mxu0 0.0
      %2229 = vmatmul.mubr.f32.gmra.mxu0 %v2027
      %v2230 = vpop.f32.mrf.mxu0
      %v2231 = vadd.f32 0.0, %v2230
      %v2232 = vpop.f32.mrf.mxu0
      %v2233 = vadd.f32 0.0, %v2232
      %2234 = vmatprep.mubr.f32.mxu0 0.0
      %2235 = vmatmul.mubr.f32.gmra.mxu0 %v2030
      %v2236 = vpop.f32.mrf.mxu0
      %v2237 = vadd.f32 0.0, %v2236
      %v2238 = vpop.f32.mrf.mxu0
      %v2239 = vadd.f32 0.0, %v2238
      %2240 = vmatprep.mubr.f32.mxu0 0.0
      %2241 = vmatmul.mubr.f32.gmra.mxu0 %v2033
      %v2242 = vpop.f32.mrf.mxu0
      %v2243 = vadd.f32 0.0, %v2242
      %v2244 = vpop.f32.mrf.mxu0
      %v2245 = vadd.f32 0.0, %v2244
      %2246 = vmatprep.mubr.f32.mxu0 0.0
      %2247 = vmatmul.mubr.f32.gmra.mxu0 %v2036
      %v2248 = vpop.f32.mrf.mxu0
      %v2249 = vadd.f32 0.0, %v2248
      %v2250 = vpop.f32.mrf.mxu0
      %v2251 = vadd.f32 0.0, %v2250
      %2252 = vmatprep.mubr.f32.mxu0 0.0
      %2253 = vmatmul.mubr.f32.gmra.mxu0 %v2039
      %v2254 = vpop.f32.mrf.mxu0
      %v2255 = vadd.f32 0.0, %v2254
      %v2256 = vpop.f32.mrf.mxu0
      %v2257 = vadd.f32 0.0, %v2256
      %2258 = vmatprep.mubr.f32.mxu0 0.0
      %2259 = vmatmul.mubr.f32.gmra.mxu0 %v2042
      %v2260 = vpop.f32.mrf.mxu0
      %v2261 = vadd.f32 0.0, %v2260
      %v2262 = vpop.f32.mrf.mxu0
      %v2263 = vadd.f32 0.0, %v2262
      %2264 = vmatprep.mubr.f32.mxu0 0.0
      %2265 = vmatmul.mubr.f32.gmra.mxu0 %v2045
      %v2266 = vpop.f32.mrf.mxu0
      %v2267 = vadd.f32 0.0, %v2266
      %v2268 = vpop.f32.mrf.mxu0
      %v2269 = vadd.f32 0.0, %v2268
      %2270 = vmatprep.mubr.f32.mxu0 0.0
      %2271 = vmatmul.mubr.f32.gmra.mxu0 %v2048
      %v2272 = vpop.f32.mrf.mxu0
      %v2273 = vadd.f32 0.0, %v2272
      %v2274 = vpop.f32.mrf.mxu0
      %v2275 = vadd.f32 0.0, %v2274
      %2276 = vmatprep.mubr.f32.mxu0 0.0
      %2277 = vmatmul.mubr.f32.gmra.mxu0 %v2051
      %v2278 = vpop.f32.mrf.mxu0
      %v2279 = vadd.f32 0.0, %v2278
      %v2280 = vpop.f32.mrf.mxu0
      %v2281 = vadd.f32 0.0, %v2280
      %2282 = vmatprep.mubr.f32.mxu0 0.0
      %2283 = vmatmul.mubr.f32.gmra.mxu0 %v2054
      %v2284 = vpop.f32.mrf.mxu0
      %v2285 = vadd.f32 0.0, %v2284
      %v2286 = vpop.f32.mrf.mxu0
      %v2287 = vadd.f32 0.0, %v2286
      %2288 = vmatprep.mubr.f32.mxu0 0.0
      %2289 = vmatmul.mubr.f32.gmra.mxu0 %v2057
      %v2290 = vpop.f32.mrf.mxu0
      %v2291 = vadd.f32 0.0, %v2290
      %v2292 = vpop.f32.mrf.mxu0
      %v2293 = vadd.f32 0.0, %v2292
      %2294 = vmatprep.mubr.f32.mxu0 0.0
      %2295 = vmatmul.mubr.f32.gmra.mxu0 %v2060
      %v2296 = vpop.f32.mrf.mxu0
      %v2297 = vadd.f32 0.0, %v2296
      %v2298 = vpop.f32.mrf.mxu0
      %v2299 = vadd.f32 0.0, %v2298
      %2300 = vmatprep.mubr.f32.mxu0 0.0
      %2301 = vmatmul.mubr.f32.gmra.mxu0 %v2063
      %v2302 = vpop.f32.mrf.mxu0
      %v2303 = vadd.f32 0.0, %v2302
      %v2304 = vpop.f32.mrf.mxu0
      %v2305 = vadd.f32 0.0, %v2304
      %2306 = vmatprep.mubr.f32.mxu0 0.0
      %2307 = vmatmul.mubr.f32.gmra.mxu0 %v2066
      %v2308 = vpop.f32.mrf.mxu0
      %v2309 = vadd.f32 0.0, %v2308
      %v2310 = vpop.f32.mrf.mxu0
      %v2311 = vadd.f32 0.0, %v2310
      %2312 = vmatprep.mubr.f32.mxu0 0.0
      %2313 = vmatmul.mubr.f32.gmra.mxu0 %v2069
      %v2314 = vpop.f32.mrf.mxu0
      %v2315 = vadd.f32 0.0, %v2314
      %v2316 = vpop.f32.mrf.mxu0
      %v2317 = vadd.f32 0.0, %v2316
      %2318 = vmatprep.mubr.f32.mxu0 0.0
      %2319 = vmatmul.mubr.f32.gmra.mxu0 %v2072
      %v2320 = vpop.f32.mrf.mxu0
      %v2321 = vadd.f32 0.0, %v2320
      %v2322 = vpop.f32.mrf.mxu0
      %v2323 = vadd.f32 0.0, %v2322
      %2324 = vmatprep.mubr.f32.mxu0 0.0
      %2325 = vmatmul.mubr.f32.gmra.mxu0 %v2075
      %v2326 = vpop.f32.mrf.mxu0
      %v2327 = vadd.f32 0.0, %v2326
      %v2328 = vpop.f32.mrf.mxu0
      %v2329 = vadd.f32 0.0, %v2328
      %2330 = vmatprep.mubr.f32.mxu0 0.0
      %2331 = vmatmul.mubr.f32.gmra.mxu0 %v2078
      %v2332 = vpop.f32.mrf.mxu0
      %v2333 = vadd.f32 0.0, %v2332
      %v2334 = vpop.f32.mrf.mxu0
      %v2335 = vadd.f32 0.0, %v2334
      %2336 = vdwg.mxu0
      %v2337 = vmax.f32 %v2147, %v2149
      %2338 = vmax.xlane.f32.xlu0 %v2337
      %v2339 = vpop.xlane.xlu0 %2338
      %v2340 = vmax.f32 %v2153, %v2155
      %2341 = vmax.xlane.f32.xlu0 %v2340
      %v2342 = vpop.xlane.xlu0 %2341
      %v2343 = vmax.f32 %v2159, %v2161
      %2344 = vmax.xlane.f32.xlu0 %v2343
      %v2345 = vpop.xlane.xlu0 %2344
      %v2346 = vmax.f32 %v2165, %v2167
      %2347 = vmax.xlane.f32.xlu0 %v2346
      %v2348 = vpop.xlane.xlu0 %2347
      %v2349 = vmax.f32 %v2171, %v2173
      %2350 = vmax.xlane.f32.xlu0 %v2349
      %v2351 = vpop.xlane.xlu0 %2350
      %v2352 = vmax.f32 %v2177, %v2179
      %2353 = vmax.xlane.f32.xlu0 %v2352
      %v2354 = vpop.xlane.xlu0 %2353
      %v2355 = vmax.f32 %v2183, %v2185
      %2356 = vmax.xlane.f32.xlu0 %v2355
      %v2357 = vpop.xlane.xlu0 %2356
      %v2358 = vmax.f32 %v2189, %v2191
      %2359 = vmax.xlane.f32.xlu0 %v2358
      %v2360 = vpop.xlane.xlu0 %2359
      %v2361 = vmax.f32 %v2195, %v2197
      %2362 = vmax.xlane.f32.xlu0 %v2361
      %v2363 = vpop.xlane.xlu0 %2362
      %v2364 = vmax.f32 %v2201, %v2203
      %2365 = vmax.xlane.f32.xlu0 %v2364
      %v2366 = vpop.xlane.xlu0 %2365
      %v2367 = vmax.f32 %v2207, %v2209
      %2368 = vmax.xlane.f32.xlu0 %v2367
      %v2369 = vpop.xlane.xlu0 %2368
      %v2370 = vmax.f32 %v2213, %v2215
      %2371 = vmax.xlane.f32.xlu0 %v2370
      %v2372 = vpop.xlane.xlu0 %2371
      %v2373 = vmax.f32 %v2219, %v2221
      %2374 = vmax.xlane.f32.xlu0 %v2373
      %v2375 = vpop.xlane.xlu0 %2374
      %v2376 = vmax.f32 %v2225, %v2227
      %2377 = vmax.xlane.f32.xlu0 %v2376
      %v2378 = vpop.xlane.xlu0 %2377
      %v2379 = vmax.f32 %v2231, %v2233
      %2380 = vmax.xlane.f32.xlu0 %v2379
      %v2381 = vpop.xlane.xlu0 %2380
      %v2382 = vmax.f32 %v2237, %v2239
      %2383 = vmax.xlane.f32.xlu0 %v2382
      %v2384 = vpop.xlane.xlu0 %2383
      %v2385 = vmax.f32 %v2243, %v2245
      %2386 = vmax.xlane.f32.xlu0 %v2385
      %v2387 = vpop.xlane.xlu0 %2386
      %v2388 = vmax.f32 %v2249, %v2251
      %2389 = vmax.xlane.f32.xlu0 %v2388
      %v2390 = vpop.xlane.xlu0 %2389
      %v2391 = vmax.f32 %v2255, %v2257
      %2392 = vmax.xlane.f32.xlu0 %v2391
      %v2393 = vpop.xlane.xlu0 %2392
      %v2394 = vmax.f32 %v2261, %v2263
      %2395 = vmax.xlane.f32.xlu0 %v2394
      %v2396 = vpop.xlane.xlu0 %2395
      %v2397 = vmax.f32 %v2267, %v2269
      %2398 = vmax.xlane.f32.xlu0 %v2397
      %v2399 = vpop.xlane.xlu0 %2398
      %v2400 = vmax.f32 %v2273, %v2275
      %2401 = vmax.xlane.f32.xlu0 %v2400
      %v2402 = vpop.xlane.xlu0 %2401
      %v2403 = vmax.f32 %v2279, %v2281
      %2404 = vmax.xlane.f32.xlu0 %v2403
      %v2405 = vpop.xlane.xlu0 %2404
      %v2406 = vmax.f32 %v2285, %v2287
      %2407 = vmax.xlane.f32.xlu0 %v2406
      %v2408 = vpop.xlane.xlu0 %2407
      %v2409 = vmax.f32 %v2291, %v2293
      %2410 = vmax.xlane.f32.xlu0 %v2409
      %v2411 = vpop.xlane.xlu0 %2410
      %v2412 = vmax.f32 %v2297, %v2299
      %2413 = vmax.xlane.f32.xlu0 %v2412
      %v2414 = vpop.xlane.xlu0 %2413
      %v2415 = vmax.f32 %v2303, %v2305
      %2416 = vmax.xlane.f32.xlu0 %v2415
      %v2417 = vpop.xlane.xlu0 %2416
      %v2418 = vmax.f32 %v2309, %v2311
      %2419 = vmax.xlane.f32.xlu0 %v2418
      %v2420 = vpop.xlane.xlu0 %2419
      %v2421 = vmax.f32 %v2315, %v2317
      %2422 = vmax.xlane.f32.xlu0 %v2421
      %v2423 = vpop.xlane.xlu0 %2422
      %v2424 = vmax.f32 %v2321, %v2323
      %2425 = vmax.xlane.f32.xlu0 %v2424
      %v2426 = vpop.xlane.xlu0 %2425
      %v2427 = vmax.f32 %v2327, %v2329
      %2428 = vmax.xlane.f32.xlu0 %v2427
      %v2429 = vpop.xlane.xlu0 %2428
      %v2430 = vmax.f32 %v2333, %v2335
      %2431 = vmax.xlane.f32.xlu0 %v2430
      %v2432 = vpop.xlane.xlu0 %2431
      %v2433 = vsub.f32 %v2147, %v2339
      %v2434 = vsub.f32 %v2149, %v2339
      %v2435 = vsub.f32 %v2153, %v2342
      %v2436 = vsub.f32 %v2155, %v2342
      %v2437 = vsub.f32 %v2159, %v2345
      %v2438 = vsub.f32 %v2161, %v2345
      %v2439 = vsub.f32 %v2165, %v2348
      %v2440 = vsub.f32 %v2167, %v2348
      %v2441 = vsub.f32 %v2171, %v2351
      %v2442 = vsub.f32 %v2173, %v2351
      %v2443 = vsub.f32 %v2177, %v2354
      %v2444 = vsub.f32 %v2179, %v2354
      %v2445 = vsub.f32 %v2183, %v2357
      %v2446 = vsub.f32 %v2185, %v2357
      %v2447 = vsub.f32 %v2189, %v2360
      %v2448 = vsub.f32 %v2191, %v2360
      %v2449 = vsub.f32 %v2195, %v2363
      %v2450 = vsub.f32 %v2197, %v2363
      %v2451 = vsub.f32 %v2201, %v2366
      %v2452 = vsub.f32 %v2203, %v2366
      %v2453 = vsub.f32 %v2207, %v2369
      %v2454 = vsub.f32 %v2209, %v2369
      %v2455 = vsub.f32 %v2213, %v2372
      %v2456 = vsub.f32 %v2215, %v2372
      %v2457 = vsub.f32 %v2219, %v2375
      %v2458 = vsub.f32 %v2221, %v2375
      %v2459 = vsub.f32 %v2225, %v2378
      %v2460 = vsub.f32 %v2227, %v2378
      %v2461 = vsub.f32 %v2231, %v2381
      %v2462 = vsub.f32 %v2233, %v2381
      %v2463 = vsub.f32 %v2237, %v2384
      %v2464 = vsub.f32 %v2239, %v2384
      %v2465 = vsub.f32 %v2243, %v2387
      %v2466 = vsub.f32 %v2245, %v2387
      %v2467 = vsub.f32 %v2249, %v2390
      %v2468 = vsub.f32 %v2251, %v2390
      %v2469 = vsub.f32 %v2255, %v2393
      %v2470 = vsub.f32 %v2257, %v2393
      %v2471 = vsub.f32 %v2261, %v2396
      %v2472 = vsub.f32 %v2263, %v2396
      %v2473 = vsub.f32 %v2267, %v2399
      %v2474 = vsub.f32 %v2269, %v2399
      %v2475 = vsub.f32 %v2273, %v2402
      %v2476 = vsub.f32 %v2275, %v2402
      %v2477 = vsub.f32 %v2279, %v2405
      %v2478 = vsub.f32 %v2281, %v2405
      %v2479 = vsub.f32 %v2285, %v2408
      %v2480 = vsub.f32 %v2287, %v2408
      %v2481 = vsub.f32 %v2291, %v2411
      %v2482 = vsub.f32 %v2293, %v2411
      %v2483 = vsub.f32 %v2297, %v2414
      %v2484 = vsub.f32 %v2299, %v2414
      %v2485 = vsub.f32 %v2303, %v2417
      %v2486 = vsub.f32 %v2305, %v2417
      %v2487 = vsub.f32 %v2309, %v2420
      %v2488 = vsub.f32 %v2311, %v2420
      %v2489 = vsub.f32 %v2315, %v2423
      %v2490 = vsub.f32 %v2317, %v2423
      %v2491 = vsub.f32 %v2321, %v2426
      %v2492 = vsub.f32 %v2323, %v2426
      %v2493 = vsub.f32 %v2327, %v2429
      %v2494 = vsub.f32 %v2329, %v2429
      %v2495 = vsub.f32 %v2333, %v2432
      %v2496 = vsub.f32 %v2335, %v2432
      %v2497 = vmul.f32 %v2433, 1.442695
      %v2498 = vpow.pop %v2497
      %v2499 = vmul.f32 %v2434, 1.442695
      %v2500 = vpow.pop %v2499
      %v2501 = vmul.f32 %v2435, 1.442695
      %v2502 = vpow.pop %v2501
      %v2503 = vmul.f32 %v2436, 1.442695
      %v2504 = vpow.pop %v2503
      %v2505 = vmul.f32 %v2437, 1.442695
      %v2506 = vpow.pop %v2505
      %v2507 = vmul.f32 %v2438, 1.442695
      %v2508 = vpow.pop %v2507
      %v2509 = vmul.f32 %v2439, 1.442695
      %v2510 = vpow.pop %v2509
      %v2511 = vmul.f32 %v2440, 1.442695
      %v2512 = vpow.pop %v2511
      %v2513 = vmul.f32 %v2441, 1.442695
      %v2514 = vpow.pop %v2513
      %v2515 = vmul.f32 %v2442, 1.442695
      %v2516 = vpow.pop %v2515
      %v2517 = vmul.f32 %v2443, 1.442695
      %v2518 = vpow.pop %v2517
      %v2519 = vmul.f32 %v2444, 1.442695
      %v2520 = vpow.pop %v2519
      %v2521 = vmul.f32 %v2445, 1.442695
      %v2522 = vpow.pop %v2521
      %v2523 = vmul.f32 %v2446, 1.442695
      %v2524 = vpow.pop %v2523
      %v2525 = vmul.f32 %v2447, 1.442695
      %v2526 = vpow.pop %v2525
      %v2527 = vmul.f32 %v2448, 1.442695
      %v2528 = vpow.pop %v2527
      %v2529 = vmul.f32 %v2449, 1.442695
      %v2530 = vpow.pop %v2529
      %v2531 = vmul.f32 %v2450, 1.442695
      %v2532 = vpow.pop %v2531
      %v2533 = vmul.f32 %v2451, 1.442695
      %v2534 = vpow.pop %v2533
      %v2535 = vmul.f32 %v2452, 1.442695
      %v2536 = vpow.pop %v2535
      %v2537 = vmul.f32 %v2453, 1.442695
      %v2538 = vpow.pop %v2537
      %v2539 = vmul.f32 %v2454, 1.442695
      %v2540 = vpow.pop %v2539
      %v2541 = vmul.f32 %v2455, 1.442695
      %v2542 = vpow.pop %v2541
      %v2543 = vmul.f32 %v2456, 1.442695
      %v2544 = vpow.pop %v2543
      %v2545 = vmul.f32 %v2457, 1.442695
      %v2546 = vpow.pop %v2545
      %v2547 = vmul.f32 %v2458, 1.442695
      %v2548 = vpow.pop %v2547
      %v2549 = vmul.f32 %v2459, 1.442695
      %v2550 = vpow.pop %v2549
      %v2551 = vmul.f32 %v2460, 1.442695
      %v2552 = vpow.pop %v2551
      %v2553 = vmul.f32 %v2461, 1.442695
      %v2554 = vpow.pop %v2553
      %v2555 = vmul.f32 %v2462, 1.442695
      %v2556 = vpow.pop %v2555
      %v2557 = vmul.f32 %v2463, 1.442695
      %v2558 = vpow.pop %v2557
      %v2559 = vmul.f32 %v2464, 1.442695
      %v2560 = vpow.pop %v2559
      %v2561 = vmul.f32 %v2465, 1.442695
      %v2562 = vpow.pop %v2561
      %v2563 = vmul.f32 %v2466, 1.442695
      %v2564 = vpow.pop %v2563
      %v2565 = vmul.f32 %v2467, 1.442695
      %v2566 = vpow.pop %v2565
      %v2567 = vmul.f32 %v2468, 1.442695
      %v2568 = vpow.pop %v2567
      %v2569 = vmul.f32 %v2469, 1.442695
      %v2570 = vpow.pop %v2569
      %v2571 = vmul.f32 %v2470, 1.442695
      %v2572 = vpow.pop %v2571
      %v2573 = vmul.f32 %v2471, 1.442695
      %v2574 = vpow.pop %v2573
      %v2575 = vmul.f32 %v2472, 1.442695
      %v2576 = vpow.pop %v2575
      %v2577 = vmul.f32 %v2473, 1.442695
      %v2578 = vpow.pop %v2577
      %v2579 = vmul.f32 %v2474, 1.442695
      %v2580 = vpow.pop %v2579
      %v2581 = vmul.f32 %v2475, 1.442695
      %v2582 = vpow.pop %v2581
      %v2583 = vmul.f32 %v2476, 1.442695
      %v2584 = vpow.pop %v2583
      %v2585 = vmul.f32 %v2477, 1.442695
      %v2586 = vpow.pop %v2585
      %v2587 = vmul.f32 %v2478, 1.442695
      %v2588 = vpow.pop %v2587
      %v2589 = vmul.f32 %v2479, 1.442695
      %v2590 = vpow.pop %v2589
      %v2591 = vmul.f32 %v2480, 1.442695
      %v2592 = vpow.pop %v2591
      %v2593 = vmul.f32 %v2481, 1.442695
      %v2594 = vpow.pop %v2593
      %v2595 = vmul.f32 %v2482, 1.442695
      %v2596 = vpow.pop %v2595
      %v2597 = vmul.f32 %v2483, 1.442695
      %v2598 = vpow.pop %v2597
      %v2599 = vmul.f32 %v2484, 1.442695
      %v2600 = vpow.pop %v2599
      %v2601 = vmul.f32 %v2485, 1.442695
      %v2602 = vpow.pop %v2601
      %v2603 = vmul.f32 %v2486, 1.442695
      %v2604 = vpow.pop %v2603
      %v2605 = vmul.f32 %v2487, 1.442695
      %v2606 = vpow.pop %v2605
      %v2607 = vmul.f32 %v2488, 1.442695
      %v2608 = vpow.pop %v2607
      %v2609 = vmul.f32 %v2489, 1.442695
      %v2610 = vpow.pop %v2609
      %v2611 = vmul.f32 %v2490, 1.442695
      %v2612 = vpow.pop %v2611
      %v2613 = vmul.f32 %v2491, 1.442695
      %v2614 = vpow.pop %v2613
      %v2615 = vmul.f32 %v2492, 1.442695
      %v2616 = vpow.pop %v2615
      %v2617 = vmul.f32 %v2493, 1.442695
      %v2618 = vpow.pop %v2617
      %v2619 = vmul.f32 %v2494, 1.442695
      %v2620 = vpow.pop %v2619
      %v2621 = vmul.f32 %v2495, 1.442695
      %v2622 = vpow.pop %v2621
      %v2623 = vmul.f32 %v2496, 1.442695
      %v2624 = vpow.pop %v2623
      %v2625 = vadd.f32 %v2498, %v2500
      %2626 = vadd.xlane.f32.xlu0 %v2625
      %v2627 = vpop.xlane.xlu0 %2626
      %v2628 = vadd.f32 %v2502, %v2504
      %2629 = vadd.xlane.f32.xlu0 %v2628
      %v2630 = vpop.xlane.xlu0 %2629
      %v2631 = vadd.f32 %v2506, %v2508
      %2632 = vadd.xlane.f32.xlu0 %v2631
      %v2633 = vpop.xlane.xlu0 %2632
      %v2634 = vadd.f32 %v2510, %v2512
      %2635 = vadd.xlane.f32.xlu0 %v2634
      %v2636 = vpop.xlane.xlu0 %2635
      %v2637 = vadd.f32 %v2514, %v2516
      %2638 = vadd.xlane.f32.xlu0 %v2637
      %v2639 = vpop.xlane.xlu0 %2638
      %v2640 = vadd.f32 %v2518, %v2520
      %2641 = vadd.xlane.f32.xlu0 %v2640
      %v2642 = vpop.xlane.xlu0 %2641
      %v2643 = vadd.f32 %v2522, %v2524
      %2644 = vadd.xlane.f32.xlu0 %v2643
      %v2645 = vpop.xlane.xlu0 %2644
      %v2646 = vadd.f32 %v2526, %v2528
      %2647 = vadd.xlane.f32.xlu0 %v2646
      %v2648 = vpop.xlane.xlu0 %2647
      %v2649 = vadd.f32 %v2530, %v2532
      %2650 = vadd.xlane.f32.xlu0 %v2649
      %v2651 = vpop.xlane.xlu0 %2650
      %v2652 = vadd.f32 %v2534, %v2536
      %2653 = vadd.xlane.f32.xlu0 %v2652
      %v2654 = vpop.xlane.xlu0 %2653
      %v2655 = vadd.f32 %v2538, %v2540
      %2656 = vadd.xlane.f32.xlu0 %v2655
      %v2657 = vpop.xlane.xlu0 %2656
      %v2658 = vadd.f32 %v2542, %v2544
      %2659 = vadd.xlane.f32.xlu0 %v2658
      %v2660 = vpop.xlane.xlu0 %2659
      %v2661 = vadd.f32 %v2546, %v2548
      %2662 = vadd.xlane.f32.xlu0 %v2661
      %v2663 = vpop.xlane.xlu0 %2662
      %v2664 = vadd.f32 %v2550, %v2552
      %2665 = vadd.xlane.f32.xlu0 %v2664
      %v2666 = vpop.xlane.xlu0 %2665
      %v2667 = vadd.f32 %v2554, %v2556
      %2668 = vadd.xlane.f32.xlu0 %v2667
      %v2669 = vpop.xlane.xlu0 %2668
      %v2670 = vadd.f32 %v2558, %v2560
      %2671 = vadd.xlane.f32.xlu0 %v2670
      %v2672 = vpop.xlane.xlu0 %2671
      %v2673 = vadd.f32 %v2562, %v2564
      %2674 = vadd.xlane.f32.xlu0 %v2673
      %v2675 = vpop.xlane.xlu0 %2674
      %v2676 = vadd.f32 %v2566, %v2568
      %2677 = vadd.xlane.f32.xlu0 %v2676
      %v2678 = vpop.xlane.xlu0 %2677
      %v2679 = vadd.f32 %v2570, %v2572
      %2680 = vadd.xlane.f32.xlu0 %v2679
      %v2681 = vpop.xlane.xlu0 %2680
      %v2682 = vadd.f32 %v2574, %v2576
      %2683 = vadd.xlane.f32.xlu0 %v2682
      %v2684 = vpop.xlane.xlu0 %2683
      %v2685 = vadd.f32 %v2578, %v2580
      %2686 = vadd.xlane.f32.xlu0 %v2685
      %v2687 = vpop.xlane.xlu0 %2686
      %v2688 = vadd.f32 %v2582, %v2584
      %2689 = vadd.xlane.f32.xlu0 %v2688
      %v2690 = vpop.xlane.xlu0 %2689
      %v2691 = vadd.f32 %v2586, %v2588
      %2692 = vadd.xlane.f32.xlu0 %v2691
      %v2693 = vpop.xlane.xlu0 %2692
      %v2694 = vadd.f32 %v2590, %v2592
      %2695 = vadd.xlane.f32.xlu0 %v2694
      %v2696 = vpop.xlane.xlu0 %2695
      %v2697 = vadd.f32 %v2594, %v2596
      %2698 = vadd.xlane.f32.xlu0 %v2697
      %v2699 = vpop.xlane.xlu0 %2698
      %v2700 = vadd.f32 %v2598, %v2600
      %2701 = vadd.xlane.f32.xlu0 %v2700
      %v2702 = vpop.xlane.xlu0 %2701
      %v2703 = vadd.f32 %v2602, %v2604
      %2704 = vadd.xlane.f32.xlu0 %v2703
      %v2705 = vpop.xlane.xlu0 %2704
      %v2706 = vadd.f32 %v2606, %v2608
      %2707 = vadd.xlane.f32.xlu0 %v2706
      %v2708 = vpop.xlane.xlu0 %2707
      %v2709 = vadd.f32 %v2610, %v2612
      %2710 = vadd.xlane.f32.xlu0 %v2709
      %v2711 = vpop.xlane.xlu0 %2710
      %v2712 = vadd.f32 %v2614, %v2616
      %2713 = vadd.xlane.f32.xlu0 %v2712
      %v2714 = vpop.xlane.xlu0 %2713
      %v2715 = vadd.f32 %v2618, %v2620
      %2716 = vadd.xlane.f32.xlu0 %v2715
      %v2717 = vpop.xlane.xlu0 %2716
      %v2718 = vadd.f32 %v2622, %v2624
      %2719 = vadd.xlane.f32.xlu0 %v2718
      %v2720 = vpop.xlane.xlu0 %2719
      %v2721 = vrcp.pop %v2627
      %v2722 = vrcp.pop %v2630
      %v2723 = vrcp.pop %v2633
      %v2724 = vrcp.pop %v2636
      %v2725 = vrcp.pop %v2639
      %v2726 = vrcp.pop %v2642
      %v2727 = vrcp.pop %v2645
      %v2728 = vrcp.pop %v2648
      %v2729 = vrcp.pop %v2651
      %v2730 = vrcp.pop %v2654
      %v2731 = vrcp.pop %v2657
      %v2732 = vrcp.pop %v2660
      %v2733 = vrcp.pop %v2663
      %v2734 = vrcp.pop %v2666
      %v2735 = vrcp.pop %v2669
      %v2736 = vrcp.pop %v2672
      %v2737 = vrcp.pop %v2675
      %v2738 = vrcp.pop %v2678
      %v2739 = vrcp.pop %v2681
      %v2740 = vrcp.pop %v2684
      %v2741 = vrcp.pop %v2687
      %v2742 = vrcp.pop %v2690
      %v2743 = vrcp.pop %v2693
      %v2744 = vrcp.pop %v2696
      %v2745 = vrcp.pop %v2699
      %v2746 = vrcp.pop %v2702
      %v2747 = vrcp.pop %v2705
      %v2748 = vrcp.pop %v2708
      %v2749 = vrcp.pop %v2711
      %v2750 = vrcp.pop %v2714
      %v2751 = vrcp.pop %v2717
      %v2752 = vrcp.pop %v2720
      %v2753 = vmul.f32 %v2498, %v2721
      %v2754 = vmul.f32 %v2500, %v2721
      %v2755 = vmul.f32 %v2502, %v2722
      %v2756 = vmul.f32 %v2504, %v2722
      %v2757 = vmul.f32 %v2506, %v2723
      %v2758 = vmul.f32 %v2508, %v2723
      %v2759 = vmul.f32 %v2510, %v2724
      %v2760 = vmul.f32 %v2512, %v2724
      %v2761 = vmul.f32 %v2514, %v2725
      %v2762 = vmul.f32 %v2516, %v2725
      %v2763 = vmul.f32 %v2518, %v2726
      %v2764 = vmul.f32 %v2520, %v2726
      %v2765 = vmul.f32 %v2522, %v2727
      %v2766 = vmul.f32 %v2524, %v2727
      %v2767 = vmul.f32 %v2526, %v2728
      %v2768 = vmul.f32 %v2528, %v2728
      %v2769 = vmul.f32 %v2530, %v2729
      %v2770 = vmul.f32 %v2532, %v2729
      %v2771 = vmul.f32 %v2534, %v2730
      %v2772 = vmul.f32 %v2536, %v2730
      %v2773 = vmul.f32 %v2538, %v2731
      %v2774 = vmul.f32 %v2540, %v2731
      %v2775 = vmul.f32 %v2542, %v2732
      %v2776 = vmul.f32 %v2544, %v2732
      %v2777 = vmul.f32 %v2546, %v2733
      %v2778 = vmul.f32 %v2548, %v2733
      %v2779 = vmul.f32 %v2550, %v2734
      %v2780 = vmul.f32 %v2552, %v2734
      %v2781 = vmul.f32 %v2554, %v2735
      %v2782 = vmul.f32 %v2556, %v2735
      %v2783 = vmul.f32 %v2558, %v2736
      %v2784 = vmul.f32 %v2560, %v2736
      %v2785 = vmul.f32 %v2562, %v2737
      %v2786 = vmul.f32 %v2564, %v2737
      %v2787 = vmul.f32 %v2566, %v2738
      %v2788 = vmul.f32 %v2568, %v2738
      %v2789 = vmul.f32 %v2570, %v2739
      %v2790 = vmul.f32 %v2572, %v2739
      %v2791 = vmul.f32 %v2574, %v2740
      %v2792 = vmul.f32 %v2576, %v2740
      %v2793 = vmul.f32 %v2578, %v2741
      %v2794 = vmul.f32 %v2580, %v2741
      %v2795 = vmul.f32 %v2582, %v2742
      %v2796 = vmul.f32 %v2584, %v2742
      %v2797 = vmul.f32 %v2586, %v2743
      %v2798 = vmul.f32 %v2588, %v2743
      %v2799 = vmul.f32 %v2590, %v2744
      %v2800 = vmul.f32 %v2592, %v2744
      %v2801 = vmul.f32 %v2594, %v2745
      %v2802 = vmul.f32 %v2596, %v2745
      %v2803 = vmul.f32 %v2598, %v2746
      %v2804 = vmul.f32 %v2600, %v2746
      %v2805 = vmul.f32 %v2602, %v2747
      %v2806 = vmul.f32 %v2604, %v2747
      %v2807 = vmul.f32 %v2606, %v2748
      %v2808 = vmul.f32 %v2608, %v2748
      %v2809 = vmul.f32 %v2610, %v2749
      %v2810 = vmul.f32 %v2612, %v2749
      %v2811 = vmul.f32 %v2614, %v2750
      %v2812 = vmul.f32 %v2616, %v2750
      %v2813 = vmul.f32 %v2618, %v2751
      %v2814 = vmul.f32 %v2620, %v2751
      %v2815 = vmul.f32 %v2622, %v2752
      %v2816 = vmul.f32 %v2624, %v2752
      %2817 = vmatprep.subr.mxu0 %v2784
      %2818 = vmatpush1.xpose.msra.mxu0 %v2783
      %2819 = vmatprep.subr.mxu0 %v2782
      %2820 = vmatpush1.xpose.msra.mxu0 %v2781
      %2821 = vmatprep.subr.mxu0 %v2780
      %2822 = vmatpush1.xpose.msra.mxu0 %v2779
      %2823 = vmatprep.subr.mxu0 %v2778
      %2824 = vmatpush1.xpose.msra.mxu0 %v2777
      %2825 = vmatprep.subr.mxu0 %v2776
      %2826 = vmatpush1.xpose.msra.mxu0 %v2775
      %2827 = vmatprep.subr.mxu0 %v2774
      %2828 = vmatpush1.xpose.msra.mxu0 %v2773
      %2829 = vmatprep.subr.mxu0 %v2772
      %2830 = vmatpush1.xpose.msra.mxu0 %v2771
      %2831 = vmatprep.subr.mxu0 %v2770
      %2832 = vmatpush1.xpose.msra.mxu0 %v2769
      %2833 = vmatprep.subr.mxu0 %v2768
      %2834 = vmatpush1.xpose.msra.mxu0 %v2767
      %2835 = vmatprep.subr.mxu0 %v2766
      %2836 = vmatpush1.xpose.msra.mxu0 %v2765
      %2837 = vmatprep.subr.mxu0 %v2764
      %2838 = vmatpush1.xpose.msra.mxu0 %v2763
      %2839 = vmatprep.subr.mxu0 %v2762
      %2840 = vmatpush1.xpose.msra.mxu0 %v2761
      %2841 = vmatprep.subr.mxu0 %v2760
      %2842 = vmatpush1.xpose.msra.mxu0 %v2759
      %2843 = vmatprep.subr.mxu0 %v2758
      %2844 = vmatpush1.xpose.msra.mxu0 %v2757
      %2845 = vmatprep.subr.mxu0 %v2756
      %2846 = vmatpush1.xpose.msra.mxu0 %v2755
      %2847 = vmatprep.subr.mxu0 %v2754
      %2848 = vmatpush1.xpose.msra.mxu0 %v2753
      %2849 = vmatprep.subr.mxu0 %v2816
      %2850 = vmatpush2.xpose.msra.mxu0 %v2815
      %2851 = vmatprep.subr.mxu0 %v2814
      %2852 = vmatpush2.xpose.msra.mxu0 %v2813
      %2853 = vmatprep.subr.mxu0 %v2812
      %2854 = vmatpush2.xpose.msra.mxu0 %v2811
      %2855 = vmatprep.subr.mxu0 %v2810
      %2856 = vmatpush2.xpose.msra.mxu0 %v2809
      %2857 = vmatprep.subr.mxu0 %v2808
      %2858 = vmatpush2.xpose.msra.mxu0 %v2807
      %2859 = vmatprep.subr.mxu0 %v2806
      %2860 = vmatpush2.xpose.msra.mxu0 %v2805
      %2861 = vmatprep.subr.mxu0 %v2804
      %2862 = vmatpush2.xpose.msra.mxu0 %v2803
      %2863 = vmatprep.subr.mxu0 %v2802
      %2864 = vmatpush2.xpose.msra.mxu0 %v2801
      %2865 = vmatprep.subr.mxu0 %v2800
      %2866 = vmatpush2.xpose.msra.mxu0 %v2799
      %2867 = vmatprep.subr.mxu0 %v2798
      %2868 = vmatpush2.xpose.msra.mxu0 %v2797
      %2869 = vmatprep.subr.mxu0 %v2796
      %2870 = vmatpush2.xpose.msra.mxu0 %v2795
      %2871 = vmatprep.subr.mxu0 %v2794
      %2872 = vmatpush2.xpose.msra.mxu0 %v2793
      %2873 = vmatprep.subr.mxu0 %v2792
      %2874 = vmatpush2.xpose.msra.mxu0 %v2791
      %2875 = vmatprep.subr.mxu0 %v2790
      %2876 = vmatpush2.xpose.msra.mxu0 %v2789
      %2877 = vmatprep.subr.mxu0 %v2788
      %2878 = vmatpush2.xpose.msra.mxu0 %v2787
      %2879 = vmatprep.subr.mxu0 %v2786
      %2880 = vmatpush2.xpose.msra.mxu0 %v2785
      %2881 = vmatprep.mubr.f32.mxu0 %v935
      %2882 = vmatmul.mubr.f32.gmra.mxu0 %v933
      %v2883 = vpop.f32.mrf.mxu0
      %v2884 = vadd.f32 0.0, %v2883
      %v2885 = vpop.f32.mrf.mxu0
      %v2886 = vadd.f32 0.0, %v2885
      %2887 = vdwg.mxu0
      %2888 = vst [vmem:[#allocation2 + $0x10] sm:$0xff] %v2884
      %2889 = vst [vmem:[#allocation2 + $0x18] sm:$0xff] %v2886
      %2890 = vxpose.xlu0.b32.start [1/16] %v891, 128
      %2891 = vxpose.xlu0.b32.cont [2/16] 0.0, 128
      %2892 = vxpose.xlu0.b32.cont [3/16] 0.0, 128
      %2893 = vxpose.xlu0.b32.cont [4/16] 0.0, 128
      %2894 = vxpose.xlu0.b32.cont [5/16] 0.0, 128
      %2895 = vxpose.xlu0.b32.cont [6/16] 0.0, 128
      %2896 = vxpose.xlu0.b32.cont [7/16] 0.0, 128
      %2897 = vxpose.xlu0.b32.cont [8/16] 0.0, 128
      %2898 = vxpose.xlu0.b32.cont [9/16] 0.0, 128
      %2899 = vxpose.xlu0.b32.cont [10/16] 0.0, 128
      %2900 = vxpose.xlu0.b32.cont [11/16] 0.0, 128
      %2901 = vxpose.xlu0.b32.cont [12/16] 0.0, 128
      %2902 = vxpose.xlu0.b32.cont [13/16] 0.0, 128
      %2903 = vxpose.xlu0.b32.cont [14/16] 0.0, 128
      %2904 = vxpose.xlu0.b32.cont [15/16] 0.0, 128
      %2905 = vxpose.xlu0.b32.end [16/16] 0.0, 128
      %v2906 = vpop.trf.xlu0
      %v2907 = vpop.trf.xlu0
      %v2908 = vpop.trf.xlu0
      %v2909 = vpop.trf.xlu0
      %v2910 = vpop.trf.xlu0
      %v2911 = vpop.trf.xlu0
      %v2912 = vpop.trf.xlu0
      %v2913 = vpop.trf.xlu0
      %v2914 = vpop.trf.xlu0
      %v2915 = vpop.trf.xlu0
      %v2916 = vpop.trf.xlu0
      %v2917 = vpop.trf.xlu0
      %v2918 = vpop.trf.xlu0
      %v2919 = vpop.trf.xlu0
      %v2920 = vpop.trf.xlu0
      %v2921 = vpop.trf.xlu0
      %2922 = vxpose.xlu0.b32.start [1/16] %v893, 128
      %2923 = vxpose.xlu0.b32.cont [2/16] 0.0, 128
      %2924 = vxpose.xlu0.b32.cont [3/16] 0.0, 128
      %2925 = vxpose.xlu0.b32.cont [4/16] 0.0, 128
      %2926 = vxpose.xlu0.b32.cont [5/16] 0.0, 128
      %2927 = vxpose.xlu0.b32.cont [6/16] 0.0, 128
      %2928 = vxpose.xlu0.b32.cont [7/16] 0.0, 128
      %2929 = vxpose.xlu0.b32.cont [8/16] 0.0, 128
      %2930 = vxpose.xlu0.b32.cont [9/16] 0.0, 128
      %2931 = vxpose.xlu0.b32.cont [10/16] 0.0, 128
      %2932 = vxpose.xlu0.b32.cont [11/16] 0.0, 128
      %2933 = vxpose.xlu0.b32.cont [12/16] 0.0, 128
      %2934 = vxpose.xlu0.b32.cont [13/16] 0.0, 128
      %2935 = vxpose.xlu0.b32.cont [14/16] 0.0, 128
      %2936 = vxpose.xlu0.b32.cont [15/16] 0.0, 128
      %2937 = vxpose.xlu0.b32.end [16/16] 0.0, 128
      %v2938 = vpop.trf.xlu0
      %v2939 = vpop.trf.xlu0
      %v2940 = vpop.trf.xlu0
      %v2941 = vpop.trf.xlu0
      %v2942 = vpop.trf.xlu0
      %v2943 = vpop.trf.xlu0
      %v2944 = vpop.trf.xlu0
      %v2945 = vpop.trf.xlu0
      %v2946 = vpop.trf.xlu0
      %v2947 = vpop.trf.xlu0
      %v2948 = vpop.trf.xlu0
      %v2949 = vpop.trf.xlu0
      %v2950 = vpop.trf.xlu0
      %v2951 = vpop.trf.xlu0
      %v2952 = vpop.trf.xlu0
      %v2953 = vpop.trf.xlu0
      %v2955 = vsel %vm1013, %v2906, 0
      %v2958 = vsel %vm1013, %v2907, 0
      %v2961 = vsel %vm1013, %v2908, 0
      %v2964 = vsel %vm1013, %v2909, 0
      %v2967 = vsel %vm1013, %v2910, 0
      %v2970 = vsel %vm1013, %v2911, 0
      %v2973 = vsel %vm1013, %v2912, 0
      %v2976 = vsel %vm1013, %v2913, 0
      %v2979 = vsel %vm1013, %v2914, 0
      %v2982 = vsel %vm1013, %v2915, 0
      %v2985 = vsel %vm1013, %v2916, 0
      %v2988 = vsel %vm1013, %v2917, 0
      %v2991 = vsel %vm1013, %v2918, 0
      %v2994 = vsel %vm1013, %v2919, 0
      %v2997 = vsel %vm1013, %v2920, 0
      %v3000 = vsel %vm1013, %v2921, 0
      %v3003 = vsel %vm1013, %v2938, 0
      %v3006 = vsel %vm1013, %v2939, 0
      %v3009 = vsel %vm1013, %v2940, 0
      %v3012 = vsel %vm1013, %v2941, 0
      %v3015 = vsel %vm1013, %v2942, 0
      %v3018 = vsel %vm1013, %v2943, 0
      %v3021 = vsel %vm1013, %v2944, 0
      %v3024 = vsel %vm1013, %v2945, 0
      %v3027 = vsel %vm1013, %v2946, 0
      %v3030 = vsel %vm1013, %v2947, 0
      %v3033 = vsel %vm1013, %v2948, 0
      %v3036 = vsel %vm1013, %v2949, 0
      %v3039 = vsel %vm1013, %v2950, 0
      %v3042 = vsel %vm1013, %v2951, 0
      %v3045 = vsel %vm1013, %v2952, 0
      %v3048 = vsel %vm1013, %v2953, 0
      %3050 = vmatprep.subr.mxu0 0.0
      %3051 = vmatpush1.msra.mxu0 0.0
      %3052 = vmatprep.subr.mxu0 0.0
      %3053 = vmatpush1.msra.mxu0 0.0
      %3054 = vmatprep.subr.mxu0 0.0
      %3055 = vmatpush1.msra.mxu0 0.0
      %3056 = vmatprep.subr.mxu0 0.0
      %3057 = vmatpush1.msra.mxu0 0.0
      %3058 = vmatprep.subr.mxu0 0.0
      %3059 = vmatpush1.msra.mxu0 0.0
      %3060 = vmatprep.subr.mxu0 0.0
      %3061 = vmatpush1.msra.mxu0 0.0
      %3062 = vmatprep.subr.mxu0 0.0
      %3063 = vmatpush1.msra.mxu0 0.0
      %3064 = vmatprep.subr.mxu0 0.0
      %3065 = vmatpush1.msra.mxu0 0.0
      %3066 = vmatprep.subr.mxu0 0.0
      %3067 = vmatpush1.msra.mxu0 0.0
      %3068 = vmatprep.subr.mxu0 0.0
      %3069 = vmatpush1.msra.mxu0 0.0
      %3070 = vmatprep.subr.mxu0 0.0
      %3071 = vmatpush1.msra.mxu0 0.0
      %3072 = vmatprep.subr.mxu0 0.0
      %3073 = vmatpush1.msra.mxu0 0.0
      %3074 = vmatprep.subr.mxu0 0.0
      %3075 = vmatpush1.msra.mxu0 0.0
      %3076 = vmatprep.subr.mxu0 0.0
      %3077 = vmatpush1.msra.mxu0 0.0
      %3078 = vmatprep.subr.mxu0 0.0
      %3079 = vmatpush1.msra.mxu0 0.0
      %3080 = vmatprep.subr.mxu0 %v917
      %3081 = vmatpush1.msra.mxu0 %v915
      %3082 = vmatprep.subr.mxu0 0.0
      %3083 = vmatpush2.msra.mxu0 0.0
      %3084 = vmatprep.subr.mxu0 0.0
      %3085 = vmatpush2.msra.mxu0 0.0
      %3086 = vmatprep.subr.mxu0 0.0
      %3087 = vmatpush2.msra.mxu0 0.0
      %3088 = vmatprep.subr.mxu0 0.0
      %3089 = vmatpush2.msra.mxu0 0.0
      %3090 = vmatprep.subr.mxu0 0.0
      %3091 = vmatpush2.msra.mxu0 0.0
      %3092 = vmatprep.subr.mxu0 0.0
      %3093 = vmatpush2.msra.mxu0 0.0
      %3094 = vmatprep.subr.mxu0 0.0
      %3095 = vmatpush2.msra.mxu0 0.0
      %3096 = vmatprep.subr.mxu0 0.0
      %3097 = vmatpush2.msra.mxu0 0.0
      %3098 = vmatprep.subr.mxu0 0.0
      %3099 = vmatpush2.msra.mxu0 0.0
      %3100 = vmatprep.subr.mxu0 0.0
      %3101 = vmatpush2.msra.mxu0 0.0
      %3102 = vmatprep.subr.mxu0 0.0
      %3103 = vmatpush2.msra.mxu0 0.0
      %3104 = vmatprep.subr.mxu0 0.0
      %3105 = vmatpush2.msra.mxu0 0.0
      %3106 = vmatprep.subr.mxu0 0.0
      %3107 = vmatpush2.msra.mxu0 0.0
      %3108 = vmatprep.subr.mxu0 0.0
      %3109 = vmatpush2.msra.mxu0 0.0
      %3110 = vmatprep.subr.mxu0 0.0
      %3111 = vmatpush2.msra.mxu0 0.0
      %3112 = vmatprep.subr.mxu0 0.0
      %3113 = vmatpush2.msra.mxu0 0.0
      %3114 = vmatprep.mubr.f32.mxu0 0.0
      %3115 = vmatmul.mubr.f32.gmra.mxu0 %v2955
      %v3116 = vpop.f32.mrf.mxu0
      %v3117 = vadd.f32 0.0, %v3116
      %v3118 = vpop.f32.mrf.mxu0
      %v3119 = vadd.f32 0.0, %v3118
      %3120 = vmatprep.mubr.f32.mxu0 0.0
      %3121 = vmatmul.mubr.f32.gmra.mxu0 %v2958
      %v3122 = vpop.f32.mrf.mxu0
      %v3123 = vadd.f32 0.0, %v3122
      %v3124 = vpop.f32.mrf.mxu0
      %v3125 = vadd.f32 0.0, %v3124
      %3126 = vmatprep.mubr.f32.mxu0 0.0
      %3127 = vmatmul.mubr.f32.gmra.mxu0 %v2961
      %v3128 = vpop.f32.mrf.mxu0
      %v3129 = vadd.f32 0.0, %v3128
      %v3130 = vpop.f32.mrf.mxu0
      %v3131 = vadd.f32 0.0, %v3130
      %3132 = vmatprep.mubr.f32.mxu0 0.0
      %3133 = vmatmul.mubr.f32.gmra.mxu0 %v2964
      %v3134 = vpop.f32.mrf.mxu0
      %v3135 = vadd.f32 0.0, %v3134
      %v3136 = vpop.f32.mrf.mxu0
      %v3137 = vadd.f32 0.0, %v3136
      %3138 = vmatprep.mubr.f32.mxu0 0.0
      %3139 = vmatmul.mubr.f32.gmra.mxu0 %v2967
      %v3140 = vpop.f32.mrf.mxu0
      %v3141 = vadd.f32 0.0, %v3140
      %v3142 = vpop.f32.mrf.mxu0
      %v3143 = vadd.f32 0.0, %v3142
      %3144 = vmatprep.mubr.f32.mxu0 0.0
      %3145 = vmatmul.mubr.f32.gmra.mxu0 %v2970
      %v3146 = vpop.f32.mrf.mxu0
      %v3147 = vadd.f32 0.0, %v3146
      %v3148 = vpop.f32.mrf.mxu0
      %v3149 = vadd.f32 0.0, %v3148
      %3150 = vmatprep.mubr.f32.mxu0 0.0
      %3151 = vmatmul.mubr.f32.gmra.mxu0 %v2973
      %v3152 = vpop.f32.mrf.mxu0
      %v3153 = vadd.f32 0.0, %v3152
      %v3154 = vpop.f32.mrf.mxu0
      %v3155 = vadd.f32 0.0, %v3154
      %3156 = vmatprep.mubr.f32.mxu0 0.0
      %3157 = vmatmul.mubr.f32.gmra.mxu0 %v2976
      %v3158 = vpop.f32.mrf.mxu0
      %v3159 = vadd.f32 0.0, %v3158
      %v3160 = vpop.f32.mrf.mxu0
      %v3161 = vadd.f32 0.0, %v3160
      %3162 = vmatprep.mubr.f32.mxu0 0.0
      %3163 = vmatmul.mubr.f32.gmra.mxu0 %v2979
      %v3164 = vpop.f32.mrf.mxu0
      %v3165 = vadd.f32 0.0, %v3164
      %v3166 = vpop.f32.mrf.mxu0
      %v3167 = vadd.f32 0.0, %v3166
      %3168 = vmatprep.mubr.f32.mxu0 0.0
      %3169 = vmatmul.mubr.f32.gmra.mxu0 %v2982
      %v3170 = vpop.f32.mrf.mxu0
      %v3171 = vadd.f32 0.0, %v3170
      %v3172 = vpop.f32.mrf.mxu0
      %v3173 = vadd.f32 0.0, %v3172
      %3174 = vmatprep.mubr.f32.mxu0 0.0
      %3175 = vmatmul.mubr.f32.gmra.mxu0 %v2985
      %v3176 = vpop.f32.mrf.mxu0
      %v3177 = vadd.f32 0.0, %v3176
      %v3178 = vpop.f32.mrf.mxu0
      %v3179 = vadd.f32 0.0, %v3178
      %3180 = vmatprep.mubr.f32.mxu0 0.0
      %3181 = vmatmul.mubr.f32.gmra.mxu0 %v2988
      %v3182 = vpop.f32.mrf.mxu0
      %v3183 = vadd.f32 0.0, %v3182
      %v3184 = vpop.f32.mrf.mxu0
      %v3185 = vadd.f32 0.0, %v3184
      %3186 = vmatprep.mubr.f32.mxu0 0.0
      %3187 = vmatmul.mubr.f32.gmra.mxu0 %v2991
      %v3188 = vpop.f32.mrf.mxu0
      %v3189 = vadd.f32 0.0, %v3188
      %v3190 = vpop.f32.mrf.mxu0
      %v3191 = vadd.f32 0.0, %v3190
      %3192 = vmatprep.mubr.f32.mxu0 0.0
      %3193 = vmatmul.mubr.f32.gmra.mxu0 %v2994
      %v3194 = vpop.f32.mrf.mxu0
      %v3195 = vadd.f32 0.0, %v3194
      %v3196 = vpop.f32.mrf.mxu0
      %v3197 = vadd.f32 0.0, %v3196
      %3198 = vmatprep.mubr.f32.mxu0 0.0
      %3199 = vmatmul.mubr.f32.gmra.mxu0 %v2997
      %v3200 = vpop.f32.mrf.mxu0
      %v3201 = vadd.f32 0.0, %v3200
      %v3202 = vpop.f32.mrf.mxu0
      %v3203 = vadd.f32 0.0, %v3202
      %3204 = vmatprep.mubr.f32.mxu0 0.0
      %3205 = vmatmul.mubr.f32.gmra.mxu0 %v3000
      %v3206 = vpop.f32.mrf.mxu0
      %v3207 = vadd.f32 0.0, %v3206
      %v3208 = vpop.f32.mrf.mxu0
      %v3209 = vadd.f32 0.0, %v3208
      %3210 = vmatprep.mubr.f32.mxu0 0.0
      %3211 = vmatmul.mubr.f32.gmra.mxu0 %v3003
      %v3212 = vpop.f32.mrf.mxu0
      %v3213 = vadd.f32 0.0, %v3212
      %v3214 = vpop.f32.mrf.mxu0
      %v3215 = vadd.f32 0.0, %v3214
      %3216 = vmatprep.mubr.f32.mxu0 0.0
      %3217 = vmatmul.mubr.f32.gmra.mxu0 %v3006
      %v3218 = vpop.f32.mrf.mxu0
      %v3219 = vadd.f32 0.0, %v3218
      %v3220 = vpop.f32.mrf.mxu0
      %v3221 = vadd.f32 0.0, %v3220
      %3222 = vmatprep.mubr.f32.mxu0 0.0
      %3223 = vmatmul.mubr.f32.gmra.mxu0 %v3009
      %v3224 = vpop.f32.mrf.mxu0
      %v3225 = vadd.f32 0.0, %v3224
      %v3226 = vpop.f32.mrf.mxu0
      %v3227 = vadd.f32 0.0, %v3226
      %3228 = vmatprep.mubr.f32.mxu0 0.0
      %3229 = vmatmul.mubr.f32.gmra.mxu0 %v3012
      %v3230 = vpop.f32.mrf.mxu0
      %v3231 = vadd.f32 0.0, %v3230
      %v3232 = vpop.f32.mrf.mxu0
      %v3233 = vadd.f32 0.0, %v3232
      %3234 = vmatprep.mubr.f32.mxu0 0.0
      %3235 = vmatmul.mubr.f32.gmra.mxu0 %v3015
      %v3236 = vpop.f32.mrf.mxu0
      %v3237 = vadd.f32 0.0, %v3236
      %v3238 = vpop.f32.mrf.mxu0
      %v3239 = vadd.f32 0.0, %v3238
      %3240 = vmatprep.mubr.f32.mxu0 0.0
      %3241 = vmatmul.mubr.f32.gmra.mxu0 %v3018
      %v3242 = vpop.f32.mrf.mxu0
      %v3243 = vadd.f32 0.0, %v3242
      %v3244 = vpop.f32.mrf.mxu0
      %v3245 = vadd.f32 0.0, %v3244
      %3246 = vmatprep.mubr.f32.mxu0 0.0
      %3247 = vmatmul.mubr.f32.gmra.mxu0 %v3021
      %v3248 = vpop.f32.mrf.mxu0
      %v3249 = vadd.f32 0.0, %v3248
      %v3250 = vpop.f32.mrf.mxu0
      %v3251 = vadd.f32 0.0, %v3250
      %3252 = vmatprep.mubr.f32.mxu0 0.0
      %3253 = vmatmul.mubr.f32.gmra.mxu0 %v3024
      %v3254 = vpop.f32.mrf.mxu0
      %v3255 = vadd.f32 0.0, %v3254
      %v3256 = vpop.f32.mrf.mxu0
      %v3257 = vadd.f32 0.0, %v3256
      %3258 = vmatprep.mubr.f32.mxu0 0.0
      %3259 = vmatmul.mubr.f32.gmra.mxu0 %v3027
      %v3260 = vpop.f32.mrf.mxu0
      %v3261 = vadd.f32 0.0, %v3260
      %v3262 = vpop.f32.mrf.mxu0
      %v3263 = vadd.f32 0.0, %v3262
      %3264 = vmatprep.mubr.f32.mxu0 0.0
      %3265 = vmatmul.mubr.f32.gmra.mxu0 %v3030
      %v3266 = vpop.f32.mrf.mxu0
      %v3267 = vadd.f32 0.0, %v3266
      %v3268 = vpop.f32.mrf.mxu0
      %v3269 = vadd.f32 0.0, %v3268
      %3270 = vmatprep.mubr.f32.mxu0 0.0
      %3271 = vmatmul.mubr.f32.gmra.mxu0 %v3033
      %v3272 = vpop.f32.mrf.mxu0
      %v3273 = vadd.f32 0.0, %v3272
      %v3274 = vpop.f32.mrf.mxu0
      %v3275 = vadd.f32 0.0, %v3274
      %3276 = vmatprep.mubr.f32.mxu0 0.0
      %3277 = vmatmul.mubr.f32.gmra.mxu0 %v3036
      %v3278 = vpop.f32.mrf.mxu0
      %v3279 = vadd.f32 0.0, %v3278
      %v3280 = vpop.f32.mrf.mxu0
      %v3281 = vadd.f32 0.0, %v3280
      %3282 = vmatprep.mubr.f32.mxu0 0.0
      %3283 = vmatmul.mubr.f32.gmra.mxu0 %v3039
      %v3284 = vpop.f32.mrf.mxu0
      %v3285 = vadd.f32 0.0, %v3284
      %v3286 = vpop.f32.mrf.mxu0
      %v3287 = vadd.f32 0.0, %v3286
      %3288 = vmatprep.mubr.f32.mxu0 0.0
      %3289 = vmatmul.mubr.f32.gmra.mxu0 %v3042
      %v3290 = vpop.f32.mrf.mxu0
      %v3291 = vadd.f32 0.0, %v3290
      %v3292 = vpop.f32.mrf.mxu0
      %v3293 = vadd.f32 0.0, %v3292
      %3294 = vmatprep.mubr.f32.mxu0 0.0
      %3295 = vmatmul.mubr.f32.gmra.mxu0 %v3045
      %v3296 = vpop.f32.mrf.mxu0
      %v3297 = vadd.f32 0.0, %v3296
      %v3298 = vpop.f32.mrf.mxu0
      %v3299 = vadd.f32 0.0, %v3298
      %3300 = vmatprep.mubr.f32.mxu0 0.0
      %3301 = vmatmul.mubr.f32.gmra.mxu0 %v3048
      %v3302 = vpop.f32.mrf.mxu0
      %v3303 = vadd.f32 0.0, %v3302
      %v3304 = vpop.f32.mrf.mxu0
      %v3305 = vadd.f32 0.0, %v3304
      %3306 = vdwg.mxu0
      %v3307 = vmax.f32 %v3117, %v3119
      %3308 = vmax.xlane.f32.xlu0 %v3307
      %v3309 = vpop.xlane.xlu0 %3308
      %v3310 = vmax.f32 %v3123, %v3125
      %3311 = vmax.xlane.f32.xlu0 %v3310
      %v3312 = vpop.xlane.xlu0 %3311
      %v3313 = vmax.f32 %v3129, %v3131
      %3314 = vmax.xlane.f32.xlu0 %v3313
      %v3315 = vpop.xlane.xlu0 %3314
      %v3316 = vmax.f32 %v3135, %v3137
      %3317 = vmax.xlane.f32.xlu0 %v3316
      %v3318 = vpop.xlane.xlu0 %3317
      %v3319 = vmax.f32 %v3141, %v3143
      %3320 = vmax.xlane.f32.xlu0 %v3319
      %v3321 = vpop.xlane.xlu0 %3320
      %v3322 = vmax.f32 %v3147, %v3149
      %3323 = vmax.xlane.f32.xlu0 %v3322
      %v3324 = vpop.xlane.xlu0 %3323
      %v3325 = vmax.f32 %v3153, %v3155
      %3326 = vmax.xlane.f32.xlu0 %v3325
      %v3327 = vpop.xlane.xlu0 %3326
      %v3328 = vmax.f32 %v3159, %v3161
      %3329 = vmax.xlane.f32.xlu0 %v3328
      %v3330 = vpop.xlane.xlu0 %3329
      %v3331 = vmax.f32 %v3165, %v3167
      %3332 = vmax.xlane.f32.xlu0 %v3331
      %v3333 = vpop.xlane.xlu0 %3332
      %v3334 = vmax.f32 %v3171, %v3173
      %3335 = vmax.xlane.f32.xlu0 %v3334
      %v3336 = vpop.xlane.xlu0 %3335
      %v3337 = vmax.f32 %v3177, %v3179
      %3338 = vmax.xlane.f32.xlu0 %v3337
      %v3339 = vpop.xlane.xlu0 %3338
      %v3340 = vmax.f32 %v3183, %v3185
      %3341 = vmax.xlane.f32.xlu0 %v3340
      %v3342 = vpop.xlane.xlu0 %3341
      %v3343 = vmax.f32 %v3189, %v3191
      %3344 = vmax.xlane.f32.xlu0 %v3343
      %v3345 = vpop.xlane.xlu0 %3344
      %v3346 = vmax.f32 %v3195, %v3197
      %3347 = vmax.xlane.f32.xlu0 %v3346
      %v3348 = vpop.xlane.xlu0 %3347
      %v3349 = vmax.f32 %v3201, %v3203
      %3350 = vmax.xlane.f32.xlu0 %v3349
      %v3351 = vpop.xlane.xlu0 %3350
      %v3352 = vmax.f32 %v3207, %v3209
      %3353 = vmax.xlane.f32.xlu0 %v3352
      %v3354 = vpop.xlane.xlu0 %3353
      %v3355 = vmax.f32 %v3213, %v3215
      %3356 = vmax.xlane.f32.xlu0 %v3355
      %v3357 = vpop.xlane.xlu0 %3356
      %v3358 = vmax.f32 %v3219, %v3221
      %3359 = vmax.xlane.f32.xlu0 %v3358
      %v3360 = vpop.xlane.xlu0 %3359
      %v3361 = vmax.f32 %v3225, %v3227
      %3362 = vmax.xlane.f32.xlu0 %v3361
      %v3363 = vpop.xlane.xlu0 %3362
      %v3364 = vmax.f32 %v3231, %v3233
      %3365 = vmax.xlane.f32.xlu0 %v3364
      %v3366 = vpop.xlane.xlu0 %3365
      %v3367 = vmax.f32 %v3237, %v3239
      %3368 = vmax.xlane.f32.xlu0 %v3367
      %v3369 = vpop.xlane.xlu0 %3368
      %v3370 = vmax.f32 %v3243, %v3245
      %3371 = vmax.xlane.f32.xlu0 %v3370
      %v3372 = vpop.xlane.xlu0 %3371
      %v3373 = vmax.f32 %v3249, %v3251
      %3374 = vmax.xlane.f32.xlu0 %v3373
      %v3375 = vpop.xlane.xlu0 %3374
      %v3376 = vmax.f32 %v3255, %v3257
      %3377 = vmax.xlane.f32.xlu0 %v3376
      %v3378 = vpop.xlane.xlu0 %3377
      %v3379 = vmax.f32 %v3261, %v3263
      %3380 = vmax.xlane.f32.xlu0 %v3379
      %v3381 = vpop.xlane.xlu0 %3380
      %v3382 = vmax.f32 %v3267, %v3269
      %3383 = vmax.xlane.f32.xlu0 %v3382
      %v3384 = vpop.xlane.xlu0 %3383
      %v3385 = vmax.f32 %v3273, %v3275
      %3386 = vmax.xlane.f32.xlu0 %v3385
      %v3387 = vpop.xlane.xlu0 %3386
      %v3388 = vmax.f32 %v3279, %v3281
      %3389 = vmax.xlane.f32.xlu0 %v3388
      %v3390 = vpop.xlane.xlu0 %3389
      %v3391 = vmax.f32 %v3285, %v3287
      %3392 = vmax.xlane.f32.xlu0 %v3391
      %v3393 = vpop.xlane.xlu0 %3392
      %v3394 = vmax.f32 %v3291, %v3293
      %3395 = vmax.xlane.f32.xlu0 %v3394
      %v3396 = vpop.xlane.xlu0 %3395
      %v3397 = vmax.f32 %v3297, %v3299
      %3398 = vmax.xlane.f32.xlu0 %v3397
      %v3399 = vpop.xlane.xlu0 %3398
      %v3400 = vmax.f32 %v3303, %v3305
      %3401 = vmax.xlane.f32.xlu0 %v3400
      %v3402 = vpop.xlane.xlu0 %3401
      %v3403 = vsub.f32 %v3117, %v3309
      %v3404 = vsub.f32 %v3119, %v3309
      %v3405 = vsub.f32 %v3123, %v3312
      %v3406 = vsub.f32 %v3125, %v3312
      %v3407 = vsub.f32 %v3129, %v3315
      %v3408 = vsub.f32 %v3131, %v3315
      %v3409 = vsub.f32 %v3135, %v3318
      %v3410 = vsub.f32 %v3137, %v3318
      %v3411 = vsub.f32 %v3141, %v3321
      %v3412 = vsub.f32 %v3143, %v3321
      %v3413 = vsub.f32 %v3147, %v3324
      %v3414 = vsub.f32 %v3149, %v3324
      %v3415 = vsub.f32 %v3153, %v3327
      %v3416 = vsub.f32 %v3155, %v3327
      %v3417 = vsub.f32 %v3159, %v3330
      %v3418 = vsub.f32 %v3161, %v3330
      %v3419 = vsub.f32 %v3165, %v3333
      %v3420 = vsub.f32 %v3167, %v3333
      %v3421 = vsub.f32 %v3171, %v3336
      %v3422 = vsub.f32 %v3173, %v3336
      %v3423 = vsub.f32 %v3177, %v3339
      %v3424 = vsub.f32 %v3179, %v3339
      %v3425 = vsub.f32 %v3183, %v3342
      %v3426 = vsub.f32 %v3185, %v3342
      %v3427 = vsub.f32 %v3189, %v3345
      %v3428 = vsub.f32 %v3191, %v3345
      %v3429 = vsub.f32 %v3195, %v3348
      %v3430 = vsub.f32 %v3197, %v3348
      %v3431 = vsub.f32 %v3201, %v3351
      %v3432 = vsub.f32 %v3203, %v3351
      %v3433 = vsub.f32 %v3207, %v3354
      %v3434 = vsub.f32 %v3209, %v3354
      %v3435 = vsub.f32 %v3213, %v3357
      %v3436 = vsub.f32 %v3215, %v3357
      %v3437 = vsub.f32 %v3219, %v3360
      %v3438 = vsub.f32 %v3221, %v3360
      %v3439 = vsub.f32 %v3225, %v3363
      %v3440 = vsub.f32 %v3227, %v3363
      %v3441 = vsub.f32 %v3231, %v3366
      %v3442 = vsub.f32 %v3233, %v3366
      %v3443 = vsub.f32 %v3237, %v3369
      %v3444 = vsub.f32 %v3239, %v3369
      %v3445 = vsub.f32 %v3243, %v3372
      %v3446 = vsub.f32 %v3245, %v3372
      %v3447 = vsub.f32 %v3249, %v3375
      %v3448 = vsub.f32 %v3251, %v3375
      %v3449 = vsub.f32 %v3255, %v3378
      %v3450 = vsub.f32 %v3257, %v3378
      %v3451 = vsub.f32 %v3261, %v3381
      %v3452 = vsub.f32 %v3263, %v3381
      %v3453 = vsub.f32 %v3267, %v3384
      %v3454 = vsub.f32 %v3269, %v3384
      %v3455 = vsub.f32 %v3273, %v3387
      %v3456 = vsub.f32 %v3275, %v3387
      %v3457 = vsub.f32 %v3279, %v3390
      %v3458 = vsub.f32 %v3281, %v3390
      %v3459 = vsub.f32 %v3285, %v3393
      %v3460 = vsub.f32 %v3287, %v3393
      %v3461 = vsub.f32 %v3291, %v3396
      %v3462 = vsub.f32 %v3293, %v3396
      %v3463 = vsub.f32 %v3297, %v3399
      %v3464 = vsub.f32 %v3299, %v3399
      %v3465 = vsub.f32 %v3303, %v3402
      %v3466 = vsub.f32 %v3305, %v3402
      %v3467 = vmul.f32 %v3403, 1.442695
      %v3468 = vpow.pop %v3467
      %v3469 = vmul.f32 %v3404, 1.442695
      %v3470 = vpow.pop %v3469
      %v3471 = vmul.f32 %v3405, 1.442695
      %v3472 = vpow.pop %v3471
      %v3473 = vmul.f32 %v3406, 1.442695
      %v3474 = vpow.pop %v3473
      %v3475 = vmul.f32 %v3407, 1.442695
      %v3476 = vpow.pop %v3475
      %v3477 = vmul.f32 %v3408, 1.442695
      %v3478 = vpow.pop %v3477
      %v3479 = vmul.f32 %v3409, 1.442695
      %v3480 = vpow.pop %v3479
      %v3481 = vmul.f32 %v3410, 1.442695
      %v3482 = vpow.pop %v3481
      %v3483 = vmul.f32 %v3411, 1.442695
      %v3484 = vpow.pop %v3483
      %v3485 = vmul.f32 %v3412, 1.442695
      %v3486 = vpow.pop %v3485
      %v3487 = vmul.f32 %v3413, 1.442695
      %v3488 = vpow.pop %v3487
      %v3489 = vmul.f32 %v3414, 1.442695
      %v3490 = vpow.pop %v3489
      %v3491 = vmul.f32 %v3415, 1.442695
      %v3492 = vpow.pop %v3491
      %v3493 = vmul.f32 %v3416, 1.442695
      %v3494 = vpow.pop %v3493
      %v3495 = vmul.f32 %v3417, 1.442695
      %v3496 = vpow.pop %v3495
      %v3497 = vmul.f32 %v3418, 1.442695
      %v3498 = vpow.pop %v3497
      %v3499 = vmul.f32 %v3419, 1.442695
      %v3500 = vpow.pop %v3499
      %v3501 = vmul.f32 %v3420, 1.442695
      %v3502 = vpow.pop %v3501
      %v3503 = vmul.f32 %v3421, 1.442695
      %v3504 = vpow.pop %v3503
      %v3505 = vmul.f32 %v3422, 1.442695
      %v3506 = vpow.pop %v3505
      %v3507 = vmul.f32 %v3423, 1.442695
      %v3508 = vpow.pop %v3507
      %v3509 = vmul.f32 %v3424, 1.442695
      %v3510 = vpow.pop %v3509
      %v3511 = vmul.f32 %v3425, 1.442695
      %v3512 = vpow.pop %v3511
      %v3513 = vmul.f32 %v3426, 1.442695
      %v3514 = vpow.pop %v3513
      %v3515 = vmul.f32 %v3427, 1.442695
      %v3516 = vpow.pop %v3515
      %v3517 = vmul.f32 %v3428, 1.442695
      %v3518 = vpow.pop %v3517
      %v3519 = vmul.f32 %v3429, 1.442695
      %v3520 = vpow.pop %v3519
      %v3521 = vmul.f32 %v3430, 1.442695
      %v3522 = vpow.pop %v3521
      %v3523 = vmul.f32 %v3431, 1.442695
      %v3524 = vpow.pop %v3523
      %v3525 = vmul.f32 %v3432, 1.442695
      %v3526 = vpow.pop %v3525
      %v3527 = vmul.f32 %v3433, 1.442695
      %v3528 = vpow.pop %v3527
      %v3529 = vmul.f32 %v3434, 1.442695
      %v3530 = vpow.pop %v3529
      %v3531 = vmul.f32 %v3435, 1.442695
      %v3532 = vpow.pop %v3531
      %v3533 = vmul.f32 %v3436, 1.442695
      %v3534 = vpow.pop %v3533
      %v3535 = vmul.f32 %v3437, 1.442695
      %v3536 = vpow.pop %v3535
      %v3537 = vmul.f32 %v3438, 1.442695
      %v3538 = vpow.pop %v3537
      %v3539 = vmul.f32 %v3439, 1.442695
      %v3540 = vpow.pop %v3539
      %v3541 = vmul.f32 %v3440, 1.442695
      %v3542 = vpow.pop %v3541
      %v3543 = vmul.f32 %v3441, 1.442695
      %v3544 = vpow.pop %v3543
      %v3545 = vmul.f32 %v3442, 1.442695
      %v3546 = vpow.pop %v3545
      %v3547 = vmul.f32 %v3443, 1.442695
      %v3548 = vpow.pop %v3547
      %v3549 = vmul.f32 %v3444, 1.442695
      %v3550 = vpow.pop %v3549
      %v3551 = vmul.f32 %v3445, 1.442695
      %v3552 = vpow.pop %v3551
      %v3553 = vmul.f32 %v3446, 1.442695
      %v3554 = vpow.pop %v3553
      %v3555 = vmul.f32 %v3447, 1.442695
      %v3556 = vpow.pop %v3555
      %v3557 = vmul.f32 %v3448, 1.442695
      %v3558 = vpow.pop %v3557
      %v3559 = vmul.f32 %v3449, 1.442695
      %v3560 = vpow.pop %v3559
      %v3561 = vmul.f32 %v3450, 1.442695
      %v3562 = vpow.pop %v3561
      %v3563 = vmul.f32 %v3451, 1.442695
      %v3564 = vpow.pop %v3563
      %v3565 = vmul.f32 %v3452, 1.442695
      %v3566 = vpow.pop %v3565
      %v3567 = vmul.f32 %v3453, 1.442695
      %v3568 = vpow.pop %v3567
      %v3569 = vmul.f32 %v3454, 1.442695
      %v3570 = vpow.pop %v3569
      %v3571 = vmul.f32 %v3455, 1.442695
      %v3572 = vpow.pop %v3571
      %v3573 = vmul.f32 %v3456, 1.442695
      %v3574 = vpow.pop %v3573
      %v3575 = vmul.f32 %v3457, 1.442695
      %v3576 = vpow.pop %v3575
      %v3577 = vmul.f32 %v3458, 1.442695
      %v3578 = vpow.pop %v3577
      %v3579 = vmul.f32 %v3459, 1.442695
      %v3580 = vpow.pop %v3579
      %v3581 = vmul.f32 %v3460, 1.442695
      %v3582 = vpow.pop %v3581
      %v3583 = vmul.f32 %v3461, 1.442695
      %v3584 = vpow.pop %v3583
      %v3585 = vmul.f32 %v3462, 1.442695
      %v3586 = vpow.pop %v3585
      %v3587 = vmul.f32 %v3463, 1.442695
      %v3588 = vpow.pop %v3587
      %v3589 = vmul.f32 %v3464, 1.442695
      %v3590 = vpow.pop %v3589
      %v3591 = vmul.f32 %v3465, 1.442695
      %v3592 = vpow.pop %v3591
      %v3593 = vmul.f32 %v3466, 1.442695
      %v3594 = vpow.pop %v3593
      %v3595 = vadd.f32 %v3468, %v3470
      %3596 = vadd.xlane.f32.xlu0 %v3595
      %v3597 = vpop.xlane.xlu0 %3596
      %v3598 = vadd.f32 %v3472, %v3474
      %3599 = vadd.xlane.f32.xlu0 %v3598
      %v3600 = vpop.xlane.xlu0 %3599
      %v3601 = vadd.f32 %v3476, %v3478
      %3602 = vadd.xlane.f32.xlu0 %v3601
      %v3603 = vpop.xlane.xlu0 %3602
      %v3604 = vadd.f32 %v3480, %v3482
      %3605 = vadd.xlane.f32.xlu0 %v3604
      %v3606 = vpop.xlane.xlu0 %3605
      %v3607 = vadd.f32 %v3484, %v3486
      %3608 = vadd.xlane.f32.xlu0 %v3607
      %v3609 = vpop.xlane.xlu0 %3608
      %v3610 = vadd.f32 %v3488, %v3490
      %3611 = vadd.xlane.f32.xlu0 %v3610
      %v3612 = vpop.xlane.xlu0 %3611
      %v3613 = vadd.f32 %v3492, %v3494
      %3614 = vadd.xlane.f32.xlu0 %v3613
      %v3615 = vpop.xlane.xlu0 %3614
      %v3616 = vadd.f32 %v3496, %v3498
      %3617 = vadd.xlane.f32.xlu0 %v3616
      %v3618 = vpop.xlane.xlu0 %3617
      %v3619 = vadd.f32 %v3500, %v3502
      %3620 = vadd.xlane.f32.xlu0 %v3619
      %v3621 = vpop.xlane.xlu0 %3620
      %v3622 = vadd.f32 %v3504, %v3506
      %3623 = vadd.xlane.f32.xlu0 %v3622
      %v3624 = vpop.xlane.xlu0 %3623
      %v3625 = vadd.f32 %v3508, %v3510
      %3626 = vadd.xlane.f32.xlu0 %v3625
      %v3627 = vpop.xlane.xlu0 %3626
      %v3628 = vadd.f32 %v3512, %v3514
      %3629 = vadd.xlane.f32.xlu0 %v3628
      %v3630 = vpop.xlane.xlu0 %3629
      %v3631 = vadd.f32 %v3516, %v3518
      %3632 = vadd.xlane.f32.xlu0 %v3631
      %v3633 = vpop.xlane.xlu0 %3632
      %v3634 = vadd.f32 %v3520, %v3522
      %3635 = vadd.xlane.f32.xlu0 %v3634
      %v3636 = vpop.xlane.xlu0 %3635
      %v3637 = vadd.f32 %v3524, %v3526
      %3638 = vadd.xlane.f32.xlu0 %v3637
      %v3639 = vpop.xlane.xlu0 %3638
      %v3640 = vadd.f32 %v3528, %v3530
      %3641 = vadd.xlane.f32.xlu0 %v3640
      %v3642 = vpop.xlane.xlu0 %3641
      %v3643 = vadd.f32 %v3532, %v3534
      %3644 = vadd.xlane.f32.xlu0 %v3643
      %v3645 = vpop.xlane.xlu0 %3644
      %v3646 = vadd.f32 %v3536, %v3538
      %3647 = vadd.xlane.f32.xlu0 %v3646
      %v3648 = vpop.xlane.xlu0 %3647
      %v3649 = vadd.f32 %v3540, %v3542
      %3650 = vadd.xlane.f32.xlu0 %v3649
      %v3651 = vpop.xlane.xlu0 %3650
      %v3652 = vadd.f32 %v3544, %v3546
      %3653 = vadd.xlane.f32.xlu0 %v3652
      %v3654 = vpop.xlane.xlu0 %3653
      %v3655 = vadd.f32 %v3548, %v3550
      %3656 = vadd.xlane.f32.xlu0 %v3655
      %v3657 = vpop.xlane.xlu0 %3656
      %v3658 = vadd.f32 %v3552, %v3554
      %3659 = vadd.xlane.f32.xlu0 %v3658
      %v3660 = vpop.xlane.xlu0 %3659
      %v3661 = vadd.f32 %v3556, %v3558
      %3662 = vadd.xlane.f32.xlu0 %v3661
      %v3663 = vpop.xlane.xlu0 %3662
      %v3664 = vadd.f32 %v3560, %v3562
      %3665 = vadd.xlane.f32.xlu0 %v3664
      %v3666 = vpop.xlane.xlu0 %3665
      %v3667 = vadd.f32 %v3564, %v3566
      %3668 = vadd.xlane.f32.xlu0 %v3667
      %v3669 = vpop.xlane.xlu0 %3668
      %v3670 = vadd.f32 %v3568, %v3570
      %3671 = vadd.xlane.f32.xlu0 %v3670
      %v3672 = vpop.xlane.xlu0 %3671
      %v3673 = vadd.f32 %v3572, %v3574
      %3674 = vadd.xlane.f32.xlu0 %v3673
      %v3675 = vpop.xlane.xlu0 %3674
      %v3676 = vadd.f32 %v3576, %v3578
      %3677 = vadd.xlane.f32.xlu0 %v3676
      %v3678 = vpop.xlane.xlu0 %3677
      %v3679 = vadd.f32 %v3580, %v3582
      %3680 = vadd.xlane.f32.xlu0 %v3679
      %v3681 = vpop.xlane.xlu0 %3680
      %v3682 = vadd.f32 %v3584, %v3586
      %3683 = vadd.xlane.f32.xlu0 %v3682
      %v3684 = vpop.xlane.xlu0 %3683
      %v3685 = vadd.f32 %v3588, %v3590
      %3686 = vadd.xlane.f32.xlu0 %v3685
      %v3687 = vpop.xlane.xlu0 %3686
      %v3688 = vadd.f32 %v3592, %v3594
      %3689 = vadd.xlane.f32.xlu0 %v3688
      %v3690 = vpop.xlane.xlu0 %3689
      %v3691 = vrcp.pop %v3597
      %v3692 = vrcp.pop %v3600
      %v3693 = vrcp.pop %v3603
      %v3694 = vrcp.pop %v3606
      %v3695 = vrcp.pop %v3609
      %v3696 = vrcp.pop %v3612
      %v3697 = vrcp.pop %v3615
      %v3698 = vrcp.pop %v3618
      %v3699 = vrcp.pop %v3621
      %v3700 = vrcp.pop %v3624
      %v3701 = vrcp.pop %v3627
      %v3702 = vrcp.pop %v3630
      %v3703 = vrcp.pop %v3633
      %v3704 = vrcp.pop %v3636
      %v3705 = vrcp.pop %v3639
      %v3706 = vrcp.pop %v3642
      %v3707 = vrcp.pop %v3645
      %v3708 = vrcp.pop %v3648
      %v3709 = vrcp.pop %v3651
      %v3710 = vrcp.pop %v3654
      %v3711 = vrcp.pop %v3657
      %v3712 = vrcp.pop %v3660
      %v3713 = vrcp.pop %v3663
      %v3714 = vrcp.pop %v3666
      %v3715 = vrcp.pop %v3669
      %v3716 = vrcp.pop %v3672
      %v3717 = vrcp.pop %v3675
      %v3718 = vrcp.pop %v3678
      %v3719 = vrcp.pop %v3681
      %v3720 = vrcp.pop %v3684
      %v3721 = vrcp.pop %v3687
      %v3722 = vrcp.pop %v3690
      %v3723 = vmul.f32 %v3468, %v3691
      %v3724 = vmul.f32 %v3470, %v3691
      %v3725 = vmul.f32 %v3472, %v3692
      %v3726 = vmul.f32 %v3474, %v3692
      %v3727 = vmul.f32 %v3476, %v3693
      %v3728 = vmul.f32 %v3478, %v3693
      %v3729 = vmul.f32 %v3480, %v3694
      %v3730 = vmul.f32 %v3482, %v3694
      %v3731 = vmul.f32 %v3484, %v3695
      %v3732 = vmul.f32 %v3486, %v3695
      %v3733 = vmul.f32 %v3488, %v3696
      %v3734 = vmul.f32 %v3490, %v3696
      %v3735 = vmul.f32 %v3492, %v3697
      %v3736 = vmul.f32 %v3494, %v3697
      %v3737 = vmul.f32 %v3496, %v3698
      %v3738 = vmul.f32 %v3498, %v3698
      %v3739 = vmul.f32 %v3500, %v3699
      %v3740 = vmul.f32 %v3502, %v3699
      %v3741 = vmul.f32 %v3504, %v3700
      %v3742 = vmul.f32 %v3506, %v3700
      %v3743 = vmul.f32 %v3508, %v3701
      %v3744 = vmul.f32 %v3510, %v3701
      %v3745 = vmul.f32 %v3512, %v3702
      %v3746 = vmul.f32 %v3514, %v3702
      %v3747 = vmul.f32 %v3516, %v3703
      %v3748 = vmul.f32 %v3518, %v3703
      %v3749 = vmul.f32 %v3520, %v3704
      %v3750 = vmul.f32 %v3522, %v3704
      %v3751 = vmul.f32 %v3524, %v3705
      %v3752 = vmul.f32 %v3526, %v3705
      %v3753 = vmul.f32 %v3528, %v3706
      %v3754 = vmul.f32 %v3530, %v3706
      %v3755 = vmul.f32 %v3532, %v3707
      %v3756 = vmul.f32 %v3534, %v3707
      %v3757 = vmul.f32 %v3536, %v3708
      %v3758 = vmul.f32 %v3538, %v3708
      %v3759 = vmul.f32 %v3540, %v3709
      %v3760 = vmul.f32 %v3542, %v3709
      %v3761 = vmul.f32 %v3544, %v3710
      %v3762 = vmul.f32 %v3546, %v3710
      %v3763 = vmul.f32 %v3548, %v3711
      %v3764 = vmul.f32 %v3550, %v3711
      %v3765 = vmul.f32 %v3552, %v3712
      %v3766 = vmul.f32 %v3554, %v3712
      %v3767 = vmul.f32 %v3556, %v3713
      %v3768 = vmul.f32 %v3558, %v3713
      %v3769 = vmul.f32 %v3560, %v3714
      %v3770 = vmul.f32 %v3562, %v3714
      %v3771 = vmul.f32 %v3564, %v3715
      %v3772 = vmul.f32 %v3566, %v3715
      %v3773 = vmul.f32 %v3568, %v3716
      %v3774 = vmul.f32 %v3570, %v3716
      %v3775 = vmul.f32 %v3572, %v3717
      %v3776 = vmul.f32 %v3574, %v3717
      %v3777 = vmul.f32 %v3576, %v3718
      %v3778 = vmul.f32 %v3578, %v3718
      %v3779 = vmul.f32 %v3580, %v3719
      %v3780 = vmul.f32 %v3582, %v3719
      %v3781 = vmul.f32 %v3584, %v3720
      %v3782 = vmul.f32 %v3586, %v3720
      %v3783 = vmul.f32 %v3588, %v3721
      %v3784 = vmul.f32 %v3590, %v3721
      %v3785 = vmul.f32 %v3592, %v3722
      %v3786 = vmul.f32 %v3594, %v3722
      %3787 = vmatprep.subr.mxu0 %v3754
      %3788 = vmatpush1.xpose.msra.mxu0 %v3753
      %3789 = vmatprep.subr.mxu0 %v3752
      %3790 = vmatpush1.xpose.msra.mxu0 %v3751
      %3791 = vmatprep.subr.mxu0 %v3750
      %3792 = vmatpush1.xpose.msra.mxu0 %v3749
      %3793 = vmatprep.subr.mxu0 %v3748
      %3794 = vmatpush1.xpose.msra.mxu0 %v3747
      %3795 = vmatprep.subr.mxu0 %v3746
      %3796 = vmatpush1.xpose.msra.mxu0 %v3745
      %3797 = vmatprep.subr.mxu0 %v3744
      %3798 = vmatpush1.xpose.msra.mxu0 %v3743
      %3799 = vmatprep.subr.mxu0 %v3742
      %3800 = vmatpush1.xpose.msra.mxu0 %v3741
      %3801 = vmatprep.subr.mxu0 %v3740
      %3802 = vmatpush1.xpose.msra.mxu0 %v3739
      %3803 = vmatprep.subr.mxu0 %v3738
      %3804 = vmatpush1.xpose.msra.mxu0 %v3737
      %3805 = vmatprep.subr.mxu0 %v3736
      %3806 = vmatpush1.xpose.msra.mxu0 %v3735
      %3807 = vmatprep.subr.mxu0 %v3734
      %3808 = vmatpush1.xpose.msra.mxu0 %v3733
      %3809 = vmatprep.subr.mxu0 %v3732
      %3810 = vmatpush1.xpose.msra.mxu0 %v3731
      %3811 = vmatprep.subr.mxu0 %v3730
      %3812 = vmatpush1.xpose.msra.mxu0 %v3729
      %3813 = vmatprep.subr.mxu0 %v3728
      %3814 = vmatpush1.xpose.msra.mxu0 %v3727
      %3815 = vmatprep.subr.mxu0 %v3726
      %3816 = vmatpush1.xpose.msra.mxu0 %v3725
      %3817 = vmatprep.subr.mxu0 %v3724
      %3818 = vmatpush1.xpose.msra.mxu0 %v3723
      %3819 = vmatprep.subr.mxu0 %v3786
      %3820 = vmatpush2.xpose.msra.mxu0 %v3785
      %3821 = vmatprep.subr.mxu0 %v3784
      %3822 = vmatpush2.xpose.msra.mxu0 %v3783
      %3823 = vmatprep.subr.mxu0 %v3782
      %3824 = vmatpush2.xpose.msra.mxu0 %v3781
      %3825 = vmatprep.subr.mxu0 %v3780
      %3826 = vmatpush2.xpose.msra.mxu0 %v3779
      %3827 = vmatprep.subr.mxu0 %v3778
      %3828 = vmatpush2.xpose.msra.mxu0 %v3777
      %3829 = vmatprep.subr.mxu0 %v3776
      %3830 = vmatpush2.xpose.msra.mxu0 %v3775
      %3831 = vmatprep.subr.mxu0 %v3774
      %3832 = vmatpush2.xpose.msra.mxu0 %v3773
      %3833 = vmatprep.subr.mxu0 %v3772
      %3834 = vmatpush2.xpose.msra.mxu0 %v3771
      %3835 = vmatprep.subr.mxu0 %v3770
      %3836 = vmatpush2.xpose.msra.mxu0 %v3769
      %3837 = vmatprep.subr.mxu0 %v3768
      %3838 = vmatpush2.xpose.msra.mxu0 %v3767
      %3839 = vmatprep.subr.mxu0 %v3766
      %3840 = vmatpush2.xpose.msra.mxu0 %v3765
      %3841 = vmatprep.subr.mxu0 %v3764
      %3842 = vmatpush2.xpose.msra.mxu0 %v3763
      %3843 = vmatprep.subr.mxu0 %v3762
      %3844 = vmatpush2.xpose.msra.mxu0 %v3761
      %3845 = vmatprep.subr.mxu0 %v3760
      %3846 = vmatpush2.xpose.msra.mxu0 %v3759
      %3847 = vmatprep.subr.mxu0 %v3758
      %3848 = vmatpush2.xpose.msra.mxu0 %v3757
      %3849 = vmatprep.subr.mxu0 %v3756
      %3850 = vmatpush2.xpose.msra.mxu0 %v3755
      %3851 = vmatprep.mubr.f32.mxu0 %v941
      %3852 = vmatmul.mubr.f32.gmra.mxu0 %v939
      %v3853 = vpop.f32.mrf.mxu0
      %v3854 = vadd.f32 0.0, %v3853
      %v3855 = vpop.f32.mrf.mxu0
      %v3856 = vadd.f32 0.0, %v3855
      %3857 = vdwg.mxu0
      %3858 = vst [vmem:[#allocation2 + $0x20] sm:$0xff] %v3854
      %3859 = vst [vmem:[#allocation2 + $0x28] sm:$0xff] %v3856
      %3860 = vxpose.xlu0.b32.start [1/16] %v897, 128
      %3861 = vxpose.xlu0.b32.cont [2/16] 0.0, 128
      %3862 = vxpose.xlu0.b32.cont [3/16] 0.0, 128
      %3863 = vxpose.xlu0.b32.cont [4/16] 0.0, 128
      %3864 = vxpose.xlu0.b32.cont [5/16] 0.0, 128
      %3865 = vxpose.xlu0.b32.cont [6/16] 0.0, 128
      %3866 = vxpose.xlu0.b32.cont [7/16] 0.0, 128
      %3867 = vxpose.xlu0.b32.cont [8/16] 0.0, 128
      %3868 = vxpose.xlu0.b32.cont [9/16] 0.0, 128
      %3869 = vxpose.xlu0.b32.cont [10/16] 0.0, 128
      %3870 = vxpose.xlu0.b32.cont [11/16] 0.0, 128
      %3871 = vxpose.xlu0.b32.cont [12/16] 0.0, 128
      %3872 = vxpose.xlu0.b32.cont [13/16] 0.0, 128
      %3873 = vxpose.xlu0.b32.cont [14/16] 0.0, 128
      %3874 = vxpose.xlu0.b32.cont [15/16] 0.0, 128
      %3875 = vxpose.xlu0.b32.end [16/16] 0.0, 128
      %v3876 = vpop.trf.xlu0
      %v3877 = vpop.trf.xlu0
      %v3878 = vpop.trf.xlu0
      %v3879 = vpop.trf.xlu0
      %v3880 = vpop.trf.xlu0
      %v3881 = vpop.trf.xlu0
      %v3882 = vpop.trf.xlu0
      %v3883 = vpop.trf.xlu0
      %v3884 = vpop.trf.xlu0
      %v3885 = vpop.trf.xlu0
      %v3886 = vpop.trf.xlu0
      %v3887 = vpop.trf.xlu0
      %v3888 = vpop.trf.xlu0
      %v3889 = vpop.trf.xlu0
      %v3890 = vpop.trf.xlu0
      %v3891 = vpop.trf.xlu0
      %3892 = vxpose.xlu0.b32.start [1/16] %v899, 128
      %3893 = vxpose.xlu0.b32.cont [2/16] 0.0, 128
      %3894 = vxpose.xlu0.b32.cont [3/16] 0.0, 128
      %3895 = vxpose.xlu0.b32.cont [4/16] 0.0, 128
      %3896 = vxpose.xlu0.b32.cont [5/16] 0.0, 128
      %3897 = vxpose.xlu0.b32.cont [6/16] 0.0, 128
      %3898 = vxpose.xlu0.b32.cont [7/16] 0.0, 128
      %3899 = vxpose.xlu0.b32.cont [8/16] 0.0, 128
      %3900 = vxpose.xlu0.b32.cont [9/16] 0.0, 128
      %3901 = vxpose.xlu0.b32.cont [10/16] 0.0, 128
      %3902 = vxpose.xlu0.b32.cont [11/16] 0.0, 128
      %3903 = vxpose.xlu0.b32.cont [12/16] 0.0, 128
      %3904 = vxpose.xlu0.b32.cont [13/16] 0.0, 128
      %3905 = vxpose.xlu0.b32.cont [14/16] 0.0, 128
      %3906 = vxpose.xlu0.b32.cont [15/16] 0.0, 128
      %3907 = vxpose.xlu0.b32.end [16/16] 0.0, 128
      %v3908 = vpop.trf.xlu0
      %v3909 = vpop.trf.xlu0
      %v3910 = vpop.trf.xlu0
      %v3911 = vpop.trf.xlu0
      %v3912 = vpop.trf.xlu0
      %v3913 = vpop.trf.xlu0
      %v3914 = vpop.trf.xlu0
      %v3915 = vpop.trf.xlu0
      %v3916 = vpop.trf.xlu0
      %v3917 = vpop.trf.xlu0
      %v3918 = vpop.trf.xlu0
      %v3919 = vpop.trf.xlu0
      %v3920 = vpop.trf.xlu0
      %v3921 = vpop.trf.xlu0
      %v3922 = vpop.trf.xlu0
      %v3923 = vpop.trf.xlu0
      %v3925 = vsel %vm1013, %v3876, 0
      %v3928 = vsel %vm1013, %v3877, 0
      %v3931 = vsel %vm1013, %v3878, 0
      %v3934 = vsel %vm1013, %v3879, 0
      %v3937 = vsel %vm1013, %v3880, 0
      %v3940 = vsel %vm1013, %v3881, 0
      %v3943 = vsel %vm1013, %v3882, 0
      %v3946 = vsel %vm1013, %v3883, 0
      %v3949 = vsel %vm1013, %v3884, 0
      %v3952 = vsel %vm1013, %v3885, 0
      %v3955 = vsel %vm1013, %v3886, 0
      %v3958 = vsel %vm1013, %v3887, 0
      %v3961 = vsel %vm1013, %v3888, 0
      %v3964 = vsel %vm1013, %v3889, 0
      %v3967 = vsel %vm1013, %v3890, 0
      %v3970 = vsel %vm1013, %v3891, 0
      %v3973 = vsel %vm1013, %v3908, 0
      %v3976 = vsel %vm1013, %v3909, 0
      %v3979 = vsel %vm1013, %v3910, 0
      %v3982 = vsel %vm1013, %v3911, 0
      %v3985 = vsel %vm1013, %v3912, 0
      %v3988 = vsel %vm1013, %v3913, 0
      %v3991 = vsel %vm1013, %v3914, 0
      %v3994 = vsel %vm1013, %v3915, 0
      %v3997 = vsel %vm1013, %v3916, 0
      %v4000 = vsel %vm1013, %v3917, 0
      %v4003 = vsel %vm1013, %v3918, 0
      %v4006 = vsel %vm1013, %v3919, 0
      %v4009 = vsel %vm1013, %v3920, 0
      %v4012 = vsel %vm1013, %v3921, 0
      %v4015 = vsel %vm1013, %v3922, 0
      %v4018 = vsel %vm1013, %v3923, 0
      %4020 = vmatprep.subr.mxu0 0.0
      %4021 = vmatpush1.msra.mxu0 0.0
      %4022 = vmatprep.subr.mxu0 0.0
      %4023 = vmatpush1.msra.mxu0 0.0
      %4024 = vmatprep.subr.mxu0 0.0
      %4025 = vmatpush1.msra.mxu0 0.0
      %4026 = vmatprep.subr.mxu0 0.0
      %4027 = vmatpush1.msra.mxu0 0.0
      %4028 = vmatprep.subr.mxu0 0.0
      %4029 = vmatpush1.msra.mxu0 0.0
      %4030 = vmatprep.subr.mxu0 0.0
      %4031 = vmatpush1.msra.mxu0 0.0
      %4032 = vmatprep.subr.mxu0 0.0
      %4033 = vmatpush1.msra.mxu0 0.0
      %4034 = vmatprep.subr.mxu0 0.0
      %4035 = vmatpush1.msra.mxu0 0.0
      %4036 = vmatprep.subr.mxu0 0.0
      %4037 = vmatpush1.msra.mxu0 0.0
      %4038 = vmatprep.subr.mxu0 0.0
      %4039 = vmatpush1.msra.mxu0 0.0
      %4040 = vmatprep.subr.mxu0 0.0
      %4041 = vmatpush1.msra.mxu0 0.0
      %4042 = vmatprep.subr.mxu0 0.0
      %4043 = vmatpush1.msra.mxu0 0.0
      %4044 = vmatprep.subr.mxu0 0.0
      %4045 = vmatpush1.msra.mxu0 0.0
      %4046 = vmatprep.subr.mxu0 0.0
      %4047 = vmatpush1.msra.mxu0 0.0
      %4048 = vmatprep.subr.mxu0 0.0
      %4049 = vmatpush1.msra.mxu0 0.0
      %4050 = vmatprep.subr.mxu0 %v923
      %4051 = vmatpush1.msra.mxu0 %v921
      %4052 = vmatprep.subr.mxu0 0.0
      %4053 = vmatpush2.msra.mxu0 0.0
      %4054 = vmatprep.subr.mxu0 0.0
      %4055 = vmatpush2.msra.mxu0 0.0
      %4056 = vmatprep.subr.mxu0 0.0
      %4057 = vmatpush2.msra.mxu0 0.0
      %4058 = vmatprep.subr.mxu0 0.0
      %4059 = vmatpush2.msra.mxu0 0.0
      %4060 = vmatprep.subr.mxu0 0.0
      %4061 = vmatpush2.msra.mxu0 0.0
      %4062 = vmatprep.subr.mxu0 0.0
      %4063 = vmatpush2.msra.mxu0 0.0
      %4064 = vmatprep.subr.mxu0 0.0
      %4065 = vmatpush2.msra.mxu0 0.0
      %4066 = vmatprep.subr.mxu0 0.0
      %4067 = vmatpush2.msra.mxu0 0.0
      %4068 = vmatprep.subr.mxu0 0.0
      %4069 = vmatpush2.msra.mxu0 0.0
      %4070 = vmatprep.subr.mxu0 0.0
      %4071 = vmatpush2.msra.mxu0 0.0
      %4072 = vmatprep.subr.mxu0 0.0
      %4073 = vmatpush2.msra.mxu0 0.0
      %4074 = vmatprep.subr.mxu0 0.0
      %4075 = vmatpush2.msra.mxu0 0.0
      %4076 = vmatprep.subr.mxu0 0.0
      %4077 = vmatpush2.msra.mxu0 0.0
      %4078 = vmatprep.subr.mxu0 0.0
      %4079 = vmatpush2.msra.mxu0 0.0
      %4080 = vmatprep.subr.mxu0 0.0
      %4081 = vmatpush2.msra.mxu0 0.0
      %4082 = vmatprep.subr.mxu0 0.0
      %4083 = vmatpush2.msra.mxu0 0.0
      %4084 = vmatprep.mubr.f32.mxu0 0.0
      %4085 = vmatmul.mubr.f32.gmra.mxu0 %v3925
      %v4086 = vpop.f32.mrf.mxu0
      %v4087 = vadd.f32 0.0, %v4086
      %v4088 = vpop.f32.mrf.mxu0
      %v4089 = vadd.f32 0.0, %v4088
      %4090 = vmatprep.mubr.f32.mxu0 0.0
      %4091 = vmatmul.mubr.f32.gmra.mxu0 %v3928
      %v4092 = vpop.f32.mrf.mxu0
      %v4093 = vadd.f32 0.0, %v4092
      %v4094 = vpop.f32.mrf.mxu0
      %v4095 = vadd.f32 0.0, %v4094
      %4096 = vmatprep.mubr.f32.mxu0 0.0
      %4097 = vmatmul.mubr.f32.gmra.mxu0 %v3931
      %v4098 = vpop.f32.mrf.mxu0
      %v4099 = vadd.f32 0.0, %v4098
      %v4100 = vpop.f32.mrf.mxu0
      %v4101 = vadd.f32 0.0, %v4100
      %4102 = vmatprep.mubr.f32.mxu0 0.0
      %4103 = vmatmul.mubr.f32.gmra.mxu0 %v3934
      %v4104 = vpop.f32.mrf.mxu0
      %v4105 = vadd.f32 0.0, %v4104
      %v4106 = vpop.f32.mrf.mxu0
      %v4107 = vadd.f32 0.0, %v4106
      %4108 = vmatprep.mubr.f32.mxu0 0.0
      %4109 = vmatmul.mubr.f32.gmra.mxu0 %v3937
      %v4110 = vpop.f32.mrf.mxu0
      %v4111 = vadd.f32 0.0, %v4110
      %v4112 = vpop.f32.mrf.mxu0
      %v4113 = vadd.f32 0.0, %v4112
      %4114 = vmatprep.mubr.f32.mxu0 0.0
      %4115 = vmatmul.mubr.f32.gmra.mxu0 %v3940
      %v4116 = vpop.f32.mrf.mxu0
      %v4117 = vadd.f32 0.0, %v4116
      %v4118 = vpop.f32.mrf.mxu0
      %v4119 = vadd.f32 0.0, %v4118
      %4120 = vmatprep.mubr.f32.mxu0 0.0
      %4121 = vmatmul.mubr.f32.gmra.mxu0 %v3943
      %v4122 = vpop.f32.mrf.mxu0
      %v4123 = vadd.f32 0.0, %v4122
      %v4124 = vpop.f32.mrf.mxu0
      %v4125 = vadd.f32 0.0, %v4124
      %4126 = vmatprep.mubr.f32.mxu0 0.0
      %4127 = vmatmul.mubr.f32.gmra.mxu0 %v3946
      %v4128 = vpop.f32.mrf.mxu0
      %v4129 = vadd.f32 0.0, %v4128
      %v4130 = vpop.f32.mrf.mxu0
      %v4131 = vadd.f32 0.0, %v4130
      %4132 = vmatprep.mubr.f32.mxu0 0.0
      %4133 = vmatmul.mubr.f32.gmra.mxu0 %v3949
      %v4134 = vpop.f32.mrf.mxu0
      %v4135 = vadd.f32 0.0, %v4134
      %v4136 = vpop.f32.mrf.mxu0
      %v4137 = vadd.f32 0.0, %v4136
      %4138 = vmatprep.mubr.f32.mxu0 0.0
      %4139 = vmatmul.mubr.f32.gmra.mxu0 %v3952
      %v4140 = vpop.f32.mrf.mxu0
      %v4141 = vadd.f32 0.0, %v4140
      %v4142 = vpop.f32.mrf.mxu0
      %v4143 = vadd.f32 0.0, %v4142
      %4144 = vmatprep.mubr.f32.mxu0 0.0
      %4145 = vmatmul.mubr.f32.gmra.mxu0 %v3955
      %v4146 = vpop.f32.mrf.mxu0
      %v4147 = vadd.f32 0.0, %v4146
      %v4148 = vpop.f32.mrf.mxu0
      %v4149 = vadd.f32 0.0, %v4148
      %4150 = vmatprep.mubr.f32.mxu0 0.0
      %4151 = vmatmul.mubr.f32.gmra.mxu0 %v3958
      %v4152 = vpop.f32.mrf.mxu0
      %v4153 = vadd.f32 0.0, %v4152
      %v4154 = vpop.f32.mrf.mxu0
      %v4155 = vadd.f32 0.0, %v4154
      %4156 = vmatprep.mubr.f32.mxu0 0.0
      %4157 = vmatmul.mubr.f32.gmra.mxu0 %v3961
      %v4158 = vpop.f32.mrf.mxu0
      %v4159 = vadd.f32 0.0, %v4158
      %v4160 = vpop.f32.mrf.mxu0
      %v4161 = vadd.f32 0.0, %v4160
      %4162 = vmatprep.mubr.f32.mxu0 0.0
      %4163 = vmatmul.mubr.f32.gmra.mxu0 %v3964
      %v4164 = vpop.f32.mrf.mxu0
      %v4165 = vadd.f32 0.0, %v4164
      %v4166 = vpop.f32.mrf.mxu0
      %v4167 = vadd.f32 0.0, %v4166
      %4168 = vmatprep.mubr.f32.mxu0 0.0
      %4169 = vmatmul.mubr.f32.gmra.mxu0 %v3967
      %v4170 = vpop.f32.mrf.mxu0
      %v4171 = vadd.f32 0.0, %v4170
      %v4172 = vpop.f32.mrf.mxu0
      %v4173 = vadd.f32 0.0, %v4172
      %4174 = vmatprep.mubr.f32.mxu0 0.0
      %4175 = vmatmul.mubr.f32.gmra.mxu0 %v3970
      %v4176 = vpop.f32.mrf.mxu0
      %v4177 = vadd.f32 0.0, %v4176
      %v4178 = vpop.f32.mrf.mxu0
      %v4179 = vadd.f32 0.0, %v4178
      %4180 = vmatprep.mubr.f32.mxu0 0.0
      %4181 = vmatmul.mubr.f32.gmra.mxu0 %v3973
      %v4182 = vpop.f32.mrf.mxu0
      %v4183 = vadd.f32 0.0, %v4182
      %v4184 = vpop.f32.mrf.mxu0
      %v4185 = vadd.f32 0.0, %v4184
      %4186 = vmatprep.mubr.f32.mxu0 0.0
      %4187 = vmatmul.mubr.f32.gmra.mxu0 %v3976
      %v4188 = vpop.f32.mrf.mxu0
      %v4189 = vadd.f32 0.0, %v4188
      %v4190 = vpop.f32.mrf.mxu0
      %v4191 = vadd.f32 0.0, %v4190
      %4192 = vmatprep.mubr.f32.mxu0 0.0
      %4193 = vmatmul.mubr.f32.gmra.mxu0 %v3979
      %v4194 = vpop.f32.mrf.mxu0
      %v4195 = vadd.f32 0.0, %v4194
      %v4196 = vpop.f32.mrf.mxu0
      %v4197 = vadd.f32 0.0, %v4196
      %4198 = vmatprep.mubr.f32.mxu0 0.0
      %4199 = vmatmul.mubr.f32.gmra.mxu0 %v3982
      %v4200 = vpop.f32.mrf.mxu0
      %v4201 = vadd.f32 0.0, %v4200
      %v4202 = vpop.f32.mrf.mxu0
      %v4203 = vadd.f32 0.0, %v4202
      %4204 = vmatprep.mubr.f32.mxu0 0.0
      %4205 = vmatmul.mubr.f32.gmra.mxu0 %v3985
      %v4206 = vpop.f32.mrf.mxu0
      %v4207 = vadd.f32 0.0, %v4206
      %v4208 = vpop.f32.mrf.mxu0
      %v4209 = vadd.f32 0.0, %v4208
      %4210 = vmatprep.mubr.f32.mxu0 0.0
      %4211 = vmatmul.mubr.f32.gmra.mxu0 %v3988
      %v4212 = vpop.f32.mrf.mxu0
      %v4213 = vadd.f32 0.0, %v4212
      %v4214 = vpop.f32.mrf.mxu0
      %v4215 = vadd.f32 0.0, %v4214
      %4216 = vmatprep.mubr.f32.mxu0 0.0
      %4217 = vmatmul.mubr.f32.gmra.mxu0 %v3991
      %v4218 = vpop.f32.mrf.mxu0
      %v4219 = vadd.f32 0.0, %v4218
      %v4220 = vpop.f32.mrf.mxu0
      %v4221 = vadd.f32 0.0, %v4220
      %4222 = vmatprep.mubr.f32.mxu0 0.0
      %4223 = vmatmul.mubr.f32.gmra.mxu0 %v3994
      %v4224 = vpop.f32.mrf.mxu0
      %v4225 = vadd.f32 0.0, %v4224
      %v4226 = vpop.f32.mrf.mxu0
      %v4227 = vadd.f32 0.0, %v4226
      %4228 = vmatprep.mubr.f32.mxu0 0.0
      %4229 = vmatmul.mubr.f32.gmra.mxu0 %v3997
      %v4230 = vpop.f32.mrf.mxu0
      %v4231 = vadd.f32 0.0, %v4230
      %v4232 = vpop.f32.mrf.mxu0
      %v4233 = vadd.f32 0.0, %v4232
      %4234 = vmatprep.mubr.f32.mxu0 0.0
      %4235 = vmatmul.mubr.f32.gmra.mxu0 %v4000
      %v4236 = vpop.f32.mrf.mxu0
      %v4237 = vadd.f32 0.0, %v4236
      %v4238 = vpop.f32.mrf.mxu0
      %v4239 = vadd.f32 0.0, %v4238
      %4240 = vmatprep.mubr.f32.mxu0 0.0
      %4241 = vmatmul.mubr.f32.gmra.mxu0 %v4003
      %v4242 = vpop.f32.mrf.mxu0
      %v4243 = vadd.f32 0.0, %v4242
      %v4244 = vpop.f32.mrf.mxu0
      %v4245 = vadd.f32 0.0, %v4244
      %4246 = vmatprep.mubr.f32.mxu0 0.0
      %4247 = vmatmul.mubr.f32.gmra.mxu0 %v4006
      %v4248 = vpop.f32.mrf.mxu0
      %v4249 = vadd.f32 0.0, %v4248
      %v4250 = vpop.f32.mrf.mxu0
      %v4251 = vadd.f32 0.0, %v4250
      %4252 = vmatprep.mubr.f32.mxu0 0.0
      %4253 = vmatmul.mubr.f32.gmra.mxu0 %v4009
      %v4254 = vpop.f32.mrf.mxu0
      %v4255 = vadd.f32 0.0, %v4254
      %v4256 = vpop.f32.mrf.mxu0
      %v4257 = vadd.f32 0.0, %v4256
      %4258 = vmatprep.mubr.f32.mxu0 0.0
      %4259 = vmatmul.mubr.f32.gmra.mxu0 %v4012
      %v4260 = vpop.f32.mrf.mxu0
      %v4261 = vadd.f32 0.0, %v4260
      %v4262 = vpop.f32.mrf.mxu0
      %v4263 = vadd.f32 0.0, %v4262
      %4264 = vmatprep.mubr.f32.mxu0 0.0
      %4265 = vmatmul.mubr.f32.gmra.mxu0 %v4015
      %v4266 = vpop.f32.mrf.mxu0
      %v4267 = vadd.f32 0.0, %v4266
      %v4268 = vpop.f32.mrf.mxu0
      %v4269 = vadd.f32 0.0, %v4268
      %4270 = vmatprep.mubr.f32.mxu0 0.0
      %4271 = vmatmul.mubr.f32.gmra.mxu0 %v4018
      %v4272 = vpop.f32.mrf.mxu0
      %v4273 = vadd.f32 0.0, %v4272
      %v4274 = vpop.f32.mrf.mxu0
      %v4275 = vadd.f32 0.0, %v4274
      %4276 = vdwg.mxu0
      %v4277 = vmax.f32 %v4087, %v4089
      %4278 = vmax.xlane.f32.xlu0 %v4277
      %v4279 = vpop.xlane.xlu0 %4278
      %v4280 = vmax.f32 %v4093, %v4095
      %4281 = vmax.xlane.f32.xlu0 %v4280
      %v4282 = vpop.xlane.xlu0 %4281
      %v4283 = vmax.f32 %v4099, %v4101
      %4284 = vmax.xlane.f32.xlu0 %v4283
      %v4285 = vpop.xlane.xlu0 %4284
      %v4286 = vmax.f32 %v4105, %v4107
      %4287 = vmax.xlane.f32.xlu0 %v4286
      %v4288 = vpop.xlane.xlu0 %4287
      %v4289 = vmax.f32 %v4111, %v4113
      %4290 = vmax.xlane.f32.xlu0 %v4289
      %v4291 = vpop.xlane.xlu0 %4290
      %v4292 = vmax.f32 %v4117, %v4119
      %4293 = vmax.xlane.f32.xlu0 %v4292
      %v4294 = vpop.xlane.xlu0 %4293
      %v4295 = vmax.f32 %v4123, %v4125
      %4296 = vmax.xlane.f32.xlu0 %v4295
      %v4297 = vpop.xlane.xlu0 %4296
      %v4298 = vmax.f32 %v4129, %v4131
      %4299 = vmax.xlane.f32.xlu0 %v4298
      %v4300 = vpop.xlane.xlu0 %4299
      %v4301 = vmax.f32 %v4135, %v4137
      %4302 = vmax.xlane.f32.xlu0 %v4301
      %v4303 = vpop.xlane.xlu0 %4302
      %v4304 = vmax.f32 %v4141, %v4143
      %4305 = vmax.xlane.f32.xlu0 %v4304
      %v4306 = vpop.xlane.xlu0 %4305
      %v4307 = vmax.f32 %v4147, %v4149
      %4308 = vmax.xlane.f32.xlu0 %v4307
      %v4309 = vpop.xlane.xlu0 %4308
      %v4310 = vmax.f32 %v4153, %v4155
      %4311 = vmax.xlane.f32.xlu0 %v4310
      %v4312 = vpop.xlane.xlu0 %4311
      %v4313 = vmax.f32 %v4159, %v4161
      %4314 = vmax.xlane.f32.xlu0 %v4313
      %v4315 = vpop.xlane.xlu0 %4314
      %v4316 = vmax.f32 %v4165, %v4167
      %4317 = vmax.xlane.f32.xlu0 %v4316
      %v4318 = vpop.xlane.xlu0 %4317
      %v4319 = vmax.f32 %v4171, %v4173
      %4320 = vmax.xlane.f32.xlu0 %v4319
      %v4321 = vpop.xlane.xlu0 %4320
      %v4322 = vmax.f32 %v4177, %v4179
      %4323 = vmax.xlane.f32.xlu0 %v4322
      %v4324 = vpop.xlane.xlu0 %4323
      %v4325 = vmax.f32 %v4183, %v4185
      %4326 = vmax.xlane.f32.xlu0 %v4325
      %v4327 = vpop.xlane.xlu0 %4326
      %v4328 = vmax.f32 %v4189, %v4191
      %4329 = vmax.xlane.f32.xlu0 %v4328
      %v4330 = vpop.xlane.xlu0 %4329
      %v4331 = vmax.f32 %v4195, %v4197
      %4332 = vmax.xlane.f32.xlu0 %v4331
      %v4333 = vpop.xlane.xlu0 %4332
      %v4334 = vmax.f32 %v4201, %v4203
      %4335 = vmax.xlane.f32.xlu0 %v4334
      %v4336 = vpop.xlane.xlu0 %4335
      %v4337 = vmax.f32 %v4207, %v4209
      %4338 = vmax.xlane.f32.xlu0 %v4337
      %v4339 = vpop.xlane.xlu0 %4338
      %v4340 = vmax.f32 %v4213, %v4215
      %4341 = vmax.xlane.f32.xlu0 %v4340
      %v4342 = vpop.xlane.xlu0 %4341
      %v4343 = vmax.f32 %v4219, %v4221
      %4344 = vmax.xlane.f32.xlu0 %v4343
      %v4345 = vpop.xlane.xlu0 %4344
      %v4346 = vmax.f32 %v4225, %v4227
      %4347 = vmax.xlane.f32.xlu0 %v4346
      %v4348 = vpop.xlane.xlu0 %4347
      %v4349 = vmax.f32 %v4231, %v4233
      %4350 = vmax.xlane.f32.xlu0 %v4349
      %v4351 = vpop.xlane.xlu0 %4350
      %v4352 = vmax.f32 %v4237, %v4239
      %4353 = vmax.xlane.f32.xlu0 %v4352
      %v4354 = vpop.xlane.xlu0 %4353
      %v4355 = vmax.f32 %v4243, %v4245
      %4356 = vmax.xlane.f32.xlu0 %v4355
      %v4357 = vpop.xlane.xlu0 %4356
      %v4358 = vmax.f32 %v4249, %v4251
      %4359 = vmax.xlane.f32.xlu0 %v4358
      %v4360 = vpop.xlane.xlu0 %4359
      %v4361 = vmax.f32 %v4255, %v4257
      %4362 = vmax.xlane.f32.xlu0 %v4361
      %v4363 = vpop.xlane.xlu0 %4362
      %v4364 = vmax.f32 %v4261, %v4263
      %4365 = vmax.xlane.f32.xlu0 %v4364
      %v4366 = vpop.xlane.xlu0 %4365
      %v4367 = vmax.f32 %v4267, %v4269
      %4368 = vmax.xlane.f32.xlu0 %v4367
      %v4369 = vpop.xlane.xlu0 %4368
      %v4370 = vmax.f32 %v4273, %v4275
      %4371 = vmax.xlane.f32.xlu0 %v4370
      %v4372 = vpop.xlane.xlu0 %4371
      %v4373 = vsub.f32 %v4087, %v4279
      %v4374 = vsub.f32 %v4089, %v4279
      %v4375 = vsub.f32 %v4093, %v4282
      %v4376 = vsub.f32 %v4095, %v4282
      %v4377 = vsub.f32 %v4099, %v4285
      %v4378 = vsub.f32 %v4101, %v4285
      %v4379 = vsub.f32 %v4105, %v4288
      %v4380 = vsub.f32 %v4107, %v4288
      %v4381 = vsub.f32 %v4111, %v4291
      %v4382 = vsub.f32 %v4113, %v4291
      %v4383 = vsub.f32 %v4117, %v4294
      %v4384 = vsub.f32 %v4119, %v4294
      %v4385 = vsub.f32 %v4123, %v4297
      %v4386 = vsub.f32 %v4125, %v4297
      %v4387 = vsub.f32 %v4129, %v4300
      %v4388 = vsub.f32 %v4131, %v4300
      %v4389 = vsub.f32 %v4135, %v4303
      %v4390 = vsub.f32 %v4137, %v4303
      %v4391 = vsub.f32 %v4141, %v4306
      %v4392 = vsub.f32 %v4143, %v4306
      %v4393 = vsub.f32 %v4147, %v4309
      %v4394 = vsub.f32 %v4149, %v4309
      %v4395 = vsub.f32 %v4153, %v4312
      %v4396 = vsub.f32 %v4155, %v4312
      %v4397 = vsub.f32 %v4159, %v4315
      %v4398 = vsub.f32 %v4161, %v4315
      %v4399 = vsub.f32 %v4165, %v4318
      %v4400 = vsub.f32 %v4167, %v4318
      %v4401 = vsub.f32 %v4171, %v4321
      %v4402 = vsub.f32 %v4173, %v4321
      %v4403 = vsub.f32 %v4177, %v4324
      %v4404 = vsub.f32 %v4179, %v4324
      %v4405 = vsub.f32 %v4183, %v4327
      %v4406 = vsub.f32 %v4185, %v4327
      %v4407 = vsub.f32 %v4189, %v4330
      %v4408 = vsub.f32 %v4191, %v4330
      %v4409 = vsub.f32 %v4195, %v4333
      %v4410 = vsub.f32 %v4197, %v4333
      %v4411 = vsub.f32 %v4201, %v4336
      %v4412 = vsub.f32 %v4203, %v4336
      %v4413 = vsub.f32 %v4207, %v4339
      %v4414 = vsub.f32 %v4209, %v4339
      %v4415 = vsub.f32 %v4213, %v4342
      %v4416 = vsub.f32 %v4215, %v4342
      %v4417 = vsub.f32 %v4219, %v4345
      %v4418 = vsub.f32 %v4221, %v4345
      %v4419 = vsub.f32 %v4225, %v4348
      %v4420 = vsub.f32 %v4227, %v4348
      %v4421 = vsub.f32 %v4231, %v4351
      %v4422 = vsub.f32 %v4233, %v4351
      %v4423 = vsub.f32 %v4237, %v4354
      %v4424 = vsub.f32 %v4239, %v4354
      %v4425 = vsub.f32 %v4243, %v4357
      %v4426 = vsub.f32 %v4245, %v4357
      %v4427 = vsub.f32 %v4249, %v4360
      %v4428 = vsub.f32 %v4251, %v4360
      %v4429 = vsub.f32 %v4255, %v4363
      %v4430 = vsub.f32 %v4257, %v4363
      %v4431 = vsub.f32 %v4261, %v4366
      %v4432 = vsub.f32 %v4263, %v4366
      %v4433 = vsub.f32 %v4267, %v4369
      %v4434 = vsub.f32 %v4269, %v4369
      %v4435 = vsub.f32 %v4273, %v4372
      %v4436 = vsub.f32 %v4275, %v4372
      %v4437 = vmul.f32 %v4373, 1.442695
      %v4438 = vpow.pop %v4437
      %v4439 = vmul.f32 %v4374, 1.442695
      %v4440 = vpow.pop %v4439
      %v4441 = vmul.f32 %v4375, 1.442695
      %v4442 = vpow.pop %v4441
      %v4443 = vmul.f32 %v4376, 1.442695
      %v4444 = vpow.pop %v4443
      %v4445 = vmul.f32 %v4377, 1.442695
      %v4446 = vpow.pop %v4445
      %v4447 = vmul.f32 %v4378, 1.442695
      %v4448 = vpow.pop %v4447
      %v4449 = vmul.f32 %v4379, 1.442695
      %v4450 = vpow.pop %v4449
      %v4451 = vmul.f32 %v4380, 1.442695
      %v4452 = vpow.pop %v4451
      %v4453 = vmul.f32 %v4381, 1.442695
      %v4454 = vpow.pop %v4453
      %v4455 = vmul.f32 %v4382, 1.442695
      %v4456 = vpow.pop %v4455
      %v4457 = vmul.f32 %v4383, 1.442695
      %v4458 = vpow.pop %v4457
      %v4459 = vmul.f32 %v4384, 1.442695
      %v4460 = vpow.pop %v4459
      %v4461 = vmul.f32 %v4385, 1.442695
      %v4462 = vpow.pop %v4461
      %v4463 = vmul.f32 %v4386, 1.442695
      %v4464 = vpow.pop %v4463
      %v4465 = vmul.f32 %v4387, 1.442695
      %v4466 = vpow.pop %v4465
      %v4467 = vmul.f32 %v4388, 1.442695
      %v4468 = vpow.pop %v4467
      %v4469 = vmul.f32 %v4389, 1.442695
      %v4470 = vpow.pop %v4469
      %v4471 = vmul.f32 %v4390, 1.442695
      %v4472 = vpow.pop %v4471
      %v4473 = vmul.f32 %v4391, 1.442695
      %v4474 = vpow.pop %v4473
      %v4475 = vmul.f32 %v4392, 1.442695
      %v4476 = vpow.pop %v4475
      %v4477 = vmul.f32 %v4393, 1.442695
      %v4478 = vpow.pop %v4477
      %v4479 = vmul.f32 %v4394, 1.442695
      %v4480 = vpow.pop %v4479
      %v4481 = vmul.f32 %v4395, 1.442695
      %v4482 = vpow.pop %v4481
      %v4483 = vmul.f32 %v4396, 1.442695
      %v4484 = vpow.pop %v4483
      %v4485 = vmul.f32 %v4397, 1.442695
      %v4486 = vpow.pop %v4485
      %v4487 = vmul.f32 %v4398, 1.442695
      %v4488 = vpow.pop %v4487
      %v4489 = vmul.f32 %v4399, 1.442695
      %v4490 = vpow.pop %v4489
      %v4491 = vmul.f32 %v4400, 1.442695
      %v4492 = vpow.pop %v4491
      %v4493 = vmul.f32 %v4401, 1.442695
      %v4494 = vpow.pop %v4493
      %v4495 = vmul.f32 %v4402, 1.442695
      %v4496 = vpow.pop %v4495
      %v4497 = vmul.f32 %v4403, 1.442695
      %v4498 = vpow.pop %v4497
      %v4499 = vmul.f32 %v4404, 1.442695
      %v4500 = vpow.pop %v4499
      %v4501 = vmul.f32 %v4405, 1.442695
      %v4502 = vpow.pop %v4501
      %v4503 = vmul.f32 %v4406, 1.442695
      %v4504 = vpow.pop %v4503
      %v4505 = vmul.f32 %v4407, 1.442695
      %v4506 = vpow.pop %v4505
      %v4507 = vmul.f32 %v4408, 1.442695
      %v4508 = vpow.pop %v4507
      %v4509 = vmul.f32 %v4409, 1.442695
      %v4510 = vpow.pop %v4509
      %v4511 = vmul.f32 %v4410, 1.442695
      %v4512 = vpow.pop %v4511
      %v4513 = vmul.f32 %v4411, 1.442695
      %v4514 = vpow.pop %v4513
      %v4515 = vmul.f32 %v4412, 1.442695
      %v4516 = vpow.pop %v4515
      %v4517 = vmul.f32 %v4413, 1.442695
      %v4518 = vpow.pop %v4517
      %v4519 = vmul.f32 %v4414, 1.442695
      %v4520 = vpow.pop %v4519
      %v4521 = vmul.f32 %v4415, 1.442695
      %v4522 = vpow.pop %v4521
      %v4523 = vmul.f32 %v4416, 1.442695
      %v4524 = vpow.pop %v4523
      %v4525 = vmul.f32 %v4417, 1.442695
      %v4526 = vpow.pop %v4525
      %v4527 = vmul.f32 %v4418, 1.442695
      %v4528 = vpow.pop %v4527
      %v4529 = vmul.f32 %v4419, 1.442695
      %v4530 = vpow.pop %v4529
      %v4531 = vmul.f32 %v4420, 1.442695
      %v4532 = vpow.pop %v4531
      %v4533 = vmul.f32 %v4421, 1.442695
      %v4534 = vpow.pop %v4533
      %v4535 = vmul.f32 %v4422, 1.442695
      %v4536 = vpow.pop %v4535
      %v4537 = vmul.f32 %v4423, 1.442695
      %v4538 = vpow.pop %v4537
      %v4539 = vmul.f32 %v4424, 1.442695
      %v4540 = vpow.pop %v4539
      %v4541 = vmul.f32 %v4425, 1.442695
      %v4542 = vpow.pop %v4541
      %v4543 = vmul.f32 %v4426, 1.442695
      %v4544 = vpow.pop %v4543
      %v4545 = vmul.f32 %v4427, 1.442695
      %v4546 = vpow.pop %v4545
      %v4547 = vmul.f32 %v4428, 1.442695
      %v4548 = vpow.pop %v4547
      %v4549 = vmul.f32 %v4429, 1.442695
      %v4550 = vpow.pop %v4549
      %v4551 = vmul.f32 %v4430, 1.442695
      %v4552 = vpow.pop %v4551
      %v4553 = vmul.f32 %v4431, 1.442695
      %v4554 = vpow.pop %v4553
      %v4555 = vmul.f32 %v4432, 1.442695
      %v4556 = vpow.pop %v4555
      %v4557 = vmul.f32 %v4433, 1.442695
      %v4558 = vpow.pop %v4557
      %v4559 = vmul.f32 %v4434, 1.442695
      %v4560 = vpow.pop %v4559
      %v4561 = vmul.f32 %v4435, 1.442695
      %v4562 = vpow.pop %v4561
      %v4563 = vmul.f32 %v4436, 1.442695
      %v4564 = vpow.pop %v4563
      %v4565 = vadd.f32 %v4438, %v4440
      %4566 = vadd.xlane.f32.xlu0 %v4565
      %v4567 = vpop.xlane.xlu0 %4566
      %v4568 = vadd.f32 %v4442, %v4444
      %4569 = vadd.xlane.f32.xlu0 %v4568
      %v4570 = vpop.xlane.xlu0 %4569
      %v4571 = vadd.f32 %v4446, %v4448
      %4572 = vadd.xlane.f32.xlu0 %v4571
      %v4573 = vpop.xlane.xlu0 %4572
      %v4574 = vadd.f32 %v4450, %v4452
      %4575 = vadd.xlane.f32.xlu0 %v4574
      %v4576 = vpop.xlane.xlu0 %4575
      %v4577 = vadd.f32 %v4454, %v4456
      %4578 = vadd.xlane.f32.xlu0 %v4577
      %v4579 = vpop.xlane.xlu0 %4578
      %v4580 = vadd.f32 %v4458, %v4460
      %4581 = vadd.xlane.f32.xlu0 %v4580
      %v4582 = vpop.xlane.xlu0 %4581
      %v4583 = vadd.f32 %v4462, %v4464
      %4584 = vadd.xlane.f32.xlu0 %v4583
      %v4585 = vpop.xlane.xlu0 %4584
      %v4586 = vadd.f32 %v4466, %v4468
      %4587 = vadd.xlane.f32.xlu0 %v4586
      %v4588 = vpop.xlane.xlu0 %4587
      %v4589 = vadd.f32 %v4470, %v4472
      %4590 = vadd.xlane.f32.xlu0 %v4589
      %v4591 = vpop.xlane.xlu0 %4590
      %v4592 = vadd.f32 %v4474, %v4476
      %4593 = vadd.xlane.f32.xlu0 %v4592
      %v4594 = vpop.xlane.xlu0 %4593
      %v4595 = vadd.f32 %v4478, %v4480
      %4596 = vadd.xlane.f32.xlu0 %v4595
      %v4597 = vpop.xlane.xlu0 %4596
      %v4598 = vadd.f32 %v4482, %v4484
      %4599 = vadd.xlane.f32.xlu0 %v4598
      %v4600 = vpop.xlane.xlu0 %4599
      %v4601 = vadd.f32 %v4486, %v4488
      %4602 = vadd.xlane.f32.xlu0 %v4601
      %v4603 = vpop.xlane.xlu0 %4602
      %v4604 = vadd.f32 %v4490, %v4492
      %4605 = vadd.xlane.f32.xlu0 %v4604
      %v4606 = vpop.xlane.xlu0 %4605
      %v4607 = vadd.f32 %v4494, %v4496
      %4608 = vadd.xlane.f32.xlu0 %v4607
      %v4609 = vpop.xlane.xlu0 %4608
      %v4610 = vadd.f32 %v4498, %v4500
      %4611 = vadd.xlane.f32.xlu0 %v4610
      %v4612 = vpop.xlane.xlu0 %4611
      %v4613 = vadd.f32 %v4502, %v4504
      %4614 = vadd.xlane.f32.xlu0 %v4613
      %v4615 = vpop.xlane.xlu0 %4614
      %v4616 = vadd.f32 %v4506, %v4508
      %4617 = vadd.xlane.f32.xlu0 %v4616
      %v4618 = vpop.xlane.xlu0 %4617
      %v4619 = vadd.f32 %v4510, %v4512
      %4620 = vadd.xlane.f32.xlu0 %v4619
      %v4621 = vpop.xlane.xlu0 %4620
      %v4622 = vadd.f32 %v4514, %v4516
      %4623 = vadd.xlane.f32.xlu0 %v4622
      %v4624 = vpop.xlane.xlu0 %4623
      %v4625 = vadd.f32 %v4518, %v4520
      %4626 = vadd.xlane.f32.xlu0 %v4625
      %v4627 = vpop.xlane.xlu0 %4626
      %v4628 = vadd.f32 %v4522, %v4524
      %4629 = vadd.xlane.f32.xlu0 %v4628
      %v4630 = vpop.xlane.xlu0 %4629
      %v4631 = vadd.f32 %v4526, %v4528
      %4632 = vadd.xlane.f32.xlu0 %v4631
      %v4633 = vpop.xlane.xlu0 %4632
      %v4634 = vadd.f32 %v4530, %v4532
      %4635 = vadd.xlane.f32.xlu0 %v4634
      %v4636 = vpop.xlane.xlu0 %4635
      %v4637 = vadd.f32 %v4534, %v4536
      %4638 = vadd.xlane.f32.xlu0 %v4637
      %v4639 = vpop.xlane.xlu0 %4638
      %v4640 = vadd.f32 %v4538, %v4540
      %4641 = vadd.xlane.f32.xlu0 %v4640
      %v4642 = vpop.xlane.xlu0 %4641
      %v4643 = vadd.f32 %v4542, %v4544
      %4644 = vadd.xlane.f32.xlu0 %v4643
      %v4645 = vpop.xlane.xlu0 %4644
      %v4646 = vadd.f32 %v4546, %v4548
      %4647 = vadd.xlane.f32.xlu0 %v4646
      %v4648 = vpop.xlane.xlu0 %4647
      %v4649 = vadd.f32 %v4550, %v4552
      %4650 = vadd.xlane.f32.xlu0 %v4649
      %v4651 = vpop.xlane.xlu0 %4650
      %v4652 = vadd.f32 %v4554, %v4556
      %4653 = vadd.xlane.f32.xlu0 %v4652
      %v4654 = vpop.xlane.xlu0 %4653
      %v4655 = vadd.f32 %v4558, %v4560
      %4656 = vadd.xlane.f32.xlu0 %v4655
      %v4657 = vpop.xlane.xlu0 %4656
      %v4658 = vadd.f32 %v4562, %v4564
      %4659 = vadd.xlane.f32.xlu0 %v4658
      %v4660 = vpop.xlane.xlu0 %4659
      %v4661 = vrcp.pop %v4567
      %v4662 = vrcp.pop %v4570
      %v4663 = vrcp.pop %v4573
      %v4664 = vrcp.pop %v4576
      %v4665 = vrcp.pop %v4579
      %v4666 = vrcp.pop %v4582
      %v4667 = vrcp.pop %v4585
      %v4668 = vrcp.pop %v4588
      %v4669 = vrcp.pop %v4591
      %v4670 = vrcp.pop %v4594
      %v4671 = vrcp.pop %v4597
      %v4672 = vrcp.pop %v4600
      %v4673 = vrcp.pop %v4603
      %v4674 = vrcp.pop %v4606
      %v4675 = vrcp.pop %v4609
      %v4676 = vrcp.pop %v4612
      %v4677 = vrcp.pop %v4615
      %v4678 = vrcp.pop %v4618
      %v4679 = vrcp.pop %v4621
      %v4680 = vrcp.pop %v4624
      %v4681 = vrcp.pop %v4627
      %v4682 = vrcp.pop %v4630
      %v4683 = vrcp.pop %v4633
      %v4684 = vrcp.pop %v4636
      %v4685 = vrcp.pop %v4639
      %v4686 = vrcp.pop %v4642
      %v4687 = vrcp.pop %v4645
      %v4688 = vrcp.pop %v4648
      %v4689 = vrcp.pop %v4651
      %v4690 = vrcp.pop %v4654
      %v4691 = vrcp.pop %v4657
      %v4692 = vrcp.pop %v4660
      %v4693 = vmul.f32 %v4438, %v4661
      %v4694 = vmul.f32 %v4440, %v4661
      %v4695 = vmul.f32 %v4442, %v4662
      %v4696 = vmul.f32 %v4444, %v4662
      %v4697 = vmul.f32 %v4446, %v4663
      %v4698 = vmul.f32 %v4448, %v4663
      %v4699 = vmul.f32 %v4450, %v4664
      %v4700 = vmul.f32 %v4452, %v4664
      %v4701 = vmul.f32 %v4454, %v4665
      %v4702 = vmul.f32 %v4456, %v4665
      %v4703 = vmul.f32 %v4458, %v4666
      %v4704 = vmul.f32 %v4460, %v4666
      %v4705 = vmul.f32 %v4462, %v4667
      %v4706 = vmul.f32 %v4464, %v4667
      %v4707 = vmul.f32 %v4466, %v4668
      %v4708 = vmul.f32 %v4468, %v4668
      %v4709 = vmul.f32 %v4470, %v4669
      %v4710 = vmul.f32 %v4472, %v4669
      %v4711 = vmul.f32 %v4474, %v4670
      %v4712 = vmul.f32 %v4476, %v4670
      %v4713 = vmul.f32 %v4478, %v4671
      %v4714 = vmul.f32 %v4480, %v4671
      %v4715 = vmul.f32 %v4482, %v4672
      %v4716 = vmul.f32 %v4484, %v4672
      %v4717 = vmul.f32 %v4486, %v4673
      %v4718 = vmul.f32 %v4488, %v4673
      %v4719 = vmul.f32 %v4490, %v4674
      %v4720 = vmul.f32 %v4492, %v4674
      %v4721 = vmul.f32 %v4494, %v4675
      %v4722 = vmul.f32 %v4496, %v4675
      %v4723 = vmul.f32 %v4498, %v4676
      %v4724 = vmul.f32 %v4500, %v4676
      %v4725 = vmul.f32 %v4502, %v4677
      %v4726 = vmul.f32 %v4504, %v4677
      %v4727 = vmul.f32 %v4506, %v4678
      %v4728 = vmul.f32 %v4508, %v4678
      %v4729 = vmul.f32 %v4510, %v4679
      %v4730 = vmul.f32 %v4512, %v4679
      %v4731 = vmul.f32 %v4514, %v4680
      %v4732 = vmul.f32 %v4516, %v4680
      %v4733 = vmul.f32 %v4518, %v4681
      %v4734 = vmul.f32 %v4520, %v4681
      %v4735 = vmul.f32 %v4522, %v4682
      %v4736 = vmul.f32 %v4524, %v4682
      %v4737 = vmul.f32 %v4526, %v4683
      %v4738 = vmul.f32 %v4528, %v4683
      %v4739 = vmul.f32 %v4530, %v4684
      %v4740 = vmul.f32 %v4532, %v4684
      %v4741 = vmul.f32 %v4534, %v4685
      %v4742 = vmul.f32 %v4536, %v4685
      %v4743 = vmul.f32 %v4538, %v4686
      %v4744 = vmul.f32 %v4540, %v4686
      %v4745 = vmul.f32 %v4542, %v4687
      %v4746 = vmul.f32 %v4544, %v4687
      %v4747 = vmul.f32 %v4546, %v4688
      %v4748 = vmul.f32 %v4548, %v4688
      %v4749 = vmul.f32 %v4550, %v4689
      %v4750 = vmul.f32 %v4552, %v4689
      %v4751 = vmul.f32 %v4554, %v4690
      %v4752 = vmul.f32 %v4556, %v4690
      %v4753 = vmul.f32 %v4558, %v4691
      %v4754 = vmul.f32 %v4560, %v4691
      %v4755 = vmul.f32 %v4562, %v4692
      %v4756 = vmul.f32 %v4564, %v4692
      %4757 = vmatprep.subr.mxu0 %v4724
      %4758 = vmatpush1.xpose.msra.mxu0 %v4723
      %4759 = vmatprep.subr.mxu0 %v4722
      %4760 = vmatpush1.xpose.msra.mxu0 %v4721
      %4761 = vmatprep.subr.mxu0 %v4720
      %4762 = vmatpush1.xpose.msra.mxu0 %v4719
      %4763 = vmatprep.subr.mxu0 %v4718
      %4764 = vmatpush1.xpose.msra.mxu0 %v4717
      %4765 = vmatprep.subr.mxu0 %v4716
      %4766 = vmatpush1.xpose.msra.mxu0 %v4715
      %4767 = vmatprep.subr.mxu0 %v4714
      %4768 = vmatpush1.xpose.msra.mxu0 %v4713
      %4769 = vmatprep.subr.mxu0 %v4712
      %4770 = vmatpush1.xpose.msra.mxu0 %v4711
      %4771 = vmatprep.subr.mxu0 %v4710
      %4772 = vmatpush1.xpose.msra.mxu0 %v4709
      %4773 = vmatprep.subr.mxu0 %v4708
      %4774 = vmatpush1.xpose.msra.mxu0 %v4707
      %4775 = vmatprep.subr.mxu0 %v4706
      %4776 = vmatpush1.xpose.msra.mxu0 %v4705
      %4777 = vmatprep.subr.mxu0 %v4704
      %4778 = vmatpush1.xpose.msra.mxu0 %v4703
      %4779 = vmatprep.subr.mxu0 %v4702
      %4780 = vmatpush1.xpose.msra.mxu0 %v4701
      %4781 = vmatprep.subr.mxu0 %v4700
      %4782 = vmatpush1.xpose.msra.mxu0 %v4699
      %4783 = vmatprep.subr.mxu0 %v4698
      %4784 = vmatpush1.xpose.msra.mxu0 %v4697
      %4785 = vmatprep.subr.mxu0 %v4696
      %4786 = vmatpush1.xpose.msra.mxu0 %v4695
      %4787 = vmatprep.subr.mxu0 %v4694
      %4788 = vmatpush1.xpose.msra.mxu0 %v4693
      %4789 = vmatprep.subr.mxu0 %v4756
      %4790 = vmatpush2.xpose.msra.mxu0 %v4755
      %4791 = vmatprep.subr.mxu0 %v4754
      %4792 = vmatpush2.xpose.msra.mxu0 %v4753
      %4793 = vmatprep.subr.mxu0 %v4752
      %4794 = vmatpush2.xpose.msra.mxu0 %v4751
      %4795 = vmatprep.subr.mxu0 %v4750
      %4796 = vmatpush2.xpose.msra.mxu0 %v4749
      %4797 = vmatprep.subr.mxu0 %v4748
      %4798 = vmatpush2.xpose.msra.mxu0 %v4747
      %4799 = vmatprep.subr.mxu0 %v4746
      %4800 = vmatpush2.xpose.msra.mxu0 %v4745
      %4801 = vmatprep.subr.mxu0 %v4744
      %4802 = vmatpush2.xpose.msra.mxu0 %v4743
      %4803 = vmatprep.subr.mxu0 %v4742
      %4804 = vmatpush2.xpose.msra.mxu0 %v4741
      %4805 = vmatprep.subr.mxu0 %v4740
      %4806 = vmatpush2.xpose.msra.mxu0 %v4739
      %4807 = vmatprep.subr.mxu0 %v4738
      %4808 = vmatpush2.xpose.msra.mxu0 %v4737
      %4809 = vmatprep.subr.mxu0 %v4736
      %4810 = vmatpush2.xpose.msra.mxu0 %v4735
      %4811 = vmatprep.subr.mxu0 %v4734
      %4812 = vmatpush2.xpose.msra.mxu0 %v4733
      %4813 = vmatprep.subr.mxu0 %v4732
      %4814 = vmatpush2.xpose.msra.mxu0 %v4731
      %4815 = vmatprep.subr.mxu0 %v4730
      %4816 = vmatpush2.xpose.msra.mxu0 %v4729
      %4817 = vmatprep.subr.mxu0 %v4728
      %4818 = vmatpush2.xpose.msra.mxu0 %v4727
      %4819 = vmatprep.subr.mxu0 %v4726
      %4820 = vmatpush2.xpose.msra.mxu0 %v4725
      %4821 = vmatprep.mubr.f32.mxu0 %v947
      %4822 = vmatmul.mubr.f32.gmra.mxu0 %v945
      %v4823 = vpop.f32.mrf.mxu0
      %v4824 = vadd.f32 0.0, %v4823
      %v4825 = vpop.f32.mrf.mxu0
      %v4826 = vadd.f32 0.0, %v4825
      %4827 = vdwg.mxu0
      %4828 = vst [vmem:[#allocation2 + $0x30] sm:$0xff] %v4824
      %4829 = vst [vmem:[#allocation2 + $0x38] sm:$0xff] %v4826
      %v4830 = vld [vmem:[%s7] sm:$0xff]
      %v4831 = vld [vmem:[%s7 + $0x8] sm:$0xff]
      %v4832 = vld [vmem:[%s7 + $0x10] sm:$0xff]
      %v4833 = vld [vmem:[%s7 + $0x18] sm:$0xff]
      %v4834 = vld [vmem:[#allocation2] sm:$0xff]
      %v4835 = vld [vmem:[#allocation2 + $0x8] sm:$0xff]
      %v4836 = vld [vmem:[#allocation2 + $0x10] sm:$0xff]
      %v4837 = vld [vmem:[#allocation2 + $0x18] sm:$0xff]
      %v4838 = vld [vmem:[#allocation2 + $0x20] sm:$0xff]
      %v4839 = vld [vmem:[#allocation2 + $0x28] sm:$0xff]
      %v4840 = vld [vmem:[#allocation2 + $0x30] sm:$0xff]
      %v4841 = vld [vmem:[#allocation2 + $0x38] sm:$0xff]
      %v4842 = vld [vmem:[%s8] sm:$0xff]
      %v4843 = vld [vmem:[%s8 + $0x8] sm:$0xff]
      %v4844 = vld [vmem:[%s8 + $0x10] sm:$0xff]
      %v4845 = vld [vmem:[%s8 + $0x18] sm:$0xff]
      %4847 = vset.pattern.permute.xlu0 0
      %4848 = vperm.xlu0 %4847, %v4842
      %v4849 = vpop.permute.xlu0 %4848
      %4852 = vset.pattern.permute.xlu0 0
      %4853 = vperm.xlu0 %4852, %v4843
      %v4854 = vpop.permute.xlu0 %4853
      %4857 = vset.pattern.permute.xlu0 0
      %4858 = vperm.xlu0 %4857, %v4844
      %v4859 = vpop.permute.xlu0 %4858
      %4862 = vset.pattern.permute.xlu0 0
      %4863 = vperm.xlu0 %4862, %v4845
      %v4864 = vpop.permute.xlu0 %4863
      %v4867 = vsel %vm582, %v4830, 0
      %v4870 = vsel %vm582, %v4831, 0
      %v4873 = vsel %vm582, %v4832, 0
      %v4876 = vsel %vm582, %v4833, 0
      %4878 = vmatprep.subr.mxu0 0.0
      %4879 = vmatpush1.msra.mxu0 0.0
      %4880 = vmatprep.subr.mxu0 0.0
      %4881 = vmatpush1.msra.mxu0 0.0
      %4882 = vmatprep.subr.mxu0 0.0
      %4883 = vmatpush1.msra.mxu0 0.0
      %4884 = vmatprep.subr.mxu0 0.0
      %4885 = vmatpush1.msra.mxu0 0.0
      %4886 = vmatprep.subr.mxu0 0.0
      %4887 = vmatpush1.msra.mxu0 0.0
      %4888 = vmatprep.subr.mxu0 0.0
      %4889 = vmatpush1.msra.mxu0 0.0
      %4890 = vmatprep.subr.mxu0 0.0
      %4891 = vmatpush1.msra.mxu0 0.0
      %4892 = vmatprep.subr.mxu0 0.0
      %4893 = vmatpush1.msra.mxu0 0.0
      %4894 = vmatprep.subr.mxu0 0.0
      %4895 = vmatpush1.msra.mxu0 0.0
      %4896 = vmatprep.subr.mxu0 0.0
      %4897 = vmatpush1.msra.mxu0 0.0
      %4898 = vmatprep.subr.mxu0 0.0
      %4899 = vmatpush1.msra.mxu0 0.0
      %4900 = vmatprep.subr.mxu0 0.0
      %4901 = vmatpush1.msra.mxu0 0.0
      %4902 = vmatprep.subr.mxu0 %v4841
      %4903 = vmatpush1.msra.mxu0 %v4840
      %4904 = vmatprep.subr.mxu0 %v4839
      %4905 = vmatpush1.msra.mxu0 %v4838
      %4906 = vmatprep.subr.mxu0 %v4837
      %4907 = vmatpush1.msra.mxu0 %v4836
      %4908 = vmatprep.subr.mxu0 %v4835
      %4909 = vmatpush1.msra.mxu0 %v4834
      %4910 = vmatprep.subr.mxu0 0.0
      %4911 = vmatpush2.msra.mxu0 0.0
      %4912 = vmatprep.subr.mxu0 0.0
      %4913 = vmatpush2.msra.mxu0 0.0
      %4914 = vmatprep.subr.mxu0 0.0
      %4915 = vmatpush2.msra.mxu0 0.0
      %4916 = vmatprep.subr.mxu0 0.0
      %4917 = vmatpush2.msra.mxu0 0.0
      %4918 = vmatprep.subr.mxu0 0.0
      %4919 = vmatpush2.msra.mxu0 0.0
      %4920 = vmatprep.subr.mxu0 0.0
      %4921 = vmatpush2.msra.mxu0 0.0
      %4922 = vmatprep.subr.mxu0 0.0
      %4923 = vmatpush2.msra.mxu0 0.0
      %4924 = vmatprep.subr.mxu0 0.0
      %4925 = vmatpush2.msra.mxu0 0.0
      %4926 = vmatprep.subr.mxu0 0.0
      %4927 = vmatpush2.msra.mxu0 0.0
      %4928 = vmatprep.subr.mxu0 0.0
      %4929 = vmatpush2.msra.mxu0 0.0
      %4930 = vmatprep.subr.mxu0 0.0
      %4931 = vmatpush2.msra.mxu0 0.0
      %4932 = vmatprep.subr.mxu0 0.0
      %4933 = vmatpush2.msra.mxu0 0.0
      %4934 = vmatprep.subr.mxu0 0.0
      %4935 = vmatpush2.msra.mxu0 0.0
      %4936 = vmatprep.subr.mxu0 0.0
      %4937 = vmatpush2.msra.mxu0 0.0
      %4938 = vmatprep.subr.mxu0 0.0
      %4939 = vmatpush2.msra.mxu0 0.0
      %4940 = vmatprep.subr.mxu0 0.0
      %4941 = vmatpush2.msra.mxu0 0.0
      %4942 = vmatprep.mubr.f32.mxu0 0.0
      %4943 = vmatmul.mubr.f32.gmra.mxu0 %v4867
      %v4944 = vpop.f32.mrf.mxu0
      %v4945 = vadd.f32 %v4849, %v4944
      %v4946 = vpop.f32.mrf.mxu0
      %v4947 = vadd.f32 %v4849, %v4946
      %4948 = vmatprep.mubr.f32.mxu0 0.0
      %4949 = vmatmul.mubr.f32.gmra.mxu0 %v4870
      %v4950 = vpop.f32.mrf.mxu0
      %v4951 = vadd.f32 %v4854, %v4950
      %v4952 = vpop.f32.mrf.mxu0
      %v4953 = vadd.f32 %v4854, %v4952
      %4954 = vmatprep.mubr.f32.mxu0 0.0
      %4955 = vmatmul.mubr.f32.gmra.mxu0 %v4873
      %v4956 = vpop.f32.mrf.mxu0
      %v4957 = vadd.f32 %v4859, %v4956
      %v4958 = vpop.f32.mrf.mxu0
      %v4959 = vadd.f32 %v4859, %v4958
      %4960 = vmatprep.mubr.f32.mxu0 0.0
      %4961 = vmatmul.mubr.f32.gmra.mxu0 %v4876
      %v4962 = vpop.f32.mrf.mxu0
      %v4963 = vadd.f32 %v4864, %v4962
      %v4964 = vpop.f32.mrf.mxu0
      %v4965 = vadd.f32 %v4864, %v4964
      %4966 = vdwg.mxu0
      %v4967 = vadd.f32 %v4945, %v684
      %v4968 = vadd.f32 %v4947, %v685
      %v4969 = vadd.f32 %v4951, %v686
      %v4970 = vadd.f32 %v4953, %v687
      %v4971 = vadd.f32 %v4957, %v688
      %v4972 = vadd.f32 %v4959, %v689
      %v4973 = vadd.f32 %v4963, %v690
      %v4974 = vadd.f32 %v4965, %v691
      %v4975 = vld [vmem:[%s9] sm:$0xff]
      %v4976 = vld [vmem:[%s9 + $0x8] sm:$0xff]
      %v4977 = vld [vmem:[%s9 + $0x10] sm:$0xff]
      %v4978 = vld [vmem:[%s9 + $0x18] sm:$0xff]
      %v4980 = vsel %vm582, %v4975, 0
      %v4983 = vsel %vm582, %v4976, 0
      %v4986 = vsel %vm582, %v4977, 0
      %v4989 = vsel %vm582, %v4978, 0
      %4991 = vmatprep.subr.mxu0 0.0
      %4992 = vmatpush1.msra.mxu0 0.0
      %4993 = vmatprep.subr.mxu0 0.0
      %4994 = vmatpush1.msra.mxu0 0.0
      %4995 = vmatprep.subr.mxu0 0.0
      %4996 = vmatpush1.msra.mxu0 0.0
      %4997 = vmatprep.subr.mxu0 0.0
      %4998 = vmatpush1.msra.mxu0 0.0
      %4999 = vmatprep.subr.mxu0 0.0
      %5000 = vmatpush1.msra.mxu0 0.0
      %5001 = vmatprep.subr.mxu0 0.0
      %5002 = vmatpush1.msra.mxu0 0.0
      %5003 = vmatprep.subr.mxu0 0.0
      %5004 = vmatpush1.msra.mxu0 0.0
      %5005 = vmatprep.subr.mxu0 0.0
      %5006 = vmatpush1.msra.mxu0 0.0
      %5007 = vmatprep.subr.mxu0 0.0
      %5008 = vmatpush1.msra.mxu0 0.0
      %5009 = vmatprep.subr.mxu0 0.0
      %5010 = vmatpush1.msra.mxu0 0.0
      %5011 = vmatprep.subr.mxu0 0.0
      %5012 = vmatpush1.msra.mxu0 0.0
      %5013 = vmatprep.subr.mxu0 0.0
      %5014 = vmatpush1.msra.mxu0 0.0
      %5015 = vmatprep.subr.mxu0 %v4974
      %5016 = vmatpush1.msra.mxu0 %v4973
      %5017 = vmatprep.subr.mxu0 %v4972
      %5018 = vmatpush1.msra.mxu0 %v4971
      %5019 = vmatprep.subr.mxu0 %v4970
      %5020 = vmatpush1.msra.mxu0 %v4969
      %5021 = vmatprep.subr.mxu0 %v4968
      %5022 = vmatpush1.msra.mxu0 %v4967
      %5023 = vmatprep.subr.mxu0 0.0
      %5024 = vmatpush2.msra.mxu0 0.0
      %5025 = vmatprep.subr.mxu0 0.0
      %5026 = vmatpush2.msra.mxu0 0.0
      %5027 = vmatprep.subr.mxu0 0.0
      %5028 = vmatpush2.msra.mxu0 0.0
      %5029 = vmatprep.subr.mxu0 0.0
      %5030 = vmatpush2.msra.mxu0 0.0
      %5031 = vmatprep.subr.mxu0 0.0
      %5032 = vmatpush2.msra.mxu0 0.0
      %5033 = vmatprep.subr.mxu0 0.0
      %5034 = vmatpush2.msra.mxu0 0.0
      %5035 = vmatprep.subr.mxu0 0.0
      %5036 = vmatpush2.msra.mxu0 0.0
      %5037 = vmatprep.subr.mxu0 0.0
      %5038 = vmatpush2.msra.mxu0 0.0
      %5039 = vmatprep.subr.mxu0 0.0
      %5040 = vmatpush2.msra.mxu0 0.0
      %5041 = vmatprep.subr.mxu0 0.0
      %5042 = vmatpush2.msra.mxu0 0.0
      %5043 = vmatprep.subr.mxu0 0.0
      %5044 = vmatpush2.msra.mxu0 0.0
      %5045 = vmatprep.subr.mxu0 0.0
      %5046 = vmatpush2.msra.mxu0 0.0
      %5047 = vmatprep.subr.mxu0 0.0
      %5048 = vmatpush2.msra.mxu0 0.0
      %5049 = vmatprep.subr.mxu0 0.0
      %5050 = vmatpush2.msra.mxu0 0.0
      %5051 = vmatprep.subr.mxu0 0.0
      %5052 = vmatpush2.msra.mxu0 0.0
      %5053 = vmatprep.subr.mxu0 0.0
      %5054 = vmatpush2.msra.mxu0 0.0
      %5055 = vmatprep.mubr.f32.mxu0 0.0
      %5056 = vmatmul.mubr.f32.gmra.mxu0 %v4980
      %v5057 = vpop.f32.mrf.mxu0
      %v5058 = vadd.f32 %v4967, %v5057
      %v5059 = vpop.f32.mrf.mxu0
      %v5060 = vadd.f32 %v4968, %v5059
      %5061 = vmatprep.mubr.f32.mxu0 0.0
      %5062 = vmatmul.mubr.f32.gmra.mxu0 %v4983
      %v5063 = vpop.f32.mrf.mxu0
      %v5064 = vadd.f32 %v4969, %v5063
      %v5065 = vpop.f32.mrf.mxu0
      %v5066 = vadd.f32 %v4970, %v5065
      %5067 = vmatprep.mubr.f32.mxu0 0.0
      %5068 = vmatmul.mubr.f32.gmra.mxu0 %v4986
      %v5069 = vpop.f32.mrf.mxu0
      %v5070 = vadd.f32 %v4971, %v5069
      %v5071 = vpop.f32.mrf.mxu0
      %v5072 = vadd.f32 %v4972, %v5071
      %5073 = vmatprep.mubr.f32.mxu0 0.0
      %5074 = vmatmul.mubr.f32.gmra.mxu0 %v4989
      %v5075 = vpop.f32.mrf.mxu0
      %v5076 = vadd.f32 %v4973, %v5075
      %v5077 = vpop.f32.mrf.mxu0
      %v5078 = vadd.f32 %v4974, %v5077
      %5079 = vdwg.mxu0
      %s5080 = scalar_lea.vmem %s5, 96
      %v5081 = vld [vmem:[%s5080] sm:$0xff]
      %v5082 = vld [vmem:[%s5080 + $0x8] sm:$0xff]
      %v5083 = vld [vmem:[%s5080 + $0x10] sm:$0xff]
      %v5084 = vld [vmem:[%s5080 + $0x18] sm:$0xff]
      %v5085 = vld [vmem:[%s5080 + $0x20] sm:$0xff]
      %v5086 = vld [vmem:[%s5080 + $0x28] sm:$0xff]
      %v5087 = vld [vmem:[%s5080 + $0x30] sm:$0xff]
      %v5088 = vld [vmem:[%s5080 + $0x38] sm:$0xff]
      %v5089 = vld [vmem:[%s5080 + $0x40] sm:$0xff]
      %v5090 = vld [vmem:[%s5080 + $0x48] sm:$0xff]
      %v5091 = vld [vmem:[%s5080 + $0x50] sm:$0xff]
      %v5092 = vld [vmem:[%s5080 + $0x58] sm:$0xff]
      %s5093 = scalar_lea.vmem %s6, 96
      %v5094 = vld [vmem:[%s5093] sm:$0xff]
      %v5095 = vld [vmem:[%s5093 + $0x8] sm:$0xff]
      %v5096 = vld [vmem:[%s5093 + $0x10] sm:$0xff]
      %v5097 = vld [vmem:[%s5093 + $0x18] sm:$0xff]
      %v5098 = vld [vmem:[%s5093 + $0x20] sm:$0xff]
      %v5099 = vld [vmem:[%s5093 + $0x28] sm:$0xff]
      %v5100 = vld [vmem:[%s5093 + $0x30] sm:$0xff]
      %v5101 = vld [vmem:[%s5093 + $0x38] sm:$0xff]
      %v5102 = vld [vmem:[%s5093 + $0x40] sm:$0xff]
      %v5103 = vld [vmem:[%s5093 + $0x48] sm:$0xff]
      %v5104 = vld [vmem:[%s5093 + $0x50] sm:$0xff]
      %v5105 = vld [vmem:[%s5093 + $0x58] sm:$0xff]
      %5107 = vset.pattern.permute.xlu0 0
      %5108 = vperm.xlu0 %5107, %v5094
      %v5109 = vpop.permute.xlu0 %5108
      %5112 = vset.pattern.permute.xlu0 0
      %5113 = vperm.xlu0 %5112, %v5095
      %v5114 = vpop.permute.xlu0 %5113
      %5117 = vset.pattern.permute.xlu0 0
      %5118 = vperm.xlu0 %5117, %v5096
      %v5119 = vpop.permute.xlu0 %5118
      %5122 = vset.pattern.permute.xlu0 0
      %5123 = vperm.xlu0 %5122, %v5097
      %v5124 = vpop.permute.xlu0 %5123
      %5127 = vset.pattern.permute.xlu0 0
      %5128 = vperm.xlu0 %5127, %v5098
      %v5129 = vpop.permute.xlu0 %5128
      %5132 = vset.pattern.permute.xlu0 0
      %5133 = vperm.xlu0 %5132, %v5099
      %v5134 = vpop.permute.xlu0 %5133
      %5137 = vset.pattern.permute.xlu0 0
      %5138 = vperm.xlu0 %5137, %v5100
      %v5139 = vpop.permute.xlu0 %5138
      %5142 = vset.pattern.permute.xlu0 0
      %5143 = vperm.xlu0 %5142, %v5101
      %v5144 = vpop.permute.xlu0 %5143
      %5147 = vset.pattern.permute.xlu0 0
      %5148 = vperm.xlu0 %5147, %v5102
      %v5149 = vpop.permute.xlu0 %5148
      %5152 = vset.pattern.permute.xlu0 0
      %5153 = vperm.xlu0 %5152, %v5103
      %v5154 = vpop.permute.xlu0 %5153
      %5157 = vset.pattern.permute.xlu0 0
      %5158 = vperm.xlu0 %5157, %v5104
      %v5159 = vpop.permute.xlu0 %5158
      %5162 = vset.pattern.permute.xlu0 0
      %5163 = vperm.xlu0 %5162, %v5105
      %v5164 = vpop.permute.xlu0 %5163
      %v5167 = vsel %vm582, %v5081, 0
      %v5170 = vsel %vm582, %v5082, 0
      %v5173 = vsel %vm582, %v5083, 0
      %v5176 = vsel %vm582, %v5084, 0
      %v5179 = vsel %vm582, %v5085, 0
      %v5182 = vsel %vm582, %v5086, 0
      %v5185 = vsel %vm582, %v5087, 0
      %v5188 = vsel %vm582, %v5088, 0
      %v5191 = vsel %vm582, %v5089, 0
      %v5194 = vsel %vm582, %v5090, 0
      %v5197 = vsel %vm582, %v5091, 0
      %v5200 = vsel %vm582, %v5092, 0
      %5202 = vmatprep.subr.mxu0 0.0
      %5203 = vmatpush1.msra.mxu0 0.0
      %5204 = vmatprep.subr.mxu0 0.0
      %5205 = vmatpush1.msra.mxu0 0.0
      %5206 = vmatprep.subr.mxu0 0.0
      %5207 = vmatpush1.msra.mxu0 0.0
      %5208 = vmatprep.subr.mxu0 0.0
      %5209 = vmatpush1.msra.mxu0 0.0
      %5210 = vmatprep.subr.mxu0 0.0
      %5211 = vmatpush1.msra.mxu0 0.0
      %5212 = vmatprep.subr.mxu0 0.0
      %5213 = vmatpush1.msra.mxu0 0.0
      %5214 = vmatprep.subr.mxu0 0.0
      %5215 = vmatpush1.msra.mxu0 0.0
      %5216 = vmatprep.subr.mxu0 0.0
      %5217 = vmatpush1.msra.mxu0 0.0
      %5218 = vmatprep.subr.mxu0 0.0
      %5219 = vmatpush1.msra.mxu0 0.0
      %5220 = vmatprep.subr.mxu0 0.0
      %5221 = vmatpush1.msra.mxu0 0.0
      %5222 = vmatprep.subr.mxu0 0.0
      %5223 = vmatpush1.msra.mxu0 0.0
      %5224 = vmatprep.subr.mxu0 0.0
      %5225 = vmatpush1.msra.mxu0 0.0
      %5226 = vmatprep.subr.mxu0 %v5078
      %5227 = vmatpush1.msra.mxu0 %v5076
      %5228 = vmatprep.subr.mxu0 %v5072
      %5229 = vmatpush1.msra.mxu0 %v5070
      %5230 = vmatprep.subr.mxu0 %v5066
      %5231 = vmatpush1.msra.mxu0 %v5064
      %5232 = vmatprep.subr.mxu0 %v5060
      %5233 = vmatpush1.msra.mxu0 %v5058
      %5234 = vmatprep.subr.mxu0 0.0
      %5235 = vmatpush2.msra.mxu0 0.0
      %5236 = vmatprep.subr.mxu0 0.0
      %5237 = vmatpush2.msra.mxu0 0.0
      %5238 = vmatprep.subr.mxu0 0.0
      %5239 = vmatpush2.msra.mxu0 0.0
      %5240 = vmatprep.subr.mxu0 0.0
      %5241 = vmatpush2.msra.mxu0 0.0
      %5242 = vmatprep.subr.mxu0 0.0
      %5243 = vmatpush2.msra.mxu0 0.0
      %5244 = vmatprep.subr.mxu0 0.0
      %5245 = vmatpush2.msra.mxu0 0.0
      %5246 = vmatprep.subr.mxu0 0.0
      %5247 = vmatpush2.msra.mxu0 0.0
      %5248 = vmatprep.subr.mxu0 0.0
      %5249 = vmatpush2.msra.mxu0 0.0
      %5250 = vmatprep.subr.mxu0 0.0
      %5251 = vmatpush2.msra.mxu0 0.0
      %5252 = vmatprep.subr.mxu0 0.0
      %5253 = vmatpush2.msra.mxu0 0.0
      %5254 = vmatprep.subr.mxu0 0.0
      %5255 = vmatpush2.msra.mxu0 0.0
      %5256 = vmatprep.subr.mxu0 0.0
      %5257 = vmatpush2.msra.mxu0 0.0
      %5258 = vmatprep.subr.mxu0 0.0
      %5259 = vmatpush2.msra.mxu0 0.0
      %5260 = vmatprep.subr.mxu0 0.0
      %5261 = vmatpush2.msra.mxu0 0.0
      %5262 = vmatprep.subr.mxu0 0.0
      %5263 = vmatpush2.msra.mxu0 0.0
      %5264 = vmatprep.subr.mxu0 0.0
      %5265 = vmatpush2.msra.mxu0 0.0
      %5266 = vmatprep.mubr.f32.mxu0 0.0
      %5267 = vmatmul.mubr.f32.gmra.mxu0 %v5167
      %v5268 = vpop.f32.mrf.mxu0
      %v5269 = vadd.f32 %v5109, %v5268
      %v5270 = vpop.f32.mrf.mxu0
      %v5271 = vadd.f32 %v5109, %v5270
      %5272 = vmatprep.mubr.f32.mxu0 0.0
      %5273 = vmatmul.mubr.f32.gmra.mxu0 %v5170
      %v5274 = vpop.f32.mrf.mxu0
      %v5275 = vadd.f32 %v5114, %v5274
      %v5276 = vpop.f32.mrf.mxu0
      %v5277 = vadd.f32 %v5114, %v5276
      %5278 = vmatprep.mubr.f32.mxu0 0.0
      %5279 = vmatmul.mubr.f32.gmra.mxu0 %v5173
      %v5280 = vpop.f32.mrf.mxu0
      %v5281 = vadd.f32 %v5119, %v5280
      %v5282 = vpop.f32.mrf.mxu0
      %v5283 = vadd.f32 %v5119, %v5282
      %5284 = vmatprep.mubr.f32.mxu0 0.0
      %5285 = vmatmul.mubr.f32.gmra.mxu0 %v5176
      %v5286 = vpop.f32.mrf.mxu0
      %v5287 = vadd.f32 %v5124, %v5286
      %v5288 = vpop.f32.mrf.mxu0
      %v5289 = vadd.f32 %v5124, %v5288
      %5290 = vmatprep.mubr.f32.mxu0 0.0
      %5291 = vmatmul.mubr.f32.gmra.mxu0 %v5179
      %v5292 = vpop.f32.mrf.mxu0
      %v5293 = vadd.f32 %v5129, %v5292
      %v5294 = vpop.f32.mrf.mxu0
      %v5295 = vadd.f32 %v5129, %v5294
      %5296 = vmatprep.mubr.f32.mxu0 0.0
      %5297 = vmatmul.mubr.f32.gmra.mxu0 %v5182
      %v5298 = vpop.f32.mrf.mxu0
      %v5299 = vadd.f32 %v5134, %v5298
      %v5300 = vpop.f32.mrf.mxu0
      %v5301 = vadd.f32 %v5134, %v5300
      %5302 = vmatprep.mubr.f32.mxu0 0.0
      %5303 = vmatmul.mubr.f32.gmra.mxu0 %v5185
      %v5304 = vpop.f32.mrf.mxu0
      %v5305 = vadd.f32 %v5139, %v5304
      %v5306 = vpop.f32.mrf.mxu0
      %v5307 = vadd.f32 %v5139, %v5306
      %5308 = vmatprep.mubr.f32.mxu0 0.0
      %5309 = vmatmul.mubr.f32.gmra.mxu0 %v5188
      %v5310 = vpop.f32.mrf.mxu0
      %v5311 = vadd.f32 %v5144, %v5310
      %v5312 = vpop.f32.mrf.mxu0
      %v5313 = vadd.f32 %v5144, %v5312
      %5314 = vmatprep.mubr.f32.mxu0 0.0
      %5315 = vmatmul.mubr.f32.gmra.mxu0 %v5191
      %v5316 = vpop.f32.mrf.mxu0
      %v5317 = vadd.f32 %v5149, %v5316
      %v5318 = vpop.f32.mrf.mxu0
      %v5319 = vadd.f32 %v5149, %v5318
      %5320 = vmatprep.mubr.f32.mxu0 0.0
      %5321 = vmatmul.mubr.f32.gmra.mxu0 %v5194
      %v5322 = vpop.f32.mrf.mxu0
      %v5323 = vadd.f32 %v5154, %v5322
      %v5324 = vpop.f32.mrf.mxu0
      %v5325 = vadd.f32 %v5154, %v5324
      %5326 = vmatprep.mubr.f32.mxu0 0.0
      %5327 = vmatmul.mubr.f32.gmra.mxu0 %v5197
      %v5328 = vpop.f32.mrf.mxu0
      %v5329 = vadd.f32 %v5159, %v5328
      %v5330 = vpop.f32.mrf.mxu0
      %v5331 = vadd.f32 %v5159, %v5330
      %5332 = vmatprep.mubr.f32.mxu0 0.0
      %5333 = vmatmul.mubr.f32.gmra.mxu0 %v5200
      %v5334 = vpop.f32.mrf.mxu0
      %v5335 = vadd.f32 %v5164, %v5334
      %v5336 = vpop.f32.mrf.mxu0
      %v5337 = vadd.f32 %v5164, %v5336
      %5338 = vdwg.mxu0
      %5339 = vxpose.xlu0.b32.start [1/16] %v5269, 128
      %5340 = vxpose.xlu0.b32.cont [2/16] 0.0, 128
      %5341 = vxpose.xlu0.b32.cont [3/16] 0.0, 128
      %5342 = vxpose.xlu0.b32.cont [4/16] 0.0, 128
      %5343 = vxpose.xlu0.b32.cont [5/16] 0.0, 128
      %5344 = vxpose.xlu0.b32.cont [6/16] 0.0, 128
      %5345 = vxpose.xlu0.b32.cont [7/16] 0.0, 128
      %5346 = vxpose.xlu0.b32.cont [8/16] 0.0, 128
      %5347 = vxpose.xlu0.b32.cont [9/16] 0.0, 128
      %5348 = vxpose.xlu0.b32.cont [10/16] 0.0, 128
      %5349 = vxpose.xlu0.b32.cont [11/16] 0.0, 128
      %5350 = vxpose.xlu0.b32.cont [12/16] 0.0, 128
      %5351 = vxpose.xlu0.b32.cont [13/16] 0.0, 128
      %5352 = vxpose.xlu0.b32.cont [14/16] 0.0, 128
      %5353 = vxpose.xlu0.b32.cont [15/16] 0.0, 128
      %5354 = vxpose.xlu0.b32.end [16/16] 0.0, 128
      %v5355 = vpop.trf.xlu0
      %v5356 = vpop.trf.xlu0
      %v5357 = vpop.trf.xlu0
      %v5358 = vpop.trf.xlu0
      %v5359 = vpop.trf.xlu0
      %v5360 = vpop.trf.xlu0
      %v5361 = vpop.trf.xlu0
      %v5362 = vpop.trf.xlu0
      %v5363 = vpop.trf.xlu0
      %v5364 = vpop.trf.xlu0
      %v5365 = vpop.trf.xlu0
      %v5366 = vpop.trf.xlu0
      %v5367 = vpop.trf.xlu0
      %v5368 = vpop.trf.xlu0
      %v5369 = vpop.trf.xlu0
      %v5370 = vpop.trf.xlu0
      %5371 = vxpose.xlu0.b32.start [1/16] %v5271, 128
      %5372 = vxpose.xlu0.b32.cont [2/16] 0.0, 128
      %5373 = vxpose.xlu0.b32.cont [3/16] 0.0, 128
      %5374 = vxpose.xlu0.b32.cont [4/16] 0.0, 128
      %5375 = vxpose.xlu0.b32.cont [5/16] 0.0, 128
      %5376 = vxpose.xlu0.b32.cont [6/16] 0.0, 128
      %5377 = vxpose.xlu0.b32.cont [7/16] 0.0, 128
      %5378 = vxpose.xlu0.b32.cont [8/16] 0.0, 128
      %5379 = vxpose.xlu0.b32.cont [9/16] 0.0, 128
      %5380 = vxpose.xlu0.b32.cont [10/16] 0.0, 128
      %5381 = vxpose.xlu0.b32.cont [11/16] 0.0, 128
      %5382 = vxpose.xlu0.b32.cont [12/16] 0.0, 128
      %5383 = vxpose.xlu0.b32.cont [13/16] 0.0, 128
      %5384 = vxpose.xlu0.b32.cont [14/16] 0.0, 128
      %5385 = vxpose.xlu0.b32.cont [15/16] 0.0, 128
      %5386 = vxpose.xlu0.b32.end [16/16] 0.0, 128
      %v5387 = vpop.trf.xlu0
      %v5388 = vpop.trf.xlu0
      %v5389 = vpop.trf.xlu0
      %v5390 = vpop.trf.xlu0
      %v5391 = vpop.trf.xlu0
      %v5392 = vpop.trf.xlu0
      %v5393 = vpop.trf.xlu0
      %v5394 = vpop.trf.xlu0
      %v5395 = vpop.trf.xlu0
      %v5396 = vpop.trf.xlu0
      %v5397 = vpop.trf.xlu0
      %v5398 = vpop.trf.xlu0
      %v5399 = vpop.trf.xlu0
      %v5400 = vpop.trf.xlu0
      %v5401 = vpop.trf.xlu0
      %v5402 = vpop.trf.xlu0
      %v5404 = vsel %vm1013, %v5355, 0
      %v5407 = vsel %vm1013, %v5356, 0
      %v5410 = vsel %vm1013, %v5357, 0
      %v5413 = vsel %vm1013, %v5358, 0
      %v5416 = vsel %vm1013, %v5359, 0
      %v5419 = vsel %vm1013, %v5360, 0
      %v5422 = vsel %vm1013, %v5361, 0
      %v5425 = vsel %vm1013, %v5362, 0
      %v5428 = vsel %vm1013, %v5363, 0
      %v5431 = vsel %vm1013, %v5364, 0
      %v5434 = vsel %vm1013, %v5365, 0
      %v5437 = vsel %vm1013, %v5366, 0
      %v5440 = vsel %vm1013, %v5367, 0
      %v5443 = vsel %vm1013, %v5368, 0
      %v5446 = vsel %vm1013, %v5369, 0
      %v5449 = vsel %vm1013, %v5370, 0
      %v5452 = vsel %vm1013, %v5387, 0
      %v5455 = vsel %vm1013, %v5388, 0
      %v5458 = vsel %vm1013, %v5389, 0
      %v5461 = vsel %vm1013, %v5390, 0
      %v5464 = vsel %vm1013, %v5391, 0
      %v5467 = vsel %vm1013, %v5392, 0
      %v5470 = vsel %vm1013, %v5393, 0
      %v5473 = vsel %vm1013, %v5394, 0
      %v5476 = vsel %vm1013, %v5395, 0
      %v5479 = vsel %vm1013, %v5396, 0
      %v5482 = vsel %vm1013, %v5397, 0
      %v5485 = vsel %vm1013, %v5398, 0
      %v5488 = vsel %vm1013, %v5399, 0
      %v5491 = vsel %vm1013, %v5400, 0
      %v5494 = vsel %vm1013, %v5401, 0
      %v5497 = vsel %vm1013, %v5402, 0
      %5499 = vmatprep.subr.mxu0 0.0
      %5500 = vmatpush1.msra.mxu0 0.0
      %5501 = vmatprep.subr.mxu0 0.0
      %5502 = vmatpush1.msra.mxu0 0.0
      %5503 = vmatprep.subr.mxu0 0.0
      %5504 = vmatpush1.msra.mxu0 0.0
      %5505 = vmatprep.subr.mxu0 0.0
      %5506 = vmatpush1.msra.mxu0 0.0
      %5507 = vmatprep.subr.mxu0 0.0
      %5508 = vmatpush1.msra.mxu0 0.0
      %5509 = vmatprep.subr.mxu0 0.0
      %5510 = vmatpush1.msra.mxu0 0.0
      %5511 = vmatprep.subr.mxu0 0.0
      %5512 = vmatpush1.msra.mxu0 0.0
      %5513 = vmatprep.subr.mxu0 0.0
      %5514 = vmatpush1.msra.mxu0 0.0
      %5515 = vmatprep.subr.mxu0 0.0
      %5516 = vmatpush1.msra.mxu0 0.0
      %5517 = vmatprep.subr.mxu0 0.0
      %5518 = vmatpush1.msra.mxu0 0.0
      %5519 = vmatprep.subr.mxu0 0.0
      %5520 = vmatpush1.msra.mxu0 0.0
      %5521 = vmatprep.subr.mxu0 0.0
      %5522 = vmatpush1.msra.mxu0 0.0
      %5523 = vmatprep.subr.mxu0 0.0
      %5524 = vmatpush1.msra.mxu0 0.0
      %5525 = vmatprep.subr.mxu0 0.0
      %5526 = vmatpush1.msra.mxu0 0.0
      %5527 = vmatprep.subr.mxu0 0.0
      %5528 = vmatpush1.msra.mxu0 0.0
      %5529 = vmatprep.subr.mxu0 %v5295
      %5530 = vmatpush1.msra.mxu0 %v5293
      %5531 = vmatprep.subr.mxu0 0.0
      %5532 = vmatpush2.msra.mxu0 0.0
      %5533 = vmatprep.subr.mxu0 0.0
      %5534 = vmatpush2.msra.mxu0 0.0
      %5535 = vmatprep.subr.mxu0 0.0
      %5536 = vmatpush2.msra.mxu0 0.0
      %5537 = vmatprep.subr.mxu0 0.0
      %5538 = vmatpush2.msra.mxu0 0.0
      %5539 = vmatprep.subr.mxu0 0.0
      %5540 = vmatpush2.msra.mxu0 0.0
      %5541 = vmatprep.subr.mxu0 0.0
      %5542 = vmatpush2.msra.mxu0 0.0
      %5543 = vmatprep.subr.mxu0 0.0
      %5544 = vmatpush2.msra.mxu0 0.0
      %5545 = vmatprep.subr.mxu0 0.0
      %5546 = vmatpush2.msra.mxu0 0.0
      %5547 = vmatprep.subr.mxu0 0.0
      %5548 = vmatpush2.msra.mxu0 0.0
      %5549 = vmatprep.subr.mxu0 0.0
      %5550 = vmatpush2.msra.mxu0 0.0
      %5551 = vmatprep.subr.mxu0 0.0
      %5552 = vmatpush2.msra.mxu0 0.0
      %5553 = vmatprep.subr.mxu0 0.0
      %5554 = vmatpush2.msra.mxu0 0.0
      %5555 = vmatprep.subr.mxu0 0.0
      %5556 = vmatpush2.msra.mxu0 0.0
      %5557 = vmatprep.subr.mxu0 0.0
      %5558 = vmatpush2.msra.mxu0 0.0
      %5559 = vmatprep.subr.mxu0 0.0
      %5560 = vmatpush2.msra.mxu0 0.0
      %5561 = vmatprep.subr.mxu0 0.0
      %5562 = vmatpush2.msra.mxu0 0.0
      %5563 = vmatprep.mubr.f32.mxu0 0.0
      %5564 = vmatmul.mubr.f32.gmra.mxu0 %v5404
      %v5565 = vpop.f32.mrf.mxu0
      %v5566 = vadd.f32 0.0, %v5565
      %v5567 = vpop.f32.mrf.mxu0
      %v5568 = vadd.f32 0.0, %v5567
      %5569 = vmatprep.mubr.f32.mxu0 0.0
      %5570 = vmatmul.mubr.f32.gmra.mxu0 %v5407
      %v5571 = vpop.f32.mrf.mxu0
      %v5572 = vadd.f32 0.0, %v5571
      %v5573 = vpop.f32.mrf.mxu0
      %v5574 = vadd.f32 0.0, %v5573
      %5575 = vmatprep.mubr.f32.mxu0 0.0
      %5576 = vmatmul.mubr.f32.gmra.mxu0 %v5410
      %v5577 = vpop.f32.mrf.mxu0
      %v5578 = vadd.f32 0.0, %v5577
      %v5579 = vpop.f32.mrf.mxu0
      %v5580 = vadd.f32 0.0, %v5579
      %5581 = vmatprep.mubr.f32.mxu0 0.0
      %5582 = vmatmul.mubr.f32.gmra.mxu0 %v5413
      %v5583 = vpop.f32.mrf.mxu0
      %v5584 = vadd.f32 0.0, %v5583
      %v5585 = vpop.f32.mrf.mxu0
      %v5586 = vadd.f32 0.0, %v5585
      %5587 = vmatprep.mubr.f32.mxu0 0.0
      %5588 = vmatmul.mubr.f32.gmra.mxu0 %v5416
      %v5589 = vpop.f32.mrf.mxu0
      %v5590 = vadd.f32 0.0, %v5589
      %v5591 = vpop.f32.mrf.mxu0
      %v5592 = vadd.f32 0.0, %v5591
      %5593 = vmatprep.mubr.f32.mxu0 0.0
      %5594 = vmatmul.mubr.f32.gmra.mxu0 %v5419
      %v5595 = vpop.f32.mrf.mxu0
      %v5596 = vadd.f32 0.0, %v5595
      %v5597 = vpop.f32.mrf.mxu0
      %v5598 = vadd.f32 0.0, %v5597
      %5599 = vmatprep.mubr.f32.mxu0 0.0
      %5600 = vmatmul.mubr.f32.gmra.mxu0 %v5422
      %v5601 = vpop.f32.mrf.mxu0
      %v5602 = vadd.f32 0.0, %v5601
      %v5603 = vpop.f32.mrf.mxu0
      %v5604 = vadd.f32 0.0, %v5603
      %5605 = vmatprep.mubr.f32.mxu0 0.0
      %5606 = vmatmul.mubr.f32.gmra.mxu0 %v5425
      %v5607 = vpop.f32.mrf.mxu0
      %v5608 = vadd.f32 0.0, %v5607
      %v5609 = vpop.f32.mrf.mxu0
      %v5610 = vadd.f32 0.0, %v5609
      %5611 = vmatprep.mubr.f32.mxu0 0.0
      %5612 = vmatmul.mubr.f32.gmra.mxu0 %v5428
      %v5613 = vpop.f32.mrf.mxu0
      %v5614 = vadd.f32 0.0, %v5613
      %v5615 = vpop.f32.mrf.mxu0
      %v5616 = vadd.f32 0.0, %v5615
      %5617 = vmatprep.mubr.f32.mxu0 0.0
      %5618 = vmatmul.mubr.f32.gmra.mxu0 %v5431
      %v5619 = vpop.f32.mrf.mxu0
      %v5620 = vadd.f32 0.0, %v5619
      %v5621 = vpop.f32.mrf.mxu0
      %v5622 = vadd.f32 0.0, %v5621
      %5623 = vmatprep.mubr.f32.mxu0 0.0
      %5624 = vmatmul.mubr.f32.gmra.mxu0 %v5434
      %v5625 = vpop.f32.mrf.mxu0
      %v5626 = vadd.f32 0.0, %v5625
      %v5627 = vpop.f32.mrf.mxu0
      %v5628 = vadd.f32 0.0, %v5627
      %5629 = vmatprep.mubr.f32.mxu0 0.0
      %5630 = vmatmul.mubr.f32.gmra.mxu0 %v5437
      %v5631 = vpop.f32.mrf.mxu0
      %v5632 = vadd.f32 0.0, %v5631
      %v5633 = vpop.f32.mrf.mxu0
      %v5634 = vadd.f32 0.0, %v5633
      %5635 = vmatprep.mubr.f32.mxu0 0.0
      %5636 = vmatmul.mubr.f32.gmra.mxu0 %v5440
      %v5637 = vpop.f32.mrf.mxu0
      %v5638 = vadd.f32 0.0, %v5637
      %v5639 = vpop.f32.mrf.mxu0
      %v5640 = vadd.f32 0.0, %v5639
      %5641 = vmatprep.mubr.f32.mxu0 0.0
      %5642 = vmatmul.mubr.f32.gmra.mxu0 %v5443
      %v5643 = vpop.f32.mrf.mxu0
      %v5644 = vadd.f32 0.0, %v5643
      %v5645 = vpop.f32.mrf.mxu0
      %v5646 = vadd.f32 0.0, %v5645
      %5647 = vmatprep.mubr.f32.mxu0 0.0
      %5648 = vmatmul.mubr.f32.gmra.mxu0 %v5446
      %v5649 = vpop.f32.mrf.mxu0
      %v5650 = vadd.f32 0.0, %v5649
      %v5651 = vpop.f32.mrf.mxu0
      %v5652 = vadd.f32 0.0, %v5651
      %5653 = vmatprep.mubr.f32.mxu0 0.0
      %5654 = vmatmul.mubr.f32.gmra.mxu0 %v5449
      %v5655 = vpop.f32.mrf.mxu0
      %v5656 = vadd.f32 0.0, %v5655
      %v5657 = vpop.f32.mrf.mxu0
      %v5658 = vadd.f32 0.0, %v5657
      %5659 = vmatprep.mubr.f32.mxu0 0.0
      %5660 = vmatmul.mubr.f32.gmra.mxu0 %v5452
      %v5661 = vpop.f32.mrf.mxu0
      %v5662 = vadd.f32 0.0, %v5661
      %v5663 = vpop.f32.mrf.mxu0
      %v5664 = vadd.f32 0.0, %v5663
      %5665 = vmatprep.mubr.f32.mxu0 0.0
      %5666 = vmatmul.mubr.f32.gmra.mxu0 %v5455
      %v5667 = vpop.f32.mrf.mxu0
      %v5668 = vadd.f32 0.0, %v5667
      %v5669 = vpop.f32.mrf.mxu0
      %v5670 = vadd.f32 0.0, %v5669
      %5671 = vmatprep.mubr.f32.mxu0 0.0
      %5672 = vmatmul.mubr.f32.gmra.mxu0 %v5458
      %v5673 = vpop.f32.mrf.mxu0
      %v5674 = vadd.f32 0.0, %v5673
      %v5675 = vpop.f32.mrf.mxu0
      %v5676 = vadd.f32 0.0, %v5675
      %5677 = vmatprep.mubr.f32.mxu0 0.0
      %5678 = vmatmul.mubr.f32.gmra.mxu0 %v5461
      %v5679 = vpop.f32.mrf.mxu0
      %v5680 = vadd.f32 0.0, %v5679
      %v5681 = vpop.f32.mrf.mxu0
      %v5682 = vadd.f32 0.0, %v5681
      %5683 = vmatprep.mubr.f32.mxu0 0.0
      %5684 = vmatmul.mubr.f32.gmra.mxu0 %v5464
      %v5685 = vpop.f32.mrf.mxu0
      %v5686 = vadd.f32 0.0, %v5685
      %v5687 = vpop.f32.mrf.mxu0
      %v5688 = vadd.f32 0.0, %v5687
      %5689 = vmatprep.mubr.f32.mxu0 0.0
      %5690 = vmatmul.mubr.f32.gmra.mxu0 %v5467
      %v5691 = vpop.f32.mrf.mxu0
      %v5692 = vadd.f32 0.0, %v5691
      %v5693 = vpop.f32.mrf.mxu0
      %v5694 = vadd.f32 0.0, %v5693
      %5695 = vmatprep.mubr.f32.mxu0 0.0
      %5696 = vmatmul.mubr.f32.gmra.mxu0 %v5470
      %v5697 = vpop.f32.mrf.mxu0
      %v5698 = vadd.f32 0.0, %v5697
      %v5699 = vpop.f32.mrf.mxu0
      %v5700 = vadd.f32 0.0, %v5699
      %5701 = vmatprep.mubr.f32.mxu0 0.0
      %5702 = vmatmul.mubr.f32.gmra.mxu0 %v5473
      %v5703 = vpop.f32.mrf.mxu0
      %v5704 = vadd.f32 0.0, %v5703
      %v5705 = vpop.f32.mrf.mxu0
      %v5706 = vadd.f32 0.0, %v5705
      %5707 = vmatprep.mubr.f32.mxu0 0.0
      %5708 = vmatmul.mubr.f32.gmra.mxu0 %v5476
      %v5709 = vpop.f32.mrf.mxu0
      %v5710 = vadd.f32 0.0, %v5709
      %v5711 = vpop.f32.mrf.mxu0
      %v5712 = vadd.f32 0.0, %v5711
      %5713 = vmatprep.mubr.f32.mxu0 0.0
      %5714 = vmatmul.mubr.f32.gmra.mxu0 %v5479
      %v5715 = vpop.f32.mrf.mxu0
      %v5716 = vadd.f32 0.0, %v5715
      %v5717 = vpop.f32.mrf.mxu0
      %v5718 = vadd.f32 0.0, %v5717
      %5719 = vmatprep.mubr.f32.mxu0 0.0
      %5720 = vmatmul.mubr.f32.gmra.mxu0 %v5482
      %v5721 = vpop.f32.mrf.mxu0
      %v5722 = vadd.f32 0.0, %v5721
      %v5723 = vpop.f32.mrf.mxu0
      %v5724 = vadd.f32 0.0, %v5723
      %5725 = vmatprep.mubr.f32.mxu0 0.0
      %5726 = vmatmul.mubr.f32.gmra.mxu0 %v5485
      %v5727 = vpop.f32.mrf.mxu0
      %v5728 = vadd.f32 0.0, %v5727
      %v5729 = vpop.f32.mrf.mxu0
      %v5730 = vadd.f32 0.0, %v5729
      %5731 = vmatprep.mubr.f32.mxu0 0.0
      %5732 = vmatmul.mubr.f32.gmra.mxu0 %v5488
      %v5733 = vpop.f32.mrf.mxu0
      %v5734 = vadd.f32 0.0, %v5733
      %v5735 = vpop.f32.mrf.mxu0
      %v5736 = vadd.f32 0.0, %v5735
      %5737 = vmatprep.mubr.f32.mxu0 0.0
      %5738 = vmatmul.mubr.f32.gmra.mxu0 %v5491
      %v5739 = vpop.f32.mrf.mxu0
      %v5740 = vadd.f32 0.0, %v5739
      %v5741 = vpop.f32.mrf.mxu0
      %v5742 = vadd.f32 0.0, %v5741
      %5743 = vmatprep.mubr.f32.mxu0 0.0
      %5744 = vmatmul.mubr.f32.gmra.mxu0 %v5494
      %v5745 = vpop.f32.mrf.mxu0
      %v5746 = vadd.f32 0.0, %v5745
      %v5747 = vpop.f32.mrf.mxu0
      %v5748 = vadd.f32 0.0, %v5747
      %5749 = vmatprep.mubr.f32.mxu0 0.0
      %5750 = vmatmul.mubr.f32.gmra.mxu0 %v5497
      %v5751 = vpop.f32.mrf.mxu0
      %v5752 = vadd.f32 0.0, %v5751
      %v5753 = vpop.f32.mrf.mxu0
      %v5754 = vadd.f32 0.0, %v5753
      %5755 = vdwg.mxu0
      %v5756 = vmax.f32 %v5566, %v5568
      %5757 = vmax.xlane.f32.xlu0 %v5756
      %v5758 = vpop.xlane.xlu0 %5757
      %v5759 = vmax.f32 %v5572, %v5574
      %5760 = vmax.xlane.f32.xlu0 %v5759
      %v5761 = vpop.xlane.xlu0 %5760
      %v5762 = vmax.f32 %v5578, %v5580
      %5763 = vmax.xlane.f32.xlu0 %v5762
      %v5764 = vpop.xlane.xlu0 %5763
      %v5765 = vmax.f32 %v5584, %v5586
      %5766 = vmax.xlane.f32.xlu0 %v5765
      %v5767 = vpop.xlane.xlu0 %5766
      %v5768 = vmax.f32 %v5590, %v5592
      %5769 = vmax.xlane.f32.xlu0 %v5768
      %v5770 = vpop.xlane.xlu0 %5769
      %v5771 = vmax.f32 %v5596, %v5598
      %5772 = vmax.xlane.f32.xlu0 %v5771
      %v5773 = vpop.xlane.xlu0 %5772
      %v5774 = vmax.f32 %v5602, %v5604
      %5775 = vmax.xlane.f32.xlu0 %v5774
      %v5776 = vpop.xlane.xlu0 %5775
      %v5777 = vmax.f32 %v5608, %v5610
      %5778 = vmax.xlane.f32.xlu0 %v5777
      %v5779 = vpop.xlane.xlu0 %5778
      %v5780 = vmax.f32 %v5614, %v5616
      %5781 = vmax.xlane.f32.xlu0 %v5780
      %v5782 = vpop.xlane.xlu0 %5781
      %v5783 = vmax.f32 %v5620, %v5622
      %5784 = vmax.xlane.f32.xlu0 %v5783
      %v5785 = vpop.xlane.xlu0 %5784
      %v5786 = vmax.f32 %v5626, %v5628
      %5787 = vmax.xlane.f32.xlu0 %v5786
      %v5788 = vpop.xlane.xlu0 %5787
      %v5789 = vmax.f32 %v5632, %v5634
      %5790 = vmax.xlane.f32.xlu0 %v5789
      %v5791 = vpop.xlane.xlu0 %5790
      %v5792 = vmax.f32 %v5638, %v5640
      %5793 = vmax.xlane.f32.xlu0 %v5792
      %v5794 = vpop.xlane.xlu0 %5793
      %v5795 = vmax.f32 %v5644, %v5646
      %5796 = vmax.xlane.f32.xlu0 %v5795
      %v5797 = vpop.xlane.xlu0 %5796
      %v5798 = vmax.f32 %v5650, %v5652
      %5799 = vmax.xlane.f32.xlu0 %v5798
      %v5800 = vpop.xlane.xlu0 %5799
      %v5801 = vmax.f32 %v5656, %v5658
      %5802 = vmax.xlane.f32.xlu0 %v5801
      %v5803 = vpop.xlane.xlu0 %5802
      %v5804 = vmax.f32 %v5662, %v5664
      %5805 = vmax.xlane.f32.xlu0 %v5804
      %v5806 = vpop.xlane.xlu0 %5805
      %v5807 = vmax.f32 %v5668, %v5670
      %5808 = vmax.xlane.f32.xlu0 %v5807
      %v5809 = vpop.xlane.xlu0 %5808
      %v5810 = vmax.f32 %v5674, %v5676
      %5811 = vmax.xlane.f32.xlu0 %v5810
      %v5812 = vpop.xlane.xlu0 %5811
      %v5813 = vmax.f32 %v5680, %v5682
      %5814 = vmax.xlane.f32.xlu0 %v5813
      %v5815 = vpop.xlane.xlu0 %5814
      %v5816 = vmax.f32 %v5686, %v5688
      %5817 = vmax.xlane.f32.xlu0 %v5816
      %v5818 = vpop.xlane.xlu0 %5817
      %v5819 = vmax.f32 %v5692, %v5694
      %5820 = vmax.xlane.f32.xlu0 %v5819
      %v5821 = vpop.xlane.xlu0 %5820
      %v5822 = vmax.f32 %v5698, %v5700
      %5823 = vmax.xlane.f32.xlu0 %v5822
      %v5824 = vpop.xlane.xlu0 %5823
      %v5825 = vmax.f32 %v5704, %v5706
      %5826 = vmax.xlane.f32.xlu0 %v5825
      %v5827 = vpop.xlane.xlu0 %5826
      %v5828 = vmax.f32 %v5710, %v5712
      %5829 = vmax.xlane.f32.xlu0 %v5828
      %v5830 = vpop.xlane.xlu0 %5829
      %v5831 = vmax.f32 %v5716, %v5718
      %5832 = vmax.xlane.f32.xlu0 %v5831
      %v5833 = vpop.xlane.xlu0 %5832
      %v5834 = vmax.f32 %v5722, %v5724
      %5835 = vmax.xlane.f32.xlu0 %v5834
      %v5836 = vpop.xlane.xlu0 %5835
      %v5837 = vmax.f32 %v5728, %v5730
      %5838 = vmax.xlane.f32.xlu0 %v5837
      %v5839 = vpop.xlane.xlu0 %5838
      %v5840 = vmax.f32 %v5734, %v5736
      %5841 = vmax.xlane.f32.xlu0 %v5840
      %v5842 = vpop.xlane.xlu0 %5841
      %v5843 = vmax.f32 %v5740, %v5742
      %5844 = vmax.xlane.f32.xlu0 %v5843
      %v5845 = vpop.xlane.xlu0 %5844
      %v5846 = vmax.f32 %v5746, %v5748
      %5847 = vmax.xlane.f32.xlu0 %v5846
      %v5848 = vpop.xlane.xlu0 %5847
      %v5849 = vmax.f32 %v5752, %v5754
      %5850 = vmax.xlane.f32.xlu0 %v5849
      %v5851 = vpop.xlane.xlu0 %5850
      %v5852 = vsub.f32 %v5566, %v5758
      %v5853 = vsub.f32 %v5568, %v5758
      %v5854 = vsub.f32 %v5572, %v5761
      %v5855 = vsub.f32 %v5574, %v5761
      %v5856 = vsub.f32 %v5578, %v5764
      %v5857 = vsub.f32 %v5580, %v5764
      %v5858 = vsub.f32 %v5584, %v5767
      %v5859 = vsub.f32 %v5586, %v5767
      %v5860 = vsub.f32 %v5590, %v5770
      %v5861 = vsub.f32 %v5592, %v5770
      %v5862 = vsub.f32 %v5596, %v5773
      %v5863 = vsub.f32 %v5598, %v5773
      %v5864 = vsub.f32 %v5602, %v5776
      %v5865 = vsub.f32 %v5604, %v5776
      %v5866 = vsub.f32 %v5608, %v5779
      %v5867 = vsub.f32 %v5610, %v5779
      %v5868 = vsub.f32 %v5614, %v5782
      %v5869 = vsub.f32 %v5616, %v5782
      %v5870 = vsub.f32 %v5620, %v5785
      %v5871 = vsub.f32 %v5622, %v5785
      %v5872 = vsub.f32 %v5626, %v5788
      %v5873 = vsub.f32 %v5628, %v5788
      %v5874 = vsub.f32 %v5632, %v5791
      %v5875 = vsub.f32 %v5634, %v5791
      %v5876 = vsub.f32 %v5638, %v5794
      %v5877 = vsub.f32 %v5640, %v5794
      %v5878 = vsub.f32 %v5644, %v5797
      %v5879 = vsub.f32 %v5646, %v5797
      %v5880 = vsub.f32 %v5650, %v5800
      %v5881 = vsub.f32 %v5652, %v5800
      %v5882 = vsub.f32 %v5656, %v5803
      %v5883 = vsub.f32 %v5658, %v5803
      %v5884 = vsub.f32 %v5662, %v5806
      %v5885 = vsub.f32 %v5664, %v5806
      %v5886 = vsub.f32 %v5668, %v5809
      %v5887 = vsub.f32 %v5670, %v5809
      %v5888 = vsub.f32 %v5674, %v5812
      %v5889 = vsub.f32 %v5676, %v5812
      %v5890 = vsub.f32 %v5680, %v5815
      %v5891 = vsub.f32 %v5682, %v5815
      %v5892 = vsub.f32 %v5686, %v5818
      %v5893 = vsub.f32 %v5688, %v5818
      %v5894 = vsub.f32 %v5692, %v5821
      %v5895 = vsub.f32 %v5694, %v5821
      %v5896 = vsub.f32 %v5698, %v5824
      %v5897 = vsub.f32 %v5700, %v5824
      %v5898 = vsub.f32 %v5704, %v5827
      %v5899 = vsub.f32 %v5706, %v5827
      %v5900 = vsub.f32 %v5710, %v5830
      %v5901 = vsub.f32 %v5712, %v5830
      %v5902 = vsub.f32 %v5716, %v5833
      %v5903 = vsub.f32 %v5718, %v5833
      %v5904 = vsub.f32 %v5722, %v5836
      %v5905 = vsub.f32 %v5724, %v5836
      %v5906 = vsub.f32 %v5728, %v5839
      %v5907 = vsub.f32 %v5730, %v5839
      %v5908 = vsub.f32 %v5734, %v5842
      %v5909 = vsub.f32 %v5736, %v5842
      %v5910 = vsub.f32 %v5740, %v5845
      %v5911 = vsub.f32 %v5742, %v5845
      %v5912 = vsub.f32 %v5746, %v5848
      %v5913 = vsub.f32 %v5748, %v5848
      %v5914 = vsub.f32 %v5752, %v5851
      %v5915 = vsub.f32 %v5754, %v5851
      %v5916 = vmul.f32 %v5852, 1.442695
      %v5917 = vpow.pop %v5916
      %v5918 = vmul.f32 %v5853, 1.442695
      %v5919 = vpow.pop %v5918
      %v5920 = vmul.f32 %v5854, 1.442695
      %v5921 = vpow.pop %v5920
      %v5922 = vmul.f32 %v5855, 1.442695
      %v5923 = vpow.pop %v5922
      %v5924 = vmul.f32 %v5856, 1.442695
      %v5925 = vpow.pop %v5924
      %v5926 = vmul.f32 %v5857, 1.442695
      %v5927 = vpow.pop %v5926
      %v5928 = vmul.f32 %v5858, 1.442695
      %v5929 = vpow.pop %v5928
      %v5930 = vmul.f32 %v5859, 1.442695
      %v5931 = vpow.pop %v5930
      %v5932 = vmul.f32 %v5860, 1.442695
      %v5933 = vpow.pop %v5932
      %v5934 = vmul.f32 %v5861, 1.442695
      %v5935 = vpow.pop %v5934
      %v5936 = vmul.f32 %v5862, 1.442695
      %v5937 = vpow.pop %v5936
      %v5938 = vmul.f32 %v5863, 1.442695
      %v5939 = vpow.pop %v5938
      %v5940 = vmul.f32 %v5864, 1.442695
      %v5941 = vpow.pop %v5940
      %v5942 = vmul.f32 %v5865, 1.442695
      %v5943 = vpow.pop %v5942
      %v5944 = vmul.f32 %v5866, 1.442695
      %v5945 = vpow.pop %v5944
      %v5946 = vmul.f32 %v5867, 1.442695
      %v5947 = vpow.pop %v5946
      %v5948 = vmul.f32 %v5868, 1.442695
      %v5949 = vpow.pop %v5948
      %v5950 = vmul.f32 %v5869, 1.442695
      %v5951 = vpow.pop %v5950
      %v5952 = vmul.f32 %v5870, 1.442695
      %v5953 = vpow.pop %v5952
      %v5954 = vmul.f32 %v5871, 1.442695
      %v5955 = vpow.pop %v5954
      %v5956 = vmul.f32 %v5872, 1.442695
      %v5957 = vpow.pop %v5956
      %v5958 = vmul.f32 %v5873, 1.442695
      %v5959 = vpow.pop %v5958
      %v5960 = vmul.f32 %v5874, 1.442695
      %v5961 = vpow.pop %v5960
      %v5962 = vmul.f32 %v5875, 1.442695
      %v5963 = vpow.pop %v5962
      %v5964 = vmul.f32 %v5876, 1.442695
      %v5965 = vpow.pop %v5964
      %v5966 = vmul.f32 %v5877, 1.442695
      %v5967 = vpow.pop %v5966
      %v5968 = vmul.f32 %v5878, 1.442695
      %v5969 = vpow.pop %v5968
      %v5970 = vmul.f32 %v5879, 1.442695
      %v5971 = vpow.pop %v5970
      %v5972 = vmul.f32 %v5880, 1.442695
      %v5973 = vpow.pop %v5972
      %v5974 = vmul.f32 %v5881, 1.442695
      %v5975 = vpow.pop %v5974
      %v5976 = vmul.f32 %v5882, 1.442695
      %v5977 = vpow.pop %v5976
      %v5978 = vmul.f32 %v5883, 1.442695
      %v5979 = vpow.pop %v5978
      %v5980 = vmul.f32 %v5884, 1.442695
      %v5981 = vpow.pop %v5980
      %v5982 = vmul.f32 %v5885, 1.442695
      %v5983 = vpow.pop %v5982
      %v5984 = vmul.f32 %v5886, 1.442695
      %v5985 = vpow.pop %v5984
      %v5986 = vmul.f32 %v5887, 1.442695
      %v5987 = vpow.pop %v5986
      %v5988 = vmul.f32 %v5888, 1.442695
      %v5989 = vpow.pop %v5988
      %v5990 = vmul.f32 %v5889, 1.442695
      %v5991 = vpow.pop %v5990
      %v5992 = vmul.f32 %v5890, 1.442695
      %v5993 = vpow.pop %v5992
      %v5994 = vmul.f32 %v5891, 1.442695
      %v5995 = vpow.pop %v5994
      %v5996 = vmul.f32 %v5892, 1.442695
      %v5997 = vpow.pop %v5996
      %v5998 = vmul.f32 %v5893, 1.442695
      %v5999 = vpow.pop %v5998
      %v6000 = vmul.f32 %v5894, 1.442695
      %v6001 = vpow.pop %v6000
      %v6002 = vmul.f32 %v5895, 1.442695
      %v6003 = vpow.pop %v6002
      %v6004 = vmul.f32 %v5896, 1.442695
      %v6005 = vpow.pop %v6004
      %v6006 = vmul.f32 %v5897, 1.442695
      %v6007 = vpow.pop %v6006
      %v6008 = vmul.f32 %v5898, 1.442695
      %v6009 = vpow.pop %v6008
      %v6010 = vmul.f32 %v5899, 1.442695
      %v6011 = vpow.pop %v6010
      %v6012 = vmul.f32 %v5900, 1.442695
      %v6013 = vpow.pop %v6012
      %v6014 = vmul.f32 %v5901, 1.442695
      %v6015 = vpow.pop %v6014
      %v6016 = vmul.f32 %v5902, 1.442695
      %v6017 = vpow.pop %v6016
      %v6018 = vmul.f32 %v5903, 1.442695
      %v6019 = vpow.pop %v6018
      %v6020 = vmul.f32 %v5904, 1.442695
      %v6021 = vpow.pop %v6020
      %v6022 = vmul.f32 %v5905, 1.442695
      %v6023 = vpow.pop %v6022
      %v6024 = vmul.f32 %v5906, 1.442695
      %v6025 = vpow.pop %v6024
      %v6026 = vmul.f32 %v5907, 1.442695
      %v6027 = vpow.pop %v6026
      %v6028 = vmul.f32 %v5908, 1.442695
      %v6029 = vpow.pop %v6028
      %v6030 = vmul.f32 %v5909, 1.442695
      %v6031 = vpow.pop %v6030
      %v6032 = vmul.f32 %v5910, 1.442695
      %v6033 = vpow.pop %v6032
      %v6034 = vmul.f32 %v5911, 1.442695
      %v6035 = vpow.pop %v6034
      %v6036 = vmul.f32 %v5912, 1.442695
      %v6037 = vpow.pop %v6036
      %v6038 = vmul.f32 %v5913, 1.442695
      %v6039 = vpow.pop %v6038
      %v6040 = vmul.f32 %v5914, 1.442695
      %v6041 = vpow.pop %v6040
      %v6042 = vmul.f32 %v5915, 1.442695
      %v6043 = vpow.pop %v6042
      %v6044 = vadd.f32 %v5917, %v5919
      %6045 = vadd.xlane.f32.xlu0 %v6044
      %v6046 = vpop.xlane.xlu0 %6045
      %v6047 = vadd.f32 %v5921, %v5923
      %6048 = vadd.xlane.f32.xlu0 %v6047
      %v6049 = vpop.xlane.xlu0 %6048
      %v6050 = vadd.f32 %v5925, %v5927
      %6051 = vadd.xlane.f32.xlu0 %v6050
      %v6052 = vpop.xlane.xlu0 %6051
      %v6053 = vadd.f32 %v5929, %v5931
      %6054 = vadd.xlane.f32.xlu0 %v6053
      %v6055 = vpop.xlane.xlu0 %6054
      %v6056 = vadd.f32 %v5933, %v5935
      %6057 = vadd.xlane.f32.xlu0 %v6056
      %v6058 = vpop.xlane.xlu0 %6057
      %v6059 = vadd.f32 %v5937, %v5939
      %6060 = vadd.xlane.f32.xlu0 %v6059
      %v6061 = vpop.xlane.xlu0 %6060
      %v6062 = vadd.f32 %v5941, %v5943
      %6063 = vadd.xlane.f32.xlu0 %v6062
      %v6064 = vpop.xlane.xlu0 %6063
      %v6065 = vadd.f32 %v5945, %v5947
      %6066 = vadd.xlane.f32.xlu0 %v6065
      %v6067 = vpop.xlane.xlu0 %6066
      %v6068 = vadd.f32 %v5949, %v5951
      %6069 = vadd.xlane.f32.xlu0 %v6068
      %v6070 = vpop.xlane.xlu0 %6069
      %v6071 = vadd.f32 %v5953, %v5955
      %6072 = vadd.xlane.f32.xlu0 %v6071
      %v6073 = vpop.xlane.xlu0 %6072
      %v6074 = vadd.f32 %v5957, %v5959
      %6075 = vadd.xlane.f32.xlu0 %v6074
      %v6076 = vpop.xlane.xlu0 %6075
      %v6077 = vadd.f32 %v5961, %v5963
      %6078 = vadd.xlane.f32.xlu0 %v6077
      %v6079 = vpop.xlane.xlu0 %6078
      %v6080 = vadd.f32 %v5965, %v5967
      %6081 = vadd.xlane.f32.xlu0 %v6080
      %v6082 = vpop.xlane.xlu0 %6081
      %v6083 = vadd.f32 %v5969, %v5971
      %6084 = vadd.xlane.f32.xlu0 %v6083
      %v6085 = vpop.xlane.xlu0 %6084
      %v6086 = vadd.f32 %v5973, %v5975
      %6087 = vadd.xlane.f32.xlu0 %v6086
      %v6088 = vpop.xlane.xlu0 %6087
      %v6089 = vadd.f32 %v5977, %v5979
      %6090 = vadd.xlane.f32.xlu0 %v6089
      %v6091 = vpop.xlane.xlu0 %6090
      %v6092 = vadd.f32 %v5981, %v5983
      %6093 = vadd.xlane.f32.xlu0 %v6092
      %v6094 = vpop.xlane.xlu0 %6093
      %v6095 = vadd.f32 %v5985, %v5987
      %6096 = vadd.xlane.f32.xlu0 %v6095
      %v6097 = vpop.xlane.xlu0 %6096
      %v6098 = vadd.f32 %v5989, %v5991
      %6099 = vadd.xlane.f32.xlu0 %v6098
      %v6100 = vpop.xlane.xlu0 %6099
      %v6101 = vadd.f32 %v5993, %v5995
      %6102 = vadd.xlane.f32.xlu0 %v6101
      %v6103 = vpop.xlane.xlu0 %6102
      %v6104 = vadd.f32 %v5997, %v5999
      %6105 = vadd.xlane.f32.xlu0 %v6104
      %v6106 = vpop.xlane.xlu0 %6105
      %v6107 = vadd.f32 %v6001, %v6003
      %6108 = vadd.xlane.f32.xlu0 %v6107
      %v6109 = vpop.xlane.xlu0 %6108
      %v6110 = vadd.f32 %v6005, %v6007
      %6111 = vadd.xlane.f32.xlu0 %v6110
      %v6112 = vpop.xlane.xlu0 %6111
      %v6113 = vadd.f32 %v6009, %v6011
      %6114 = vadd.xlane.f32.xlu0 %v6113
      %v6115 = vpop.xlane.xlu0 %6114
      %v6116 = vadd.f32 %v6013, %v6015
      %6117 = vadd.xlane.f32.xlu0 %v6116
      %v6118 = vpop.xlane.xlu0 %6117
      %v6119 = vadd.f32 %v6017, %v6019
      %6120 = vadd.xlane.f32.xlu0 %v6119
      %v6121 = vpop.xlane.xlu0 %6120
      %v6122 = vadd.f32 %v6021, %v6023
      %6123 = vadd.xlane.f32.xlu0 %v6122
      %v6124 = vpop.xlane.xlu0 %6123
      %v6125 = vadd.f32 %v6025, %v6027
      %6126 = vadd.xlane.f32.xlu0 %v6125
      %v6127 = vpop.xlane.xlu0 %6126
      %v6128 = vadd.f32 %v6029, %v6031
      %6129 = vadd.xlane.f32.xlu0 %v6128
      %v6130 = vpop.xlane.xlu0 %6129
      %v6131 = vadd.f32 %v6033, %v6035
      %6132 = vadd.xlane.f32.xlu0 %v6131
      %v6133 = vpop.xlane.xlu0 %6132
      %v6134 = vadd.f32 %v6037, %v6039
      %6135 = vadd.xlane.f32.xlu0 %v6134
      %v6136 = vpop.xlane.xlu0 %6135
      %v6137 = vadd.f32 %v6041, %v6043
      %6138 = vadd.xlane.f32.xlu0 %v6137
      %v6139 = vpop.xlane.xlu0 %6138
      %v6140 = vrcp.pop %v6046
      %v6141 = vrcp.pop %v6049
      %v6142 = vrcp.pop %v6052
      %v6143 = vrcp.pop %v6055
      %v6144 = vrcp.pop %v6058
      %v6145 = vrcp.pop %v6061
      %v6146 = vrcp.pop %v6064
      %v6147 = vrcp.pop %v6067
      %v6148 = vrcp.pop %v6070
      %v6149 = vrcp.pop %v6073
      %v6150 = vrcp.pop %v6076
      %v6151 = vrcp.pop %v6079
      %v6152 = vrcp.pop %v6082
      %v6153 = vrcp.pop %v6085
      %v6154 = vrcp.pop %v6088
      %v6155 = vrcp.pop %v6091
      %v6156 = vrcp.pop %v6094
      %v6157 = vrcp.pop %v6097
      %v6158 = vrcp.pop %v6100
      %v6159 = vrcp.pop %v6103
      %v6160 = vrcp.pop %v6106
      %v6161 = vrcp.pop %v6109
      %v6162 = vrcp.pop %v6112
      %v6163 = vrcp.pop %v6115
      %v6164 = vrcp.pop %v6118
      %v6165 = vrcp.pop %v6121
      %v6166 = vrcp.pop %v6124
      %v6167 = vrcp.pop %v6127
      %v6168 = vrcp.pop %v6130
      %v6169 = vrcp.pop %v6133
      %v6170 = vrcp.pop %v6136
      %v6171 = vrcp.pop %v6139
      %v6172 = vmul.f32 %v5917, %v6140
      %v6173 = vmul.f32 %v5919, %v6140
      %v6174 = vmul.f32 %v5921, %v6141
      %v6175 = vmul.f32 %v5923, %v6141
      %v6176 = vmul.f32 %v5925, %v6142
      %v6177 = vmul.f32 %v5927, %v6142
      %v6178 = vmul.f32 %v5929, %v6143
      %v6179 = vmul.f32 %v5931, %v6143
      %v6180 = vmul.f32 %v5933, %v6144
      %v6181 = vmul.f32 %v5935, %v6144
      %v6182 = vmul.f32 %v5937, %v6145
      %v6183 = vmul.f32 %v5939, %v6145
      %v6184 = vmul.f32 %v5941, %v6146
      %v6185 = vmul.f32 %v5943, %v6146
      %v6186 = vmul.f32 %v5945, %v6147
      %v6187 = vmul.f32 %v5947, %v6147
      %v6188 = vmul.f32 %v5949, %v6148
      %v6189 = vmul.f32 %v5951, %v6148
      %v6190 = vmul.f32 %v5953, %v6149
      %v6191 = vmul.f32 %v5955, %v6149
      %v6192 = vmul.f32 %v5957, %v6150
      %v6193 = vmul.f32 %v5959, %v6150
      %v6194 = vmul.f32 %v5961, %v6151
      %v6195 = vmul.f32 %v5963, %v6151
      %v6196 = vmul.f32 %v5965, %v6152
      %v6197 = vmul.f32 %v5967, %v6152
      %v6198 = vmul.f32 %v5969, %v6153
      %v6199 = vmul.f32 %v5971, %v6153
      %v6200 = vmul.f32 %v5973, %v6154
      %v6201 = vmul.f32 %v5975, %v6154
      %v6202 = vmul.f32 %v5977, %v6155
      %v6203 = vmul.f32 %v5979, %v6155
      %v6204 = vmul.f32 %v5981, %v6156
      %v6205 = vmul.f32 %v5983, %v6156
      %v6206 = vmul.f32 %v5985, %v6157
      %v6207 = vmul.f32 %v5987, %v6157
      %v6208 = vmul.f32 %v5989, %v6158
      %v6209 = vmul.f32 %v5991, %v6158
      %v6210 = vmul.f32 %v5993, %v6159
      %v6211 = vmul.f32 %v5995, %v6159
      %v6212 = vmul.f32 %v5997, %v6160
      %v6213 = vmul.f32 %v5999, %v6160
      %v6214 = vmul.f32 %v6001, %v6161
      %v6215 = vmul.f32 %v6003, %v6161
      %v6216 = vmul.f32 %v6005, %v6162
      %v6217 = vmul.f32 %v6007, %v6162
      %v6218 = vmul.f32 %v6009, %v6163
      %v6219 = vmul.f32 %v6011, %v6163
      %v6220 = vmul.f32 %v6013, %v6164
      %v6221 = vmul.f32 %v6015, %v6164
      %v6222 = vmul.f32 %v6017, %v6165
      %v6223 = vmul.f32 %v6019, %v6165
      %v6224 = vmul.f32 %v6021, %v6166
      %v6225 = vmul.f32 %v6023, %v6166
      %v6226 = vmul.f32 %v6025, %v6167
      %v6227 = vmul.f32 %v6027, %v6167
      %v6228 = vmul.f32 %v6029, %v6168
      %v6229 = vmul.f32 %v6031, %v6168
      %v6230 = vmul.f32 %v6033, %v6169
      %v6231 = vmul.f32 %v6035, %v6169
      %v6232 = vmul.f32 %v6037, %v6170
      %v6233 = vmul.f32 %v6039, %v6170
      %v6234 = vmul.f32 %v6041, %v6171
      %v6235 = vmul.f32 %v6043, %v6171
      %6236 = vmatprep.subr.mxu0 %v6203
      %6237 = vmatpush1.xpose.msra.mxu0 %v6202
      %6238 = vmatprep.subr.mxu0 %v6201
      %6239 = vmatpush1.xpose.msra.mxu0 %v6200
      %6240 = vmatprep.subr.mxu0 %v6199
      %6241 = vmatpush1.xpose.msra.mxu0 %v6198
      %6242 = vmatprep.subr.mxu0 %v6197
      %6243 = vmatpush1.xpose.msra.mxu0 %v6196
      %6244 = vmatprep.subr.mxu0 %v6195
      %6245 = vmatpush1.xpose.msra.mxu0 %v6194
      %6246 = vmatprep.subr.mxu0 %v6193
      %6247 = vmatpush1.xpose.msra.mxu0 %v6192
      %6248 = vmatprep.subr.mxu0 %v6191
      %6249 = vmatpush1.xpose.msra.mxu0 %v6190
      %6250 = vmatprep.subr.mxu0 %v6189
      %6251 = vmatpush1.xpose.msra.mxu0 %v6188
      %6252 = vmatprep.subr.mxu0 %v6187
      %6253 = vmatpush1.xpose.msra.mxu0 %v6186
      %6254 = vmatprep.subr.mxu0 %v6185
      %6255 = vmatpush1.xpose.msra.mxu0 %v6184
      %6256 = vmatprep.subr.mxu0 %v6183
      %6257 = vmatpush1.xpose.msra.mxu0 %v6182
      %6258 = vmatprep.subr.mxu0 %v6181
      %6259 = vmatpush1.xpose.msra.mxu0 %v6180
      %6260 = vmatprep.subr.mxu0 %v6179
      %6261 = vmatpush1.xpose.msra.mxu0 %v6178
      %6262 = vmatprep.subr.mxu0 %v6177
      %6263 = vmatpush1.xpose.msra.mxu0 %v6176
      %6264 = vmatprep.subr.mxu0 %v6175
      %6265 = vmatpush1.xpose.msra.mxu0 %v6174
      %6266 = vmatprep.subr.mxu0 %v6173
      %6267 = vmatpush1.xpose.msra.mxu0 %v6172
      %6268 = vmatprep.subr.mxu0 %v6235
      %6269 = vmatpush2.xpose.msra.mxu0 %v6234
      %6270 = vmatprep.subr.mxu0 %v6233
      %6271 = vmatpush2.xpose.msra.mxu0 %v6232
      %6272 = vmatprep.subr.mxu0 %v6231
      %6273 = vmatpush2.xpose.msra.mxu0 %v6230
      %6274 = vmatprep.subr.mxu0 %v6229
      %6275 = vmatpush2.xpose.msra.mxu0 %v6228
      %6276 = vmatprep.subr.mxu0 %v6227
      %6277 = vmatpush2.xpose.msra.mxu0 %v6226
      %6278 = vmatprep.subr.mxu0 %v6225
      %6279 = vmatpush2.xpose.msra.mxu0 %v6224
      %6280 = vmatprep.subr.mxu0 %v6223
      %6281 = vmatpush2.xpose.msra.mxu0 %v6222
      %6282 = vmatprep.subr.mxu0 %v6221
      %6283 = vmatpush2.xpose.msra.mxu0 %v6220
      %6284 = vmatprep.subr.mxu0 %v6219
      %6285 = vmatpush2.xpose.msra.mxu0 %v6218
      %6286 = vmatprep.subr.mxu0 %v6217
      %6287 = vmatpush2.xpose.msra.mxu0 %v6216
      %6288 = vmatprep.subr.mxu0 %v6215
      %6289 = vmatpush2.xpose.msra.mxu0 %v6214
      %6290 = vmatprep.subr.mxu0 %v6213
      %6291 = vmatpush2.xpose.msra.mxu0 %v6212
      %6292 = vmatprep.subr.mxu0 %v6211
      %6293 = vmatpush2.xpose.msra.mxu0 %v6210
      %6294 = vmatprep.subr.mxu0 %v6209
      %6295 = vmatpush2.xpose.msra.mxu0 %v6208
      %6296 = vmatprep.subr.mxu0 %v6207
      %6297 = vmatpush2.xpose.msra.mxu0 %v6206
      %6298 = vmatprep.subr.mxu0 %v6205
      %6299 = vmatpush2.xpose.msra.mxu0 %v6204
      %6300 = vmatprep.mubr.f32.mxu0 %v5319
      %6301 = vmatmul.mubr.f32.gmra.mxu0 %v5317
      %v6302 = vpop.f32.mrf.mxu0
      %v6303 = vadd.f32 0.0, %v6302
      %v6304 = vpop.f32.mrf.mxu0
      %v6305 = vadd.f32 0.0, %v6304
      %6306 = vdwg.mxu0
      %6307 = vst [vmem:[#allocation2] sm:$0xff] %v6303
      %6308 = vst [vmem:[#allocation2 + $0x8] sm:$0xff] %v6305
      %6309 = vxpose.xlu0.b32.start [1/16] %v5275, 128
      %6310 = vxpose.xlu0.b32.cont [2/16] 0.0, 128
      %6311 = vxpose.xlu0.b32.cont [3/16] 0.0, 128
      %6312 = vxpose.xlu0.b32.cont [4/16] 0.0, 128
      %6313 = vxpose.xlu0.b32.cont [5/16] 0.0, 128
      %6314 = vxpose.xlu0.b32.cont [6/16] 0.0, 128
      %6315 = vxpose.xlu0.b32.cont [7/16] 0.0, 128
      %6316 = vxpose.xlu0.b32.cont [8/16] 0.0, 128
      %6317 = vxpose.xlu0.b32.cont [9/16] 0.0, 128
      %6318 = vxpose.xlu0.b32.cont [10/16] 0.0, 128
      %6319 = vxpose.xlu0.b32.cont [11/16] 0.0, 128
      %6320 = vxpose.xlu0.b32.cont [12/16] 0.0, 128
      %6321 = vxpose.xlu0.b32.cont [13/16] 0.0, 128
      %6322 = vxpose.xlu0.b32.cont [14/16] 0.0, 128
      %6323 = vxpose.xlu0.b32.cont [15/16] 0.0, 128
      %6324 = vxpose.xlu0.b32.end [16/16] 0.0, 128
      %v6325 = vpop.trf.xlu0
      %v6326 = vpop.trf.xlu0
      %v6327 = vpop.trf.xlu0
      %v6328 = vpop.trf.xlu0
      %v6329 = vpop.trf.xlu0
      %v6330 = vpop.trf.xlu0
      %v6331 = vpop.trf.xlu0
      %v6332 = vpop.trf.xlu0
      %v6333 = vpop.trf.xlu0
      %v6334 = vpop.trf.xlu0
      %v6335 = vpop.trf.xlu0
      %v6336 = vpop.trf.xlu0
      %v6337 = vpop.trf.xlu0
      %v6338 = vpop.trf.xlu0
      %v6339 = vpop.trf.xlu0
      %v6340 = vpop.trf.xlu0
      %6341 = vxpose.xlu0.b32.start [1/16] %v5277, 128
      %6342 = vxpose.xlu0.b32.cont [2/16] 0.0, 128
      %6343 = vxpose.xlu0.b32.cont [3/16] 0.0, 128
      %6344 = vxpose.xlu0.b32.cont [4/16] 0.0, 128
      %6345 = vxpose.xlu0.b32.cont [5/16] 0.0, 128
      %6346 = vxpose.xlu0.b32.cont [6/16] 0.0, 128
      %6347 = vxpose.xlu0.b32.cont [7/16] 0.0, 128
      %6348 = vxpose.xlu0.b32.cont [8/16] 0.0, 128
      %6349 = vxpose.xlu0.b32.cont [9/16] 0.0, 128
      %6350 = vxpose.xlu0.b32.cont [10/16] 0.0, 128
      %6351 = vxpose.xlu0.b32.cont [11/16] 0.0, 128
      %6352 = vxpose.xlu0.b32.cont [12/16] 0.0, 128
      %6353 = vxpose.xlu0.b32.cont [13/16] 0.0, 128
      %6354 = vxpose.xlu0.b32.cont [14/16] 0.0, 128
      %6355 = vxpose.xlu0.b32.cont [15/16] 0.0, 128
      %6356 = vxpose.xlu0.b32.end [16/16] 0.0, 128
      %v6357 = vpop.trf.xlu0
      %v6358 = vpop.trf.xlu0
      %v6359 = vpop.trf.xlu0
      %v6360 = vpop.trf.xlu0
      %v6361 = vpop.trf.xlu0
      %v6362 = vpop.trf.xlu0
      %v6363 = vpop.trf.xlu0
      %v6364 = vpop.trf.xlu0
      %v6365 = vpop.trf.xlu0
      %v6366 = vpop.trf.xlu0
      %v6367 = vpop.trf.xlu0
      %v6368 = vpop.trf.xlu0
      %v6369 = vpop.trf.xlu0
      %v6370 = vpop.trf.xlu0
      %v6371 = vpop.trf.xlu0
      %v6372 = vpop.trf.xlu0
      %v6374 = vsel %vm1013, %v6325, 0
      %v6377 = vsel %vm1013, %v6326, 0
      %v6380 = vsel %vm1013, %v6327, 0
      %v6383 = vsel %vm1013, %v6328, 0
      %v6386 = vsel %vm1013, %v6329, 0
      %v6389 = vsel %vm1013, %v6330, 0
      %v6392 = vsel %vm1013, %v6331, 0
      %v6395 = vsel %vm1013, %v6332, 0
      %v6398 = vsel %vm1013, %v6333, 0
      %v6401 = vsel %vm1013, %v6334, 0
      %v6404 = vsel %vm1013, %v6335, 0
      %v6407 = vsel %vm1013, %v6336, 0
      %v6410 = vsel %vm1013, %v6337, 0
      %v6413 = vsel %vm1013, %v6338, 0
      %v6416 = vsel %vm1013, %v6339, 0
      %v6419 = vsel %vm1013, %v6340, 0
      %v6422 = vsel %vm1013, %v6357, 0
      %v6425 = vsel %vm1013, %v6358, 0
      %v6428 = vsel %vm1013, %v6359, 0
      %v6431 = vsel %vm1013, %v6360, 0
      %v6434 = vsel %vm1013, %v6361, 0
      %v6437 = vsel %vm1013, %v6362, 0
      %v6440 = vsel %vm1013, %v6363, 0
      %v6443 = vsel %vm1013, %v6364, 0
      %v6446 = vsel %vm1013, %v6365, 0
      %v6449 = vsel %vm1013, %v6366, 0
      %v6452 = vsel %vm1013, %v6367, 0
      %v6455 = vsel %vm1013, %v6368, 0
      %v6458 = vsel %vm1013, %v6369, 0
      %v6461 = vsel %vm1013, %v6370, 0
      %v6464 = vsel %vm1013, %v6371, 0
      %v6467 = vsel %vm1013, %v6372, 0
      %6469 = vmatprep.subr.mxu0 0.0
      %6470 = vmatpush1.msra.mxu0 0.0
      %6471 = vmatprep.subr.mxu0 0.0
      %6472 = vmatpush1.msra.mxu0 0.0
      %6473 = vmatprep.subr.mxu0 0.0
      %6474 = vmatpush1.msra.mxu0 0.0
      %6475 = vmatprep.subr.mxu0 0.0
      %6476 = vmatpush1.msra.mxu0 0.0
      %6477 = vmatprep.subr.mxu0 0.0
      %6478 = vmatpush1.msra.mxu0 0.0
      %6479 = vmatprep.subr.mxu0 0.0
      %6480 = vmatpush1.msra.mxu0 0.0
      %6481 = vmatprep.subr.mxu0 0.0
      %6482 = vmatpush1.msra.mxu0 0.0
      %6483 = vmatprep.subr.mxu0 0.0
      %6484 = vmatpush1.msra.mxu0 0.0
      %6485 = vmatprep.subr.mxu0 0.0
      %6486 = vmatpush1.msra.mxu0 0.0
      %6487 = vmatprep.subr.mxu0 0.0
      %6488 = vmatpush1.msra.mxu0 0.0
      %6489 = vmatprep.subr.mxu0 0.0
      %6490 = vmatpush1.msra.mxu0 0.0
      %6491 = vmatprep.subr.mxu0 0.0
      %6492 = vmatpush1.msra.mxu0 0.0
      %6493 = vmatprep.subr.mxu0 0.0
      %6494 = vmatpush1.msra.mxu0 0.0
      %6495 = vmatprep.subr.mxu0 0.0
      %6496 = vmatpush1.msra.mxu0 0.0
      %6497 = vmatprep.subr.mxu0 0.0
      %6498 = vmatpush1.msra.mxu0 0.0
      %6499 = vmatprep.subr.mxu0 %v5301
      %6500 = vmatpush1.msra.mxu0 %v5299
      %6501 = vmatprep.subr.mxu0 0.0
      %6502 = vmatpush2.msra.mxu0 0.0
      %6503 = vmatprep.subr.mxu0 0.0
      %6504 = vmatpush2.msra.mxu0 0.0
      %6505 = vmatprep.subr.mxu0 0.0
      %6506 = vmatpush2.msra.mxu0 0.0
      %6507 = vmatprep.subr.mxu0 0.0
      %6508 = vmatpush2.msra.mxu0 0.0
      %6509 = vmatprep.subr.mxu0 0.0
      %6510 = vmatpush2.msra.mxu0 0.0
      %6511 = vmatprep.subr.mxu0 0.0
      %6512 = vmatpush2.msra.mxu0 0.0
      %6513 = vmatprep.subr.mxu0 0.0
      %6514 = vmatpush2.msra.mxu0 0.0
      %6515 = vmatprep.subr.mxu0 0.0
      %6516 = vmatpush2.msra.mxu0 0.0
      %6517 = vmatprep.subr.mxu0 0.0
      %6518 = vmatpush2.msra.mxu0 0.0
      %6519 = vmatprep.subr.mxu0 0.0
      %6520 = vmatpush2.msra.mxu0 0.0
      %6521 = vmatprep.subr.mxu0 0.0
      %6522 = vmatpush2.msra.mxu0 0.0
      %6523 = vmatprep.subr.mxu0 0.0
      %6524 = vmatpush2.msra.mxu0 0.0
      %6525 = vmatprep.subr.mxu0 0.0
      %6526 = vmatpush2.msra.mxu0 0.0
      %6527 = vmatprep.subr.mxu0 0.0
      %6528 = vmatpush2.msra.mxu0 0.0
      %6529 = vmatprep.subr.mxu0 0.0
      %6530 = vmatpush2.msra.mxu0 0.0
      %6531 = vmatprep.subr.mxu0 0.0
      %6532 = vmatpush2.msra.mxu0 0.0
      %6533 = vmatprep.mubr.f32.mxu0 0.0
      %6534 = vmatmul.mubr.f32.gmra.mxu0 %v6374
      %v6535 = vpop.f32.mrf.mxu0
      %v6536 = vadd.f32 0.0, %v6535
      %v6537 = vpop.f32.mrf.mxu0
      %v6538 = vadd.f32 0.0, %v6537
      %6539 = vmatprep.mubr.f32.mxu0 0.0
      %6540 = vmatmul.mubr.f32.gmra.mxu0 %v6377
      %v6541 = vpop.f32.mrf.mxu0
      %v6542 = vadd.f32 0.0, %v6541
      %v6543 = vpop.f32.mrf.mxu0
      %v6544 = vadd.f32 0.0, %v6543
      %6545 = vmatprep.mubr.f32.mxu0 0.0
      %6546 = vmatmul.mubr.f32.gmra.mxu0 %v6380
      %v6547 = vpop.f32.mrf.mxu0
      %v6548 = vadd.f32 0.0, %v6547
      %v6549 = vpop.f32.mrf.mxu0
      %v6550 = vadd.f32 0.0, %v6549
      %6551 = vmatprep.mubr.f32.mxu0 0.0
      %6552 = vmatmul.mubr.f32.gmra.mxu0 %v6383
      %v6553 = vpop.f32.mrf.mxu0
      %v6554 = vadd.f32 0.0, %v6553
      %v6555 = vpop.f32.mrf.mxu0
      %v6556 = vadd.f32 0.0, %v6555
      %6557 = vmatprep.mubr.f32.mxu0 0.0
      %6558 = vmatmul.mubr.f32.gmra.mxu0 %v6386
      %v6559 = vpop.f32.mrf.mxu0
      %v6560 = vadd.f32 0.0, %v6559
      %v6561 = vpop.f32.mrf.mxu0
      %v6562 = vadd.f32 0.0, %v6561
      %6563 = vmatprep.mubr.f32.mxu0 0.0
      %6564 = vmatmul.mubr.f32.gmra.mxu0 %v6389
      %v6565 = vpop.f32.mrf.mxu0
      %v6566 = vadd.f32 0.0, %v6565
      %v6567 = vpop.f32.mrf.mxu0
      %v6568 = vadd.f32 0.0, %v6567
      %6569 = vmatprep.mubr.f32.mxu0 0.0
      %6570 = vmatmul.mubr.f32.gmra.mxu0 %v6392
      %v6571 = vpop.f32.mrf.mxu0
      %v6572 = vadd.f32 0.0, %v6571
      %v6573 = vpop.f32.mrf.mxu0
      %v6574 = vadd.f32 0.0, %v6573
      %6575 = vmatprep.mubr.f32.mxu0 0.0
      %6576 = vmatmul.mubr.f32.gmra.mxu0 %v6395
      %v6577 = vpop.f32.mrf.mxu0
      %v6578 = vadd.f32 0.0, %v6577
      %v6579 = vpop.f32.mrf.mxu0
      %v6580 = vadd.f32 0.0, %v6579
      %6581 = vmatprep.mubr.f32.mxu0 0.0
      %6582 = vmatmul.mubr.f32.gmra.mxu0 %v6398
      %v6583 = vpop.f32.mrf.mxu0
      %v6584 = vadd.f32 0.0, %v6583
      %v6585 = vpop.f32.mrf.mxu0
      %v6586 = vadd.f32 0.0, %v6585
      %6587 = vmatprep.mubr.f32.mxu0 0.0
      %6588 = vmatmul.mubr.f32.gmra.mxu0 %v6401
      %v6589 = vpop.f32.mrf.mxu0
      %v6590 = vadd.f32 0.0, %v6589
      %v6591 = vpop.f32.mrf.mxu0
      %v6592 = vadd.f32 0.0, %v6591
      %6593 = vmatprep.mubr.f32.mxu0 0.0
      %6594 = vmatmul.mubr.f32.gmra.mxu0 %v6404
      %v6595 = vpop.f32.mrf.mxu0
      %v6596 = vadd.f32 0.0, %v6595
      %v6597 = vpop.f32.mrf.mxu0
      %v6598 = vadd.f32 0.0, %v6597
      %6599 = vmatprep.mubr.f32.mxu0 0.0
      %6600 = vmatmul.mubr.f32.gmra.mxu0 %v6407
      %v6601 = vpop.f32.mrf.mxu0
      %v6602 = vadd.f32 0.0, %v6601
      %v6603 = vpop.f32.mrf.mxu0
      %v6604 = vadd.f32 0.0, %v6603
      %6605 = vmatprep.mubr.f32.mxu0 0.0
      %6606 = vmatmul.mubr.f32.gmra.mxu0 %v6410
      %v6607 = vpop.f32.mrf.mxu0
      %v6608 = vadd.f32 0.0, %v6607
      %v6609 = vpop.f32.mrf.mxu0
      %v6610 = vadd.f32 0.0, %v6609
      %6611 = vmatprep.mubr.f32.mxu0 0.0
      %6612 = vmatmul.mubr.f32.gmra.mxu0 %v6413
      %v6613 = vpop.f32.mrf.mxu0
      %v6614 = vadd.f32 0.0, %v6613
      %v6615 = vpop.f32.mrf.mxu0
      %v6616 = vadd.f32 0.0, %v6615
      %6617 = vmatprep.mubr.f32.mxu0 0.0
      %6618 = vmatmul.mubr.f32.gmra.mxu0 %v6416
      %v6619 = vpop.f32.mrf.mxu0
      %v6620 = vadd.f32 0.0, %v6619
      %v6621 = vpop.f32.mrf.mxu0
      %v6622 = vadd.f32 0.0, %v6621
      %6623 = vmatprep.mubr.f32.mxu0 0.0
      %6624 = vmatmul.mubr.f32.gmra.mxu0 %v6419
      %v6625 = vpop.f32.mrf.mxu0
      %v6626 = vadd.f32 0.0, %v6625
      %v6627 = vpop.f32.mrf.mxu0
      %v6628 = vadd.f32 0.0, %v6627
      %6629 = vmatprep.mubr.f32.mxu0 0.0
      %6630 = vmatmul.mubr.f32.gmra.mxu0 %v6422
      %v6631 = vpop.f32.mrf.mxu0
      %v6632 = vadd.f32 0.0, %v6631
      %v6633 = vpop.f32.mrf.mxu0
      %v6634 = vadd.f32 0.0, %v6633
      %6635 = vmatprep.mubr.f32.mxu0 0.0
      %6636 = vmatmul.mubr.f32.gmra.mxu0 %v6425
      %v6637 = vpop.f32.mrf.mxu0
      %v6638 = vadd.f32 0.0, %v6637
      %v6639 = vpop.f32.mrf.mxu0
      %v6640 = vadd.f32 0.0, %v6639
      %6641 = vmatprep.mubr.f32.mxu0 0.0
      %6642 = vmatmul.mubr.f32.gmra.mxu0 %v6428
      %v6643 = vpop.f32.mrf.mxu0
      %v6644 = vadd.f32 0.0, %v6643
      %v6645 = vpop.f32.mrf.mxu0
      %v6646 = vadd.f32 0.0, %v6645
      %6647 = vmatprep.mubr.f32.mxu0 0.0
      %6648 = vmatmul.mubr.f32.gmra.mxu0 %v6431
      %v6649 = vpop.f32.mrf.mxu0
      %v6650 = vadd.f32 0.0, %v6649
      %v6651 = vpop.f32.mrf.mxu0
      %v6652 = vadd.f32 0.0, %v6651
      %6653 = vmatprep.mubr.f32.mxu0 0.0
      %6654 = vmatmul.mubr.f32.gmra.mxu0 %v6434
      %v6655 = vpop.f32.mrf.mxu0
      %v6656 = vadd.f32 0.0, %v6655
      %v6657 = vpop.f32.mrf.mxu0
      %v6658 = vadd.f32 0.0, %v6657
      %6659 = vmatprep.mubr.f32.mxu0 0.0
      %6660 = vmatmul.mubr.f32.gmra.mxu0 %v6437
      %v6661 = vpop.f32.mrf.mxu0
      %v6662 = vadd.f32 0.0, %v6661
      %v6663 = vpop.f32.mrf.mxu0
      %v6664 = vadd.f32 0.0, %v6663
      %6665 = vmatprep.mubr.f32.mxu0 0.0
      %6666 = vmatmul.mubr.f32.gmra.mxu0 %v6440
      %v6667 = vpop.f32.mrf.mxu0
      %v6668 = vadd.f32 0.0, %v6667
      %v6669 = vpop.f32.mrf.mxu0
      %v6670 = vadd.f32 0.0, %v6669
      %6671 = vmatprep.mubr.f32.mxu0 0.0
      %6672 = vmatmul.mubr.f32.gmra.mxu0 %v6443
      %v6673 = vpop.f32.mrf.mxu0
      %v6674 = vadd.f32 0.0, %v6673
      %v6675 = vpop.f32.mrf.mxu0
      %v6676 = vadd.f32 0.0, %v6675
      %6677 = vmatprep.mubr.f32.mxu0 0.0
      %6678 = vmatmul.mubr.f32.gmra.mxu0 %v6446
      %v6679 = vpop.f32.mrf.mxu0
      %v6680 = vadd.f32 0.0, %v6679
      %v6681 = vpop.f32.mrf.mxu0
      %v6682 = vadd.f32 0.0, %v6681
      %6683 = vmatprep.mubr.f32.mxu0 0.0
      %6684 = vmatmul.mubr.f32.gmra.mxu0 %v6449
      %v6685 = vpop.f32.mrf.mxu0
      %v6686 = vadd.f32 0.0, %v6685
      %v6687 = vpop.f32.mrf.mxu0
      %v6688 = vadd.f32 0.0, %v6687
      %6689 = vmatprep.mubr.f32.mxu0 0.0
      %6690 = vmatmul.mubr.f32.gmra.mxu0 %v6452
      %v6691 = vpop.f32.mrf.mxu0
      %v6692 = vadd.f32 0.0, %v6691
      %v6693 = vpop.f32.mrf.mxu0
      %v6694 = vadd.f32 0.0, %v6693
      %6695 = vmatprep.mubr.f32.mxu0 0.0
      %6696 = vmatmul.mubr.f32.gmra.mxu0 %v6455
      %v6697 = vpop.f32.mrf.mxu0
      %v6698 = vadd.f32 0.0, %v6697
      %v6699 = vpop.f32.mrf.mxu0
      %v6700 = vadd.f32 0.0, %v6699
      %6701 = vmatprep.mubr.f32.mxu0 0.0
      %6702 = vmatmul.mubr.f32.gmra.mxu0 %v6458
      %v6703 = vpop.f32.mrf.mxu0
      %v6704 = vadd.f32 0.0, %v6703
      %v6705 = vpop.f32.mrf.mxu0
      %v6706 = vadd.f32 0.0, %v6705
      %6707 = vmatprep.mubr.f32.mxu0 0.0
      %6708 = vmatmul.mubr.f32.gmra.mxu0 %v6461
      %v6709 = vpop.f32.mrf.mxu0
      %v6710 = vadd.f32 0.0, %v6709
      %v6711 = vpop.f32.mrf.mxu0
      %v6712 = vadd.f32 0.0, %v6711
      %6713 = vmatprep.mubr.f32.mxu0 0.0
      %6714 = vmatmul.mubr.f32.gmra.mxu0 %v6464
      %v6715 = vpop.f32.mrf.mxu0
      %v6716 = vadd.f32 0.0, %v6715
      %v6717 = vpop.f32.mrf.mxu0
      %v6718 = vadd.f32 0.0, %v6717
      %6719 = vmatprep.mubr.f32.mxu0 0.0
      %6720 = vmatmul.mubr.f32.gmra.mxu0 %v6467
      %v6721 = vpop.f32.mrf.mxu0
      %v6722 = vadd.f32 0.0, %v6721
      %v6723 = vpop.f32.mrf.mxu0
      %v6724 = vadd.f32 0.0, %v6723
      %6725 = vdwg.mxu0
      %v6726 = vmax.f32 %v6536, %v6538
      %6727 = vmax.xlane.f32.xlu0 %v6726
      %v6728 = vpop.xlane.xlu0 %6727
      %v6729 = vmax.f32 %v6542, %v6544
      %6730 = vmax.xlane.f32.xlu0 %v6729
      %v6731 = vpop.xlane.xlu0 %6730
      %v6732 = vmax.f32 %v6548, %v6550
      %6733 = vmax.xlane.f32.xlu0 %v6732
      %v6734 = vpop.xlane.xlu0 %6733
      %v6735 = vmax.f32 %v6554, %v6556
      %6736 = vmax.xlane.f32.xlu0 %v6735
      %v6737 = vpop.xlane.xlu0 %6736
      %v6738 = vmax.f32 %v6560, %v6562
      %6739 = vmax.xlane.f32.xlu0 %v6738
      %v6740 = vpop.xlane.xlu0 %6739
      %v6741 = vmax.f32 %v6566, %v6568
      %6742 = vmax.xlane.f32.xlu0 %v6741
      %v6743 = vpop.xlane.xlu0 %6742
      %v6744 = vmax.f32 %v6572, %v6574
      %6745 = vmax.xlane.f32.xlu0 %v6744
      %v6746 = vpop.xlane.xlu0 %6745
      %v6747 = vmax.f32 %v6578, %v6580
      %6748 = vmax.xlane.f32.xlu0 %v6747
      %v6749 = vpop.xlane.xlu0 %6748
      %v6750 = vmax.f32 %v6584, %v6586
      %6751 = vmax.xlane.f32.xlu0 %v6750
      %v6752 = vpop.xlane.xlu0 %6751
      %v6753 = vmax.f32 %v6590, %v6592
      %6754 = vmax.xlane.f32.xlu0 %v6753
      %v6755 = vpop.xlane.xlu0 %6754
      %v6756 = vmax.f32 %v6596, %v6598
      %6757 = vmax.xlane.f32.xlu0 %v6756
      %v6758 = vpop.xlane.xlu0 %6757
      %v6759 = vmax.f32 %v6602, %v6604
      %6760 = vmax.xlane.f32.xlu0 %v6759
      %v6761 = vpop.xlane.xlu0 %6760
      %v6762 = vmax.f32 %v6608, %v6610
      %6763 = vmax.xlane.f32.xlu0 %v6762
      %v6764 = vpop.xlane.xlu0 %6763
      %v6765 = vmax.f32 %v6614, %v6616
      %6766 = vmax.xlane.f32.xlu0 %v6765
      %v6767 = vpop.xlane.xlu0 %6766
      %v6768 = vmax.f32 %v6620, %v6622
      %6769 = vmax.xlane.f32.xlu0 %v6768
      %v6770 = vpop.xlane.xlu0 %6769
      %v6771 = vmax.f32 %v6626, %v6628
      %6772 = vmax.xlane.f32.xlu0 %v6771
      %v6773 = vpop.xlane.xlu0 %6772
      %v6774 = vmax.f32 %v6632, %v6634
      %6775 = vmax.xlane.f32.xlu0 %v6774
      %v6776 = vpop.xlane.xlu0 %6775
      %v6777 = vmax.f32 %v6638, %v6640
      %6778 = vmax.xlane.f32.xlu0 %v6777
      %v6779 = vpop.xlane.xlu0 %6778
      %v6780 = vmax.f32 %v6644, %v6646
      %6781 = vmax.xlane.f32.xlu0 %v6780
      %v6782 = vpop.xlane.xlu0 %6781
      %v6783 = vmax.f32 %v6650, %v6652
      %6784 = vmax.xlane.f32.xlu0 %v6783
      %v6785 = vpop.xlane.xlu0 %6784
      %v6786 = vmax.f32 %v6656, %v6658
      %6787 = vmax.xlane.f32.xlu0 %v6786
      %v6788 = vpop.xlane.xlu0 %6787
      %v6789 = vmax.f32 %v6662, %v6664
      %6790 = vmax.xlane.f32.xlu0 %v6789
      %v6791 = vpop.xlane.xlu0 %6790
      %v6792 = vmax.f32 %v6668, %v6670
      %6793 = vmax.xlane.f32.xlu0 %v6792
      %v6794 = vpop.xlane.xlu0 %6793
      %v6795 = vmax.f32 %v6674, %v6676
      %6796 = vmax.xlane.f32.xlu0 %v6795
      %v6797 = vpop.xlane.xlu0 %6796
      %v6798 = vmax.f32 %v6680, %v6682
      %6799 = vmax.xlane.f32.xlu0 %v6798
      %v6800 = vpop.xlane.xlu0 %6799
      %v6801 = vmax.f32 %v6686, %v6688
      %6802 = vmax.xlane.f32.xlu0 %v6801
      %v6803 = vpop.xlane.xlu0 %6802
      %v6804 = vmax.f32 %v6692, %v6694
      %6805 = vmax.xlane.f32.xlu0 %v6804
      %v6806 = vpop.xlane.xlu0 %6805
      %v6807 = vmax.f32 %v6698, %v6700
      %6808 = vmax.xlane.f32.xlu0 %v6807
      %v6809 = vpop.xlane.xlu0 %6808
      %v6810 = vmax.f32 %v6704, %v6706
      %6811 = vmax.xlane.f32.xlu0 %v6810
      %v6812 = vpop.xlane.xlu0 %6811
      %v6813 = vmax.f32 %v6710, %v6712
      %6814 = vmax.xlane.f32.xlu0 %v6813
      %v6815 = vpop.xlane.xlu0 %6814
      %v6816 = vmax.f32 %v6716, %v6718
      %6817 = vmax.xlane.f32.xlu0 %v6816
      %v6818 = vpop.xlane.xlu0 %6817
      %v6819 = vmax.f32 %v6722, %v6724
      %6820 = vmax.xlane.f32.xlu0 %v6819
      %v6821 = vpop.xlane.xlu0 %6820
      %v6822 = vsub.f32 %v6536, %v6728
      %v6823 = vsub.f32 %v6538, %v6728
      %v6824 = vsub.f32 %v6542, %v6731
      %v6825 = vsub.f32 %v6544, %v6731
      %v6826 = vsub.f32 %v6548, %v6734
      %v6827 = vsub.f32 %v6550, %v6734
      %v6828 = vsub.f32 %v6554, %v6737
      %v6829 = vsub.f32 %v6556, %v6737
      %v6830 = vsub.f32 %v6560, %v6740
      %v6831 = vsub.f32 %v6562, %v6740
      %v6832 = vsub.f32 %v6566, %v6743
      %v6833 = vsub.f32 %v6568, %v6743
      %v6834 = vsub.f32 %v6572, %v6746
      %v6835 = vsub.f32 %v6574, %v6746
      %v6836 = vsub.f32 %v6578, %v6749
      %v6837 = vsub.f32 %v6580, %v6749
      %v6838 = vsub.f32 %v6584, %v6752
      %v6839 = vsub.f32 %v6586, %v6752
      %v6840 = vsub.f32 %v6590, %v6755
      %v6841 = vsub.f32 %v6592, %v6755
      %v6842 = vsub.f32 %v6596, %v6758
      %v6843 = vsub.f32 %v6598, %v6758
      %v6844 = vsub.f32 %v6602, %v6761
      %v6845 = vsub.f32 %v6604, %v6761
      %v6846 = vsub.f32 %v6608, %v6764
      %v6847 = vsub.f32 %v6610, %v6764
      %v6848 = vsub.f32 %v6614, %v6767
      %v6849 = vsub.f32 %v6616, %v6767
      %v6850 = vsub.f32 %v6620, %v6770
      %v6851 = vsub.f32 %v6622, %v6770
      %v6852 = vsub.f32 %v6626, %v6773
      %v6853 = vsub.f32 %v6628, %v6773
      %v6854 = vsub.f32 %v6632, %v6776
      %v6855 = vsub.f32 %v6634, %v6776
      %v6856 = vsub.f32 %v6638, %v6779
      %v6857 = vsub.f32 %v6640, %v6779
      %v6858 = vsub.f32 %v6644, %v6782
      %v6859 = vsub.f32 %v6646, %v6782
      %v6860 = vsub.f32 %v6650, %v6785
      %v6861 = vsub.f32 %v6652, %v6785
      %v6862 = vsub.f32 %v6656, %v6788
      %v6863 = vsub.f32 %v6658, %v6788
      %v6864 = vsub.f32 %v6662, %v6791
      %v6865 = vsub.f32 %v6664, %v6791
      %v6866 = vsub.f32 %v6668, %v6794
      %v6867 = vsub.f32 %v6670, %v6794
      %v6868 = vsub.f32 %v6674, %v6797
      %v6869 = vsub.f32 %v6676, %v6797
      %v6870 = vsub.f32 %v6680, %v6800
      %v6871 = vsub.f32 %v6682, %v6800
      %v6872 = vsub.f32 %v6686, %v6803
      %v6873 = vsub.f32 %v6688, %v6803
      %v6874 = vsub.f32 %v6692, %v6806
      %v6875 = vsub.f32 %v6694, %v6806
      %v6876 = vsub.f32 %v6698, %v6809
      %v6877 = vsub.f32 %v6700, %v6809
      %v6878 = vsub.f32 %v6704, %v6812
      %v6879 = vsub.f32 %v6706, %v6812
      %v6880 = vsub.f32 %v6710, %v6815
      %v6881 = vsub.f32 %v6712, %v6815
      %v6882 = vsub.f32 %v6716, %v6818
      %v6883 = vsub.f32 %v6718, %v6818
      %v6884 = vsub.f32 %v6722, %v6821
      %v6885 = vsub.f32 %v6724, %v6821
      %v6886 = vmul.f32 %v6822, 1.442695
      %v6887 = vpow.pop %v6886
      %v6888 = vmul.f32 %v6823, 1.442695
      %v6889 = vpow.pop %v6888
      %v6890 = vmul.f32 %v6824, 1.442695
      %v6891 = vpow.pop %v6890
      %v6892 = vmul.f32 %v6825, 1.442695
      %v6893 = vpow.pop %v6892
      %v6894 = vmul.f32 %v6826, 1.442695
      %v6895 = vpow.pop %v6894
      %v6896 = vmul.f32 %v6827, 1.442695
      %v6897 = vpow.pop %v6896
      %v6898 = vmul.f32 %v6828, 1.442695
      %v6899 = vpow.pop %v6898
      %v6900 = vmul.f32 %v6829, 1.442695
      %v6901 = vpow.pop %v6900
      %v6902 = vmul.f32 %v6830, 1.442695
      %v6903 = vpow.pop %v6902
      %v6904 = vmul.f32 %v6831, 1.442695
      %v6905 = vpow.pop %v6904
      %v6906 = vmul.f32 %v6832, 1.442695
      %v6907 = vpow.pop %v6906
      %v6908 = vmul.f32 %v6833, 1.442695
      %v6909 = vpow.pop %v6908
      %v6910 = vmul.f32 %v6834, 1.442695
      %v6911 = vpow.pop %v6910
      %v6912 = vmul.f32 %v6835, 1.442695
      %v6913 = vpow.pop %v6912
      %v6914 = vmul.f32 %v6836, 1.442695
      %v6915 = vpow.pop %v6914
      %v6916 = vmul.f32 %v6837, 1.442695
      %v6917 = vpow.pop %v6916
      %v6918 = vmul.f32 %v6838, 1.442695
      %v6919 = vpow.pop %v6918
      %v6920 = vmul.f32 %v6839, 1.442695
      %v6921 = vpow.pop %v6920
      %v6922 = vmul.f32 %v6840, 1.442695
      %v6923 = vpow.pop %v6922
      %v6924 = vmul.f32 %v6841, 1.442695
      %v6925 = vpow.pop %v6924
      %v6926 = vmul.f32 %v6842, 1.442695
      %v6927 = vpow.pop %v6926
      %v6928 = vmul.f32 %v6843, 1.442695
      %v6929 = vpow.pop %v6928
      %v6930 = vmul.f32 %v6844, 1.442695
      %v6931 = vpow.pop %v6930
      %v6932 = vmul.f32 %v6845, 1.442695
      %v6933 = vpow.pop %v6932
      %v6934 = vmul.f32 %v6846, 1.442695
      %v6935 = vpow.pop %v6934
      %v6936 = vmul.f32 %v6847, 1.442695
      %v6937 = vpow.pop %v6936
      %v6938 = vmul.f32 %v6848, 1.442695
      %v6939 = vpow.pop %v6938
      %v6940 = vmul.f32 %v6849, 1.442695
      %v6941 = vpow.pop %v6940
      %v6942 = vmul.f32 %v6850, 1.442695
      %v6943 = vpow.pop %v6942
      %v6944 = vmul.f32 %v6851, 1.442695
      %v6945 = vpow.pop %v6944
      %v6946 = vmul.f32 %v6852, 1.442695
      %v6947 = vpow.pop %v6946
      %v6948 = vmul.f32 %v6853, 1.442695
      %v6949 = vpow.pop %v6948
      %v6950 = vmul.f32 %v6854, 1.442695
      %v6951 = vpow.pop %v6950
      %v6952 = vmul.f32 %v6855, 1.442695
      %v6953 = vpow.pop %v6952
      %v6954 = vmul.f32 %v6856, 1.442695
      %v6955 = vpow.pop %v6954
      %v6956 = vmul.f32 %v6857, 1.442695
      %v6957 = vpow.pop %v6956
      %v6958 = vmul.f32 %v6858, 1.442695
      %v6959 = vpow.pop %v6958
      %v6960 = vmul.f32 %v6859, 1.442695
      %v6961 = vpow.pop %v6960
      %v6962 = vmul.f32 %v6860, 1.442695
      %v6963 = vpow.pop %v6962
      %v6964 = vmul.f32 %v6861, 1.442695
      %v6965 = vpow.pop %v6964
      %v6966 = vmul.f32 %v6862, 1.442695
      %v6967 = vpow.pop %v6966
      %v6968 = vmul.f32 %v6863, 1.442695
      %v6969 = vpow.pop %v6968
      %v6970 = vmul.f32 %v6864, 1.442695
      %v6971 = vpow.pop %v6970
      %v6972 = vmul.f32 %v6865, 1.442695
      %v6973 = vpow.pop %v6972
      %v6974 = vmul.f32 %v6866, 1.442695
      %v6975 = vpow.pop %v6974
      %v6976 = vmul.f32 %v6867, 1.442695
      %v6977 = vpow.pop %v6976
      %v6978 = vmul.f32 %v6868, 1.442695
      %v6979 = vpow.pop %v6978
      %v6980 = vmul.f32 %v6869, 1.442695
      %v6981 = vpow.pop %v6980
      %v6982 = vmul.f32 %v6870, 1.442695
      %v6983 = vpow.pop %v6982
      %v6984 = vmul.f32 %v6871, 1.442695
      %v6985 = vpow.pop %v6984
      %v6986 = vmul.f32 %v6872, 1.442695
      %v6987 = vpow.pop %v6986
      %v6988 = vmul.f32 %v6873, 1.442695
      %v6989 = vpow.pop %v6988
      %v6990 = vmul.f32 %v6874, 1.442695
      %v6991 = vpow.pop %v6990
      %v6992 = vmul.f32 %v6875, 1.442695
      %v6993 = vpow.pop %v6992
      %v6994 = vmul.f32 %v6876, 1.442695
      %v6995 = vpow.pop %v6994
      %v6996 = vmul.f32 %v6877, 1.442695
      %v6997 = vpow.pop %v6996
      %v6998 = vmul.f32 %v6878, 1.442695
      %v6999 = vpow.pop %v6998
      %v7000 = vmul.f32 %v6879, 1.442695
      %v7001 = vpow.pop %v7000
      %v7002 = vmul.f32 %v6880, 1.442695
      %v7003 = vpow.pop %v7002
      %v7004 = vmul.f32 %v6881, 1.442695
      %v7005 = vpow.pop %v7004
      %v7006 = vmul.f32 %v6882, 1.442695
      %v7007 = vpow.pop %v7006
      %v7008 = vmul.f32 %v6883, 1.442695
      %v7009 = vpow.pop %v7008
      %v7010 = vmul.f32 %v6884, 1.442695
      %v7011 = vpow.pop %v7010
      %v7012 = vmul.f32 %v6885, 1.442695
      %v7013 = vpow.pop %v7012
      %v7014 = vadd.f32 %v6887, %v6889
      %7015 = vadd.xlane.f32.xlu0 %v7014
      %v7016 = vpop.xlane.xlu0 %7015
      %v7017 = vadd.f32 %v6891, %v6893
      %7018 = vadd.xlane.f32.xlu0 %v7017
      %v7019 = vpop.xlane.xlu0 %7018
      %v7020 = vadd.f32 %v6895, %v6897
      %7021 = vadd.xlane.f32.xlu0 %v7020
      %v7022 = vpop.xlane.xlu0 %7021
      %v7023 = vadd.f32 %v6899, %v6901
      %7024 = vadd.xlane.f32.xlu0 %v7023
      %v7025 = vpop.xlane.xlu0 %7024
      %v7026 = vadd.f32 %v6903, %v6905
      %7027 = vadd.xlane.f32.xlu0 %v7026
      %v7028 = vpop.xlane.xlu0 %7027
      %v7029 = vadd.f32 %v6907, %v6909
      %7030 = vadd.xlane.f32.xlu0 %v7029
      %v7031 = vpop.xlane.xlu0 %7030
      %v7032 = vadd.f32 %v6911, %v6913
      %7033 = vadd.xlane.f32.xlu0 %v7032
      %v7034 = vpop.xlane.xlu0 %7033
      %v7035 = vadd.f32 %v6915, %v6917
      %7036 = vadd.xlane.f32.xlu0 %v7035
      %v7037 = vpop.xlane.xlu0 %7036
      %v7038 = vadd.f32 %v6919, %v6921
      %7039 = vadd.xlane.f32.xlu0 %v7038
      %v7040 = vpop.xlane.xlu0 %7039
      %v7041 = vadd.f32 %v6923, %v6925
      %7042 = vadd.xlane.f32.xlu0 %v7041
      %v7043 = vpop.xlane.xlu0 %7042
      %v7044 = vadd.f32 %v6927, %v6929
      %7045 = vadd.xlane.f32.xlu0 %v7044
      %v7046 = vpop.xlane.xlu0 %7045
      %v7047 = vadd.f32 %v6931, %v6933
      %7048 = vadd.xlane.f32.xlu0 %v7047
      %v7049 = vpop.xlane.xlu0 %7048
      %v7050 = vadd.f32 %v6935, %v6937
      %7051 = vadd.xlane.f32.xlu0 %v7050
      %v7052 = vpop.xlane.xlu0 %7051
      %v7053 = vadd.f32 %v6939, %v6941
      %7054 = vadd.xlane.f32.xlu0 %v7053
      %v7055 = vpop.xlane.xlu0 %7054
      %v7056 = vadd.f32 %v6943, %v6945
      %7057 = vadd.xlane.f32.xlu0 %v7056
      %v7058 = vpop.xlane.xlu0 %7057
      %v7059 = vadd.f32 %v6947, %v6949
      %7060 = vadd.xlane.f32.xlu0 %v7059
      %v7061 = vpop.xlane.xlu0 %7060
      %v7062 = vadd.f32 %v6951, %v6953
      %7063 = vadd.xlane.f32.xlu0 %v7062
      %v7064 = vpop.xlane.xlu0 %7063
      %v7065 = vadd.f32 %v6955, %v6957
      %7066 = vadd.xlane.f32.xlu0 %v7065
      %v7067 = vpop.xlane.xlu0 %7066
      %v7068 = vadd.f32 %v6959, %v6961
      %7069 = vadd.xlane.f32.xlu0 %v7068
      %v7070 = vpop.xlane.xlu0 %7069
      %v7071 = vadd.f32 %v6963, %v6965
      %7072 = vadd.xlane.f32.xlu0 %v7071
      %v7073 = vpop.xlane.xlu0 %7072
      %v7074 = vadd.f32 %v6967, %v6969
      %7075 = vadd.xlane.f32.xlu0 %v7074
      %v7076 = vpop.xlane.xlu0 %7075
      %v7077 = vadd.f32 %v6971, %v6973
      %7078 = vadd.xlane.f32.xlu0 %v7077
      %v7079 = vpop.xlane.xlu0 %7078
      %v7080 = vadd.f32 %v6975, %v6977
      %7081 = vadd.xlane.f32.xlu0 %v7080
      %v7082 = vpop.xlane.xlu0 %7081
      %v7083 = vadd.f32 %v6979, %v6981
      %7084 = vadd.xlane.f32.xlu0 %v7083
      %v7085 = vpop.xlane.xlu0 %7084
      %v7086 = vadd.f32 %v6983, %v6985
      %7087 = vadd.xlane.f32.xlu0 %v7086
      %v7088 = vpop.xlane.xlu0 %7087
      %v7089 = vadd.f32 %v6987, %v6989
      %7090 = vadd.xlane.f32.xlu0 %v7089
      %v7091 = vpop.xlane.xlu0 %7090
      %v7092 = vadd.f32 %v6991, %v6993
      %7093 = vadd.xlane.f32.xlu0 %v7092
      %v7094 = vpop.xlane.xlu0 %7093
      %v7095 = vadd.f32 %v6995, %v6997
      %7096 = vadd.xlane.f32.xlu0 %v7095
      %v7097 = vpop.xlane.xlu0 %7096
      %v7098 = vadd.f32 %v6999, %v7001
      %7099 = vadd.xlane.f32.xlu0 %v7098
      %v7100 = vpop.xlane.xlu0 %7099
      %v7101 = vadd.f32 %v7003, %v7005
      %7102 = vadd.xlane.f32.xlu0 %v7101
      %v7103 = vpop.xlane.xlu0 %7102
      %v7104 = vadd.f32 %v7007, %v7009
      %7105 = vadd.xlane.f32.xlu0 %v7104
      %v7106 = vpop.xlane.xlu0 %7105
      %v7107 = vadd.f32 %v7011, %v7013
      %7108 = vadd.xlane.f32.xlu0 %v7107
      %v7109 = vpop.xlane.xlu0 %7108
      %v7110 = vrcp.pop %v7016
      %v7111 = vrcp.pop %v7019
      %v7112 = vrcp.pop %v7022
      %v7113 = vrcp.pop %v7025
      %v7114 = vrcp.pop %v7028
      %v7115 = vrcp.pop %v7031
      %v7116 = vrcp.pop %v7034
      %v7117 = vrcp.pop %v7037
      %v7118 = vrcp.pop %v7040
      %v7119 = vrcp.pop %v7043
      %v7120 = vrcp.pop %v7046
      %v7121 = vrcp.pop %v7049
      %v7122 = vrcp.pop %v7052
      %v7123 = vrcp.pop %v7055
      %v7124 = vrcp.pop %v7058
      %v7125 = vrcp.pop %v7061
      %v7126 = vrcp.pop %v7064
      %v7127 = vrcp.pop %v7067
      %v7128 = vrcp.pop %v7070
      %v7129 = vrcp.pop %v7073
      %v7130 = vrcp.pop %v7076
      %v7131 = vrcp.pop %v7079
      %v7132 = vrcp.pop %v7082
      %v7133 = vrcp.pop %v7085
      %v7134 = vrcp.pop %v7088
      %v7135 = vrcp.pop %v7091
      %v7136 = vrcp.pop %v7094
      %v7137 = vrcp.pop %v7097
      %v7138 = vrcp.pop %v7100
      %v7139 = vrcp.pop %v7103
      %v7140 = vrcp.pop %v7106
      %v7141 = vrcp.pop %v7109
      %v7142 = vmul.f32 %v6887, %v7110
      %v7143 = vmul.f32 %v6889, %v7110
      %v7144 = vmul.f32 %v6891, %v7111
      %v7145 = vmul.f32 %v6893, %v7111
      %v7146 = vmul.f32 %v6895, %v7112
      %v7147 = vmul.f32 %v6897, %v7112
      %v7148 = vmul.f32 %v6899, %v7113
      %v7149 = vmul.f32 %v6901, %v7113
      %v7150 = vmul.f32 %v6903, %v7114
      %v7151 = vmul.f32 %v6905, %v7114
      %v7152 = vmul.f32 %v6907, %v7115
      %v7153 = vmul.f32 %v6909, %v7115
      %v7154 = vmul.f32 %v6911, %v7116
      %v7155 = vmul.f32 %v6913, %v7116
      %v7156 = vmul.f32 %v6915, %v7117
      %v7157 = vmul.f32 %v6917, %v7117
      %v7158 = vmul.f32 %v6919, %v7118
      %v7159 = vmul.f32 %v6921, %v7118
      %v7160 = vmul.f32 %v6923, %v7119
      %v7161 = vmul.f32 %v6925, %v7119
      %v7162 = vmul.f32 %v6927, %v7120
      %v7163 = vmul.f32 %v6929, %v7120
      %v7164 = vmul.f32 %v6931, %v7121
      %v7165 = vmul.f32 %v6933, %v7121
      %v7166 = vmul.f32 %v6935, %v7122
      %v7167 = vmul.f32 %v6937, %v7122
      %v7168 = vmul.f32 %v6939, %v7123
      %v7169 = vmul.f32 %v6941, %v7123
      %v7170 = vmul.f32 %v6943, %v7124
      %v7171 = vmul.f32 %v6945, %v7124
      %v7172 = vmul.f32 %v6947, %v7125
      %v7173 = vmul.f32 %v6949, %v7125
      %v7174 = vmul.f32 %v6951, %v7126
      %v7175 = vmul.f32 %v6953, %v7126
      %v7176 = vmul.f32 %v6955, %v7127
      %v7177 = vmul.f32 %v6957, %v7127
      %v7178 = vmul.f32 %v6959, %v7128
      %v7179 = vmul.f32 %v6961, %v7128
      %v7180 = vmul.f32 %v6963, %v7129
      %v7181 = vmul.f32 %v6965, %v7129
      %v7182 = vmul.f32 %v6967, %v7130
      %v7183 = vmul.f32 %v6969, %v7130
      %v7184 = vmul.f32 %v6971, %v7131
      %v7185 = vmul.f32 %v6973, %v7131
      %v7186 = vmul.f32 %v6975, %v7132
      %v7187 = vmul.f32 %v6977, %v7132
      %v7188 = vmul.f32 %v6979, %v7133
      %v7189 = vmul.f32 %v6981, %v7133
      %v7190 = vmul.f32 %v6983, %v7134
      %v7191 = vmul.f32 %v6985, %v7134
      %v7192 = vmul.f32 %v6987, %v7135
      %v7193 = vmul.f32 %v6989, %v7135
      %v7194 = vmul.f32 %v6991, %v7136
      %v7195 = vmul.f32 %v6993, %v7136
      %v7196 = vmul.f32 %v6995, %v7137
      %v7197 = vmul.f32 %v6997, %v7137
      %v7198 = vmul.f32 %v6999, %v7138
      %v7199 = vmul.f32 %v7001, %v7138
      %v7200 = vmul.f32 %v7003, %v7139
      %v7201 = vmul.f32 %v7005, %v7139
      %v7202 = vmul.f32 %v7007, %v7140
      %v7203 = vmul.f32 %v7009, %v7140
      %v7204 = vmul.f32 %v7011, %v7141
      %v7205 = vmul.f32 %v7013, %v7141
      %7206 = vmatprep.subr.mxu0 %v7173
      %7207 = vmatpush1.xpose.msra.mxu0 %v7172
      %7208 = vmatprep.subr.mxu0 %v7171
      %7209 = vmatpush1.xpose.msra.mxu0 %v7170
      %7210 = vmatprep.subr.mxu0 %v7169
      %7211 = vmatpush1.xpose.msra.mxu0 %v7168
      %7212 = vmatprep.subr.mxu0 %v7167
      %7213 = vmatpush1.xpose.msra.mxu0 %v7166
      %7214 = vmatprep.subr.mxu0 %v7165
      %7215 = vmatpush1.xpose.msra.mxu0 %v7164
      %7216 = vmatprep.subr.mxu0 %v7163
      %7217 = vmatpush1.xpose.msra.mxu0 %v7162
      %7218 = vmatprep.subr.mxu0 %v7161
      %7219 = vmatpush1.xpose.msra.mxu0 %v7160
      %7220 = vmatprep.subr.mxu0 %v7159
      %7221 = vmatpush1.xpose.msra.mxu0 %v7158
      %7222 = vmatprep.subr.mxu0 %v7157
      %7223 = vmatpush1.xpose.msra.mxu0 %v7156
      %7224 = vmatprep.subr.mxu0 %v7155
      %7225 = vmatpush1.xpose.msra.mxu0 %v7154
      %7226 = vmatprep.subr.mxu0 %v7153
      %7227 = vmatpush1.xpose.msra.mxu0 %v7152
      %7228 = vmatprep.subr.mxu0 %v7151
      %7229 = vmatpush1.xpose.msra.mxu0 %v7150
      %7230 = vmatprep.subr.mxu0 %v7149
      %7231 = vmatpush1.xpose.msra.mxu0 %v7148
      %7232 = vmatprep.subr.mxu0 %v7147
      %7233 = vmatpush1.xpose.msra.mxu0 %v7146
      %7234 = vmatprep.subr.mxu0 %v7145
      %7235 = vmatpush1.xpose.msra.mxu0 %v7144
      %7236 = vmatprep.subr.mxu0 %v7143
      %7237 = vmatpush1.xpose.msra.mxu0 %v7142
      %7238 = vmatprep.subr.mxu0 %v7205
      %7239 = vmatpush2.xpose.msra.mxu0 %v7204
      %7240 = vmatprep.subr.mxu0 %v7203
      %7241 = vmatpush2.xpose.msra.mxu0 %v7202
      %7242 = vmatprep.subr.mxu0 %v7201
      %7243 = vmatpush2.xpose.msra.mxu0 %v7200
      %7244 = vmatprep.subr.mxu0 %v7199
      %7245 = vmatpush2.xpose.msra.mxu0 %v7198
      %7246 = vmatprep.subr.mxu0 %v7197
      %7247 = vmatpush2.xpose.msra.mxu0 %v7196
      %7248 = vmatprep.subr.mxu0 %v7195
      %7249 = vmatpush2.xpose.msra.mxu0 %v7194
      %7250 = vmatprep.subr.mxu0 %v7193
      %7251 = vmatpush2.xpose.msra.mxu0 %v7192
      %7252 = vmatprep.subr.mxu0 %v7191
      %7253 = vmatpush2.xpose.msra.mxu0 %v7190
      %7254 = vmatprep.subr.mxu0 %v7189
      %7255 = vmatpush2.xpose.msra.mxu0 %v7188
      %7256 = vmatprep.subr.mxu0 %v7187
      %7257 = vmatpush2.xpose.msra.mxu0 %v7186
      %7258 = vmatprep.subr.mxu0 %v7185
      %7259 = vmatpush2.xpose.msra.mxu0 %v7184
      %7260 = vmatprep.subr.mxu0 %v7183
      %7261 = vmatpush2.xpose.msra.mxu0 %v7182
      %7262 = vmatprep.subr.mxu0 %v7181
      %7263 = vmatpush2.xpose.msra.mxu0 %v7180
      %7264 = vmatprep.subr.mxu0 %v7179
      %7265 = vmatpush2.xpose.msra.mxu0 %v7178
      %7266 = vmatprep.subr.mxu0 %v7177
      %7267 = vmatpush2.xpose.msra.mxu0 %v7176
      %7268 = vmatprep.subr.mxu0 %v7175
      %7269 = vmatpush2.xpose.msra.mxu0 %v7174
      %7270 = vmatprep.mubr.f32.mxu0 %v5325
      %7271 = vmatmul.mubr.f32.gmra.mxu0 %v5323
      %v7272 = vpop.f32.mrf.mxu0
      %v7273 = vadd.f32 0.0, %v7272
      %v7274 = vpop.f32.mrf.mxu0
      %v7275 = vadd.f32 0.0, %v7274
      %7276 = vdwg.mxu0
      %7277 = vst [vmem:[#allocation2 + $0x10] sm:$0xff] %v7273
      %7278 = vst [vmem:[#allocation2 + $0x18] sm:$0xff] %v7275
      %7279 = vxpose.xlu0.b32.start [1/16] %v5281, 128
      %7280 = vxpose.xlu0.b32.cont [2/16] 0.0, 128
      %7281 = vxpose.xlu0.b32.cont [3/16] 0.0, 128
      %7282 = vxpose.xlu0.b32.cont [4/16] 0.0, 128
      %7283 = vxpose.xlu0.b32.cont [5/16] 0.0, 128
      %7284 = vxpose.xlu0.b32.cont [6/16] 0.0, 128
      %7285 = vxpose.xlu0.b32.cont [7/16] 0.0, 128
      %7286 = vxpose.xlu0.b32.cont [8/16] 0.0, 128
      %7287 = vxpose.xlu0.b32.cont [9/16] 0.0, 128
      %7288 = vxpose.xlu0.b32.cont [10/16] 0.0, 128
      %7289 = vxpose.xlu0.b32.cont [11/16] 0.0, 128
      %7290 = vxpose.xlu0.b32.cont [12/16] 0.0, 128
      %7291 = vxpose.xlu0.b32.cont [13/16] 0.0, 128
      %7292 = vxpose.xlu0.b32.cont [14/16] 0.0, 128
      %7293 = vxpose.xlu0.b32.cont [15/16] 0.0, 128
      %7294 = vxpose.xlu0.b32.end [16/16] 0.0, 128
      %v7295 = vpop.trf.xlu0
      %v7296 = vpop.trf.xlu0
      %v7297 = vpop.trf.xlu0
      %v7298 = vpop.trf.xlu0
      %v7299 = vpop.trf.xlu0
      %v7300 = vpop.trf.xlu0
      %v7301 = vpop.trf.xlu0
      %v7302 = vpop.trf.xlu0
      %v7303 = vpop.trf.xlu0
      %v7304 = vpop.trf.xlu0
      %v7305 = vpop.trf.xlu0
      %v7306 = vpop.trf.xlu0
      %v7307 = vpop.trf.xlu0
      %v7308 = vpop.trf.xlu0
      %v7309 = vpop.trf.xlu0
      %v7310 = vpop.trf.xlu0
      %7311 = vxpose.xlu0.b32.start [1/16] %v5283, 128
      %7312 = vxpose.xlu0.b32.cont [2/16] 0.0, 128
      %7313 = vxpose.xlu0.b32.cont [3/16] 0.0, 128
      %7314 = vxpose.xlu0.b32.cont [4/16] 0.0, 128
      %7315 = vxpose.xlu0.b32.cont [5/16] 0.0, 128
      %7316 = vxpose.xlu0.b32.cont [6/16] 0.0, 128
      %7317 = vxpose.xlu0.b32.cont [7/16] 0.0, 128
      %7318 = vxpose.xlu0.b32.cont [8/16] 0.0, 128
      %7319 = vxpose.xlu0.b32.cont [9/16] 0.0, 128
      %7320 = vxpose.xlu0.b32.cont [10/16] 0.0, 128
      %7321 = vxpose.xlu0.b32.cont [11/16] 0.0, 128
      %7322 = vxpose.xlu0.b32.cont [12/16] 0.0, 128
      %7323 = vxpose.xlu0.b32.cont [13/16] 0.0, 128
      %7324 = vxpose.xlu0.b32.cont [14/16] 0.0, 128
      %7325 = vxpose.xlu0.b32.cont [15/16] 0.0, 128
      %7326 = vxpose.xlu0.b32.end [16/16] 0.0, 128
      %v7327 = vpop.trf.xlu0
      %v7328 = vpop.trf.xlu0
      %v7329 = vpop.trf.xlu0
      %v7330 = vpop.trf.xlu0
      %v7331 = vpop.trf.xlu0
      %v7332 = vpop.trf.xlu0
      %v7333 = vpop.trf.xlu0
      %v7334 = vpop.trf.xlu0
      %v7335 = vpop.trf.xlu0
      %v7336 = vpop.trf.xlu0
      %v7337 = vpop.trf.xlu0
      %v7338 = vpop.trf.xlu0
      %v7339 = vpop.trf.xlu0
      %v7340 = vpop.trf.xlu0
      %v7341 = vpop.trf.xlu0
      %v7342 = vpop.trf.xlu0
      %v7344 = vsel %vm1013, %v7295, 0
      %v7347 = vsel %vm1013, %v7296, 0
      %v7350 = vsel %vm1013, %v7297, 0
      %v7353 = vsel %vm1013, %v7298, 0
      %v7356 = vsel %vm1013, %v7299, 0
      %v7359 = vsel %vm1013, %v7300, 0
      %v7362 = vsel %vm1013, %v7301, 0
      %v7365 = vsel %vm1013, %v7302, 0
      %v7368 = vsel %vm1013, %v7303, 0
      %v7371 = vsel %vm1013, %v7304, 0
      %v7374 = vsel %vm1013, %v7305, 0
      %v7377 = vsel %vm1013, %v7306, 0
      %v7380 = vsel %vm1013, %v7307, 0
      %v7383 = vsel %vm1013, %v7308, 0
      %v7386 = vsel %vm1013, %v7309, 0
      %v7389 = vsel %vm1013, %v7310, 0
      %v7392 = vsel %vm1013, %v7327, 0
      %v7395 = vsel %vm1013, %v7328, 0
      %v7398 = vsel %vm1013, %v7329, 0
      %v7401 = vsel %vm1013, %v7330, 0
      %v7404 = vsel %vm1013, %v7331, 0
      %v7407 = vsel %vm1013, %v7332, 0
      %v7410 = vsel %vm1013, %v7333, 0
      %v7413 = vsel %vm1013, %v7334, 0
      %v7416 = vsel %vm1013, %v7335, 0
      %v7419 = vsel %vm1013, %v7336, 0
      %v7422 = vsel %vm1013, %v7337, 0
      %v7425 = vsel %vm1013, %v7338, 0
      %v7428 = vsel %vm1013, %v7339, 0
      %v7431 = vsel %vm1013, %v7340, 0
      %v7434 = vsel %vm1013, %v7341, 0
      %v7437 = vsel %vm1013, %v7342, 0
      %7439 = vmatprep.subr.mxu0 0.0
      %7440 = vmatpush1.msra.mxu0 0.0
      %7441 = vmatprep.subr.mxu0 0.0
      %7442 = vmatpush1.msra.mxu0 0.0
      %7443 = vmatprep.subr.mxu0 0.0
      %7444 = vmatpush1.msra.mxu0 0.0
      %7445 = vmatprep.subr.mxu0 0.0
      %7446 = vmatpush1.msra.mxu0 0.0
      %7447 = vmatprep.subr.mxu0 0.0
      %7448 = vmatpush1.msra.mxu0 0.0
      %7449 = vmatprep.subr.mxu0 0.0
      %7450 = vmatpush1.msra.mxu0 0.0
      %7451 = vmatprep.subr.mxu0 0.0
      %7452 = vmatpush1.msra.mxu0 0.0
      %7453 = vmatprep.subr.mxu0 0.0
      %7454 = vmatpush1.msra.mxu0 0.0
      %7455 = vmatprep.subr.mxu0 0.0
      %7456 = vmatpush1.msra.mxu0 0.0
      %7457 = vmatprep.subr.mxu0 0.0
      %7458 = vmatpush1.msra.mxu0 0.0
      %7459 = vmatprep.subr.mxu0 0.0
      %7460 = vmatpush1.msra.mxu0 0.0
      %7461 = vmatprep.subr.mxu0 0.0
      %7462 = vmatpush1.msra.mxu0 0.0
      %7463 = vmatprep.subr.mxu0 0.0
      %7464 = vmatpush1.msra.mxu0 0.0
      %7465 = vmatprep.subr.mxu0 0.0
      %7466 = vmatpush1.msra.mxu0 0.0
      %7467 = vmatprep.subr.mxu0 0.0
      %7468 = vmatpush1.msra.mxu0 0.0
      %7469 = vmatprep.subr.mxu0 %v5307
      %7470 = vmatpush1.msra.mxu0 %v5305
      %7471 = vmatprep.subr.mxu0 0.0
      %7472 = vmatpush2.msra.mxu0 0.0
      %7473 = vmatprep.subr.mxu0 0.0
      %7474 = vmatpush2.msra.mxu0 0.0
      %7475 = vmatprep.subr.mxu0 0.0
      %7476 = vmatpush2.msra.mxu0 0.0
      %7477 = vmatprep.subr.mxu0 0.0
      %7478 = vmatpush2.msra.mxu0 0.0
      %7479 = vmatprep.subr.mxu0 0.0
      %7480 = vmatpush2.msra.mxu0 0.0
      %7481 = vmatprep.subr.mxu0 0.0
      %7482 = vmatpush2.msra.mxu0 0.0
      %7483 = vmatprep.subr.mxu0 0.0
      %7484 = vmatpush2.msra.mxu0 0.0
      %7485 = vmatprep.subr.mxu0 0.0
      %7486 = vmatpush2.msra.mxu0 0.0
      %7487 = vmatprep.subr.mxu0 0.0
      %7488 = vmatpush2.msra.mxu0 0.0
      %7489 = vmatprep.subr.mxu0 0.0
      %7490 = vmatpush2.msra.mxu0 0.0
      %7491 = vmatprep.subr.mxu0 0.0
      %7492 = vmatpush2.msra.mxu0 0.0
      %7493 = vmatprep.subr.mxu0 0.0
      %7494 = vmatpush2.msra.mxu0 0.0
      %7495 = vmatprep.subr.mxu0 0.0
      %7496 = vmatpush2.msra.mxu0 0.0
      %7497 = vmatprep.subr.mxu0 0.0
      %7498 = vmatpush2.msra.mxu0 0.0
      %7499 = vmatprep.subr.mxu0 0.0
      %7500 = vmatpush2.msra.mxu0 0.0
      %7501 = vmatprep.subr.mxu0 0.0
      %7502 = vmatpush2.msra.mxu0 0.0
      %7503 = vmatprep.mubr.f32.mxu0 0.0
      %7504 = vmatmul.mubr.f32.gmra.mxu0 %v7344
      %v7505 = vpop.f32.mrf.mxu0
      %v7506 = vadd.f32 0.0, %v7505
      %v7507 = vpop.f32.mrf.mxu0
      %v7508 = vadd.f32 0.0, %v7507
      %7509 = vmatprep.mubr.f32.mxu0 0.0
      %7510 = vmatmul.mubr.f32.gmra.mxu0 %v7347
      %v7511 = vpop.f32.mrf.mxu0
      %v7512 = vadd.f32 0.0, %v7511
      %v7513 = vpop.f32.mrf.mxu0
      %v7514 = vadd.f32 0.0, %v7513
      %7515 = vmatprep.mubr.f32.mxu0 0.0
      %7516 = vmatmul.mubr.f32.gmra.mxu0 %v7350
      %v7517 = vpop.f32.mrf.mxu0
      %v7518 = vadd.f32 0.0, %v7517
      %v7519 = vpop.f32.mrf.mxu0
      %v7520 = vadd.f32 0.0, %v7519
      %7521 = vmatprep.mubr.f32.mxu0 0.0
      %7522 = vmatmul.mubr.f32.gmra.mxu0 %v7353
      %v7523 = vpop.f32.mrf.mxu0
      %v7524 = vadd.f32 0.0, %v7523
      %v7525 = vpop.f32.mrf.mxu0
      %v7526 = vadd.f32 0.0, %v7525
      %7527 = vmatprep.mubr.f32.mxu0 0.0
      %7528 = vmatmul.mubr.f32.gmra.mxu0 %v7356
      %v7529 = vpop.f32.mrf.mxu0
      %v7530 = vadd.f32 0.0, %v7529
      %v7531 = vpop.f32.mrf.mxu0
      %v7532 = vadd.f32 0.0, %v7531
      %7533 = vmatprep.mubr.f32.mxu0 0.0
      %7534 = vmatmul.mubr.f32.gmra.mxu0 %v7359
      %v7535 = vpop.f32.mrf.mxu0
      %v7536 = vadd.f32 0.0, %v7535
      %v7537 = vpop.f32.mrf.mxu0
      %v7538 = vadd.f32 0.0, %v7537
      %7539 = vmatprep.mubr.f32.mxu0 0.0
      %7540 = vmatmul.mubr.f32.gmra.mxu0 %v7362
      %v7541 = vpop.f32.mrf.mxu0
      %v7542 = vadd.f32 0.0, %v7541
      %v7543 = vpop.f32.mrf.mxu0
      %v7544 = vadd.f32 0.0, %v7543
      %7545 = vmatprep.mubr.f32.mxu0 0.0
      %7546 = vmatmul.mubr.f32.gmra.mxu0 %v7365
      %v7547 = vpop.f32.mrf.mxu0
      %v7548 = vadd.f32 0.0, %v7547
      %v7549 = vpop.f32.mrf.mxu0
      %v7550 = vadd.f32 0.0, %v7549
      %7551 = vmatprep.mubr.f32.mxu0 0.0
      %7552 = vmatmul.mubr.f32.gmra.mxu0 %v7368
      %v7553 = vpop.f32.mrf.mxu0
      %v7554 = vadd.f32 0.0, %v7553
      %v7555 = vpop.f32.mrf.mxu0
      %v7556 = vadd.f32 0.0, %v7555
      %7557 = vmatprep.mubr.f32.mxu0 0.0
      %7558 = vmatmul.mubr.f32.gmra.mxu0 %v7371
      %v7559 = vpop.f32.mrf.mxu0
      %v7560 = vadd.f32 0.0, %v7559
      %v7561 = vpop.f32.mrf.mxu0
      %v7562 = vadd.f32 0.0, %v7561
      %7563 = vmatprep.mubr.f32.mxu0 0.0
      %7564 = vmatmul.mubr.f32.gmra.mxu0 %v7374
      %v7565 = vpop.f32.mrf.mxu0
      %v7566 = vadd.f32 0.0, %v7565
      %v7567 = vpop.f32.mrf.mxu0
      %v7568 = vadd.f32 0.0, %v7567
      %7569 = vmatprep.mubr.f32.mxu0 0.0
      %7570 = vmatmul.mubr.f32.gmra.mxu0 %v7377
      %v7571 = vpop.f32.mrf.mxu0
      %v7572 = vadd.f32 0.0, %v7571
      %v7573 = vpop.f32.mrf.mxu0
      %v7574 = vadd.f32 0.0, %v7573
      %7575 = vmatprep.mubr.f32.mxu0 0.0
      %7576 = vmatmul.mubr.f32.gmra.mxu0 %v7380
      %v7577 = vpop.f32.mrf.mxu0
      %v7578 = vadd.f32 0.0, %v7577
      %v7579 = vpop.f32.mrf.mxu0
      %v7580 = vadd.f32 0.0, %v7579
      %7581 = vmatprep.mubr.f32.mxu0 0.0
      %7582 = vmatmul.mubr.f32.gmra.mxu0 %v7383
      %v7583 = vpop.f32.mrf.mxu0
      %v7584 = vadd.f32 0.0, %v7583
      %v7585 = vpop.f32.mrf.mxu0
      %v7586 = vadd.f32 0.0, %v7585
      %7587 = vmatprep.mubr.f32.mxu0 0.0
      %7588 = vmatmul.mubr.f32.gmra.mxu0 %v7386
      %v7589 = vpop.f32.mrf.mxu0
      %v7590 = vadd.f32 0.0, %v7589
      %v7591 = vpop.f32.mrf.mxu0
      %v7592 = vadd.f32 0.0, %v7591
      %7593 = vmatprep.mubr.f32.mxu0 0.0
      %7594 = vmatmul.mubr.f32.gmra.mxu0 %v7389
      %v7595 = vpop.f32.mrf.mxu0
      %v7596 = vadd.f32 0.0, %v7595
      %v7597 = vpop.f32.mrf.mxu0
      %v7598 = vadd.f32 0.0, %v7597
      %7599 = vmatprep.mubr.f32.mxu0 0.0
      %7600 = vmatmul.mubr.f32.gmra.mxu0 %v7392
      %v7601 = vpop.f32.mrf.mxu0
      %v7602 = vadd.f32 0.0, %v7601
      %v7603 = vpop.f32.mrf.mxu0
      %v7604 = vadd.f32 0.0, %v7603
      %7605 = vmatprep.mubr.f32.mxu0 0.0
      %7606 = vmatmul.mubr.f32.gmra.mxu0 %v7395
      %v7607 = vpop.f32.mrf.mxu0
      %v7608 = vadd.f32 0.0, %v7607
      %v7609 = vpop.f32.mrf.mxu0
      %v7610 = vadd.f32 0.0, %v7609
      %7611 = vmatprep.mubr.f32.mxu0 0.0
      %7612 = vmatmul.mubr.f32.gmra.mxu0 %v7398
      %v7613 = vpop.f32.mrf.mxu0
      %v7614 = vadd.f32 0.0, %v7613
      %v7615 = vpop.f32.mrf.mxu0
      %v7616 = vadd.f32 0.0, %v7615
      %7617 = vmatprep.mubr.f32.mxu0 0.0
      %7618 = vmatmul.mubr.f32.gmra.mxu0 %v7401
      %v7619 = vpop.f32.mrf.mxu0
      %v7620 = vadd.f32 0.0, %v7619
      %v7621 = vpop.f32.mrf.mxu0
      %v7622 = vadd.f32 0.0, %v7621
      %7623 = vmatprep.mubr.f32.mxu0 0.0
      %7624 = vmatmul.mubr.f32.gmra.mxu0 %v7404
      %v7625 = vpop.f32.mrf.mxu0
      %v7626 = vadd.f32 0.0, %v7625
      %v7627 = vpop.f32.mrf.mxu0
      %v7628 = vadd.f32 0.0, %v7627
      %7629 = vmatprep.mubr.f32.mxu0 0.0
      %7630 = vmatmul.mubr.f32.gmra.mxu0 %v7407
      %v7631 = vpop.f32.mrf.mxu0
      %v7632 = vadd.f32 0.0, %v7631
      %v7633 = vpop.f32.mrf.mxu0
      %v7634 = vadd.f32 0.0, %v7633
      %7635 = vmatprep.mubr.f32.mxu0 0.0
      %7636 = vmatmul.mubr.f32.gmra.mxu0 %v7410
      %v7637 = vpop.f32.mrf.mxu0
      %v7638 = vadd.f32 0.0, %v7637
      %v7639 = vpop.f32.mrf.mxu0
      %v7640 = vadd.f32 0.0, %v7639
      %7641 = vmatprep.mubr.f32.mxu0 0.0
      %7642 = vmatmul.mubr.f32.gmra.mxu0 %v7413
      %v7643 = vpop.f32.mrf.mxu0
      %v7644 = vadd.f32 0.0, %v7643
      %v7645 = vpop.f32.mrf.mxu0
      %v7646 = vadd.f32 0.0, %v7645
      %7647 = vmatprep.mubr.f32.mxu0 0.0
      %7648 = vmatmul.mubr.f32.gmra.mxu0 %v7416
      %v7649 = vpop.f32.mrf.mxu0
      %v7650 = vadd.f32 0.0, %v7649
      %v7651 = vpop.f32.mrf.mxu0
      %v7652 = vadd.f32 0.0, %v7651
      %7653 = vmatprep.mubr.f32.mxu0 0.0
      %7654 = vmatmul.mubr.f32.gmra.mxu0 %v7419
      %v7655 = vpop.f32.mrf.mxu0
      %v7656 = vadd.f32 0.0, %v7655
      %v7657 = vpop.f32.mrf.mxu0
      %v7658 = vadd.f32 0.0, %v7657
      %7659 = vmatprep.mubr.f32.mxu0 0.0
      %7660 = vmatmul.mubr.f32.gmra.mxu0 %v7422
      %v7661 = vpop.f32.mrf.mxu0
      %v7662 = vadd.f32 0.0, %v7661
      %v7663 = vpop.f32.mrf.mxu0
      %v7664 = vadd.f32 0.0, %v7663
      %7665 = vmatprep.mubr.f32.mxu0 0.0
      %7666 = vmatmul.mubr.f32.gmra.mxu0 %v7425
      %v7667 = vpop.f32.mrf.mxu0
      %v7668 = vadd.f32 0.0, %v7667
      %v7669 = vpop.f32.mrf.mxu0
      %v7670 = vadd.f32 0.0, %v7669
      %7671 = vmatprep.mubr.f32.mxu0 0.0
      %7672 = vmatmul.mubr.f32.gmra.mxu0 %v7428
      %v7673 = vpop.f32.mrf.mxu0
      %v7674 = vadd.f32 0.0, %v7673
      %v7675 = vpop.f32.mrf.mxu0
      %v7676 = vadd.f32 0.0, %v7675
      %7677 = vmatprep.mubr.f32.mxu0 0.0
      %7678 = vmatmul.mubr.f32.gmra.mxu0 %v7431
      %v7679 = vpop.f32.mrf.mxu0
      %v7680 = vadd.f32 0.0, %v7679
      %v7681 = vpop.f32.mrf.mxu0
      %v7682 = vadd.f32 0.0, %v7681
      %7683 = vmatprep.mubr.f32.mxu0 0.0
      %7684 = vmatmul.mubr.f32.gmra.mxu0 %v7434
      %v7685 = vpop.f32.mrf.mxu0
      %v7686 = vadd.f32 0.0, %v7685
      %v7687 = vpop.f32.mrf.mxu0
      %v7688 = vadd.f32 0.0, %v7687
      %7689 = vmatprep.mubr.f32.mxu0 0.0
      %7690 = vmatmul.mubr.f32.gmra.mxu0 %v7437
      %v7691 = vpop.f32.mrf.mxu0
      %v7692 = vadd.f32 0.0, %v7691
      %v7693 = vpop.f32.mrf.mxu0
      %v7694 = vadd.f32 0.0, %v7693
      %7695 = vdwg.mxu0
      %v7696 = vmax.f32 %v7506, %v7508
      %7697 = vmax.xlane.f32.xlu0 %v7696
      %v7698 = vpop.xlane.xlu0 %7697
      %v7699 = vmax.f32 %v7512, %v7514
      %7700 = vmax.xlane.f32.xlu0 %v7699
      %v7701 = vpop.xlane.xlu0 %7700
      %v7702 = vmax.f32 %v7518, %v7520
      %7703 = vmax.xlane.f32.xlu0 %v7702
      %v7704 = vpop.xlane.xlu0 %7703
      %v7705 = vmax.f32 %v7524, %v7526
      %7706 = vmax.xlane.f32.xlu0 %v7705
      %v7707 = vpop.xlane.xlu0 %7706
      %v7708 = vmax.f32 %v7530, %v7532
      %7709 = vmax.xlane.f32.xlu0 %v7708
      %v7710 = vpop.xlane.xlu0 %7709
      %v7711 = vmax.f32 %v7536, %v7538
      %7712 = vmax.xlane.f32.xlu0 %v7711
      %v7713 = vpop.xlane.xlu0 %7712
      %v7714 = vmax.f32 %v7542, %v7544
      %7715 = vmax.xlane.f32.xlu0 %v7714
      %v7716 = vpop.xlane.xlu0 %7715
      %v7717 = vmax.f32 %v7548, %v7550
      %7718 = vmax.xlane.f32.xlu0 %v7717
      %v7719 = vpop.xlane.xlu0 %7718
      %v7720 = vmax.f32 %v7554, %v7556
      %7721 = vmax.xlane.f32.xlu0 %v7720
      %v7722 = vpop.xlane.xlu0 %7721
      %v7723 = vmax.f32 %v7560, %v7562
      %7724 = vmax.xlane.f32.xlu0 %v7723
      %v7725 = vpop.xlane.xlu0 %7724
      %v7726 = vmax.f32 %v7566, %v7568
      %7727 = vmax.xlane.f32.xlu0 %v7726
      %v7728 = vpop.xlane.xlu0 %7727
      %v7729 = vmax.f32 %v7572, %v7574
      %7730 = vmax.xlane.f32.xlu0 %v7729
      %v7731 = vpop.xlane.xlu0 %7730
      %v7732 = vmax.f32 %v7578, %v7580
      %7733 = vmax.xlane.f32.xlu0 %v7732
      %v7734 = vpop.xlane.xlu0 %7733
      %v7735 = vmax.f32 %v7584, %v7586
      %7736 = vmax.xlane.f32.xlu0 %v7735
      %v7737 = vpop.xlane.xlu0 %7736
      %v7738 = vmax.f32 %v7590, %v7592
      %7739 = vmax.xlane.f32.xlu0 %v7738
      %v7740 = vpop.xlane.xlu0 %7739
      %v7741 = vmax.f32 %v7596, %v7598
      %7742 = vmax.xlane.f32.xlu0 %v7741
      %v7743 = vpop.xlane.xlu0 %7742
      %v7744 = vmax.f32 %v7602, %v7604
      %7745 = vmax.xlane.f32.xlu0 %v7744
      %v7746 = vpop.xlane.xlu0 %7745
      %v7747 = vmax.f32 %v7608, %v7610
      %7748 = vmax.xlane.f32.xlu0 %v7747
      %v7749 = vpop.xlane.xlu0 %7748
      %v7750 = vmax.f32 %v7614, %v7616
      %7751 = vmax.xlane.f32.xlu0 %v7750
      %v7752 = vpop.xlane.xlu0 %7751
      %v7753 = vmax.f32 %v7620, %v7622
      %7754 = vmax.xlane.f32.xlu0 %v7753
      %v7755 = vpop.xlane.xlu0 %7754
      %v7756 = vmax.f32 %v7626, %v7628
      %7757 = vmax.xlane.f32.xlu0 %v7756
      %v7758 = vpop.xlane.xlu0 %7757
      %v7759 = vmax.f32 %v7632, %v7634
      %7760 = vmax.xlane.f32.xlu0 %v7759
      %v7761 = vpop.xlane.xlu0 %7760
      %v7762 = vmax.f32 %v7638, %v7640
      %7763 = vmax.xlane.f32.xlu0 %v7762
      %v7764 = vpop.xlane.xlu0 %7763
      %v7765 = vmax.f32 %v7644, %v7646
      %7766 = vmax.xlane.f32.xlu0 %v7765
      %v7767 = vpop.xlane.xlu0 %7766
      %v7768 = vmax.f32 %v7650, %v7652
      %7769 = vmax.xlane.f32.xlu0 %v7768
      %v7770 = vpop.xlane.xlu0 %7769
      %v7771 = vmax.f32 %v7656, %v7658
      %7772 = vmax.xlane.f32.xlu0 %v7771
      %v7773 = vpop.xlane.xlu0 %7772
      %v7774 = vmax.f32 %v7662, %v7664
      %7775 = vmax.xlane.f32.xlu0 %v7774
      %v7776 = vpop.xlane.xlu0 %7775
      %v7777 = vmax.f32 %v7668, %v7670
      %7778 = vmax.xlane.f32.xlu0 %v7777
      %v7779 = vpop.xlane.xlu0 %7778
      %v7780 = vmax.f32 %v7674, %v7676
      %7781 = vmax.xlane.f32.xlu0 %v7780
      %v7782 = vpop.xlane.xlu0 %7781
      %v7783 = vmax.f32 %v7680, %v7682
      %7784 = vmax.xlane.f32.xlu0 %v7783
      %v7785 = vpop.xlane.xlu0 %7784
      %v7786 = vmax.f32 %v7686, %v7688
      %7787 = vmax.xlane.f32.xlu0 %v7786
      %v7788 = vpop.xlane.xlu0 %7787
      %v7789 = vmax.f32 %v7692, %v7694
      %7790 = vmax.xlane.f32.xlu0 %v7789
      %v7791 = vpop.xlane.xlu0 %7790
      %v7792 = vsub.f32 %v7506, %v7698
      %v7793 = vsub.f32 %v7508, %v7698
      %v7794 = vsub.f32 %v7512, %v7701
      %v7795 = vsub.f32 %v7514, %v7701
      %v7796 = vsub.f32 %v7518, %v7704
      %v7797 = vsub.f32 %v7520, %v7704
      %v7798 = vsub.f32 %v7524, %v7707
      %v7799 = vsub.f32 %v7526, %v7707
      %v7800 = vsub.f32 %v7530, %v7710
      %v7801 = vsub.f32 %v7532, %v7710
      %v7802 = vsub.f32 %v7536, %v7713
      %v7803 = vsub.f32 %v7538, %v7713
      %v7804 = vsub.f32 %v7542, %v7716
      %v7805 = vsub.f32 %v7544, %v7716
      %v7806 = vsub.f32 %v7548, %v7719
      %v7807 = vsub.f32 %v7550, %v7719
      %v7808 = vsub.f32 %v7554, %v7722
      %v7809 = vsub.f32 %v7556, %v7722
      %v7810 = vsub.f32 %v7560, %v7725
      %v7811 = vsub.f32 %v7562, %v7725
      %v7812 = vsub.f32 %v7566, %v7728
      %v7813 = vsub.f32 %v7568, %v7728
      %v7814 = vsub.f32 %v7572, %v7731
      %v7815 = vsub.f32 %v7574, %v7731
      %v7816 = vsub.f32 %v7578, %v7734
      %v7817 = vsub.f32 %v7580, %v7734
      %v7818 = vsub.f32 %v7584, %v7737
      %v7819 = vsub.f32 %v7586, %v7737
      %v7820 = vsub.f32 %v7590, %v7740
      %v7821 = vsub.f32 %v7592, %v7740
      %v7822 = vsub.f32 %v7596, %v7743
      %v7823 = vsub.f32 %v7598, %v7743
      %v7824 = vsub.f32 %v7602, %v7746
      %v7825 = vsub.f32 %v7604, %v7746
      %v7826 = vsub.f32 %v7608, %v7749
      %v7827 = vsub.f32 %v7610, %v7749
      %v7828 = vsub.f32 %v7614, %v7752
      %v7829 = vsub.f32 %v7616, %v7752
      %v7830 = vsub.f32 %v7620, %v7755
      %v7831 = vsub.f32 %v7622, %v7755
      %v7832 = vsub.f32 %v7626, %v7758
      %v7833 = vsub.f32 %v7628, %v7758
      %v7834 = vsub.f32 %v7632, %v7761
      %v7835 = vsub.f32 %v7634, %v7761
      %v7836 = vsub.f32 %v7638, %v7764
      %v7837 = vsub.f32 %v7640, %v7764
      %v7838 = vsub.f32 %v7644, %v7767
      %v7839 = vsub.f32 %v7646, %v7767
      %v7840 = vsub.f32 %v7650, %v7770
      %v7841 = vsub.f32 %v7652, %v7770
      %v7842 = vsub.f32 %v7656, %v7773
      %v7843 = vsub.f32 %v7658, %v7773
      %v7844 = vsub.f32 %v7662, %v7776
      %v7845 = vsub.f32 %v7664, %v7776
      %v7846 = vsub.f32 %v7668, %v7779
      %v7847 = vsub.f32 %v7670, %v7779
      %v7848 = vsub.f32 %v7674, %v7782
      %v7849 = vsub.f32 %v7676, %v7782
      %v7850 = vsub.f32 %v7680, %v7785
      %v7851 = vsub.f32 %v7682, %v7785
      %v7852 = vsub.f32 %v7686, %v7788
      %v7853 = vsub.f32 %v7688, %v7788
      %v7854 = vsub.f32 %v7692, %v7791
      %v7855 = vsub.f32 %v7694, %v7791
      %v7856 = vmul.f32 %v7792, 1.442695
      %v7857 = vpow.pop %v7856
      %v7858 = vmul.f32 %v7793, 1.442695
      %v7859 = vpow.pop %v7858
      %v7860 = vmul.f32 %v7794, 1.442695
      %v7861 = vpow.pop %v7860
      %v7862 = vmul.f32 %v7795, 1.442695
      %v7863 = vpow.pop %v7862
      %v7864 = vmul.f32 %v7796, 1.442695
      %v7865 = vpow.pop %v7864
      %v7866 = vmul.f32 %v7797, 1.442695
      %v7867 = vpow.pop %v7866
      %v7868 = vmul.f32 %v7798, 1.442695
      %v7869 = vpow.pop %v7868
      %v7870 = vmul.f32 %v7799, 1.442695
      %v7871 = vpow.pop %v7870
      %v7872 = vmul.f32 %v7800, 1.442695
      %v7873 = vpow.pop %v7872
      %v7874 = vmul.f32 %v7801, 1.442695
      %v7875 = vpow.pop %v7874
      %v7876 = vmul.f32 %v7802, 1.442695
      %v7877 = vpow.pop %v7876
      %v7878 = vmul.f32 %v7803, 1.442695
      %v7879 = vpow.pop %v7878
      %v7880 = vmul.f32 %v7804, 1.442695
      %v7881 = vpow.pop %v7880
      %v7882 = vmul.f32 %v7805, 1.442695
      %v7883 = vpow.pop %v7882
      %v7884 = vmul.f32 %v7806, 1.442695
      %v7885 = vpow.pop %v7884
      %v7886 = vmul.f32 %v7807, 1.442695
      %v7887 = vpow.pop %v7886
      %v7888 = vmul.f32 %v7808, 1.442695
      %v7889 = vpow.pop %v7888
      %v7890 = vmul.f32 %v7809, 1.442695
      %v7891 = vpow.pop %v7890
      %v7892 = vmul.f32 %v7810, 1.442695
      %v7893 = vpow.pop %v7892
      %v7894 = vmul.f32 %v7811, 1.442695
      %v7895 = vpow.pop %v7894
      %v7896 = vmul.f32 %v7812, 1.442695
      %v7897 = vpow.pop %v7896
      %v7898 = vmul.f32 %v7813, 1.442695
      %v7899 = vpow.pop %v7898
      %v7900 = vmul.f32 %v7814, 1.442695
      %v7901 = vpow.pop %v7900
      %v7902 = vmul.f32 %v7815, 1.442695
      %v7903 = vpow.pop %v7902
      %v7904 = vmul.f32 %v7816, 1.442695
      %v7905 = vpow.pop %v7904
      %v7906 = vmul.f32 %v7817, 1.442695
      %v7907 = vpow.pop %v7906
      %v7908 = vmul.f32 %v7818, 1.442695
      %v7909 = vpow.pop %v7908
      %v7910 = vmul.f32 %v7819, 1.442695
      %v7911 = vpow.pop %v7910
      %v7912 = vmul.f32 %v7820, 1.442695
      %v7913 = vpow.pop %v7912
      %v7914 = vmul.f32 %v7821, 1.442695
      %v7915 = vpow.pop %v7914
      %v7916 = vmul.f32 %v7822, 1.442695
      %v7917 = vpow.pop %v7916
      %v7918 = vmul.f32 %v7823, 1.442695
      %v7919 = vpow.pop %v7918
      %v7920 = vmul.f32 %v7824, 1.442695
      %v7921 = vpow.pop %v7920
      %v7922 = vmul.f32 %v7825, 1.442695
      %v7923 = vpow.pop %v7922
      %v7924 = vmul.f32 %v7826, 1.442695
      %v7925 = vpow.pop %v7924
      %v7926 = vmul.f32 %v7827, 1.442695
      %v7927 = vpow.pop %v7926
      %v7928 = vmul.f32 %v7828, 1.442695
      %v7929 = vpow.pop %v7928
      %v7930 = vmul.f32 %v7829, 1.442695
      %v7931 = vpow.pop %v7930
      %v7932 = vmul.f32 %v7830, 1.442695
      %v7933 = vpow.pop %v7932
      %v7934 = vmul.f32 %v7831, 1.442695
      %v7935 = vpow.pop %v7934
      %v7936 = vmul.f32 %v7832, 1.442695
      %v7937 = vpow.pop %v7936
      %v7938 = vmul.f32 %v7833, 1.442695
      %v7939 = vpow.pop %v7938
      %v7940 = vmul.f32 %v7834, 1.442695
      %v7941 = vpow.pop %v7940
      %v7942 = vmul.f32 %v7835, 1.442695
      %v7943 = vpow.pop %v7942
      %v7944 = vmul.f32 %v7836, 1.442695
      %v7945 = vpow.pop %v7944
      %v7946 = vmul.f32 %v7837, 1.442695
      %v7947 = vpow.pop %v7946
      %v7948 = vmul.f32 %v7838, 1.442695
      %v7949 = vpow.pop %v7948
      %v7950 = vmul.f32 %v7839, 1.442695
      %v7951 = vpow.pop %v7950
      %v7952 = vmul.f32 %v7840, 1.442695
      %v7953 = vpow.pop %v7952
      %v7954 = vmul.f32 %v7841, 1.442695
      %v7955 = vpow.pop %v7954
      %v7956 = vmul.f32 %v7842, 1.442695
      %v7957 = vpow.pop %v7956
      %v7958 = vmul.f32 %v7843, 1.442695
      %v7959 = vpow.pop %v7958
      %v7960 = vmul.f32 %v7844, 1.442695
      %v7961 = vpow.pop %v7960
      %v7962 = vmul.f32 %v7845, 1.442695
      %v7963 = vpow.pop %v7962
      %v7964 = vmul.f32 %v7846, 1.442695
      %v7965 = vpow.pop %v7964
      %v7966 = vmul.f32 %v7847, 1.442695
      %v7967 = vpow.pop %v7966
      %v7968 = vmul.f32 %v7848, 1.442695
      %v7969 = vpow.pop %v7968
      %v7970 = vmul.f32 %v7849, 1.442695
      %v7971 = vpow.pop %v7970
      %v7972 = vmul.f32 %v7850, 1.442695
      %v7973 = vpow.pop %v7972
      %v7974 = vmul.f32 %v7851, 1.442695
      %v7975 = vpow.pop %v7974
      %v7976 = vmul.f32 %v7852, 1.442695
      %v7977 = vpow.pop %v7976
      %v7978 = vmul.f32 %v7853, 1.442695
      %v7979 = vpow.pop %v7978
      %v7980 = vmul.f32 %v7854, 1.442695
      %v7981 = vpow.pop %v7980
      %v7982 = vmul.f32 %v7855, 1.442695
      %v7983 = vpow.pop %v7982
      %v7984 = vadd.f32 %v7857, %v7859
      %7985 = vadd.xlane.f32.xlu0 %v7984
      %v7986 = vpop.xlane.xlu0 %7985
      %v7987 = vadd.f32 %v7861, %v7863
      %7988 = vadd.xlane.f32.xlu0 %v7987
      %v7989 = vpop.xlane.xlu0 %7988
      %v7990 = vadd.f32 %v7865, %v7867
      %7991 = vadd.xlane.f32.xlu0 %v7990
      %v7992 = vpop.xlane.xlu0 %7991
      %v7993 = vadd.f32 %v7869, %v7871
      %7994 = vadd.xlane.f32.xlu0 %v7993
      %v7995 = vpop.xlane.xlu0 %7994
      %v7996 = vadd.f32 %v7873, %v7875
      %7997 = vadd.xlane.f32.xlu0 %v7996
      %v7998 = vpop.xlane.xlu0 %7997
      %v7999 = vadd.f32 %v7877, %v7879
      %8000 = vadd.xlane.f32.xlu0 %v7999
      %v8001 = vpop.xlane.xlu0 %8000
      %v8002 = vadd.f32 %v7881, %v7883
      %8003 = vadd.xlane.f32.xlu0 %v8002
      %v8004 = vpop.xlane.xlu0 %8003
      %v8005 = vadd.f32 %v7885, %v7887
      %8006 = vadd.xlane.f32.xlu0 %v8005
      %v8007 = vpop.xlane.xlu0 %8006
      %v8008 = vadd.f32 %v7889, %v7891
      %8009 = vadd.xlane.f32.xlu0 %v8008
      %v8010 = vpop.xlane.xlu0 %8009
      %v8011 = vadd.f32 %v7893, %v7895
      %8012 = vadd.xlane.f32.xlu0 %v8011
      %v8013 = vpop.xlane.xlu0 %8012
      %v8014 = vadd.f32 %v7897, %v7899
      %8015 = vadd.xlane.f32.xlu0 %v8014
      %v8016 = vpop.xlane.xlu0 %8015
      %v8017 = vadd.f32 %v7901, %v7903
      %8018 = vadd.xlane.f32.xlu0 %v8017
      %v8019 = vpop.xlane.xlu0 %8018
      %v8020 = vadd.f32 %v7905, %v7907
      %8021 = vadd.xlane.f32.xlu0 %v8020
      %v8022 = vpop.xlane.xlu0 %8021
      %v8023 = vadd.f32 %v7909, %v7911
      %8024 = vadd.xlane.f32.xlu0 %v8023
      %v8025 = vpop.xlane.xlu0 %8024
      %v8026 = vadd.f32 %v7913, %v7915
      %8027 = vadd.xlane.f32.xlu0 %v8026
      %v8028 = vpop.xlane.xlu0 %8027
      %v8029 = vadd.f32 %v7917, %v7919
      %8030 = vadd.xlane.f32.xlu0 %v8029
      %v8031 = vpop.xlane.xlu0 %8030
      %v8032 = vadd.f32 %v7921, %v7923
      %8033 = vadd.xlane.f32.xlu0 %v8032
      %v8034 = vpop.xlane.xlu0 %8033
      %v8035 = vadd.f32 %v7925, %v7927
      %8036 = vadd.xlane.f32.xlu0 %v8035
      %v8037 = vpop.xlane.xlu0 %8036
      %v8038 = vadd.f32 %v7929, %v7931
      %8039 = vadd.xlane.f32.xlu0 %v8038
      %v8040 = vpop.xlane.xlu0 %8039
      %v8041 = vadd.f32 %v7933, %v7935
      %8042 = vadd.xlane.f32.xlu0 %v8041
      %v8043 = vpop.xlane.xlu0 %8042
      %v8044 = vadd.f32 %v7937, %v7939
      %8045 = vadd.xlane.f32.xlu0 %v8044
      %v8046 = vpop.xlane.xlu0 %8045
      %v8047 = vadd.f32 %v7941, %v7943
      %8048 = vadd.xlane.f32.xlu0 %v8047
      %v8049 = vpop.xlane.xlu0 %8048
      %v8050 = vadd.f32 %v7945, %v7947
      %8051 = vadd.xlane.f32.xlu0 %v8050
      %v8052 = vpop.xlane.xlu0 %8051
      %v8053 = vadd.f32 %v7949, %v7951
      %8054 = vadd.xlane.f32.xlu0 %v8053
      %v8055 = vpop.xlane.xlu0 %8054
      %v8056 = vadd.f32 %v7953, %v7955
      %8057 = vadd.xlane.f32.xlu0 %v8056
      %v8058 = vpop.xlane.xlu0 %8057
      %v8059 = vadd.f32 %v7957, %v7959
      %8060 = vadd.xlane.f32.xlu0 %v8059
      %v8061 = vpop.xlane.xlu0 %8060
      %v8062 = vadd.f32 %v7961, %v7963
      %8063 = vadd.xlane.f32.xlu0 %v8062
      %v8064 = vpop.xlane.xlu0 %8063
      %v8065 = vadd.f32 %v7965, %v7967
      %8066 = vadd.xlane.f32.xlu0 %v8065
      %v8067 = vpop.xlane.xlu0 %8066
      %v8068 = vadd.f32 %v7969, %v7971
      %8069 = vadd.xlane.f32.xlu0 %v8068
      %v8070 = vpop.xlane.xlu0 %8069
      %v8071 = vadd.f32 %v7973, %v7975
      %8072 = vadd.xlane.f32.xlu0 %v8071
      %v8073 = vpop.xlane.xlu0 %8072
      %v8074 = vadd.f32 %v7977, %v7979
      %8075 = vadd.xlane.f32.xlu0 %v8074
      %v8076 = vpop.xlane.xlu0 %8075
      %v8077 = vadd.f32 %v7981, %v7983
      %8078 = vadd.xlane.f32.xlu0 %v8077
      %v8079 = vpop.xlane.xlu0 %8078
      %v8080 = vrcp.pop %v7986
      %v8081 = vrcp.pop %v7989
      %v8082 = vrcp.pop %v7992
      %v8083 = vrcp.pop %v7995
      %v8084 = vrcp.pop %v7998
      %v8085 = vrcp.pop %v8001
      %v8086 = vrcp.pop %v8004
      %v8087 = vrcp.pop %v8007
      %v8088 = vrcp.pop %v8010
      %v8089 = vrcp.pop %v8013
      %v8090 = vrcp.pop %v8016
      %v8091 = vrcp.pop %v8019
      %v8092 = vrcp.pop %v8022
      %v8093 = vrcp.pop %v8025
      %v8094 = vrcp.pop %v8028
      %v8095 = vrcp.pop %v8031
      %v8096 = vrcp.pop %v8034
      %v8097 = vrcp.pop %v8037
      %v8098 = vrcp.pop %v8040
      %v8099 = vrcp.pop %v8043
      %v8100 = vrcp.pop %v8046
      %v8101 = vrcp.pop %v8049
      %v8102 = vrcp.pop %v8052
      %v8103 = vrcp.pop %v8055
      %v8104 = vrcp.pop %v8058
      %v8105 = vrcp.pop %v8061
      %v8106 = vrcp.pop %v8064
      %v8107 = vrcp.pop %v8067
      %v8108 = vrcp.pop %v8070
      %v8109 = vrcp.pop %v8073
      %v8110 = vrcp.pop %v8076
      %v8111 = vrcp.pop %v8079
      %v8112 = vmul.f32 %v7857, %v8080
      %v8113 = vmul.f32 %v7859, %v8080
      %v8114 = vmul.f32 %v7861, %v8081
      %v8115 = vmul.f32 %v7863, %v8081
      %v8116 = vmul.f32 %v7865, %v8082
      %v8117 = vmul.f32 %v7867, %v8082
      %v8118 = vmul.f32 %v7869, %v8083
      %v8119 = vmul.f32 %v7871, %v8083
      %v8120 = vmul.f32 %v7873, %v8084
      %v8121 = vmul.f32 %v7875, %v8084
      %v8122 = vmul.f32 %v7877, %v8085
      %v8123 = vmul.f32 %v7879, %v8085
      %v8124 = vmul.f32 %v7881, %v8086
      %v8125 = vmul.f32 %v7883, %v8086
      %v8126 = vmul.f32 %v7885, %v8087
      %v8127 = vmul.f32 %v7887, %v8087
      %v8128 = vmul.f32 %v7889, %v8088
      %v8129 = vmul.f32 %v7891, %v8088
      %v8130 = vmul.f32 %v7893, %v8089
      %v8131 = vmul.f32 %v7895, %v8089
      %v8132 = vmul.f32 %v7897, %v8090
      %v8133 = vmul.f32 %v7899, %v8090
      %v8134 = vmul.f32 %v7901, %v8091
      %v8135 = vmul.f32 %v7903, %v8091
      %v8136 = vmul.f32 %v7905, %v8092
      %v8137 = vmul.f32 %v7907, %v8092
      %v8138 = vmul.f32 %v7909, %v8093
      %v8139 = vmul.f32 %v7911, %v8093
      %v8140 = vmul.f32 %v7913, %v8094
      %v8141 = vmul.f32 %v7915, %v8094
      %v8142 = vmul.f32 %v7917, %v8095
      %v8143 = vmul.f32 %v7919, %v8095
      %v8144 = vmul.f32 %v7921, %v8096
      %v8145 = vmul.f32 %v7923, %v8096
      %v8146 = vmul.f32 %v7925, %v8097
      %v8147 = vmul.f32 %v7927, %v8097
      %v8148 = vmul.f32 %v7929, %v8098
      %v8149 = vmul.f32 %v7931, %v8098
      %v8150 = vmul.f32 %v7933, %v8099
      %v8151 = vmul.f32 %v7935, %v8099
      %v8152 = vmul.f32 %v7937, %v8100
      %v8153 = vmul.f32 %v7939, %v8100
      %v8154 = vmul.f32 %v7941, %v8101
      %v8155 = vmul.f32 %v7943, %v8101
      %v8156 = vmul.f32 %v7945, %v8102
      %v8157 = vmul.f32 %v7947, %v8102
      %v8158 = vmul.f32 %v7949, %v8103
      %v8159 = vmul.f32 %v7951, %v8103
      %v8160 = vmul.f32 %v7953, %v8104
      %v8161 = vmul.f32 %v7955, %v8104
      %v8162 = vmul.f32 %v7957, %v8105
      %v8163 = vmul.f32 %v7959, %v8105
      %v8164 = vmul.f32 %v7961, %v8106
      %v8165 = vmul.f32 %v7963, %v8106
      %v8166 = vmul.f32 %v7965, %v8107
      %v8167 = vmul.f32 %v7967, %v8107
      %v8168 = vmul.f32 %v7969, %v8108
      %v8169 = vmul.f32 %v7971, %v8108
      %v8170 = vmul.f32 %v7973, %v8109
      %v8171 = vmul.f32 %v7975, %v8109
      %v8172 = vmul.f32 %v7977, %v8110
      %v8173 = vmul.f32 %v7979, %v8110
      %v8174 = vmul.f32 %v7981, %v8111
      %v8175 = vmul.f32 %v7983, %v8111
      %8176 = vmatprep.subr.mxu0 %v8143
      %8177 = vmatpush1.xpose.msra.mxu0 %v8142
      %8178 = vmatprep.subr.mxu0 %v8141
      %8179 = vmatpush1.xpose.msra.mxu0 %v8140
      %8180 = vmatprep.subr.mxu0 %v8139
      %8181 = vmatpush1.xpose.msra.mxu0 %v8138
      %8182 = vmatprep.subr.mxu0 %v8137
      %8183 = vmatpush1.xpose.msra.mxu0 %v8136
      %8184 = vmatprep.subr.mxu0 %v8135
      %8185 = vmatpush1.xpose.msra.mxu0 %v8134
      %8186 = vmatprep.subr.mxu0 %v8133
      %8187 = vmatpush1.xpose.msra.mxu0 %v8132
      %8188 = vmatprep.subr.mxu0 %v8131
      %8189 = vmatpush1.xpose.msra.mxu0 %v8130
      %8190 = vmatprep.subr.mxu0 %v8129
      %8191 = vmatpush1.xpose.msra.mxu0 %v8128
      %8192 = vmatprep.subr.mxu0 %v8127
      %8193 = vmatpush1.xpose.msra.mxu0 %v8126
      %8194 = vmatprep.subr.mxu0 %v8125
      %8195 = vmatpush1.xpose.msra.mxu0 %v8124
      %8196 = vmatprep.subr.mxu0 %v8123
      %8197 = vmatpush1.xpose.msra.mxu0 %v8122
      %8198 = vmatprep.subr.mxu0 %v8121
      %8199 = vmatpush1.xpose.msra.mxu0 %v8120
      %8200 = vmatprep.subr.mxu0 %v8119
      %8201 = vmatpush1.xpose.msra.mxu0 %v8118
      %8202 = vmatprep.subr.mxu0 %v8117
      %8203 = vmatpush1.xpose.msra.mxu0 %v8116
      %8204 = vmatprep.subr.mxu0 %v8115
      %8205 = vmatpush1.xpose.msra.mxu0 %v8114
      %8206 = vmatprep.subr.mxu0 %v8113
      %8207 = vmatpush1.xpose.msra.mxu0 %v8112
      %8208 = vmatprep.subr.mxu0 %v8175
      %8209 = vmatpush2.xpose.msra.mxu0 %v8174
      %8210 = vmatprep.subr.mxu0 %v8173
      %8211 = vmatpush2.xpose.msra.mxu0 %v8172
      %8212 = vmatprep.subr.mxu0 %v8171
      %8213 = vmatpush2.xpose.msra.mxu0 %v8170
      %8214 = vmatprep.subr.mxu0 %v8169
      %8215 = vmatpush2.xpose.msra.mxu0 %v8168
      %8216 = vmatprep.subr.mxu0 %v8167
      %8217 = vmatpush2.xpose.msra.mxu0 %v8166
      %8218 = vmatprep.subr.mxu0 %v8165
      %8219 = vmatpush2.xpose.msra.mxu0 %v8164
      %8220 = vmatprep.subr.mxu0 %v8163
      %8221 = vmatpush2.xpose.msra.mxu0 %v8162
      %8222 = vmatprep.subr.mxu0 %v8161
      %8223 = vmatpush2.xpose.msra.mxu0 %v8160
      %8224 = vmatprep.subr.mxu0 %v8159
      %8225 = vmatpush2.xpose.msra.mxu0 %v8158
      %8226 = vmatprep.subr.mxu0 %v8157
      %8227 = vmatpush2.xpose.msra.mxu0 %v8156
      %8228 = vmatprep.subr.mxu0 %v8155
      %8229 = vmatpush2.xpose.msra.mxu0 %v8154
      %8230 = vmatprep.subr.mxu0 %v8153
      %8231 = vmatpush2.xpose.msra.mxu0 %v8152
      %8232 = vmatprep.subr.mxu0 %v8151
      %8233 = vmatpush2.xpose.msra.mxu0 %v8150
      %8234 = vmatprep.subr.mxu0 %v8149
      %8235 = vmatpush2.xpose.msra.mxu0 %v8148
      %8236 = vmatprep.subr.mxu0 %v8147
      %8237 = vmatpush2.xpose.msra.mxu0 %v8146
      %8238 = vmatprep.subr.mxu0 %v8145
      %8239 = vmatpush2.xpose.msra.mxu0 %v8144
      %8240 = vmatprep.mubr.f32.mxu0 %v5331
      %8241 = vmatmul.mubr.f32.gmra.mxu0 %v5329
      %v8242 = vpop.f32.mrf.mxu0
      %v8243 = vadd.f32 0.0, %v8242
      %v8244 = vpop.f32.mrf.mxu0
      %v8245 = vadd.f32 0.0, %v8244
      %8246 = vdwg.mxu0
      %8247 = vst [vmem:[#allocation2 + $0x20] sm:$0xff] %v8243
      %8248 = vst [vmem:[#allocation2 + $0x28] sm:$0xff] %v8245
      %8249 = vxpose.xlu0.b32.start [1/16] %v5287, 128
      %8250 = vxpose.xlu0.b32.cont [2/16] 0.0, 128
      %8251 = vxpose.xlu0.b32.cont [3/16] 0.0, 128
      %8252 = vxpose.xlu0.b32.cont [4/16] 0.0, 128
      %8253 = vxpose.xlu0.b32.cont [5/16] 0.0, 128
      %8254 = vxpose.xlu0.b32.cont [6/16] 0.0, 128
      %8255 = vxpose.xlu0.b32.cont [7/16] 0.0, 128
      %8256 = vxpose.xlu0.b32.cont [8/16] 0.0, 128
      %8257 = vxpose.xlu0.b32.cont [9/16] 0.0, 128
      %8258 = vxpose.xlu0.b32.cont [10/16] 0.0, 128
      %8259 = vxpose.xlu0.b32.cont [11/16] 0.0, 128
      %8260 = vxpose.xlu0.b32.cont [12/16] 0.0, 128
      %8261 = vxpose.xlu0.b32.cont [13/16] 0.0, 128
      %8262 = vxpose.xlu0.b32.cont [14/16] 0.0, 128
      %8263 = vxpose.xlu0.b32.cont [15/16] 0.0, 128
      %8264 = vxpose.xlu0.b32.end [16/16] 0.0, 128
      %v8265 = vpop.trf.xlu0
      %v8266 = vpop.trf.xlu0
      %v8267 = vpop.trf.xlu0
      %v8268 = vpop.trf.xlu0
      %v8269 = vpop.trf.xlu0
      %v8270 = vpop.trf.xlu0
      %v8271 = vpop.trf.xlu0
      %v8272 = vpop.trf.xlu0
      %v8273 = vpop.trf.xlu0
      %v8274 = vpop.trf.xlu0
      %v8275 = vpop.trf.xlu0
      %v8276 = vpop.trf.xlu0
      %v8277 = vpop.trf.xlu0
      %v8278 = vpop.trf.xlu0
      %v8279 = vpop.trf.xlu0
      %v8280 = vpop.trf.xlu0
      %8281 = vxpose.xlu0.b32.start [1/16] %v5289, 128
      %8282 = vxpose.xlu0.b32.cont [2/16] 0.0, 128
      %8283 = vxpose.xlu0.b32.cont [3/16] 0.0, 128
      %8284 = vxpose.xlu0.b32.cont [4/16] 0.0, 128
      %8285 = vxpose.xlu0.b32.cont [5/16] 0.0, 128
      %8286 = vxpose.xlu0.b32.cont [6/16] 0.0, 128
      %8287 = vxpose.xlu0.b32.cont [7/16] 0.0, 128
      %8288 = vxpose.xlu0.b32.cont [8/16] 0.0, 128
      %8289 = vxpose.xlu0.b32.cont [9/16] 0.0, 128
      %8290 = vxpose.xlu0.b32.cont [10/16] 0.0, 128
      %8291 = vxpose.xlu0.b32.cont [11/16] 0.0, 128
      %8292 = vxpose.xlu0.b32.cont [12/16] 0.0, 128
      %8293 = vxpose.xlu0.b32.cont [13/16] 0.0, 128
      %8294 = vxpose.xlu0.b32.cont [14/16] 0.0, 128
      %8295 = vxpose.xlu0.b32.cont [15/16] 0.0, 128
      %8296 = vxpose.xlu0.b32.end [16/16] 0.0, 128
      %v8297 = vpop.trf.xlu0
      %v8298 = vpop.trf.xlu0
      %v8299 = vpop.trf.xlu0
      %v8300 = vpop.trf.xlu0
      %v8301 = vpop.trf.xlu0
      %v8302 = vpop.trf.xlu0
      %v8303 = vpop.trf.xlu0
      %v8304 = vpop.trf.xlu0
      %v8305 = vpop.trf.xlu0
      %v8306 = vpop.trf.xlu0
      %v8307 = vpop.trf.xlu0
      %v8308 = vpop.trf.xlu0
      %v8309 = vpop.trf.xlu0
      %v8310 = vpop.trf.xlu0
      %v8311 = vpop.trf.xlu0
      %v8312 = vpop.trf.xlu0
      %v8314 = vsel %vm1013, %v8265, 0
      %v8317 = vsel %vm1013, %v8266, 0
      %v8320 = vsel %vm1013, %v8267, 0
      %v8323 = vsel %vm1013, %v8268, 0
      %v8326 = vsel %vm1013, %v8269, 0
      %v8329 = vsel %vm1013, %v8270, 0
      %v8332 = vsel %vm1013, %v8271, 0
      %v8335 = vsel %vm1013, %v8272, 0
      %v8338 = vsel %vm1013, %v8273, 0
      %v8341 = vsel %vm1013, %v8274, 0
      %v8344 = vsel %vm1013, %v8275, 0
      %v8347 = vsel %vm1013, %v8276, 0
      %v8350 = vsel %vm1013, %v8277, 0
      %v8353 = vsel %vm1013, %v8278, 0
      %v8356 = vsel %vm1013, %v8279, 0
      %v8359 = vsel %vm1013, %v8280, 0
      %v8362 = vsel %vm1013, %v8297, 0
      %v8365 = vsel %vm1013, %v8298, 0
      %v8368 = vsel %vm1013, %v8299, 0
      %v8371 = vsel %vm1013, %v8300, 0
      %v8374 = vsel %vm1013, %v8301, 0
      %v8377 = vsel %vm1013, %v8302, 0
      %v8380 = vsel %vm1013, %v8303, 0
      %v8383 = vsel %vm1013, %v8304, 0
      %v8386 = vsel %vm1013, %v8305, 0
      %v8389 = vsel %vm1013, %v8306, 0
      %v8392 = vsel %vm1013, %v8307, 0
      %v8395 = vsel %vm1013, %v8308, 0
      %v8398 = vsel %vm1013, %v8309, 0
      %v8401 = vsel %vm1013, %v8310, 0
      %v8404 = vsel %vm1013, %v8311, 0
      %v8407 = vsel %vm1013, %v8312, 0
      %8409 = vmatprep.subr.mxu0 0.0
      %8410 = vmatpush1.msra.mxu0 0.0
      %8411 = vmatprep.subr.mxu0 0.0
      %8412 = vmatpush1.msra.mxu0 0.0
      %8413 = vmatprep.subr.mxu0 0.0
      %8414 = vmatpush1.msra.mxu0 0.0
      %8415 = vmatprep.subr.mxu0 0.0
      %8416 = vmatpush1.msra.mxu0 0.0
      %8417 = vmatprep.subr.mxu0 0.0
      %8418 = vmatpush1.msra.mxu0 0.0
      %8419 = vmatprep.subr.mxu0 0.0
      %8420 = vmatpush1.msra.mxu0 0.0
      %8421 = vmatprep.subr.mxu0 0.0
      %8422 = vmatpush1.msra.mxu0 0.0
      %8423 = vmatprep.subr.mxu0 0.0
      %8424 = vmatpush1.msra.mxu0 0.0
      %8425 = vmatprep.subr.mxu0 0.0
      %8426 = vmatpush1.msra.mxu0 0.0
      %8427 = vmatprep.subr.mxu0 0.0
      %8428 = vmatpush1.msra.mxu0 0.0
      %8429 = vmatprep.subr.mxu0 0.0
      %8430 = vmatpush1.msra.mxu0 0.0
      %8431 = vmatprep.subr.mxu0 0.0
      %8432 = vmatpush1.msra.mxu0 0.0
      %8433 = vmatprep.subr.mxu0 0.0
      %8434 = vmatpush1.msra.mxu0 0.0
      %8435 = vmatprep.subr.mxu0 0.0
      %8436 = vmatpush1.msra.mxu0 0.0
      %8437 = vmatprep.subr.mxu0 0.0
      %8438 = vmatpush1.msra.mxu0 0.0
      %8439 = vmatprep.subr.mxu0 %v5313
      %8440 = vmatpush1.msra.mxu0 %v5311
      %8441 = vmatprep.subr.mxu0 0.0
      %8442 = vmatpush2.msra.mxu0 0.0
      %8443 = vmatprep.subr.mxu0 0.0
      %8444 = vmatpush2.msra.mxu0 0.0
      %8445 = vmatprep.subr.mxu0 0.0
      %8446 = vmatpush2.msra.mxu0 0.0
      %8447 = vmatprep.subr.mxu0 0.0
      %8448 = vmatpush2.msra.mxu0 0.0
      %8449 = vmatprep.subr.mxu0 0.0
      %8450 = vmatpush2.msra.mxu0 0.0
      %8451 = vmatprep.subr.mxu0 0.0
      %8452 = vmatpush2.msra.mxu0 0.0
      %8453 = vmatprep.subr.mxu0 0.0
      %8454 = vmatpush2.msra.mxu0 0.0
      %8455 = vmatprep.subr.mxu0 0.0
      %8456 = vmatpush2.msra.mxu0 0.0
      %8457 = vmatprep.subr.mxu0 0.0
      %8458 = vmatpush2.msra.mxu0 0.0
      %8459 = vmatprep.subr.mxu0 0.0
      %8460 = vmatpush2.msra.mxu0 0.0
      %8461 = vmatprep.subr.mxu0 0.0
      %8462 = vmatpush2.msra.mxu0 0.0
      %8463 = vmatprep.subr.mxu0 0.0
      %8464 = vmatpush2.msra.mxu0 0.0
      %8465 = vmatprep.subr.mxu0 0.0
      %8466 = vmatpush2.msra.mxu0 0.0
      %8467 = vmatprep.subr.mxu0 0.0
      %8468 = vmatpush2.msra.mxu0 0.0
      %8469 = vmatprep.subr.mxu0 0.0
      %8470 = vmatpush2.msra.mxu0 0.0
      %8471 = vmatprep.subr.mxu0 0.0
      %8472 = vmatpush2.msra.mxu0 0.0
      %8473 = vmatprep.mubr.f32.mxu0 0.0
      %8474 = vmatmul.mubr.f32.gmra.mxu0 %v8314
      %v8475 = vpop.f32.mrf.mxu0
      %v8476 = vadd.f32 0.0, %v8475
      %v8477 = vpop.f32.mrf.mxu0
      %v8478 = vadd.f32 0.0, %v8477
      %8479 = vmatprep.mubr.f32.mxu0 0.0
      %8480 = vmatmul.mubr.f32.gmra.mxu0 %v8317
      %v8481 = vpop.f32.mrf.mxu0
      %v8482 = vadd.f32 0.0, %v8481
      %v8483 = vpop.f32.mrf.mxu0
      %v8484 = vadd.f32 0.0, %v8483
      %8485 = vmatprep.mubr.f32.mxu0 0.0
      %8486 = vmatmul.mubr.f32.gmra.mxu0 %v8320
      %v8487 = vpop.f32.mrf.mxu0
      %v8488 = vadd.f32 0.0, %v8487
      %v8489 = vpop.f32.mrf.mxu0
      %v8490 = vadd.f32 0.0, %v8489
      %8491 = vmatprep.mubr.f32.mxu0 0.0
      %8492 = vmatmul.mubr.f32.gmra.mxu0 %v8323
      %v8493 = vpop.f32.mrf.mxu0
      %v8494 = vadd.f32 0.0, %v8493
      %v8495 = vpop.f32.mrf.mxu0
      %v8496 = vadd.f32 0.0, %v8495
      %8497 = vmatprep.mubr.f32.mxu0 0.0
      %8498 = vmatmul.mubr.f32.gmra.mxu0 %v8326
      %v8499 = vpop.f32.mrf.mxu0
      %v8500 = vadd.f32 0.0, %v8499
      %v8501 = vpop.f32.mrf.mxu0
      %v8502 = vadd.f32 0.0, %v8501
      %8503 = vmatprep.mubr.f32.mxu0 0.0
      %8504 = vmatmul.mubr.f32.gmra.mxu0 %v8329
      %v8505 = vpop.f32.mrf.mxu0
      %v8506 = vadd.f32 0.0, %v8505
      %v8507 = vpop.f32.mrf.mxu0
      %v8508 = vadd.f32 0.0, %v8507
      %8509 = vmatprep.mubr.f32.mxu0 0.0
      %8510 = vmatmul.mubr.f32.gmra.mxu0 %v8332
      %v8511 = vpop.f32.mrf.mxu0
      %v8512 = vadd.f32 0.0, %v8511
      %v8513 = vpop.f32.mrf.mxu0
      %v8514 = vadd.f32 0.0, %v8513
      %8515 = vmatprep.mubr.f32.mxu0 0.0
      %8516 = vmatmul.mubr.f32.gmra.mxu0 %v8335
      %v8517 = vpop.f32.mrf.mxu0
      %v8518 = vadd.f32 0.0, %v8517
      %v8519 = vpop.f32.mrf.mxu0
      %v8520 = vadd.f32 0.0, %v8519
      %8521 = vmatprep.mubr.f32.mxu0 0.0
      %8522 = vmatmul.mubr.f32.gmra.mxu0 %v8338
      %v8523 = vpop.f32.mrf.mxu0
      %v8524 = vadd.f32 0.0, %v8523
      %v8525 = vpop.f32.mrf.mxu0
      %v8526 = vadd.f32 0.0, %v8525
      %8527 = vmatprep.mubr.f32.mxu0 0.0
      %8528 = vmatmul.mubr.f32.gmra.mxu0 %v8341
      %v8529 = vpop.f32.mrf.mxu0
      %v8530 = vadd.f32 0.0, %v8529
      %v8531 = vpop.f32.mrf.mxu0
      %v8532 = vadd.f32 0.0, %v8531
      %8533 = vmatprep.mubr.f32.mxu0 0.0
      %8534 = vmatmul.mubr.f32.gmra.mxu0 %v8344
      %v8535 = vpop.f32.mrf.mxu0
      %v8536 = vadd.f32 0.0, %v8535
      %v8537 = vpop.f32.mrf.mxu0
      %v8538 = vadd.f32 0.0, %v8537
      %8539 = vmatprep.mubr.f32.mxu0 0.0
      %8540 = vmatmul.mubr.f32.gmra.mxu0 %v8347
      %v8541 = vpop.f32.mrf.mxu0
      %v8542 = vadd.f32 0.0, %v8541
      %v8543 = vpop.f32.mrf.mxu0
      %v8544 = vadd.f32 0.0, %v8543
      %8545 = vmatprep.mubr.f32.mxu0 0.0
      %8546 = vmatmul.mubr.f32.gmra.mxu0 %v8350
      %v8547 = vpop.f32.mrf.mxu0
      %v8548 = vadd.f32 0.0, %v8547
      %v8549 = vpop.f32.mrf.mxu0
      %v8550 = vadd.f32 0.0, %v8549
      %8551 = vmatprep.mubr.f32.mxu0 0.0
      %8552 = vmatmul.mubr.f32.gmra.mxu0 %v8353
      %v8553 = vpop.f32.mrf.mxu0
      %v8554 = vadd.f32 0.0, %v8553
      %v8555 = vpop.f32.mrf.mxu0
      %v8556 = vadd.f32 0.0, %v8555
      %8557 = vmatprep.mubr.f32.mxu0 0.0
      %8558 = vmatmul.mubr.f32.gmra.mxu0 %v8356
      %v8559 = vpop.f32.mrf.mxu0
      %v8560 = vadd.f32 0.0, %v8559
      %v8561 = vpop.f32.mrf.mxu0
      %v8562 = vadd.f32 0.0, %v8561
      %8563 = vmatprep.mubr.f32.mxu0 0.0
      %8564 = vmatmul.mubr.f32.gmra.mxu0 %v8359
      %v8565 = vpop.f32.mrf.mxu0
      %v8566 = vadd.f32 0.0, %v8565
      %v8567 = vpop.f32.mrf.mxu0
      %v8568 = vadd.f32 0.0, %v8567
      %8569 = vmatprep.mubr.f32.mxu0 0.0
      %8570 = vmatmul.mubr.f32.gmra.mxu0 %v8362
      %v8571 = vpop.f32.mrf.mxu0
      %v8572 = vadd.f32 0.0, %v8571
      %v8573 = vpop.f32.mrf.mxu0
      %v8574 = vadd.f32 0.0, %v8573
      %8575 = vmatprep.mubr.f32.mxu0 0.0
      %8576 = vmatmul.mubr.f32.gmra.mxu0 %v8365
      %v8577 = vpop.f32.mrf.mxu0
      %v8578 = vadd.f32 0.0, %v8577
      %v8579 = vpop.f32.mrf.mxu0
      %v8580 = vadd.f32 0.0, %v8579
      %8581 = vmatprep.mubr.f32.mxu0 0.0
      %8582 = vmatmul.mubr.f32.gmra.mxu0 %v8368
      %v8583 = vpop.f32.mrf.mxu0
      %v8584 = vadd.f32 0.0, %v8583
      %v8585 = vpop.f32.mrf.mxu0
      %v8586 = vadd.f32 0.0, %v8585
      %8587 = vmatprep.mubr.f32.mxu0 0.0
      %8588 = vmatmul.mubr.f32.gmra.mxu0 %v8371
      %v8589 = vpop.f32.mrf.mxu0
      %v8590 = vadd.f32 0.0, %v8589
      %v8591 = vpop.f32.mrf.mxu0
      %v8592 = vadd.f32 0.0, %v8591
      %8593 = vmatprep.mubr.f32.mxu0 0.0
      %8594 = vmatmul.mubr.f32.gmra.mxu0 %v8374
      %v8595 = vpop.f32.mrf.mxu0
      %v8596 = vadd.f32 0.0, %v8595
      %v8597 = vpop.f32.mrf.mxu0
      %v8598 = vadd.f32 0.0, %v8597
      %8599 = vmatprep.mubr.f32.mxu0 0.0
      %8600 = vmatmul.mubr.f32.gmra.mxu0 %v8377
      %v8601 = vpop.f32.mrf.mxu0
      %v8602 = vadd.f32 0.0, %v8601
      %v8603 = vpop.f32.mrf.mxu0
      %v8604 = vadd.f32 0.0, %v8603
      %8605 = vmatprep.mubr.f32.mxu0 0.0
      %8606 = vmatmul.mubr.f32.gmra.mxu0 %v8380
      %v8607 = vpop.f32.mrf.mxu0
      %v8608 = vadd.f32 0.0, %v8607
      %v8609 = vpop.f32.mrf.mxu0
      %v8610 = vadd.f32 0.0, %v8609
      %8611 = vmatprep.mubr.f32.mxu0 0.0
      %8612 = vmatmul.mubr.f32.gmra.mxu0 %v8383
      %v8613 = vpop.f32.mrf.mxu0
      %v8614 = vadd.f32 0.0, %v8613
      %v8615 = vpop.f32.mrf.mxu0
      %v8616 = vadd.f32 0.0, %v8615
      %8617 = vmatprep.mubr.f32.mxu0 0.0
      %8618 = vmatmul.mubr.f32.gmra.mxu0 %v8386
      %v8619 = vpop.f32.mrf.mxu0
      %v8620 = vadd.f32 0.0, %v8619
      %v8621 = vpop.f32.mrf.mxu0
      %v8622 = vadd.f32 0.0, %v8621
      %8623 = vmatprep.mubr.f32.mxu0 0.0
      %8624 = vmatmul.mubr.f32.gmra.mxu0 %v8389
      %v8625 = vpop.f32.mrf.mxu0
      %v8626 = vadd.f32 0.0, %v8625
      %v8627 = vpop.f32.mrf.mxu0
      %v8628 = vadd.f32 0.0, %v8627
      %8629 = vmatprep.mubr.f32.mxu0 0.0
      %8630 = vmatmul.mubr.f32.gmra.mxu0 %v8392
      %v8631 = vpop.f32.mrf.mxu0
      %v8632 = vadd.f32 0.0, %v8631
      %v8633 = vpop.f32.mrf.mxu0
      %v8634 = vadd.f32 0.0, %v8633
      %8635 = vmatprep.mubr.f32.mxu0 0.0
      %8636 = vmatmul.mubr.f32.gmra.mxu0 %v8395
      %v8637 = vpop.f32.mrf.mxu0
      %v8638 = vadd.f32 0.0, %v8637
      %v8639 = vpop.f32.mrf.mxu0
      %v8640 = vadd.f32 0.0, %v8639
      %8641 = vmatprep.mubr.f32.mxu0 0.0
      %8642 = vmatmul.mubr.f32.gmra.mxu0 %v8398
      %v8643 = vpop.f32.mrf.mxu0
      %v8644 = vadd.f32 0.0, %v8643
      %v8645 = vpop.f32.mrf.mxu0
      %v8646 = vadd.f32 0.0, %v8645
      %8647 = vmatprep.mubr.f32.mxu0 0.0
      %8648 = vmatmul.mubr.f32.gmra.mxu0 %v8401
      %v8649 = vpop.f32.mrf.mxu0
      %v8650 = vadd.f32 0.0, %v8649
      %v8651 = vpop.f32.mrf.mxu0
      %v8652 = vadd.f32 0.0, %v8651
      %8653 = vmatprep.mubr.f32.mxu0 0.0
      %8654 = vmatmul.mubr.f32.gmra.mxu0 %v8404
      %v8655 = vpop.f32.mrf.mxu0
      %v8656 = vadd.f32 0.0, %v8655
      %v8657 = vpop.f32.mrf.mxu0
      %v8658 = vadd.f32 0.0, %v8657
      %8659 = vmatprep.mubr.f32.mxu0 0.0
      %8660 = vmatmul.mubr.f32.gmra.mxu0 %v8407
      %v8661 = vpop.f32.mrf.mxu0
      %v8662 = vadd.f32 0.0, %v8661
      %v8663 = vpop.f32.mrf.mxu0
      %v8664 = vadd.f32 0.0, %v8663
      %8665 = vdwg.mxu0
      %v8666 = vmax.f32 %v8476, %v8478
      %8667 = vmax.xlane.f32.xlu0 %v8666
      %v8668 = vpop.xlane.xlu0 %8667
      %v8669 = vmax.f32 %v8482, %v8484
      %8670 = vmax.xlane.f32.xlu0 %v8669
      %v8671 = vpop.xlane.xlu0 %8670
      %v8672 = vmax.f32 %v8488, %v8490
      %8673 = vmax.xlane.f32.xlu0 %v8672
      %v8674 = vpop.xlane.xlu0 %8673
      %v8675 = vmax.f32 %v8494, %v8496
      %8676 = vmax.xlane.f32.xlu0 %v8675
      %v8677 = vpop.xlane.xlu0 %8676
      %v8678 = vmax.f32 %v8500, %v8502
      %8679 = vmax.xlane.f32.xlu0 %v8678
      %v8680 = vpop.xlane.xlu0 %8679
      %v8681 = vmax.f32 %v8506, %v8508
      %8682 = vmax.xlane.f32.xlu0 %v8681
      %v8683 = vpop.xlane.xlu0 %8682
      %v8684 = vmax.f32 %v8512, %v8514
      %8685 = vmax.xlane.f32.xlu0 %v8684
      %v8686 = vpop.xlane.xlu0 %8685
      %v8687 = vmax.f32 %v8518, %v8520
      %8688 = vmax.xlane.f32.xlu0 %v8687
      %v8689 = vpop.xlane.xlu0 %8688
      %v8690 = vmax.f32 %v8524, %v8526
      %8691 = vmax.xlane.f32.xlu0 %v8690
      %v8692 = vpop.xlane.xlu0 %8691
      %v8693 = vmax.f32 %v8530, %v8532
      %8694 = vmax.xlane.f32.xlu0 %v8693
      %v8695 = vpop.xlane.xlu0 %8694
      %v8696 = vmax.f32 %v8536, %v8538
      %8697 = vmax.xlane.f32.xlu0 %v8696
      %v8698 = vpop.xlane.xlu0 %8697
      %v8699 = vmax.f32 %v8542, %v8544
      %8700 = vmax.xlane.f32.xlu0 %v8699
      %v8701 = vpop.xlane.xlu0 %8700
      %v8702 = vmax.f32 %v8548, %v8550
      %8703 = vmax.xlane.f32.xlu0 %v8702
      %v8704 = vpop.xlane.xlu0 %8703
      %v8705 = vmax.f32 %v8554, %v8556
      %8706 = vmax.xlane.f32.xlu0 %v8705
      %v8707 = vpop.xlane.xlu0 %8706
      %v8708 = vmax.f32 %v8560, %v8562
      %8709 = vmax.xlane.f32.xlu0 %v8708
      %v8710 = vpop.xlane.xlu0 %8709
      %v8711 = vmax.f32 %v8566, %v8568
      %8712 = vmax.xlane.f32.xlu0 %v8711
      %v8713 = vpop.xlane.xlu0 %8712
      %v8714 = vmax.f32 %v8572, %v8574
      %8715 = vmax.xlane.f32.xlu0 %v8714
      %v8716 = vpop.xlane.xlu0 %8715
      %v8717 = vmax.f32 %v8578, %v8580
      %8718 = vmax.xlane.f32.xlu0 %v8717
      %v8719 = vpop.xlane.xlu0 %8718
      %v8720 = vmax.f32 %v8584, %v8586
      %8721 = vmax.xlane.f32.xlu0 %v8720
      %v8722 = vpop.xlane.xlu0 %8721
      %v8723 = vmax.f32 %v8590, %v8592
      %8724 = vmax.xlane.f32.xlu0 %v8723
      %v8725 = vpop.xlane.xlu0 %8724
      %v8726 = vmax.f32 %v8596, %v8598
      %8727 = vmax.xlane.f32.xlu0 %v8726
      %v8728 = vpop.xlane.xlu0 %8727
      %v8729 = vmax.f32 %v8602, %v8604
      %8730 = vmax.xlane.f32.xlu0 %v8729
      %v8731 = vpop.xlane.xlu0 %8730
      %v8732 = vmax.f32 %v8608, %v8610
      %8733 = vmax.xlane.f32.xlu0 %v8732
      %v8734 = vpop.xlane.xlu0 %8733
      %v8735 = vmax.f32 %v8614, %v8616
      %8736 = vmax.xlane.f32.xlu0 %v8735
      %v8737 = vpop.xlane.xlu0 %8736
      %v8738 = vmax.f32 %v8620, %v8622
      %8739 = vmax.xlane.f32.xlu0 %v8738
      %v8740 = vpop.xlane.xlu0 %8739
      %v8741 = vmax.f32 %v8626, %v8628
      %8742 = vmax.xlane.f32.xlu0 %v8741
      %v8743 = vpop.xlane.xlu0 %8742
      %v8744 = vmax.f32 %v8632, %v8634
      %8745 = vmax.xlane.f32.xlu0 %v8744
      %v8746 = vpop.xlane.xlu0 %8745
      %v8747 = vmax.f32 %v8638, %v8640
      %8748 = vmax.xlane.f32.xlu0 %v8747
      %v8749 = vpop.xlane.xlu0 %8748
      %v8750 = vmax.f32 %v8644, %v8646
      %8751 = vmax.xlane.f32.xlu0 %v8750
      %v8752 = vpop.xlane.xlu0 %8751
      %v8753 = vmax.f32 %v8650, %v8652
      %8754 = vmax.xlane.f32.xlu0 %v8753
      %v8755 = vpop.xlane.xlu0 %8754
      %v8756 = vmax.f32 %v8656, %v8658
      %8757 = vmax.xlane.f32.xlu0 %v8756
      %v8758 = vpop.xlane.xlu0 %8757
      %v8759 = vmax.f32 %v8662, %v8664
      %8760 = vmax.xlane.f32.xlu0 %v8759
      %v8761 = vpop.xlane.xlu0 %8760
      %v8762 = vsub.f32 %v8476, %v8668
      %v8763 = vsub.f32 %v8478, %v8668
      %v8764 = vsub.f32 %v8482, %v8671
      %v8765 = vsub.f32 %v8484, %v8671
      %v8766 = vsub.f32 %v8488, %v8674
      %v8767 = vsub.f32 %v8490, %v8674
      %v8768 = vsub.f32 %v8494, %v8677
      %v8769 = vsub.f32 %v8496, %v8677
      %v8770 = vsub.f32 %v8500, %v8680
      %v8771 = vsub.f32 %v8502, %v8680
      %v8772 = vsub.f32 %v8506, %v8683
      %v8773 = vsub.f32 %v8508, %v8683
      %v8774 = vsub.f32 %v8512, %v8686
      %v8775 = vsub.f32 %v8514, %v8686
      %v8776 = vsub.f32 %v8518, %v8689
      %v8777 = vsub.f32 %v8520, %v8689
      %v8778 = vsub.f32 %v8524, %v8692
      %v8779 = vsub.f32 %v8526, %v8692
      %v8780 = vsub.f32 %v8530, %v8695
      %v8781 = vsub.f32 %v8532, %v8695
      %v8782 = vsub.f32 %v8536, %v8698
      %v8783 = vsub.f32 %v8538, %v8698
      %v8784 = vsub.f32 %v8542, %v8701
      %v8785 = vsub.f32 %v8544, %v8701
      %v8786 = vsub.f32 %v8548, %v8704
      %v8787 = vsub.f32 %v8550, %v8704
      %v8788 = vsub.f32 %v8554, %v8707
      %v8789 = vsub.f32 %v8556, %v8707
      %v8790 = vsub.f32 %v8560, %v8710
      %v8791 = vsub.f32 %v8562, %v8710
      %v8792 = vsub.f32 %v8566, %v8713
      %v8793 = vsub.f32 %v8568, %v8713
      %v8794 = vsub.f32 %v8572, %v8716
      %v8795 = vsub.f32 %v8574, %v8716
      %v8796 = vsub.f32 %v8578, %v8719
      %v8797 = vsub.f32 %v8580, %v8719
      %v8798 = vsub.f32 %v8584, %v8722
      %v8799 = vsub.f32 %v8586, %v8722
      %v8800 = vsub.f32 %v8590, %v8725
      %v8801 = vsub.f32 %v8592, %v8725
      %v8802 = vsub.f32 %v8596, %v8728
      %v8803 = vsub.f32 %v8598, %v8728
      %v8804 = vsub.f32 %v8602, %v8731
      %v8805 = vsub.f32 %v8604, %v8731
      %v8806 = vsub.f32 %v8608, %v8734
      %v8807 = vsub.f32 %v8610, %v8734
      %v8808 = vsub.f32 %v8614, %v8737
      %v8809 = vsub.f32 %v8616, %v8737
      %v8810 = vsub.f32 %v8620, %v8740
      %v8811 = vsub.f32 %v8622, %v8740
      %v8812 = vsub.f32 %v8626, %v8743
      %v8813 = vsub.f32 %v8628, %v8743
      %v8814 = vsub.f32 %v8632, %v8746
      %v8815 = vsub.f32 %v8634, %v8746
      %v8816 = vsub.f32 %v8638, %v8749
      %v8817 = vsub.f32 %v8640, %v8749
      %v8818 = vsub.f32 %v8644, %v8752
      %v8819 = vsub.f32 %v8646, %v8752
      %v8820 = vsub.f32 %v8650, %v8755
      %v8821 = vsub.f32 %v8652, %v8755
      %v8822 = vsub.f32 %v8656, %v8758
      %v8823 = vsub.f32 %v8658, %v8758
      %v8824 = vsub.f32 %v8662, %v8761
      %v8825 = vsub.f32 %v8664, %v8761
      %v8826 = vmul.f32 %v8762, 1.442695
      %v8827 = vpow.pop %v8826
      %v8828 = vmul.f32 %v8763, 1.442695
      %v8829 = vpow.pop %v8828
      %v8830 = vmul.f32 %v8764, 1.442695
      %v8831 = vpow.pop %v8830
      %v8832 = vmul.f32 %v8765, 1.442695
      %v8833 = vpow.pop %v8832
      %v8834 = vmul.f32 %v8766, 1.442695
      %v8835 = vpow.pop %v8834
      %v8836 = vmul.f32 %v8767, 1.442695
      %v8837 = vpow.pop %v8836
      %v8838 = vmul.f32 %v8768, 1.442695
      %v8839 = vpow.pop %v8838
      %v8840 = vmul.f32 %v8769, 1.442695
      %v8841 = vpow.pop %v8840
      %v8842 = vmul.f32 %v8770, 1.442695
      %v8843 = vpow.pop %v8842
      %v8844 = vmul.f32 %v8771, 1.442695
      %v8845 = vpow.pop %v8844
      %v8846 = vmul.f32 %v8772, 1.442695
      %v8847 = vpow.pop %v8846
      %v8848 = vmul.f32 %v8773, 1.442695
      %v8849 = vpow.pop %v8848
      %v8850 = vmul.f32 %v8774, 1.442695
      %v8851 = vpow.pop %v8850
      %v8852 = vmul.f32 %v8775, 1.442695
      %v8853 = vpow.pop %v8852
      %v8854 = vmul.f32 %v8776, 1.442695
      %v8855 = vpow.pop %v8854
      %v8856 = vmul.f32 %v8777, 1.442695
      %v8857 = vpow.pop %v8856
      %v8858 = vmul.f32 %v8778, 1.442695
      %v8859 = vpow.pop %v8858
      %v8860 = vmul.f32 %v8779, 1.442695
      %v8861 = vpow.pop %v8860
      %v8862 = vmul.f32 %v8780, 1.442695
      %v8863 = vpow.pop %v8862
      %v8864 = vmul.f32 %v8781, 1.442695
      %v8865 = vpow.pop %v8864
      %v8866 = vmul.f32 %v8782, 1.442695
      %v8867 = vpow.pop %v8866
      %v8868 = vmul.f32 %v8783, 1.442695
      %v8869 = vpow.pop %v8868
      %v8870 = vmul.f32 %v8784, 1.442695
      %v8871 = vpow.pop %v8870
      %v8872 = vmul.f32 %v8785, 1.442695
      %v8873 = vpow.pop %v8872
      %v8874 = vmul.f32 %v8786, 1.442695
      %v8875 = vpow.pop %v8874
      %v8876 = vmul.f32 %v8787, 1.442695
      %v8877 = vpow.pop %v8876
      %v8878 = vmul.f32 %v8788, 1.442695
      %v8879 = vpow.pop %v8878
      %v8880 = vmul.f32 %v8789, 1.442695
      %v8881 = vpow.pop %v8880
      %v8882 = vmul.f32 %v8790, 1.442695
      %v8883 = vpow.pop %v8882
      %v8884 = vmul.f32 %v8791, 1.442695
      %v8885 = vpow.pop %v8884
      %v8886 = vmul.f32 %v8792, 1.442695
      %v8887 = vpow.pop %v8886
      %v8888 = vmul.f32 %v8793, 1.442695
      %v8889 = vpow.pop %v8888
      %v8890 = vmul.f32 %v8794, 1.442695
      %v8891 = vpow.pop %v8890
      %v8892 = vmul.f32 %v8795, 1.442695
      %v8893 = vpow.pop %v8892
      %v8894 = vmul.f32 %v8796, 1.442695
      %v8895 = vpow.pop %v8894
      %v8896 = vmul.f32 %v8797, 1.442695
      %v8897 = vpow.pop %v8896
      %v8898 = vmul.f32 %v8798, 1.442695
      %v8899 = vpow.pop %v8898
      %v8900 = vmul.f32 %v8799, 1.442695
      %v8901 = vpow.pop %v8900
      %v8902 = vmul.f32 %v8800, 1.442695
      %v8903 = vpow.pop %v8902
      %v8904 = vmul.f32 %v8801, 1.442695
      %v8905 = vpow.pop %v8904
      %v8906 = vmul.f32 %v8802, 1.442695
      %v8907 = vpow.pop %v8906
      %v8908 = vmul.f32 %v8803, 1.442695
      %v8909 = vpow.pop %v8908
      %v8910 = vmul.f32 %v8804, 1.442695
      %v8911 = vpow.pop %v8910
      %v8912 = vmul.f32 %v8805, 1.442695
      %v8913 = vpow.pop %v8912
      %v8914 = vmul.f32 %v8806, 1.442695
      %v8915 = vpow.pop %v8914
      %v8916 = vmul.f32 %v8807, 1.442695
      %v8917 = vpow.pop %v8916
      %v8918 = vmul.f32 %v8808, 1.442695
      %v8919 = vpow.pop %v8918
      %v8920 = vmul.f32 %v8809, 1.442695
      %v8921 = vpow.pop %v8920
      %v8922 = vmul.f32 %v8810, 1.442695
      %v8923 = vpow.pop %v8922
      %v8924 = vmul.f32 %v8811, 1.442695
      %v8925 = vpow.pop %v8924
      %v8926 = vmul.f32 %v8812, 1.442695
      %v8927 = vpow.pop %v8926
      %v8928 = vmul.f32 %v8813, 1.442695
      %v8929 = vpow.pop %v8928
      %v8930 = vmul.f32 %v8814, 1.442695
      %v8931 = vpow.pop %v8930
      %v8932 = vmul.f32 %v8815, 1.442695
      %v8933 = vpow.pop %v8932
      %v8934 = vmul.f32 %v8816, 1.442695
      %v8935 = vpow.pop %v8934
      %v8936 = vmul.f32 %v8817, 1.442695
      %v8937 = vpow.pop %v8936
      %v8938 = vmul.f32 %v8818, 1.442695
      %v8939 = vpow.pop %v8938
      %v8940 = vmul.f32 %v8819, 1.442695
      %v8941 = vpow.pop %v8940
      %v8942 = vmul.f32 %v8820, 1.442695
      %v8943 = vpow.pop %v8942
      %v8944 = vmul.f32 %v8821, 1.442695
      %v8945 = vpow.pop %v8944
      %v8946 = vmul.f32 %v8822, 1.442695
      %v8947 = vpow.pop %v8946
      %v8948 = vmul.f32 %v8823, 1.442695
      %v8949 = vpow.pop %v8948
      %v8950 = vmul.f32 %v8824, 1.442695
      %v8951 = vpow.pop %v8950
      %v8952 = vmul.f32 %v8825, 1.442695
      %v8953 = vpow.pop %v8952
      %v8954 = vadd.f32 %v8827, %v8829
      %8955 = vadd.xlane.f32.xlu0 %v8954
      %v8956 = vpop.xlane.xlu0 %8955
      %v8957 = vadd.f32 %v8831, %v8833
      %8958 = vadd.xlane.f32.xlu0 %v8957
      %v8959 = vpop.xlane.xlu0 %8958
      %v8960 = vadd.f32 %v8835, %v8837
      %8961 = vadd.xlane.f32.xlu0 %v8960
      %v8962 = vpop.xlane.xlu0 %8961
      %v8963 = vadd.f32 %v8839, %v8841
      %8964 = vadd.xlane.f32.xlu0 %v8963
      %v8965 = vpop.xlane.xlu0 %8964
      %v8966 = vadd.f32 %v8843, %v8845
      %8967 = vadd.xlane.f32.xlu0 %v8966
      %v8968 = vpop.xlane.xlu0 %8967
      %v8969 = vadd.f32 %v8847, %v8849
      %8970 = vadd.xlane.f32.xlu0 %v8969
      %v8971 = vpop.xlane.xlu0 %8970
      %v8972 = vadd.f32 %v8851, %v8853
      %8973 = vadd.xlane.f32.xlu0 %v8972
      %v8974 = vpop.xlane.xlu0 %8973
      %v8975 = vadd.f32 %v8855, %v8857
      %8976 = vadd.xlane.f32.xlu0 %v8975
      %v8977 = vpop.xlane.xlu0 %8976
      %v8978 = vadd.f32 %v8859, %v8861
      %8979 = vadd.xlane.f32.xlu0 %v8978
      %v8980 = vpop.xlane.xlu0 %8979
      %v8981 = vadd.f32 %v8863, %v8865
      %8982 = vadd.xlane.f32.xlu0 %v8981
      %v8983 = vpop.xlane.xlu0 %8982
      %v8984 = vadd.f32 %v8867, %v8869
      %8985 = vadd.xlane.f32.xlu0 %v8984
      %v8986 = vpop.xlane.xlu0 %8985
      %v8987 = vadd.f32 %v8871, %v8873
      %8988 = vadd.xlane.f32.xlu0 %v8987
      %v8989 = vpop.xlane.xlu0 %8988
      %v8990 = vadd.f32 %v8875, %v8877
      %8991 = vadd.xlane.f32.xlu0 %v8990
      %v8992 = vpop.xlane.xlu0 %8991
      %v8993 = vadd.f32 %v8879, %v8881
      %8994 = vadd.xlane.f32.xlu0 %v8993
      %v8995 = vpop.xlane.xlu0 %8994
      %v8996 = vadd.f32 %v8883, %v8885
      %8997 = vadd.xlane.f32.xlu0 %v8996
      %v8998 = vpop.xlane.xlu0 %8997
      %v8999 = vadd.f32 %v8887, %v8889
      %9000 = vadd.xlane.f32.xlu0 %v8999
      %v9001 = vpop.xlane.xlu0 %9000
      %v9002 = vadd.f32 %v8891, %v8893
      %9003 = vadd.xlane.f32.xlu0 %v9002
      %v9004 = vpop.xlane.xlu0 %9003
      %v9005 = vadd.f32 %v8895, %v8897
      %9006 = vadd.xlane.f32.xlu0 %v9005
      %v9007 = vpop.xlane.xlu0 %9006
      %v9008 = vadd.f32 %v8899, %v8901
      %9009 = vadd.xlane.f32.xlu0 %v9008
      %v9010 = vpop.xlane.xlu0 %9009
      %v9011 = vadd.f32 %v8903, %v8905
      %9012 = vadd.xlane.f32.xlu0 %v9011
      %v9013 = vpop.xlane.xlu0 %9012
      %v9014 = vadd.f32 %v8907, %v8909
      %9015 = vadd.xlane.f32.xlu0 %v9014
      %v9016 = vpop.xlane.xlu0 %9015
      %v9017 = vadd.f32 %v8911, %v8913
      %9018 = vadd.xlane.f32.xlu0 %v9017
      %v9019 = vpop.xlane.xlu0 %9018
      %v9020 = vadd.f32 %v8915, %v8917
      %9021 = vadd.xlane.f32.xlu0 %v9020
      %v9022 = vpop.xlane.xlu0 %9021
      %v9023 = vadd.f32 %v8919, %v8921
      %9024 = vadd.xlane.f32.xlu0 %v9023
      %v9025 = vpop.xlane.xlu0 %9024
      %v9026 = vadd.f32 %v8923, %v8925
      %9027 = vadd.xlane.f32.xlu0 %v9026
      %v9028 = vpop.xlane.xlu0 %9027
      %v9029 = vadd.f32 %v8927, %v8929
      %9030 = vadd.xlane.f32.xlu0 %v9029
      %v9031 = vpop.xlane.xlu0 %9030
      %v9032 = vadd.f32 %v8931, %v8933
      %9033 = vadd.xlane.f32.xlu0 %v9032
      %v9034 = vpop.xlane.xlu0 %9033
      %v9035 = vadd.f32 %v8935, %v8937
      %9036 = vadd.xlane.f32.xlu0 %v9035
      %v9037 = vpop.xlane.xlu0 %9036
      %v9038 = vadd.f32 %v8939, %v8941
      %9039 = vadd.xlane.f32.xlu0 %v9038
      %v9040 = vpop.xlane.xlu0 %9039
      %v9041 = vadd.f32 %v8943, %v8945
      %9042 = vadd.xlane.f32.xlu0 %v9041
      %v9043 = vpop.xlane.xlu0 %9042
      %v9044 = vadd.f32 %v8947, %v8949
      %9045 = vadd.xlane.f32.xlu0 %v9044
      %v9046 = vpop.xlane.xlu0 %9045
      %v9047 = vadd.f32 %v8951, %v8953
      %9048 = vadd.xlane.f32.xlu0 %v9047
      %v9049 = vpop.xlane.xlu0 %9048
      %v9050 = vrcp.pop %v8956
      %v9051 = vrcp.pop %v8959
      %v9052 = vrcp.pop %v8962
      %v9053 = vrcp.pop %v8965
      %v9054 = vrcp.pop %v8968
      %v9055 = vrcp.pop %v8971
      %v9056 = vrcp.pop %v8974
      %v9057 = vrcp.pop %v8977
      %v9058 = vrcp.pop %v8980
      %v9059 = vrcp.pop %v8983
      %v9060 = vrcp.pop %v8986
      %v9061 = vrcp.pop %v8989
      %v9062 = vrcp.pop %v8992
      %v9063 = vrcp.pop %v8995
      %v9064 = vrcp.pop %v8998
      %v9065 = vrcp.pop %v9001
      %v9066 = vrcp.pop %v9004
      %v9067 = vrcp.pop %v9007
      %v9068 = vrcp.pop %v9010
      %v9069 = vrcp.pop %v9013
      %v9070 = vrcp.pop %v9016
      %v9071 = vrcp.pop %v9019
      %v9072 = vrcp.pop %v9022
      %v9073 = vrcp.pop %v9025
      %v9074 = vrcp.pop %v9028
      %v9075 = vrcp.pop %v9031
      %v9076 = vrcp.pop %v9034
      %v9077 = vrcp.pop %v9037
      %v9078 = vrcp.pop %v9040
      %v9079 = vrcp.pop %v9043
      %v9080 = vrcp.pop %v9046
      %v9081 = vrcp.pop %v9049
      %v9082 = vmul.f32 %v8827, %v9050
      %v9083 = vmul.f32 %v8829, %v9050
      %v9084 = vmul.f32 %v8831, %v9051
      %v9085 = vmul.f32 %v8833, %v9051
      %v9086 = vmul.f32 %v8835, %v9052
      %v9087 = vmul.f32 %v8837, %v9052
      %v9088 = vmul.f32 %v8839, %v9053
      %v9089 = vmul.f32 %v8841, %v9053
      %v9090 = vmul.f32 %v8843, %v9054
      %v9091 = vmul.f32 %v8845, %v9054
      %v9092 = vmul.f32 %v8847, %v9055
      %v9093 = vmul.f32 %v8849, %v9055
      %v9094 = vmul.f32 %v8851, %v9056
      %v9095 = vmul.f32 %v8853, %v9056
      %v9096 = vmul.f32 %v8855, %v9057
      %v9097 = vmul.f32 %v8857, %v9057
      %v9098 = vmul.f32 %v8859, %v9058
      %v9099 = vmul.f32 %v8861, %v9058
      %v9100 = vmul.f32 %v8863, %v9059
      %v9101 = vmul.f32 %v8865, %v9059
      %v9102 = vmul.f32 %v8867, %v9060
      %v9103 = vmul.f32 %v8869, %v9060
      %v9104 = vmul.f32 %v8871, %v9061
      %v9105 = vmul.f32 %v8873, %v9061
      %v9106 = vmul.f32 %v8875, %v9062
      %v9107 = vmul.f32 %v8877, %v9062
      %v9108 = vmul.f32 %v8879, %v9063
      %v9109 = vmul.f32 %v8881, %v9063
      %v9110 = vmul.f32 %v8883, %v9064
      %v9111 = vmul.f32 %v8885, %v9064
      %v9112 = vmul.f32 %v8887, %v9065
      %v9113 = vmul.f32 %v8889, %v9065
      %v9114 = vmul.f32 %v8891, %v9066
      %v9115 = vmul.f32 %v8893, %v9066
      %v9116 = vmul.f32 %v8895, %v9067
      %v9117 = vmul.f32 %v8897, %v9067
      %v9118 = vmul.f32 %v8899, %v9068
      %v9119 = vmul.f32 %v8901, %v9068
      %v9120 = vmul.f32 %v8903, %v9069
      %v9121 = vmul.f32 %v8905, %v9069
      %v9122 = vmul.f32 %v8907, %v9070
      %v9123 = vmul.f32 %v8909, %v9070
      %v9124 = vmul.f32 %v8911, %v9071
      %v9125 = vmul.f32 %v8913, %v9071
      %v9126 = vmul.f32 %v8915, %v9072
      %v9127 = vmul.f32 %v8917, %v9072
      %v9128 = vmul.f32 %v8919, %v9073
      %v9129 = vmul.f32 %v8921, %v9073
      %v9130 = vmul.f32 %v8923, %v9074
      %v9131 = vmul.f32 %v8925, %v9074
      %v9132 = vmul.f32 %v8927, %v9075
      %v9133 = vmul.f32 %v8929, %v9075
      %v9134 = vmul.f32 %v8931, %v9076
      %v9135 = vmul.f32 %v8933, %v9076
      %v9136 = vmul.f32 %v8935, %v9077
      %v9137 = vmul.f32 %v8937, %v9077
      %v9138 = vmul.f32 %v8939, %v9078
      %v9139 = vmul.f32 %v8941, %v9078
      %v9140 = vmul.f32 %v8943, %v9079
      %v9141 = vmul.f32 %v8945, %v9079
      %v9142 = vmul.f32 %v8947, %v9080
      %v9143 = vmul.f32 %v8949, %v9080
      %v9144 = vmul.f32 %v8951, %v9081
      %v9145 = vmul.f32 %v8953, %v9081
      %9146 = vmatprep.subr.mxu0 %v9113
      %9147 = vmatpush1.xpose.msra.mxu0 %v9112
      %9148 = vmatprep.subr.mxu0 %v9111
      %9149 = vmatpush1.xpose.msra.mxu0 %v9110
      %9150 = vmatprep.subr.mxu0 %v9109
      %9151 = vmatpush1.xpose.msra.mxu0 %v9108
      %9152 = vmatprep.subr.mxu0 %v9107
      %9153 = vmatpush1.xpose.msra.mxu0 %v9106
      %9154 = vmatprep.subr.mxu0 %v9105
      %9155 = vmatpush1.xpose.msra.mxu0 %v9104
      %9156 = vmatprep.subr.mxu0 %v9103
      %9157 = vmatpush1.xpose.msra.mxu0 %v9102
      %9158 = vmatprep.subr.mxu0 %v9101
      %9159 = vmatpush1.xpose.msra.mxu0 %v9100
      %9160 = vmatprep.subr.mxu0 %v9099
      %9161 = vmatpush1.xpose.msra.mxu0 %v9098
      %9162 = vmatprep.subr.mxu0 %v9097
      %9163 = vmatpush1.xpose.msra.mxu0 %v9096
      %9164 = vmatprep.subr.mxu0 %v9095
      %9165 = vmatpush1.xpose.msra.mxu0 %v9094
      %9166 = vmatprep.subr.mxu0 %v9093
      %9167 = vmatpush1.xpose.msra.mxu0 %v9092
      %9168 = vmatprep.subr.mxu0 %v9091
      %9169 = vmatpush1.xpose.msra.mxu0 %v9090
      %9170 = vmatprep.subr.mxu0 %v9089
      %9171 = vmatpush1.xpose.msra.mxu0 %v9088
      %9172 = vmatprep.subr.mxu0 %v9087
      %9173 = vmatpush1.xpose.msra.mxu0 %v9086
      %9174 = vmatprep.subr.mxu0 %v9085
      %9175 = vmatpush1.xpose.msra.mxu0 %v9084
      %9176 = vmatprep.subr.mxu0 %v9083
      %9177 = vmatpush1.xpose.msra.mxu0 %v9082
      %9178 = vmatprep.subr.mxu0 %v9145
      %9179 = vmatpush2.xpose.msra.mxu0 %v9144
      %9180 = vmatprep.subr.mxu0 %v9143
      %9181 = vmatpush2.xpose.msra.mxu0 %v9142
      %9182 = vmatprep.subr.mxu0 %v9141
      %9183 = vmatpush2.xpose.msra.mxu0 %v9140
      %9184 = vmatprep.subr.mxu0 %v9139
      %9185 = vmatpush2.xpose.msra.mxu0 %v9138
      %9186 = vmatprep.subr.mxu0 %v9137
      %9187 = vmatpush2.xpose.msra.mxu0 %v9136
      %9188 = vmatprep.subr.mxu0 %v9135
      %9189 = vmatpush2.xpose.msra.mxu0 %v9134
      %9190 = vmatprep.subr.mxu0 %v9133
      %9191 = vmatpush2.xpose.msra.mxu0 %v9132
      %9192 = vmatprep.subr.mxu0 %v9131
      %9193 = vmatpush2.xpose.msra.mxu0 %v9130
      %9194 = vmatprep.subr.mxu0 %v9129
      %9195 = vmatpush2.xpose.msra.mxu0 %v9128
      %9196 = vmatprep.subr.mxu0 %v9127
      %9197 = vmatpush2.xpose.msra.mxu0 %v9126
      %9198 = vmatprep.subr.mxu0 %v9125
      %9199 = vmatpush2.xpose.msra.mxu0 %v9124
      %9200 = vmatprep.subr.mxu0 %v9123
      %9201 = vmatpush2.xpose.msra.mxu0 %v9122
      %9202 = vmatprep.subr.mxu0 %v9121
      %9203 = vmatpush2.xpose.msra.mxu0 %v9120
      %9204 = vmatprep.subr.mxu0 %v9119
      %9205 = vmatpush2.xpose.msra.mxu0 %v9118
      %9206 = vmatprep.subr.mxu0 %v9117
      %9207 = vmatpush2.xpose.msra.mxu0 %v9116
      %9208 = vmatprep.subr.mxu0 %v9115
      %9209 = vmatpush2.xpose.msra.mxu0 %v9114
      %9210 = vmatprep.mubr.f32.mxu0 %v5337
      %9211 = vmatmul.mubr.f32.gmra.mxu0 %v5335
      %v9212 = vpop.f32.mrf.mxu0
      %v9213 = vadd.f32 0.0, %v9212
      %v9214 = vpop.f32.mrf.mxu0
      %v9215 = vadd.f32 0.0, %v9214
      %9216 = vdwg.mxu0
      %9217 = vst [vmem:[#allocation2 + $0x30] sm:$0xff] %v9213
      %9218 = vst [vmem:[#allocation2 + $0x38] sm:$0xff] %v9215
      %s9219 = scalar_lea.vmem %s7, 32
      %v9220 = vld [vmem:[%s9219] sm:$0xff]
      %v9221 = vld [vmem:[%s9219 + $0x8] sm:$0xff]
      %v9222 = vld [vmem:[%s9219 + $0x10] sm:$0xff]
      %v9223 = vld [vmem:[%s9219 + $0x18] sm:$0xff]
      %v9224 = vld [vmem:[#allocation2] sm:$0xff]
      %v9225 = vld [vmem:[#allocation2 + $0x8] sm:$0xff]
      %v9226 = vld [vmem:[#allocation2 + $0x10] sm:$0xff]
      %v9227 = vld [vmem:[#allocation2 + $0x18] sm:$0xff]
      %v9228 = vld [vmem:[#allocation2 + $0x20] sm:$0xff]
      %v9229 = vld [vmem:[#allocation2 + $0x28] sm:$0xff]
      %v9230 = vld [vmem:[#allocation2 + $0x30] sm:$0xff]
      %v9231 = vld [vmem:[#allocation2 + $0x38] sm:$0xff]
      %s9232 = scalar_lea.vmem %s8, 32
      %v9233 = vld [vmem:[%s9232] sm:$0xff]
      %v9234 = vld [vmem:[%s9232 + $0x8] sm:$0xff]
      %v9235 = vld [vmem:[%s9232 + $0x10] sm:$0xff]
      %v9236 = vld [vmem:[%s9232 + $0x18] sm:$0xff]
      %9238 = vset.pattern.permute.xlu0 0
      %9239 = vperm.xlu0 %9238, %v9233
      %v9240 = vpop.permute.xlu0 %9239
      %9243 = vset.pattern.permute.xlu0 0
      %9244 = vperm.xlu0 %9243, %v9234
      %v9245 = vpop.permute.xlu0 %9244
      %9248 = vset.pattern.permute.xlu0 0
      %9249 = vperm.xlu0 %9248, %v9235
      %v9250 = vpop.permute.xlu0 %9249
      %9253 = vset.pattern.permute.xlu0 0
      %9254 = vperm.xlu0 %9253, %v9236
      %v9255 = vpop.permute.xlu0 %9254
      %v9258 = vsel %vm582, %v9220, 0
      %v9261 = vsel %vm582, %v9221, 0
      %v9264 = vsel %vm582, %v9222, 0
      %v9267 = vsel %vm582, %v9223, 0
      %9269 = vmatprep.subr.mxu0 0.0
      %9270 = vmatpush1.msra.mxu0 0.0
      %9271 = vmatprep.subr.mxu0 0.0
      %9272 = vmatpush1.msra.mxu0 0.0
      %9273 = vmatprep.subr.mxu0 0.0
      %9274 = vmatpush1.msra.mxu0 0.0
      %9275 = vmatprep.subr.mxu0 0.0
      %9276 = vmatpush1.msra.mxu0 0.0
      %9277 = vmatprep.subr.mxu0 0.0
      %9278 = vmatpush1.msra.mxu0 0.0
      %9279 = vmatprep.subr.mxu0 0.0
      %9280 = vmatpush1.msra.mxu0 0.0
      %9281 = vmatprep.subr.mxu0 0.0
      %9282 = vmatpush1.msra.mxu0 0.0
      %9283 = vmatprep.subr.mxu0 0.0
      %9284 = vmatpush1.msra.mxu0 0.0
      %9285 = vmatprep.subr.mxu0 0.0
      %9286 = vmatpush1.msra.mxu0 0.0
      %9287 = vmatprep.subr.mxu0 0.0
      %9288 = vmatpush1.msra.mxu0 0.0
      %9289 = vmatprep.subr.mxu0 0.0
      %9290 = vmatpush1.msra.mxu0 0.0
      %9291 = vmatprep.subr.mxu0 0.0
      %9292 = vmatpush1.msra.mxu0 0.0
      %9293 = vmatprep.subr.mxu0 %v9231
      %9294 = vmatpush1.msra.mxu0 %v9230
      %9295 = vmatprep.subr.mxu0 %v9229
      %9296 = vmatpush1.msra.mxu0 %v9228
      %9297 = vmatprep.subr.mxu0 %v9227
      %9298 = vmatpush1.msra.mxu0 %v9226
      %9299 = vmatprep.subr.mxu0 %v9225
      %9300 = vmatpush1.msra.mxu0 %v9224
      %9301 = vmatprep.subr.mxu0 0.0
      %9302 = vmatpush2.msra.mxu0 0.0
      %9303 = vmatprep.subr.mxu0 0.0
      %9304 = vmatpush2.msra.mxu0 0.0
      %9305 = vmatprep.subr.mxu0 0.0
      %9306 = vmatpush2.msra.mxu0 0.0
      %9307 = vmatprep.subr.mxu0 0.0
      %9308 = vmatpush2.msra.mxu0 0.0
      %9309 = vmatprep.subr.mxu0 0.0
      %9310 = vmatpush2.msra.mxu0 0.0
      %9311 = vmatprep.subr.mxu0 0.0
      %9312 = vmatpush2.msra.mxu0 0.0
      %9313 = vmatprep.subr.mxu0 0.0
      %9314 = vmatpush2.msra.mxu0 0.0
      %9315 = vmatprep.subr.mxu0 0.0
      %9316 = vmatpush2.msra.mxu0 0.0
      %9317 = vmatprep.subr.mxu0 0.0
      %9318 = vmatpush2.msra.mxu0 0.0
      %9319 = vmatprep.subr.mxu0 0.0
      %9320 = vmatpush2.msra.mxu0 0.0
      %9321 = vmatprep.subr.mxu0 0.0
      %9322 = vmatpush2.msra.mxu0 0.0
      %9323 = vmatprep.subr.mxu0 0.0
      %9324 = vmatpush2.msra.mxu0 0.0
      %9325 = vmatprep.subr.mxu0 0.0
      %9326 = vmatpush2.msra.mxu0 0.0
      %9327 = vmatprep.subr.mxu0 0.0
      %9328 = vmatpush2.msra.mxu0 0.0
      %9329 = vmatprep.subr.mxu0 0.0
      %9330 = vmatpush2.msra.mxu0 0.0
      %9331 = vmatprep.subr.mxu0 0.0
      %9332 = vmatpush2.msra.mxu0 0.0
      %9333 = vmatprep.mubr.f32.mxu0 0.0
      %9334 = vmatmul.mubr.f32.gmra.mxu0 %v9258
      %v9335 = vpop.f32.mrf.mxu0
      %v9336 = vadd.f32 %v9240, %v9335
      %v9337 = vpop.f32.mrf.mxu0
      %v9338 = vadd.f32 %v9240, %v9337
      %9339 = vmatprep.mubr.f32.mxu0 0.0
      %9340 = vmatmul.mubr.f32.gmra.mxu0 %v9261
      %v9341 = vpop.f32.mrf.mxu0
      %v9342 = vadd.f32 %v9245, %v9341
      %v9343 = vpop.f32.mrf.mxu0
      %v9344 = vadd.f32 %v9245, %v9343
      %9345 = vmatprep.mubr.f32.mxu0 0.0
      %9346 = vmatmul.mubr.f32.gmra.mxu0 %v9264
      %v9347 = vpop.f32.mrf.mxu0
      %v9348 = vadd.f32 %v9250, %v9347
      %v9349 = vpop.f32.mrf.mxu0
      %v9350 = vadd.f32 %v9250, %v9349
      %9351 = vmatprep.mubr.f32.mxu0 0.0
      %9352 = vmatmul.mubr.f32.gmra.mxu0 %v9267
      %v9353 = vpop.f32.mrf.mxu0
      %v9354 = vadd.f32 %v9255, %v9353
      %v9355 = vpop.f32.mrf.mxu0
      %v9356 = vadd.f32 %v9255, %v9355
      %9357 = vdwg.mxu0
      %v9358 = vadd.f32 %v9336, %v5058
      %v9359 = vadd.f32 %v9338, %v5060
      %v9360 = vadd.f32 %v9342, %v5064
      %v9361 = vadd.f32 %v9344, %v5066
      %v9362 = vadd.f32 %v9348, %v5070
      %v9363 = vadd.f32 %v9350, %v5072
      %v9364 = vadd.f32 %v9354, %v5076
      %v9365 = vadd.f32 %v9356, %v5078
      %s9366 = scalar_lea.vmem %s9, 32
      %v9367 = vld [vmem:[%s9366] sm:$0xff]
      %v9368 = vld [vmem:[%s9366 + $0x8] sm:$0xff]
      %v9369 = vld [vmem:[%s9366 + $0x10] sm:$0xff]
      %v9370 = vld [vmem:[%s9366 + $0x18] sm:$0xff]
      %v9372 = vsel %vm582, %v9367, 0
      %v9375 = vsel %vm582, %v9368, 0
      %v9378 = vsel %vm582, %v9369, 0
      %v9381 = vsel %vm582, %v9370, 0
      %9383 = vmatprep.subr.mxu0 0.0
      %9384 = vmatpush1.msra.mxu0 0.0
      %9385 = vmatprep.subr.mxu0 0.0
      %9386 = vmatpush1.msra.mxu0 0.0
      %9387 = vmatprep.subr.mxu0 0.0
      %9388 = vmatpush1.msra.mxu0 0.0
      %9389 = vmatprep.subr.mxu0 0.0
      %9390 = vmatpush1.msra.mxu0 0.0
      %9391 = vmatprep.subr.mxu0 0.0
      %9392 = vmatpush1.msra.mxu0 0.0
      %9393 = vmatprep.subr.mxu0 0.0
      %9394 = vmatpush1.msra.mxu0 0.0
      %9395 = vmatprep.subr.mxu0 0.0
      %9396 = vmatpush1.msra.mxu0 0.0
      %9397 = vmatprep.subr.mxu0 0.0
      %9398 = vmatpush1.msra.mxu0 0.0
      %9399 = vmatprep.subr.mxu0 0.0
      %9400 = vmatpush1.msra.mxu0 0.0
      %9401 = vmatprep.subr.mxu0 0.0
      %9402 = vmatpush1.msra.mxu0 0.0
      %9403 = vmatprep.subr.mxu0 0.0
      %9404 = vmatpush1.msra.mxu0 0.0
      %9405 = vmatprep.subr.mxu0 0.0
      %9406 = vmatpush1.msra.mxu0 0.0
      %9407 = vmatprep.subr.mxu0 %v9365
      %9408 = vmatpush1.msra.mxu0 %v9364
      %9409 = vmatprep.subr.mxu0 %v9363
      %9410 = vmatpush1.msra.mxu0 %v9362
      %9411 = vmatprep.subr.mxu0 %v9361
      %9412 = vmatpush1.msra.mxu0 %v9360
      %9413 = vmatprep.subr.mxu0 %v9359
      %9414 = vmatpush1.msra.mxu0 %v9358
      %9415 = vmatprep.subr.mxu0 0.0
      %9416 = vmatpush2.msra.mxu0 0.0
      %9417 = vmatprep.subr.mxu0 0.0
      %9418 = vmatpush2.msra.mxu0 0.0
      %9419 = vmatprep.subr.mxu0 0.0
      %9420 = vmatpush2.msra.mxu0 0.0
      %9421 = vmatprep.subr.mxu0 0.0
      %9422 = vmatpush2.msra.mxu0 0.0
      %9423 = vmatprep.subr.mxu0 0.0
      %9424 = vmatpush2.msra.mxu0 0.0
      %9425 = vmatprep.subr.mxu0 0.0
      %9426 = vmatpush2.msra.mxu0 0.0
      %9427 = vmatprep.subr.mxu0 0.0
      %9428 = vmatpush2.msra.mxu0 0.0
      %9429 = vmatprep.subr.mxu0 0.0
      %9430 = vmatpush2.msra.mxu0 0.0
      %9431 = vmatprep.subr.mxu0 0.0
      %9432 = vmatpush2.msra.mxu0 0.0
      %9433 = vmatprep.subr.mxu0 0.0
      %9434 = vmatpush2.msra.mxu0 0.0
      %9435 = vmatprep.subr.mxu0 0.0
      %9436 = vmatpush2.msra.mxu0 0.0
      %9437 = vmatprep.subr.mxu0 0.0
      %9438 = vmatpush2.msra.mxu0 0.0
      %9439 = vmatprep.subr.mxu0 0.0
      %9440 = vmatpush2.msra.mxu0 0.0
      %9441 = vmatprep.subr.mxu0 0.0
      %9442 = vmatpush2.msra.mxu0 0.0
      %9443 = vmatprep.subr.mxu0 0.0
      %9444 = vmatpush2.msra.mxu0 0.0
      %9445 = vmatprep.subr.mxu0 0.0
      %9446 = vmatpush2.msra.mxu0 0.0
      %9447 = vmatprep.mubr.f32.mxu0 0.0
      %9448 = vmatmul.mubr.f32.gmra.mxu0 %v9372
      %v9449 = vpop.f32.mrf.mxu0
      %v9450 = vadd.f32 %v9358, %v9449
      %v9451 = vpop.f32.mrf.mxu0
      %v9452 = vadd.f32 %v9359, %v9451
      %9453 = vmatprep.mubr.f32.mxu0 0.0
      %9454 = vmatmul.mubr.f32.gmra.mxu0 %v9375
      %v9455 = vpop.f32.mrf.mxu0
      %v9456 = vadd.f32 %v9360, %v9455
      %v9457 = vpop.f32.mrf.mxu0
      %v9458 = vadd.f32 %v9361, %v9457
      %9459 = vmatprep.mubr.f32.mxu0 0.0
      %9460 = vmatmul.mubr.f32.gmra.mxu0 %v9378
      %v9461 = vpop.f32.mrf.mxu0
      %v9462 = vadd.f32 %v9362, %v9461
      %v9463 = vpop.f32.mrf.mxu0
      %v9464 = vadd.f32 %v9363, %v9463
      %9465 = vmatprep.mubr.f32.mxu0 0.0
      %9466 = vmatmul.mubr.f32.gmra.mxu0 %v9381
      %v9467 = vpop.f32.mrf.mxu0
      %v9468 = vadd.f32 %v9364, %v9467
      %v9469 = vpop.f32.mrf.mxu0
      %v9470 = vadd.f32 %v9365, %v9469
      %9471 = vdwg.mxu0
      %9472 = vst [vmem:[%s359] sm:$0xff] %v9450
      %9473 = vst [vmem:[%s359 + $0x8] sm:$0xff] %v9452
      %9474 = vst [vmem:[%s359 + $0x10] sm:$0xff] %v9456
      %9475 = vst [vmem:[%s359 + $0x18] sm:$0xff] %v9458
      %9476 = vst [vmem:[%s359 + $0x20] sm:$0xff] %v9462
      %9477 = vst [vmem:[%s359 + $0x28] sm:$0xff] %v9464
      %9478 = vst [vmem:[%s359 + $0x30] sm:$0xff] %v9468
      %9479 = vst [vmem:[%s359 + $0x38] sm:$0xff] %v9470
      %p9480 = scmp.lt.s32.totalorder %s21, 1
      %s9481 = scalar_select %p9480, %s21, 1
      %s9482 = smul.addr %s9481, 8
      %s9483 = smul.addr %s9482, 8
      %s9484 = scalar_lea.vmem %s10, %s9483
      // Predicated region
      $region61: #{transformer_block_forward.1} parent=59 // pred_check
        %p9485 = pneg %p254
      $region62: #{transformer_block_forward.1} parent=59 // pred_check_branch
        %9487 = sbr.rel (%p9485) target = $region64
      $region63: #{transformer_block_forward.1} parent=59 // pred_region
        _
      $region64: #{transformer_block_forward.1} parent=59 // pred_fallthru
        _
    $region60: #{transformer_block_forward.1} parent=5 // pred_fallthru
      _
    %p9488 = scmp.le.s32.totalorder 2, %s16
    // Predicated region
    $region65: #{transformer_block_forward.1} parent=5 // pred_check
      %p9489 = pneg %p9488
    $region66: #{transformer_block_forward.1} parent=5 // pred_check_branch
      %9491 = sbr.rel (%p9489) target = $region68
    $region67: #{transformer_block_forward.1} parent=5 // pred_region
      %s9492 = ssub.s32 %s16, 2
      // Predicated region
      $region69: #{transformer_block_forward.1} parent=67 // pred_check
        %p9493 = pneg %p260
      $region70: #{transformer_block_forward.1} parent=67 // pred_check_branch
        %9495 = sbr.rel (%p9493) target = $region72
      $region71: #{transformer_block_forward.1} parent=67 // pred_region
        %p9496 = scmp.lt.s32.totalorder %s22, 1
        %s9497 = scalar_select %p9496, %s22, 1
        %s9498 = smul.addr %s9497, 8
        %s9499 = smul.addr %s9498, 8
        %s9500 = scalar_lea.vmem %s10, %s9499
      $region72: #{transformer_block_forward.1} parent=67 // pred_fallthru
        _
    $region68: #{transformer_block_forward.1} parent=5 // pred_fallthru
      _
  $region6: #{transformer_block_forward.1} parent=0 // loop_footer
    %s20 = sadd.s32 1, %s16
  $region7: #{transformer_block_forward.1} parent=0 // loop_footer_branch
    %15 = sbr.rel target = $region3
  $region8: #{transformer_block_forward.1} parent=0 // loop_exit
    _

</llo_original>
